<compile_context>
chip_gen: v7x
topology: tpu7x:2x2x1
jax: 0.10.0
libtpu: 0.0.40
codegen_flags: <defaults>
</compile_context>

<pallas_src>
import functools

import jax
import jax.numpy as jnp
from jax.experimental import pallas as pl
from jax.experimental.pallas import tpu as pltpu

LEAKY_SLOPE = 0.01  # torch.nn.LeakyReLU default negative_slope


def _round_up(n, m):
    return ((n + m - 1) // m) * m


def _row_tiling(rows, max_tile=512):
    """Row tile (multiple of 8, <= max_tile, >=2 tiles when possible) and padded rows."""
    half = _round_up((rows + 1) // 2, 8)          # ensure >=2 grid steps for v7x dual-TC
    tr = min(max_tile, max(half, 8))
    return tr, _round_up(rows, tr)


def _leaky(y):
    # LeakyReLU with slope in (0, 1):  max(y, slope*y)  (cheaper than compare+select)
    return jnp.maximum(y, LEAKY_SLOPE * y)


# ----------------------------------------------------------------------------- kernels
def _e1_fused_kernel(x_ref, w1_ref, b1_ref, w2_ref, b2_ref, h_ref):
    # EmbeddingInput #1: LBRD -> LBRD fused, intermediate lives only in vregs/VMEM.
    # BN scale is pre-folded into the bf16 weights; bias added post-matmul in f32.
    y = jnp.dot(x_ref[...].astype(jnp.bfloat16), w1_ref[...],
                preferred_element_type=jnp.float32) + b1_ref[...]
    y = _leaky(y)
    y = jnp.dot(y.astype(jnp.bfloat16), w2_ref[...],
                preferred_element_type=jnp.float32) + b2_ref[...]
    y = _leaky(y)
    h_ref[...] = y.astype(h_ref.dtype)            # bf16 out -> halves all downstream streams


def _pdist_kernel(xq_ref, xk_ref, sqk_ref, o_ref):
    # Negated squared pairwise distances for one (query-tile x all-keys) block.
    # Key squared norms are precomputed once per batch and passed in (hoisted).
    xq = xq_ref[0]                                                      # (TQ, D) bf16
    xk = xk_ref[0]                                                      # (N,  D) bf16
    inner = jax.lax.dot_general(xq, xk, (((1,), (1,)), ((), ())),
                                preferred_element_type=jnp.float32)     # (TQ, N) MXU
    xq32 = xq.astype(jnp.float32)
    sq_q = jnp.sum(xq32 * xq32, axis=1, keepdims=True)                  # (TQ, 1) XLU
    # negated squared distance: bigger == closer, feeds top_k directly (no extra negation)
    o_ref[0] = 2.0 * inner - sq_q - sqk_ref[0]


def _e2_fused_kernel(center_ref, nbrs_ref, w1t_ref, w1d_ref, b1_ref, w2_ref, b2_ref, o_ref):
    # Fused EmbeddingInput #2 + max over k for one row tile; ALL k neighbors per grid step.
    #   concat([nbr - c, c]) @ W1 == nbr @ W1_top + c @ (W1_bot - W1_top)
    # BN scales are pre-folded into W1_top / (W1_bot - W1_top) / W2.
    w1t = w1t_ref[...]                             # (D, C2)  bf16
    w2 = w2_ref[...]                               # (C2, C2) bf16
    b2 = b2_ref[...]                               # (1, C2)  f32
    # center projection + bias1: computed once per row tile
    cproj = jnp.dot(center_ref[...], w1d_ref[...],
                    preferred_element_type=jnp.float32) + b1_ref[...]

    def one_neighbor(kk):
        y = jnp.dot(nbrs_ref[kk], w1t, preferred_element_type=jnp.float32) + cproj
        y = _leaky(y)                              # LBRD #1
        y = jnp.dot(y.astype(jnp.bfloat16), w2, preferred_element_type=jnp.float32) + b2
        return _leaky(y)                           # LBRD #2

    best = one_neighbor(0)
    nk = nbrs_ref.shape[0]
    best = jax.lax.fori_loop(
        1, nk, lambda kk, acc: jnp.maximum(acc, one_neighbor(kk)), best, unroll=True)
    o_ref[...] = best                              # single write, no per-k o_ref RMW


# ----------------------------------------------------------------------------- wrappers
def embed1(x, p):
    """Fused EmbeddingInput #1: (B, N, cin) -> (B, N, D) in bf16."""
    B, N, cin = x.shape
    D = p["e1_w2"].shape[1]
    cpad = max(8, _round_up(cin, 8))               # pad Cin=3 -> 8 (zero weight rows: exact)

    x2d = x.reshape(B * N, cin)
    if cpad != cin:
        x2d = jnp.pad(x2d, ((0, 0), (0, cpad - cin)))
    w1 = jnp.pad(p["e1_w1"], ((0, cpad - cin), (0, 0)))
    w1s = (w1 * p["e1_s1"][None, :]).astype(jnp.bfloat16)       # fold BN scale (f32) -> bf16
    w2s = (p["e1_w2"] * p["e1_s2"][None, :]).astype(jnp.bfloat16)
    b1 = p["e1_b1"].reshape(1, D)
    b2 = p["e1_b2"].reshape(1, D)

    rows = B * N
    tr, rows_p = _row_tiling(rows)
    if rows_p != rows:
        x2d = jnp.pad(x2d, ((0, rows_p - rows), (0, 0)))

    h = pl.pallas_call(
        _e1_fused_kernel,
        out_shape=jax.ShapeDtypeStruct((rows_p, D), jnp.bfloat16),
        grid=(rows_p // tr,),
        in_specs=[pl.BlockSpec((tr, cpad), lambda i: (i, 0)),
                  pl.BlockSpec((cpad, D), lambda i: (0, 0)),
                  pl.BlockSpec((1, D), lambda i: (0, 0)),
                  pl.BlockSpec((D, D), lambda i: (0, 0)),
                  pl.BlockSpec((1, D), lambda i: (0, 0))],
        out_specs=pl.BlockSpec((tr, D), lambda i: (i, 0)),
        compiler_params=pltpu.CompilerParams(dimension_semantics=("parallel",)),
    )(x2d, w1s, b1, w2s, b2)
    if rows_p != rows:
        h = h[:rows]
    return h.reshape(B, N, D)


def neg_pairwise_sq_dist(h_bf):
    """Negated squared pairwise distances per batch element, tiled over the query axis."""
    B, N, D = h_bf.shape
    # per-point squared key norms: computed once (hoisted out of the per-query-tile loop)
    sqk = jnp.sum(jnp.square(h_bf.astype(jnp.float32)), axis=-1).reshape(B, 1, N)

    tq = min(512, _round_up(N, 8))
    nq_p = _round_up(N, tq)
    hq = h_bf if nq_p == N else jnp.pad(h_bf, ((0, 0), (0, nq_p - N), (0, 0)))

    # TODO(synk): for very large N on v7x (64 MiB VMEM), add a key-axis tile instead of
    # loading the full (1, N, D) key slab / (tq, N) output block per step.
    out = pl.pallas_call(
        _pdist_kernel,
        out_shape=jax.ShapeDtypeStruct((B, nq_p, N), jnp.float32),
        grid=(B, nq_p // tq),
        in_specs=[pl.BlockSpec((1, tq, D), lambda b, q: (b, q, 0)),
                  pl.BlockSpec((1, N, D), lambda b, q: (b, 0, 0)),
                  pl.BlockSpec((1, 1, N), lambda b, q: (b, 0, 0))],
        out_specs=pl.BlockSpec((1, tq, N), lambda b, q: (b, q, 0)),
        compiler_params=pltpu.CompilerParams(
            dimension_semantics=("parallel", "parallel")),
    )(hq, h_bf, sqk)
    if nq_p != N:
        out = out[:, :N, :]
    return out


def _embed2_max_fused(center_bf, nbrs_bf, p):
    """Fused EmbeddingInput #2 (2D -> 2D) + max over k.

    center_bf: (R, D) bf16 per-point features; nbrs_bf: (K, R, D) bf16 gathered neighbors.
    Returns (R, 2D) float32."""
    K, R, D = nbrs_bf.shape
    C2 = 2 * D
    w1 = p["e2_w1"]                                # (2D, 2D): rows [:D] act on (nbr-c), [D:] on c
    s1 = p["e2_s1"]
    w1_top = (w1[:D] * s1[None, :]).astype(jnp.bfloat16)
    w1_diff = ((w1[D:] - w1[:D]) * s1[None, :]).astype(jnp.bfloat16)
    w2s = (p["e2_w2"] * p["e2_s2"][None, :]).astype(jnp.bfloat16)
    b1 = p["e2_b1"].reshape(1, C2)
    b2 = p["e2_b2"].reshape(1, C2)

    tr, rows_p = _row_tiling(R)
    if rows_p != R:
        center_bf = jnp.pad(center_bf, ((0, rows_p - R), (0, 0)))
        nbrs_bf = jnp.pad(nbrs_bf, ((0, 0), (0, rows_p - R), (0, 0)))

    out = pl.pallas_call(
        _e2_fused_kernel,
        out_shape=jax.ShapeDtypeStruct((rows_p, C2), jnp.float32),
        grid=(rows_p // tr,),
        in_specs=[
            pl.BlockSpec((tr, D), lambda i: (i, 0)),          # center tile (bf16)
            pl.BlockSpec((K, tr, D), lambda i: (0, i, 0)),    # all K neighbor slabs (bf16)
            pl.BlockSpec((D, C2), lambda i: (0, 0)),          # W1_top * s1 (bf16)
            pl.BlockSpec((D, C2), lambda i: (0, 0)),          # (W1_bot - W1_top) * s1 (bf16)
            pl.BlockSpec((1, C2), lambda i: (0, 0)),          # b1
            pl.BlockSpec((C2, C2), lambda i: (0, 0)),         # W2 * s2 (bf16)
            pl.BlockSpec((1, C2), lambda i: (0, 0)),          # b2
        ],
        out_specs=pl.BlockSpec((tr, C2), lambda i: (i, 0)),
        compiler_params=pltpu.CompilerParams(dimension_semantics=("parallel",)),
    )(center_bf, nbrs_bf, w1_top, w1_diff, b1, w2s, b2)
    if rows_p != R:
        out = out[:R]
    return out


def neighbor_embedding(x, p, *, knn_k):
    """NeighborEmbedding: EmbeddingInput -> kNN grouping -> EmbeddingInput -> max over k."""
    B, N, _ = x.shape
    D = p["e1_w2"].shape[1]

    # ---- embed1 (fused two LBRDs), h kept in bf16 for all downstream HBM streams.
    h = embed1(x, p)                                          # (B, N, D) bf16

    # ---- kNN grouping.
    # TODO(synk): kdneighGPU is not defined in the reference source; assume the standard
    # DGCNN-style grouping returning concat([x_j - x_i, x_i]) over the k nearest neighbors
    # (squared-distance top-k, self included).
    negdist = neg_pairwise_sq_dist(h)                         # (B, N, N)   Pallas
    _, idx = jax.lax.top_k(negdist, knn_k)                    # (B, N, K)   plain JAX
    idx_t = jnp.transpose(idx, (2, 0, 1))                     # (K, B, N)
    nbrs = jax.vmap(lambda it: jax.vmap(lambda hb, ib: hb[ib])(h, it))(idx_t)  # (K,B,N,D) bf16

    # ---- embed2 + max over k, fused (concat never materialized, all K per grid step).
    out = _embed2_max_fused(h.reshape(B * N, D), nbrs.reshape(knn_k, B * N, D), p)
    return out.reshape(B, N, 2 * D)


# ----------------------------------------------------------------------------- params
def _conv_w(key, cin, cout):
    # torch Conv2d 1x1 weight (cout, cin, 1, 1) stored transposed as (cin, cout)
    return jax.random.normal(key, (cin, cout), jnp.float32) / jnp.sqrt(jnp.float32(cin))


def _bn_affine(key, c, eps=1e-5):
    k1, k2 = jax.random.split(key)
    gamma = jax.random.uniform(k1, (c,), jnp.float32, 0.5, 1.5)
    beta = 0.1 * jax.random.normal(k2, (c,), jnp.float32)
    # eval-mode BN with running_mean = 0, running_var = 1
    return gamma / jnp.sqrt(1.0 + eps), beta


def init_params(key, dim_in=3, dim_embed=128):
    keys = iter(jax.random.split(key, 16))
    d2 = 2 * dim_embed

    def lbrd_params(cin, cout):
        w = _conv_w(next(keys), cin, cout)
        s, b = _bn_affine(next(keys), cout)
        return w, s, b

    p = {}
    p["e1_w1"], p["e1_s1"], p["e1_b1"] = lbrd_params(dim_in, dim_embed)
    p["e1_w2"], p["e1_s2"], p["e1_b2"] = lbrd_params(dim_embed, dim_embed)
    p["e2_w1"], p["e2_s1"], p["e2_b1"] = lbrd_params(d2, d2)
    p["e2_w2"], p["e2_s2"], p["e2_b2"] = lbrd_params(d2, d2)
    return p


# ----------------------------------------------------------------------------- main
if __name__ == "__main__":
    key = jax.random.PRNGKey(0)
    B, N = 2, 64
    dim_in, dim_embed = 3, 64
    knn_k = 16

    pkey, xkey = jax.random.split(key)
    params = init_params(pkey, dim_in, dim_embed)
    x = jax.random.normal(xkey, (B, N, dim_in), jnp.float32)   # point cloud (B, N, 3)

    fn = jax.jit(functools.partial(neighbor_embedding, knn_k=knn_k))
    out = fn(x, params)
    jax.block_until_ready(out)

    assert out.shape == (B, N, 2 * dim_embed), out.shape
    assert out.dtype == jnp.float32
    assert bool(jnp.all(jnp.isfinite(out)))
    print("KERNEL_OK")
</pallas_src>

<mosaic_0001>
module attributes {stable_mosaic.version = 11 : i64} {
  func.func @_e1_fused_kernel(%arg0: i32, %arg1: memref<64x8xf32, #tpu.memory_space<vmem>>, %arg2: memref<8x64xbf16, #tpu.memory_space<vmem>>, %arg3: memref<1x64xf32, #tpu.memory_space<vmem>>, %arg4: memref<64x64xbf16, #tpu.memory_space<vmem>>, %arg5: memref<1x64xf32, #tpu.memory_space<vmem>>, %arg6: memref<64x64xbf16, #tpu.memory_space<vmem>>) attributes {dimension_semantics = [#tpu.dimension_semantics<parallel>], iteration_bounds = array<i64: 2>, scalar_prefetch = 0 : i64, scratch_operands = 0 : i64, tpu.core_type = #tpu.core_type<tc>, window_params = [{transform_indices = @transform_0, window_bounds = array<i64: 64, 8>}, {pipeline_mode = #tpu.pipeline_mode<synchronous>, transform_indices = @transform_1, window_bounds = array<i64: 8, 64>}, {pipeline_mode = #tpu.pipeline_mode<synchronous>, transform_indices = @transform_2, window_bounds = array<i64: 1, 64>}, {pipeline_mode = #tpu.pipeline_mode<synchronous>, transform_indices = @transform_3, window_bounds = array<i64: 64, 64>}, {pipeline_mode = #tpu.pipeline_mode<synchronous>, transform_indices = @transform_4, window_bounds = array<i64: 1, 64>}, {transform_indices = @transform_5, window_bounds = array<i64: 64, 64>}]} {
    %c0 = arith.constant 0 : index
    %c0_0 = arith.constant 0 : index
    %0 = vector.load %arg1[%c0, %c0_0] : memref<64x8xf32, #tpu.memory_space<vmem>>, vector<64x8xf32>
    %1 = arith.truncf %0 : vector<64x8xf32> to vector<64x8xbf16>
    %c0_1 = arith.constant 0 : index
    %c0_2 = arith.constant 0 : index
    %2 = vector.load %arg2[%c0_1, %c0_2] : memref<8x64xbf16, #tpu.memory_space<vmem>>, vector<8x64xbf16>
    %cst = arith.constant dense<0.000000e+00> : vector<64x64xf32>
    %3 = tpu.matmul %1, %2, %cst {dimension_numbers = #tpu.dot_dimension_numbers<[1], [0], [0], [1], [0, 0, 1, 1], [], []>} : vector<64x8xbf16>, vector<8x64xbf16>, vector<64x64xf32> -> vector<64x64xf32>
    %c0_3 = arith.constant 0 : index
    %c0_4 = arith.constant 0 : index
    %4 = vector.load %arg3[%c0_3, %c0_4] : memref<1x64xf32, #tpu.memory_space<vmem>>, vector<1x64xf32>
    %5 = vector.broadcast %4 : vector<1x64xf32> to vector<64x64xf32>
    %6 = arith.addf %3, %5 : vector<64x64xf32>
    %cst_5 = arith.constant 0.00999999977 : f32
    %7 = vector.broadcast %cst_5 : f32 to vector<64x64xf32>
    %8 = arith.mulf %7, %6 : vector<64x64xf32>
    %9 = arith.maximumf %6, %8 : vector<64x64xf32>
    %10 = arith.truncf %9 : vector<64x64xf32> to vector<64x64xbf16>
    %c0_6 = arith.constant 0 : index
    %c0_7 = arith.constant 0 : index
    %11 = vector.load %arg4[%c0_6, %c0_7] : memref<64x64xbf16, #tpu.memory_space<vmem>>, vector<64x64xbf16>
    %cst_8 = arith.constant dense<0.000000e+00> : vector<64x64xf32>
    %12 = tpu.matmul %10, %11, %cst_8 {dimension_numbers = #tpu.dot_dimension_numbers<[1], [0], [0], [1], [0, 0, 1, 1], [], []>} : vector<64x64xbf16>, vector<64x64xbf16>, vector<64x64xf32> -> vector<64x64xf32>
    %c0_9 = arith.constant 0 : index
    %c0_10 = arith.constant 0 : index
    %13 = vector.load %arg5[%c0_9, %c0_10] : memref<1x64xf32, #tpu.memory_space<vmem>>, vector<1x64xf32>
    %14 = vector.broadcast %13 : vector<1x64xf32> to vector<64x64xf32>
    %15 = arith.addf %12, %14 : vector<64x64xf32>
    %cst_11 = arith.constant 0.00999999977 : f32
    %16 = vector.broadcast %cst_11 : f32 to vector<64x64xf32>
    %17 = arith.mulf %16, %15 : vector<64x64xf32>
    %18 = arith.maximumf %15, %17 : vector<64x64xf32>
    %19 = arith.truncf %18 : vector<64x64xf32> to vector<64x64xbf16>
    %c0_12 = arith.constant 0 : index
    %c0_13 = arith.constant 0 : index
    %20 = vector.load %arg6[%c0_12, %c0_13] : memref<64x64xbf16, #tpu.memory_space<vmem>>, vector<64x64xbf16>
    tpu.vector_store %arg6[%c0_12, %c0_13], %19 {strides = array<i32>} : memref<64x64xbf16, #tpu.memory_space<vmem>>, vector<64x64xbf16>,
    return
  }
  func.func @transform_0(%arg0: i32) -> (i32, i32) {
    %c0_i32 = arith.constant 0 : i32
    %c0_i32_0 = arith.constant 0 : i32
    return %arg0, %c0_i32 : i32, i32
  }
  func.func @transform_1(%arg0: i32) -> (i32, i32) {
    %c0_i32 = arith.constant 0 : i32
    %c0_i32_0 = arith.constant 0 : i32
    %c0_i32_1 = arith.constant 0 : i32
    return %c0_i32, %c0_i32_0 : i32, i32
  }
  func.func @transform_2(%arg0: i32) -> (i32, i32) {
    %c0_i32 = arith.constant 0 : i32
    %c0_i32_0 = arith.constant 0 : i32
    %c0_i32_1 = arith.constant 0 : i32
    return %c0_i32, %c0_i32_0 : i32, i32
  }
  func.func @transform_3(%arg0: i32) -> (i32, i32) {
    %c0_i32 = arith.constant 0 : i32
    %c0_i32_0 = arith.constant 0 : i32
    %c0_i32_1 = arith.constant 0 : i32
    return %c0_i32, %c0_i32_0 : i32, i32
  }
  func.func @transform_4(%arg0: i32) -> (i32, i32) {
    %c0_i32 = arith.constant 0 : i32
    %c0_i32_0 = arith.constant 0 : i32
    %c0_i32_1 = arith.constant 0 : i32
    return %c0_i32, %c0_i32_0 : i32, i32
  }
  func.func @transform_5(%arg0: i32) -> (i32, i32) {
    %c0_i32 = arith.constant 0 : i32
    %c0_i32_0 = arith.constant 0 : i32
    return %arg0, %c0_i32 : i32, i32
  }
}

module attributes {stable_mosaic.version = 11 : i64} {
  func.func @_pdist_kernel(%arg0: i32, %arg1: i32, %arg2: memref<1x64x64xbf16, #tpu.memory_space<vmem>>, %arg3: memref<1x64x64xbf16, #tpu.memory_space<vmem>>, %arg4: memref<1x1x64xf32, #tpu.memory_space<vmem>>, %arg5: memref<1x64x64xf32, #tpu.memory_space<vmem>>) attributes {dimension_semantics = [#tpu.dimension_semantics<parallel>, #tpu.dimension_semantics<parallel>], iteration_bounds = array<i64: 2, 1>, scalar_prefetch = 0 : i64, scratch_operands = 0 : i64, tpu.core_type = #tpu.core_type<tc>, window_params = [{transform_indices = @transform_0, window_bounds = array<i64: 1, 64, 64>}, {transform_indices = @transform_1, window_bounds = array<i64: 1, 64, 64>}, {transform_indices = @transform_2, window_bounds = array<i64: 1, 1, 64>}, {transform_indices = @transform_3, window_bounds = array<i64: 1, 64, 64>}]} {
    %c0 = arith.constant 0 : index
    %c0_0 = arith.constant 0 : index
    %c0_1 = arith.constant 0 : index
    %0 = vector.load %arg2[%c0, %c0_0, %c0_1] : memref<1x64x64xbf16, #tpu.memory_space<vmem>>, vector<1x64x64xbf16>
    %1 = vector.shape_cast %0 : vector<1x64x64xbf16> to vector<64x64xbf16>
    %c0_2 = arith.constant 0 : index
    %c0_3 = arith.constant 0 : index
    %c0_4 = arith.constant 0 : index
    %2 = vector.load %arg3[%c0_2, %c0_3, %c0_4] : memref<1x64x64xbf16, #tpu.memory_space<vmem>>, vector<1x64x64xbf16>
    %3 = vector.shape_cast %2 : vector<1x64x64xbf16> to vector<64x64xbf16>
    %cst = arith.constant dense<0.000000e+00> : vector<64x64xf32>
    %4 = tpu.matmul %1, %3, %cst {dimension_numbers = #tpu.dot_dimension_numbers<[1], [1], [0], [0], [0, 0, 1, 0], [], []>} : vector<64x64xbf16>, vector<64x64xbf16>, vector<64x64xf32> -> vector<64x64xf32>
    %5 = arith.extf %1 : vector<64x64xbf16> to vector<64x64xf32>
    %6 = arith.mulf %5, %5 : vector<64x64xf32>
    %cst_5 = arith.constant dense<0.000000e+00> : vector<64xf32>
    %7 = vector.multi_reduction <add>, %6, %cst_5 [1] : vector<64x64xf32> to vector<64xf32>
    %8 = vector.shape_cast %7 : vector<64xf32> to vector<64x1xf32>
    %cst_6 = arith.constant 2.000000e+00 : f32
    %9 = vector.broadcast %cst_6 : f32 to vector<64x64xf32>
    %10 = arith.mulf %9, %4 : vector<64x64xf32>
    %11 = vector.broadcast %8 : vector<64x1xf32> to vector<64x64xf32>
    %12 = arith.subf %10, %11 : vector<64x64xf32>
    %c0_7 = arith.constant 0 : index
    %c0_8 = arith.constant 0 : index
    %c0_9 = arith.constant 0 : index
    %13 = vector.load %arg4[%c0_7, %c0_8, %c0_9] : memref<1x1x64xf32, #tpu.memory_space<vmem>>, vector<1x1x64xf32>
    %14 = vector.shape_cast %13 : vector<1x1x64xf32> to vector<1x64xf32>
    %15 = vector.broadcast %14 : vector<1x64xf32> to vector<64x64xf32>
    %16 = arith.subf %12, %15 : vector<64x64xf32>
    %c0_10 = arith.constant 0 : index
    %c0_11 = arith.constant 0 : index
    %c0_12 = arith.constant 0 : index
    %17 = vector.load %arg5[%c0_10, %c0_11, %c0_12] : memref<1x64x64xf32, #tpu.memory_space<vmem>>, vector<1x64x64xf32>
    %18 = vector.shape_cast %17 : vector<1x64x64xf32> to vector<64x64xf32>
    %19 = vector.shape_cast %16 : vector<64x64xf32> to vector<1x64x64xf32>
    tpu.vector_store %arg5[%c0_10, %c0_11, %c0_12], %19 {strides = array<i32>} : memref<1x64x64xf32, #tpu.memory_space<vmem>>, vector<1x64x64xf32>,
    return
  }
  func.func @transform_0(%arg0: i32, %arg1: i32) -> (i32, i32, i32) {
    %c0_i32 = arith.constant 0 : i32
    %c0_i32_0 = arith.constant 0 : i32
    return %arg0, %arg1, %c0_i32 : i32, i32, i32
  }
  func.func @transform_1(%arg0: i32, %arg1: i32) -> (i32, i32, i32) {
    %c0_i32 = arith.constant 0 : i32
    %c0_i32_0 = arith.constant 0 : i32
    %c0_i32_1 = arith.constant 0 : i32
    return %arg0, %c0_i32, %c0_i32_0 : i32, i32, i32
  }
  func.func @transform_2(%arg0: i32, %arg1: i32) -> (i32, i32, i32) {
    %c0_i32 = arith.constant 0 : i32
    %c0_i32_0 = arith.constant 0 : i32
    %c0_i32_1 = arith.constant 0 : i32
    return %arg0, %c0_i32, %c0_i32_0 : i32, i32, i32
  }
  func.func @transform_3(%arg0: i32, %arg1: i32) -> (i32, i32, i32) {
    %c0_i32 = arith.constant 0 : i32
    %c0_i32_0 = arith.constant 0 : i32
    return %arg0, %arg1, %c0_i32 : i32, i32, i32
  }
}

module attributes {stable_mosaic.version = 11 : i64} {
  func.func @_e2_fused_kernel(%arg0: i32, %arg1: memref<64x64xbf16, #tpu.memory_space<vmem>>, %arg2: memref<16x64x64xbf16, #tpu.memory_space<vmem>>, %arg3: memref<64x128xbf16, #tpu.memory_space<vmem>>, %arg4: memref<64x128xbf16, #tpu.memory_space<vmem>>, %arg5: memref<1x128xf32, #tpu.memory_space<vmem>>, %arg6: memref<128x128xbf16, #tpu.memory_space<vmem>>, %arg7: memref<1x128xf32, #tpu.memory_space<vmem>>, %arg8: memref<64x128xf32, #tpu.memory_space<vmem>>) attributes {dimension_semantics = [#tpu.dimension_semantics<parallel>], iteration_bounds = array<i64: 2>, scalar_prefetch = 0 : i64, scratch_operands = 0 : i64, tpu.core_type = #tpu.core_type<tc>, window_params = [{transform_indices = @transform_0, window_bounds = array<i64: 64, 64>}, {transform_indices = @transform_1, window_bounds = array<i64: 16, 64, 64>}, {pipeline_mode = #tpu.pipeline_mode<synchronous>, transform_indices = @transform_2, window_bounds = array<i64: 64, 128>}, {pipeline_mode = #tpu.pipeline_mode<synchronous>, transform_indices = @transform_3, window_bounds = array<i64: 64, 128>}, {pipeline_mode = #tpu.pipeline_mode<synchronous>, transform_indices = @transform_4, window_bounds = array<i64: 1, 128>}, {pipeline_mode = #tpu.pipeline_mode<synchronous>, transform_indices = @transform_5, window_bounds = array<i64: 128, 128>}, {pipeline_mode = #tpu.pipeline_mode<synchronous>, transform_indices = @transform_6, window_bounds = array<i64: 1, 128>}, {transform_indices = @transform_7, window_bounds = array<i64: 64, 128>}]} {
    %c0 = arith.constant 0 : index
    %c0_0 = arith.constant 0 : index
    %0 = vector.load %arg3[%c0, %c0_0] : memref<64x128xbf16, #tpu.memory_space<vmem>>, vector<64x128xbf16>
    %c0_1 = arith.constant 0 : index
    %c0_2 = arith.constant 0 : index
    %1 = vector.load %arg6[%c0_1, %c0_2] : memref<128x128xbf16, #tpu.memory_space<vmem>>, vector<128x128xbf16>
    %c0_3 = arith.constant 0 : index
    %c0_4 = arith.constant 0 : index
    %2 = vector.load %arg7[%c0_3, %c0_4] : memref<1x128xf32, #tpu.memory_space<vmem>>, vector<1x128xf32>
    %c0_5 = arith.constant 0 : index
    %c0_6 = arith.constant 0 : index
    %3 = vector.load %arg1[%c0_5, %c0_6] : memref<64x64xbf16, #tpu.memory_space<vmem>>, vector<64x64xbf16>
    %c0_7 = arith.constant 0 : index
    %c0_8 = arith.constant 0 : index
    %4 = vector.load %arg4[%c0_7, %c0_8] : memref<64x128xbf16, #tpu.memory_space<vmem>>, vector<64x128xbf16>
    %cst = arith.constant dense<0.000000e+00> : vector<64x128xf32>
    %5 = tpu.matmul %3, %4, %cst {dimension_numbers = #tpu.dot_dimension_numbers<[1], [0], [0], [1], [0, 0, 1, 1], [], []>} : vector<64x64xbf16>, vector<64x128xbf16>, vector<64x128xf32> -> vector<64x128xf32>
    %c0_9 = arith.constant 0 : index
    %c0_10 = arith.constant 0 : index
    %6 = vector.load %arg5[%c0_9, %c0_10] : memref<1x128xf32, #tpu.memory_space<vmem>>, vector<1x128xf32>
    %7 = vector.broadcast %6 : vector<1x128xf32> to vector<64x128xf32>
    %8 = arith.addf %5, %7 : vector<64x128xf32>
    %c0_11 = arith.constant 0 : index
    %c0_12 = arith.constant 0 : index
    %c0_13 = arith.constant 0 : index
    %9 = vector.load %arg2[%c0_11, %c0_12, %c0_13] : memref<16x64x64xbf16, #tpu.memory_space<vmem>>, vector<1x64x64xbf16>
    %10 = vector.shape_cast %9 : vector<1x64x64xbf16> to vector<64x64xbf16>
    %cst_14 = arith.constant dense<0.000000e+00> : vector<64x128xf32>
    %11 = tpu.matmul %10, %0, %cst_14 {dimension_numbers = #tpu.dot_dimension_numbers<[1], [0], [0], [1], [0, 0, 1, 1], [], []>} : vector<64x64xbf16>, vector<64x128xbf16>, vector<64x128xf32> -> vector<64x128xf32>
    %12 = arith.addf %11, %8 : vector<64x128xf32>
    %cst_15 = arith.constant 0.00999999977 : f32
    %13 = vector.broadcast %cst_15 : f32 to vector<64x128xf32>
    %14 = arith.mulf %13, %12 : vector<64x128xf32>
    %15 = arith.maximumf %12, %14 : vector<64x128xf32>
    %16 = arith.truncf %15 : vector<64x128xf32> to vector<64x128xbf16>
    %cst_16 = arith.constant dense<0.000000e+00> : vector<64x128xf32>
    %17 = tpu.matmul %16, %1, %cst_16 {dimension_numbers = #tpu.dot_dimension_numbers<[1], [0], [0], [1], [0, 0, 1, 1], [], []>} : vector<64x128xbf16>, vector<128x128xbf16>, vector<64x128xf32> -> vector<64x128xf32>
    %18 = vector.broadcast %2 : vector<1x128xf32> to vector<64x128xf32>
    %19 = arith.addf %17, %18 : vector<64x128xf32>
    %cst_17 = arith.constant 0.00999999977 : f32
    %20 = vector.broadcast %cst_17 : f32 to vector<64x128xf32>
    %21 = arith.mulf %20, %19 : vector<64x128xf32>
    %22 = arith.maximumf %19, %21 : vector<64x128xf32>
    %c1_i32 = arith.constant 1 : i32
    %23 = arith.index_cast %c1_i32 : i32 to index
    %c0_18 = arith.constant 0 : index
    %c0_19 = arith.constant 0 : index
    %24 = vector.load %arg2[%23, %c0_18, %c0_19] : memref<16x64x64xbf16, #tpu.memory_space<vmem>>, vector<1x64x64xbf16>
    %25 = vector.shape_cast %24 : vector<1x64x64xbf16> to vector<64x64xbf16>
    %cst_20 = arith.constant dense<0.000000e+00> : vector<64x128xf32>
    %26 = tpu.matmul %25, %0, %cst_20 {dimension_numbers = #tpu.dot_dimension_numbers<[1], [0], [0], [1], [0, 0, 1, 1], [], []>} : vector<64x64xbf16>, vector<64x128xbf16>, vector<64x128xf32> -> vector<64x128xf32>
    %27 = arith.addf %26, %8 : vector<64x128xf32>
    %cst_21 = arith.constant 0.00999999977 : f32
    %28 = vector.broadcast %cst_21 : f32 to vector<64x128xf32>
    %29 = arith.mulf %28, %27 : vector<64x128xf32>
    %30 = arith.maximumf %27, %29 : vector<64x128xf32>
    %31 = arith.truncf %30 : vector<64x128xf32> to vector<64x128xbf16>
    %cst_22 = arith.constant dense<0.000000e+00> : vector<64x128xf32>
    %32 = tpu.matmul %31, %1, %cst_22 {dimension_numbers = #tpu.dot_dimension_numbers<[1], [0], [0], [1], [0, 0, 1, 1], [], []>} : vector<64x128xbf16>, vector<128x128xbf16>, vector<64x128xf32> -> vector<64x128xf32>
    %33 = vector.broadcast %2 : vector<1x128xf32> to vector<64x128xf32>
    %34 = arith.addf %32, %33 : vector<64x128xf32>
    %cst_23 = arith.constant 0.00999999977 : f32
    %35 = vector.broadcast %cst_23 : f32 to vector<64x128xf32>
    %36 = arith.mulf %35, %34 : vector<64x128xf32>
    %37 = arith.maximumf %34, %36 : vector<64x128xf32>
    %38 = arith.maximumf %22, %37 : vector<64x128xf32>
    %c2_i32 = arith.constant 2 : i32
    %39 = arith.index_cast %c2_i32 : i32 to index
    %c0_24 = arith.constant 0 : index
    %c0_25 = arith.constant 0 : index
    %40 = vector.load %arg2[%39, %c0_24, %c0_25] : memref<16x64x64xbf16, #tpu.memory_space<vmem>>, vector<1x64x64xbf16>
    %41 = vector.shape_cast %40 : vector<1x64x64xbf16> to vector<64x64xbf16>
    %cst_26 = arith.constant dense<0.000000e+00> : vector<64x128xf32>
    %42 = tpu.matmul %41, %0, %cst_26 {dimension_numbers = #tpu.dot_dimension_numbers<[1], [0], [0], [1], [0, 0, 1, 1], [], []>} : vector<64x64xbf16>, vector<64x128xbf16>, vector<64x128xf32> -> vector<64x128xf32>
    %43 = arith.addf %42, %8 : vector<64x128xf32>
    %cst_27 = arith.constant 0.00999999977 : f32
    %44 = vector.broadcast %cst_27 : f32 to vector<64x128xf32>
    %45 = arith.mulf %44, %43 : vector<64x128xf32>
    %46 = arith.maximumf %43, %45 : vector<64x128xf32>
    %47 = arith.truncf %46 : vector<64x128xf32> to vector<64x128xbf16>
    %cst_28 = arith.constant dense<0.000000e+00> : vector<64x128xf32>
    %48 = tpu.matmul %47, %1, %cst_28 {dimension_numbers = #tpu.dot_dimension_numbers<[1], [0], [0], [1], [0, 0, 1, 1], [], []>} : vector<64x128xbf16>, vector<128x128xbf16>, vector<64x128xf32> -> vector<64x128xf32>
    %49 = vector.broadcast %2 : vector<1x128xf32> to vector<64x128xf32>
    %50 = arith.addf %48, %49 : vector<64x128xf32>
    %cst_29 = arith.constant 0.00999999977 : f32
    %51 = vector.broadcast %cst_29 : f32 to vector<64x128xf32>
    %52 = arith.mulf %51, %50 : vector<64x128xf32>
    %53 = arith.maximumf %50, %52 : vector<64x128xf32>
    %54 = arith.maximumf %38, %53 : vector<64x128xf32>
    %c3_i32 = arith.constant 3 : i32
    %55 = arith.index_cast %c3_i32 : i32 to index
    %c0_30 = arith.constant 0 : index
    %c0_31 = arith.constant 0 : index
    %56 = vector.load %arg2[%55, %c0_30, %c0_31] : memref<16x64x64xbf16, #tpu.memory_space<vmem>>, vector<1x64x64xbf16>
    %57 = vector.shape_cast %56 : vector<1x64x64xbf16> to vector<64x64xbf16>
    %cst_32 = arith.constant dense<0.000000e+00> : vector<64x128xf32>
    %58 = tpu.matmul %57, %0, %cst_32 {dimension_numbers = #tpu.dot_dimension_numbers<[1], [0], [0], [1], [0, 0, 1, 1], [], []>} : vector<64x64xbf16>, vector<64x128xbf16>, vector<64x128xf32> -> vector<64x128xf32>
    %59 = arith.addf %58, %8 : vector<64x128xf32>
    %cst_33 = arith.constant 0.00999999977 : f32
    %60 = vector.broadcast %cst_33 : f32 to vector<64x128xf32>
    %61 = arith.mulf %60, %59 : vector<64x128xf32>
    %62 = arith.maximumf %59, %61 : vector<64x128xf32>
    %63 = arith.truncf %62 : vector<64x128xf32> to vector<64x128xbf16>
    %cst_34 = arith.constant dense<0.000000e+00> : vector<64x128xf32>
    %64 = tpu.matmul %63, %1, %cst_34 {dimension_numbers = #tpu.dot_dimension_numbers<[1], [0], [0], [1], [0, 0, 1, 1], [], []>} : vector<64x128xbf16>, vector<128x128xbf16>, vector<64x128xf32> -> vector<64x128xf32>
    %65 = vector.broadcast %2 : vector<1x128xf32> to vector<64x128xf32>
    %66 = arith.addf %64, %65 : vector<64x128xf32>
    %cst_35 = arith.constant 0.00999999977 : f32
    %67 = vector.broadcast %cst_35 : f32 to vector<64x128xf32>
    %68 = arith.mulf %67, %66 : vector<64x128xf32>
    %69 = arith.maximumf %66, %68 : vector<64x128xf32>
    %70 = arith.maximumf %54, %69 : vector<64x128xf32>
    %c4_i32 = arith.constant 4 : i32
    %71 = arith.index_cast %c4_i32 : i32 to index
    %c0_36 = arith.constant 0 : index
    %c0_37 = arith.constant 0 : index
    %72 = vector.load %arg2[%71, %c0_36, %c0_37] : memref<16x64x64xbf16, #tpu.memory_space<vmem>>, vector<1x64x64xbf16>
    %73 = vector.shape_cast %72 : vector<1x64x64xbf16> to vector<64x64xbf16>
    %cst_38 = arith.constant dense<0.000000e+00> : vector<64x128xf32>
    %74 = tpu.matmul %73, %0, %cst_38 {dimension_numbers = #tpu.dot_dimension_numbers<[1], [0], [0], [1], [0, 0, 1, 1], [], []>} : vector<64x64xbf16>, vector<64x128xbf16>, vector<64x128xf32> -> vector<64x128xf32>
    %75 = arith.addf %74, %8 : vector<64x128xf32>
    %cst_39 = arith.constant 0.00999999977 : f32
    %76 = vector.broadcast %cst_39 : f32 to vector<64x128xf32>
    %77 = arith.mulf %76, %75 : vector<64x128xf32>
    %78 = arith.maximumf %75, %77 : vector<64x128xf32>
    %79 = arith.truncf %78 : vector<64x128xf32> to vector<64x128xbf16>
    %cst_40 = arith.constant dense<0.000000e+00> : vector<64x128xf32>
    %80 = tpu.matmul %79, %1, %cst_40 {dimension_numbers = #tpu.dot_dimension_numbers<[1], [0], [0], [1], [0, 0, 1, 1], [], []>} : vector<64x128xbf16>, vector<128x128xbf16>, vector<64x128xf32> -> vector<64x128xf32>
    %81 = vector.broadcast %2 : vector<1x128xf32> to vector<64x128xf32>
    %82 = arith.addf %80, %81 : vector<64x128xf32>
    %cst_41 = arith.constant 0.00999999977 : f32
    %83 = vector.broadcast %cst_41 : f32 to vector<64x128xf32>
    %84 = arith.mulf %83, %82 : vector<64x128xf32>
    %85 = arith.maximumf %82, %84 : vector<64x128xf32>
    %86 = arith.maximumf %70, %85 : vector<64x128xf32>
    %c5_i32 = arith.constant 5 : i32
    %87 = arith.index_cast %c5_i32 : i32 to index
    %c0_42 = arith.constant 0 : index
    %c0_43 = arith.constant 0 : index
    %88 = vector.load %arg2[%87, %c0_42, %c0_43] : memref<16x64x64xbf16, #tpu.memory_space<vmem>>, vector<1x64x64xbf16>
    %89 = vector.shape_cast %88 : vector<1x64x64xbf16> to vector<64x64xbf16>
    %cst_44 = arith.constant dense<0.000000e+00> : vector<64x128xf32>
    %90 = tpu.matmul %89, %0, %cst_44 {dimension_numbers = #tpu.dot_dimension_numbers<[1], [0], [0], [1], [0, 0, 1, 1], [], []>} : vector<64x64xbf16>, vector<64x128xbf16>, vector<64x128xf32> -> vector<64x128xf32>
    %91 = arith.addf %90, %8 : vector<64x128xf32>
    %cst_45 = arith.constant 0.00999999977 : f32
    %92 = vector.broadcast %cst_45 : f32 to vector<64x128xf32>
    %93 = arith.mulf %92, %91 : vector<64x128xf32>
    %94 = arith.maximumf %91, %93 : vector<64x128xf32>
    %95 = arith.truncf %94 : vector<64x128xf32> to vector<64x128xbf16>
    %cst_46 = arith.constant dense<0.000000e+00> : vector<64x128xf32>
    %96 = tpu.matmul %95, %1, %cst_46 {dimension_numbers = #tpu.dot_dimension_numbers<[1], [0], [0], [1], [0, 0, 1, 1], [], []>} : vector<64x128xbf16>, vector<128x128xbf16>, vector<64x128xf32> -> vector<64x128xf32>
    %97 = vector.broadcast %2 : vector<1x128xf32> to vector<64x128xf32>
    %98 = arith.addf %96, %97 : vector<64x128xf32>
    %cst_47 = arith.constant 0.00999999977 : f32
    %99 = vector.broadcast %cst_47 : f32 to vector<64x128xf32>
    %100 = arith.mulf %99, %98 : vector<64x128xf32>
    %101 = arith.maximumf %98, %100 : vector<64x128xf32>
    %102 = arith.maximumf %86, %101 : vector<64x128xf32>
    %c6_i32 = arith.constant 6 : i32
    %103 = arith.index_cast %c6_i32 : i32 to index
    %c0_48 = arith.constant 0 : index
    %c0_49 = arith.constant 0 : index
    %104 = vector.load %arg2[%103, %c0_48, %c0_49] : memref<16x64x64xbf16, #tpu.memory_space<vmem>>, vector<1x64x64xbf16>
    %105 = vector.shape_cast %104 : vector<1x64x64xbf16> to vector<64x64xbf16>
    %cst_50 = arith.constant dense<0.000000e+00> : vector<64x128xf32>
    %106 = tpu.matmul %105, %0, %cst_50 {dimension_numbers = #tpu.dot_dimension_numbers<[1], [0], [0], [1], [0, 0, 1, 1], [], []>} : vector<64x64xbf16>, vector<64x128xbf16>, vector<64x128xf32> -> vector<64x128xf32>
    %107 = arith.addf %106, %8 : vector<64x128xf32>
    %cst_51 = arith.constant 0.00999999977 : f32
    %108 = vector.broadcast %cst_51 : f32 to vector<64x128xf32>
    %109 = arith.mulf %108, %107 : vector<64x128xf32>
    %110 = arith.maximumf %107, %109 : vector<64x128xf32>
    %111 = arith.truncf %110 : vector<64x128xf32> to vector<64x128xbf16>
    %cst_52 = arith.constant dense<0.000000e+00> : vector<64x128xf32>
    %112 = tpu.matmul %111, %1, %cst_52 {dimension_numbers = #tpu.dot_dimension_numbers<[1], [0], [0], [1], [0, 0, 1, 1], [], []>} : vector<64x128xbf16>, vector<128x128xbf16>, vector<64x128xf32> -> vector<64x128xf32>
    %113 = vector.broadcast %2 : vector<1x128xf32> to vector<64x128xf32>
    %114 = arith.addf %112, %113 : vector<64x128xf32>
    %cst_53 = arith.constant 0.00999999977 : f32
    %115 = vector.broadcast %cst_53 : f32 to vector<64x128xf32>
    %116 = arith.mulf %115, %114 : vector<64x128xf32>
    %117 = arith.maximumf %114, %116 : vector<64x128xf32>
    %118 = arith.maximumf %102, %117 : vector<64x128xf32>
    %c7_i32 = arith.constant 7 : i32
    %119 = arith.index_cast %c7_i32 : i32 to index
    %c0_54 = arith.constant 0 : index
    %c0_55 = arith.constant 0 : index
    %120 = vector.load %arg2[%119, %c0_54, %c0_55] : memref<16x64x64xbf16, #tpu.memory_space<vmem>>, vector<1x64x64xbf16>
    %121 = vector.shape_cast %120 : vector<1x64x64xbf16> to vector<64x64xbf16>
    %cst_56 = arith.constant dense<0.000000e+00> : vector<64x128xf32>
    %122 = tpu.matmul %121, %0, %cst_56 {dimension_numbers = #tpu.dot_dimension_numbers<[1], [0], [0], [1], [0, 0, 1, 1], [], []>} : vector<64x64xbf16>, vector<64x128xbf16>, vector<64x128xf32> -> vector<64x128xf32>
    %123 = arith.addf %122, %8 : vector<64x128xf32>
    %cst_57 = arith.constant 0.00999999977 : f32
    %124 = vector.broadcast %cst_57 : f32 to vector<64x128xf32>
    %125 = arith.mulf %124, %123 : vector<64x128xf32>
    %126 = arith.maximumf %123, %125 : vector<64x128xf32>
    %127 = arith.truncf %126 : vector<64x128xf32> to vector<64x128xbf16>
    %cst_58 = arith.constant dense<0.000000e+00> : vector<64x128xf32>
    %128 = tpu.matmul %127, %1, %cst_58 {dimension_numbers = #tpu.dot_dimension_numbers<[1], [0], [0], [1], [0, 0, 1, 1], [], []>} : vector<64x128xbf16>, vector<128x128xbf16>, vector<64x128xf32> -> vector<64x128xf32>
    %129 = vector.broadcast %2 : vector<1x128xf32> to vector<64x128xf32>
    %130 = arith.addf %128, %129 : vector<64x128xf32>
    %cst_59 = arith.constant 0.00999999977 : f32
    %131 = vector.broadcast %cst_59 : f32 to vector<64x128xf32>
    %132 = arith.mulf %131, %130 : vector<64x128xf32>
    %133 = arith.maximumf %130, %132 : vector<64x128xf32>
    %134 = arith.maximumf %118, %133 : vector<64x128xf32>
    %c8_i32 = arith.constant 8 : i32
    %135 = arith.index_cast %c8_i32 : i32 to index
    %c0_60 = arith.constant 0 : index
    %c0_61 = arith.constant 0 : index
    %136 = vector.load %arg2[%135, %c0_60, %c0_61] : memref<16x64x64xbf16, #tpu.memory_space<vmem>>, vector<1x64x64xbf16>
    %137 = vector.shape_cast %136 : vector<1x64x64xbf16> to vector<64x64xbf16>
    %cst_62 = arith.constant dense<0.000000e+00> : vector<64x128xf32>
    %138 = tpu.matmul %137, %0, %cst_62 {dimension_numbers = #tpu.dot_dimension_numbers<[1], [0], [0], [1], [0, 0, 1, 1], [], []>} : vector<64x64xbf16>, vector<64x128xbf16>, vector<64x128xf32> -> vector<64x128xf32>
    %139 = arith.addf %138, %8 : vector<64x128xf32>
    %cst_63 = arith.constant 0.00999999977 : f32
    %140 = vector.broadcast %cst_63 : f32 to vector<64x128xf32>
    %141 = arith.mulf %140, %139 : vector<64x128xf32>
    %142 = arith.maximumf %139, %141 : vector<64x128xf32>
    %143 = arith.truncf %142 : vector<64x128xf32> to vector<64x128xbf16>
    %cst_64 = arith.constant dense<0.000000e+00> : vector<64x128xf32>
    %144 = tpu.matmul %143, %1, %cst_64 {dimension_numbers = #tpu.dot_dimension_numbers<[1], [0], [0], [1], [0, 0, 1, 1], [], []>} : vector<64x128xbf16>, vector<128x128xbf16>, vector<64x128xf32> -> vector<64x128xf32>
    %145 = vector.broadcast %2 : vector<1x128xf32> to vector<64x128xf32>
    %146 = arith.addf %144, %145 : vector<64x128xf32>
    %cst_65 = arith.constant 0.00999999977 : f32
    %147 = vector.broadcast %cst_65 : f32 to vector<64x128xf32>
    %148 = arith.mulf %147, %146 : vector<64x128xf32>
    %149 = arith.maximumf %146, %148 : vector<64x128xf32>
    %150 = arith.maximumf %134, %149 : vector<64x128xf32>
    %c9_i32 = arith.constant 9 : i32
    %151 = arith.index_cast %c9_i32 : i32 to index
    %c0_66 = arith.constant 0 : index
    %c0_67 = arith.constant 0 : index
    %152 = vector.load %arg2[%151, %c0_66, %c0_67] : memref<16x64x64xbf16, #tpu.memory_space<vmem>>, vector<1x64x64xbf16>
    %153 = vector.shape_cast %152 : vector<1x64x64xbf16> to vector<64x64xbf16>
    %cst_68 = arith.constant dense<0.000000e+00> : vector<64x128xf32>
    %154 = tpu.matmul %153, %0, %cst_68 {dimension_numbers = #tpu.dot_dimension_numbers<[1], [0], [0], [1], [0, 0, 1, 1], [], []>} : vector<64x64xbf16>, vector<64x128xbf16>, vector<64x128xf32> -> vector<64x128xf32>
    %155 = arith.addf %154, %8 : vector<64x128xf32>
    %cst_69 = arith.constant 0.00999999977 : f32
    %156 = vector.broadcast %cst_69 : f32 to vector<64x128xf32>
    %157 = arith.mulf %156, %155 : vector<64x128xf32>
    %158 = arith.maximumf %155, %157 : vector<64x128xf32>
    %159 = arith.truncf %158 : vector<64x128xf32> to vector<64x128xbf16>
    %cst_70 = arith.constant dense<0.000000e+00> : vector<64x128xf32>
    %160 = tpu.matmul %159, %1, %cst_70 {dimension_numbers = #tpu.dot_dimension_numbers<[1], [0], [0], [1], [0, 0, 1, 1], [], []>} : vector<64x128xbf16>, vector<128x128xbf16>, vector<64x128xf32> -> vector<64x128xf32>
    %161 = vector.broadcast %2 : vector<1x128xf32> to vector<64x128xf32>
    %162 = arith.addf %160, %161 : vector<64x128xf32>
    %cst_71 = arith.constant 0.00999999977 : f32
    %163 = vector.broadcast %cst_71 : f32 to vector<64x128xf32>
    %164 = arith.mulf %163, %162 : vector<64x128xf32>
    %165 = arith.maximumf %162, %164 : vector<64x128xf32>
    %166 = arith.maximumf %150, %165 : vector<64x128xf32>
    %c10_i32 = arith.constant 10 : i32
    %167 = arith.index_cast %c10_i32 : i32 to index
    %c0_72 = arith.constant 0 : index
    %c0_73 = arith.constant 0 : index
    %168 = vector.load %arg2[%167, %c0_72, %c0_73] : memref<16x64x64xbf16, #tpu.memory_space<vmem>>, vector<1x64x64xbf16>
    %169 = vector.shape_cast %168 : vector<1x64x64xbf16> to vector<64x64xbf16>
    %cst_74 = arith.constant dense<0.000000e+00> : vector<64x128xf32>
    %170 = tpu.matmul %169, %0, %cst_74 {dimension_numbers = #tpu.dot_dimension_numbers<[1], [0], [0], [1], [0, 0, 1, 1], [], []>} : vector<64x64xbf16>, vector<64x128xbf16>, vector<64x128xf32> -> vector<64x128xf32>
    %171 = arith.addf %170, %8 : vector<64x128xf32>
    %cst_75 = arith.constant 0.00999999977 : f32
    %172 = vector.broadcast %cst_75 : f32 to vector<64x128xf32>
    %173 = arith.mulf %172, %171 : vector<64x128xf32>
    %174 = arith.maximumf %171, %173 : vector<64x128xf32>
    %175 = arith.truncf %174 : vector<64x128xf32> to vector<64x128xbf16>
    %cst_76 = arith.constant dense<0.000000e+00> : vector<64x128xf32>
    %176 = tpu.matmul %175, %1, %cst_76 {dimension_numbers = #tpu.dot_dimension_numbers<[1], [0], [0], [1], [0, 0, 1, 1], [], []>} : vector<64x128xbf16>, vector<128x128xbf16>, vector<64x128xf32> -> vector<64x128xf32>
    %177 = vector.broadcast %2 : vector<1x128xf32> to vector<64x128xf32>
    %178 = arith.addf %176, %177 : vector<64x128xf32>
    %cst_77 = arith.constant 0.00999999977 : f32
    %179 = vector.broadcast %cst_77 : f32 to vector<64x128xf32>
    %180 = arith.mulf %179, %178 : vector<64x128xf32>
    %181 = arith.maximumf %178, %180 : vector<64x128xf32>
    %182 = arith.maximumf %166, %181 : vector<64x128xf32>
    %c11_i32 = arith.constant 11 : i32
    %183 = arith.index_cast %c11_i32 : i32 to index
    %c0_78 = arith.constant 0 : index
    %c0_79 = arith.constant 0 : index
    %184 = vector.load %arg2[%183, %c0_78, %c0_79] : memref<16x64x64xbf16, #tpu.memory_space<vmem>>, vector<1x64x64xbf16>
    %185 = vector.shape_cast %184 : vector<1x64x64xbf16> to vector<64x64xbf16>
    %cst_80 = arith.constant dense<0.000000e+00> : vector<64x128xf32>
    %186 = tpu.matmul %185, %0, %cst_80 {dimension_numbers = #tpu.dot_dimension_numbers<[1], [0], [0], [1], [0, 0, 1, 1], [], []>} : vector<64x64xbf16>, vector<64x128xbf16>, vector<64x128xf32> -> vector<64x128xf32>
    %187 = arith.addf %186, %8 : vector<64x128xf32>
    %cst_81 = arith.constant 0.00999999977 : f32
    %188 = vector.broadcast %cst_81 : f32 to vector<64x128xf32>
    %189 = arith.mulf %188, %187 : vector<64x128xf32>
    %190 = arith.maximumf %187, %189 : vector<64x128xf32>
    %191 = arith.truncf %190 : vector<64x128xf32> to vector<64x128xbf16>
    %cst_82 = arith.constant dense<0.000000e+00> : vector<64x128xf32>
    %192 = tpu.matmul %191, %1, %cst_82 {dimension_numbers = #tpu.dot_dimension_numbers<[1], [0], [0], [1], [0, 0, 1, 1], [], []>} : vector<64x128xbf16>, vector<128x128xbf16>, vector<64x128xf32> -> vector<64x128xf32>
    %193 = vector.broadcast %2 : vector<1x128xf32> to vector<64x128xf32>
    %194 = arith.addf %192, %193 : vector<64x128xf32>
    %cst_83 = arith.constant 0.00999999977 : f32
    %195 = vector.broadcast %cst_83 : f32 to vector<64x128xf32>
    %196 = arith.mulf %195, %194 : vector<64x128xf32>
    %197 = arith.maximumf %194, %196 : vector<64x128xf32>
    %198 = arith.maximumf %182, %197 : vector<64x128xf32>
    %c12_i32 = arith.constant 12 : i32
    %199 = arith.index_cast %c12_i32 : i32 to index
    %c0_84 = arith.constant 0 : index
    %c0_85 = arith.constant 0 : index
    %200 = vector.load %arg2[%199, %c0_84, %c0_85] : memref<16x64x64xbf16, #tpu.memory_space<vmem>>, vector<1x64x64xbf16>
    %201 = vector.shape_cast %200 : vector<1x64x64xbf16> to vector<64x64xbf16>
    %cst_86 = arith.constant dense<0.000000e+00> : vector<64x128xf32>
    %202 = tpu.matmul %201, %0, %cst_86 {dimension_numbers = #tpu.dot_dimension_numbers<[1], [0], [0], [1], [0, 0, 1, 1], [], []>} : vector<64x64xbf16>, vector<64x128xbf16>, vector<64x128xf32> -> vector<64x128xf32>
    %203 = arith.addf %202, %8 : vector<64x128xf32>
    %cst_87 = arith.constant 0.00999999977 : f32
    %204 = vector.broadcast %cst_87 : f32 to vector<64x128xf32>
    %205 = arith.mulf %204, %203 : vector<64x128xf32>
    %206 = arith.maximumf %203, %205 : vector<64x128xf32>
    %207 = arith.truncf %206 : vector<64x128xf32> to vector<64x128xbf16>
    %cst_88 = arith.constant dense<0.000000e+00> : vector<64x128xf32>
    %208 = tpu.matmul %207, %1, %cst_88 {dimension_numbers = #tpu.dot_dimension_numbers<[1], [0], [0], [1], [0, 0, 1, 1], [], []>} : vector<64x128xbf16>, vector<128x128xbf16>, vector<64x128xf32> -> vector<64x128xf32>
    %209 = vector.broadcast %2 : vector<1x128xf32> to vector<64x128xf32>
    %210 = arith.addf %208, %209 : vector<64x128xf32>
    %cst_89 = arith.constant 0.00999999977 : f32
    %211 = vector.broadcast %cst_89 : f32 to vector<64x128xf32>
    %212 = arith.mulf %211, %210 : vector<64x128xf32>
    %213 = arith.maximumf %210, %212 : vector<64x128xf32>
    %214 = arith.maximumf %198, %213 : vector<64x128xf32>
    %c13_i32 = arith.constant 13 : i32
    %215 = arith.index_cast %c13_i32 : i32 to index
    %c0_90 = arith.constant 0 : index
    %c0_91 = arith.constant 0 : index
    %216 = vector.load %arg2[%215, %c0_90, %c0_91] : memref<16x64x64xbf16, #tpu.memory_space<vmem>>, vector<1x64x64xbf16>
    %217 = vector.shape_cast %216 : vector<1x64x64xbf16> to vector<64x64xbf16>
    %cst_92 = arith.constant dense<0.000000e+00> : vector<64x128xf32>
    %218 = tpu.matmul %217, %0, %cst_92 {dimension_numbers = #tpu.dot_dimension_numbers<[1], [0], [0], [1], [0, 0, 1, 1], [], []>} : vector<64x64xbf16>, vector<64x128xbf16>, vector<64x128xf32> -> vector<64x128xf32>
    %219 = arith.addf %218, %8 : vector<64x128xf32>
    %cst_93 = arith.constant 0.00999999977 : f32
    %220 = vector.broadcast %cst_93 : f32 to vector<64x128xf32>
    %221 = arith.mulf %220, %219 : vector<64x128xf32>
    %222 = arith.maximumf %219, %221 : vector<64x128xf32>
    %223 = arith.truncf %222 : vector<64x128xf32> to vector<64x128xbf16>
    %cst_94 = arith.constant dense<0.000000e+00> : vector<64x128xf32>
    %224 = tpu.matmul %223, %1, %cst_94 {dimension_numbers = #tpu.dot_dimension_numbers<[1], [0], [0], [1], [0, 0, 1, 1], [], []>} : vector<64x128xbf16>, vector<128x128xbf16>, vector<64x128xf32> -> vector<64x128xf32>
    %225 = vector.broadcast %2 : vector<1x128xf32> to vector<64x128xf32>
    %226 = arith.addf %224, %225 : vector<64x128xf32>
    %cst_95 = arith.constant 0.00999999977 : f32
    %227 = vector.broadcast %cst_95 : f32 to vector<64x128xf32>
    %228 = arith.mulf %227, %226 : vector<64x128xf32>
    %229 = arith.maximumf %226, %228 : vector<64x128xf32>
    %230 = arith.maximumf %214, %229 : vector<64x128xf32>
    %c14_i32 = arith.constant 14 : i32
    %231 = arith.index_cast %c14_i32 : i32 to index
    %c0_96 = arith.constant 0 : index
    %c0_97 = arith.constant 0 : index
    %232 = vector.load %arg2[%231, %c0_96, %c0_97] : memref<16x64x64xbf16, #tpu.memory_space<vmem>>, vector<1x64x64xbf16>
    %233 = vector.shape_cast %232 : vector<1x64x64xbf16> to vector<64x64xbf16>
    %cst_98 = arith.constant dense<0.000000e+00> : vector<64x128xf32>
    %234 = tpu.matmul %233, %0, %cst_98 {dimension_numbers = #tpu.dot_dimension_numbers<[1], [0], [0], [1], [0, 0, 1, 1], [], []>} : vector<64x64xbf16>, vector<64x128xbf16>, vector<64x128xf32> -> vector<64x128xf32>
    %235 = arith.addf %234, %8 : vector<64x128xf32>
    %cst_99 = arith.constant 0.00999999977 : f32
    %236 = vector.broadcast %cst_99 : f32 to vector<64x128xf32>
    %237 = arith.mulf %236, %235 : vector<64x128xf32>
    %238 = arith.maximumf %235, %237 : vector<64x128xf32>
    %239 = arith.truncf %238 : vector<64x128xf32> to vector<64x128xbf16>
    %cst_100 = arith.constant dense<0.000000e+00> : vector<64x128xf32>
    %240 = tpu.matmul %239, %1, %cst_100 {dimension_numbers = #tpu.dot_dimension_numbers<[1], [0], [0], [1], [0, 0, 1, 1], [], []>} : vector<64x128xbf16>, vector<128x128xbf16>, vector<64x128xf32> -> vector<64x128xf32>
    %241 = vector.broadcast %2 : vector<1x128xf32> to vector<64x128xf32>
    %242 = arith.addf %240, %241 : vector<64x128xf32>
    %cst_101 = arith.constant 0.00999999977 : f32
    %243 = vector.broadcast %cst_101 : f32 to vector<64x128xf32>
    %244 = arith.mulf %243, %242 : vector<64x128xf32>
    %245 = arith.maximumf %242, %244 : vector<64x128xf32>
    %246 = arith.maximumf %230, %245 : vector<64x128xf32>
    %c15_i32 = arith.constant 15 : i32
    %247 = arith.index_cast %c15_i32 : i32 to index
    %c0_102 = arith.constant 0 : index
    %c0_103 = arith.constant 0 : index
    %248 = vector.load %arg2[%247, %c0_102, %c0_103] : memref<16x64x64xbf16, #tpu.memory_space<vmem>>, vector<1x64x64xbf16>
    %249 = vector.shape_cast %248 : vector<1x64x64xbf16> to vector<64x64xbf16>
    %cst_104 = arith.constant dense<0.000000e+00> : vector<64x128xf32>
    %250 = tpu.matmul %249, %0, %cst_104 {dimension_numbers = #tpu.dot_dimension_numbers<[1], [0], [0], [1], [0, 0, 1, 1], [], []>} : vector<64x64xbf16>, vector<64x128xbf16>, vector<64x128xf32> -> vector<64x128xf32>
    %251 = arith.addf %250, %8 : vector<64x128xf32>
    %cst_105 = arith.constant 0.00999999977 : f32
    %252 = vector.broadcast %cst_105 : f32 to vector<64x128xf32>
    %253 = arith.mulf %252, %251 : vector<64x128xf32>
    %254 = arith.maximumf %251, %253 : vector<64x128xf32>
    %255 = arith.truncf %254 : vector<64x128xf32> to vector<64x128xbf16>
    %cst_106 = arith.constant dense<0.000000e+00> : vector<64x128xf32>
    %256 = tpu.matmul %255, %1, %cst_106 {dimension_numbers = #tpu.dot_dimension_numbers<[1], [0], [0], [1], [0, 0, 1, 1], [], []>} : vector<64x128xbf16>, vector<128x128xbf16>, vector<64x128xf32> -> vector<64x128xf32>
    %257 = vector.broadcast %2 : vector<1x128xf32> to vector<64x128xf32>
    %258 = arith.addf %256, %257 : vector<64x128xf32>
    %cst_107 = arith.constant 0.00999999977 : f32
    %259 = vector.broadcast %cst_107 : f32 to vector<64x128xf32>
    %260 = arith.mulf %259, %258 : vector<64x128xf32>
    %261 = arith.maximumf %258, %260 : vector<64x128xf32>
    %262 = arith.maximumf %246, %261 : vector<64x128xf32>
    %c15_i32_108 = arith.constant 15 : i32
    %c0_109 = arith.constant 0 : index
    %c0_110 = arith.constant 0 : index
    %263 = vector.load %arg8[%c0_109, %c0_110] : memref<64x128xf32, #tpu.memory_space<vmem>>, vector<64x128xf32>
    tpu.vector_store %arg8[%c0_109, %c0_110], %262 {strides = array<i32>} : memref<64x128xf32, #tpu.memory_space<vmem>>, vector<64x128xf32>,
    return
  }
  func.func @transform_0(%arg0: i32) -> (i32, i32) {
    %c0_i32 = arith.constant 0 : i32
    %c0_i32_0 = arith.constant 0 : i32
    return %arg0, %c0_i32 : i32, i32
  }
  func.func @transform_1(%arg0: i32) -> (i32, i32, i32) {
    %c0_i32 = arith.constant 0 : i32
    %c0_i32_0 = arith.constant 0 : i32
    %c0_i32_1 = arith.constant 0 : i32
    return %c0_i32, %arg0, %c0_i32_0 : i32, i32, i32
  }
  func.func @transform_2(%arg0: i32) -> (i32, i32) {
    %c0_i32 = arith.constant 0 : i32
    %c0_i32_0 = arith.constant 0 : i32
    %c0_i32_1 = arith.constant 0 : i32
    return %c0_i32, %c0_i32_0 : i32, i32
  }
  func.func @transform_3(%arg0: i32) -> (i32, i32) {
    %c0_i32 = arith.constant 0 : i32
    %c0_i32_0 = arith.constant 0 : i32
    %c0_i32_1 = arith.constant 0 : i32
    return %c0_i32, %c0_i32_0 : i32, i32
  }
  func.func @transform_4(%arg0: i32) -> (i32, i32) {
    %c0_i32 = arith.constant 0 : i32
    %c0_i32_0 = arith.constant 0 : i32
    %c0_i32_1 = arith.constant 0 : i32
    return %c0_i32, %c0_i32_0 : i32, i32
  }
  func.func @transform_5(%arg0: i32) -> (i32, i32) {
    %c0_i32 = arith.constant 0 : i32
    %c0_i32_0 = arith.constant 0 : i32
    %c0_i32_1 = arith.constant 0 : i32
    return %c0_i32, %c0_i32_0 : i32, i32
  }
  func.func @transform_6(%arg0: i32) -> (i32, i32) {
    %c0_i32 = arith.constant 0 : i32
    %c0_i32_0 = arith.constant 0 : i32
    %c0_i32_1 = arith.constant 0 : i32
    return %c0_i32, %c0_i32_0 : i32, i32
  }
  func.func @transform_7(%arg0: i32) -> (i32, i32) {
    %c0_i32 = arith.constant 0 : i32
    %c0_i32_0 = arith.constant 0 : i32
    return %arg0, %c0_i32 : i32, i32
  }
}

</mosaic_0001>

<llo_original>
// kernel: neighbor_embedding.4
$region0: #{neighbor_embedding.4}
  #allocation0 [shape = 'u32[]', space=smem, size = 0x4, offset = 0x4, fixed_abs, tag = 'smem constant byte address 0x4 - core index']
  #allocation1 [shape = 'u32[144,128]{1,0:T(1,128)}', space=vmem, size = 0x12000, scoped, tag = 'internal scratch']
  %s0 = inlined_call_operand.vmem [shape: bf16[2,64,64], index: 0, kind: input, shape index: {}, may-alias: {0,1}]
  %s1 = inlined_call_operand.vmem [shape: bf16[2,64,64], index: 1, kind: input, shape index: {}, may-alias: {0,1}]
  %s2 = inlined_call_operand.vmem [shape: f32[2,1,64], index: 2, kind: input, shape index: {}]
  %s3 = inlined_call_operand.vmem [shape: f32[2,64,64], index: 3, kind: output, shape index: {}]
  %s4 = sld [smem:[#allocation0]]
  $region45: #{neighbor_embedding.4} parent=0
    _
  %s6 = ssub.s32 1, %s4
  %s7 = scalar_select 0, %s6, %s4
  loop: start=0, step=1, limit=4
  $region2: #{neighbor_embedding.4} parent=0 // loop_pre_header
    _
  $region3: #{neighbor_embedding.4} parent=0 // loop_header
    %s9 = sphi 0, %s13
    %p10 = scmp.ge.s32.totalorder %s9, 4
    %s16 = sphi 0, %s28
    %s17 = sphi 0, %s24
    %s18 = sphi 0, %s16
    %s19 = sphi 0, %s17
    %s20 = sphi 0, %s18
    %s21 = sphi 0, %s19
    %s33 = sphi 0, %s35
    %s36 = sphi 0, %s33
    %s37 = sphi 0, %s36
    %s53 = sphi 0, %s37
    %s59 = sphi 0, %s61
    %s62 = sphi 0, %s59
    %s63 = sphi 0, %s62
    %s79 = sphi 0, %s63
    %s85 = sphi 0, %s87
    %s88 = sphi 0, %s85
    %s89 = sphi 0, %s88
    %s105 = sphi 0, %s89
    %s113 = sphi 0, %s115
    %s116 = sphi 0, %s113
    %s117 = sphi 0, %s116
    %s133 = sphi 0, %s117
  $region4: #{neighbor_embedding.4} parent=0 // loop_header_branch
    %12 = sbr.rel (%p10) target = $region8
  $region5: #{neighbor_embedding.4} parent=0 // loop_body
    %s14 = ssub.s32 %s9, 1
    %s15 = ssub.s32 %s9, 2
    %s22 = sadd.s32 1, %s17
    %p23 = scmp.ge.s32.totalorder %s22, 1
    %s24 = scalar_select %p23, 0, %s22
    %s25 = sadd.s32 1, %s16
    %s26 = scalar_select %p23, %s25, %s16
    %p27 = scmp.ge.s32.totalorder %s26, 2
    %s28 = scalar_select %p27, 0, %s26
    %s29 = ssub.s32 %s16, %s28
    %s30 = ssub.s32 %s17, %s24
    %s31 = sor.u32 %s29, %s30
    %p32 = scmp.eq.s32.totalorder %s31, 0
    %s34 = sadd.s32 %s33, 1
    %s35 = scalar_select %p32, %s33, %s34
    %p38 = pneg %p32
    %p39 = scmp.eq.s32.totalorder %s9, 1
    %p40 = por %p38, %p39
    %p41 = scmp.ne.s32.totalorder %s33, %s36
    %p42 = scmp.eq.s32.totalorder %s9, 0
    %p43 = por %p41, %p42
    %p44 = scmp.ne.s32.totalorder %s33, %s36
    %p45 = scmp.eq.s32.totalorder %s14, 1
    %p46 = por %p44, %p45
    %p47 = scmp.ne.s32.totalorder %s36, %s37
    %p48 = scmp.eq.s32.totalorder %s14, 0
    %p49 = por %p47, %p48
    %p50 = scmp.ne.s32.totalorder %s36, %s37
    %p51 = scmp.eq.s32.totalorder %s15, 1
    %p52 = por %p50, %p51
    %p54 = scmp.ne.s32.totalorder %s37, %s53
    %p55 = scmp.eq.s32.totalorder %s15, 0
    %p56 = por %p54, %p55
    %s57 = ssub.s32 %s16, %s28
    %p58 = scmp.eq.s32.totalorder %s57, 0
    %s60 = sadd.s32 %s59, 1
    %s61 = scalar_select %p58, %s59, %s60
    %p64 = pneg %p58
    %p65 = scmp.eq.s32.totalorder %s9, 1
    %p66 = por %p64, %p65
    %p67 = scmp.ne.s32.totalorder %s59, %s62
    %p68 = scmp.eq.s32.totalorder %s9, 0
    %p69 = por %p67, %p68
    %p70 = scmp.ne.s32.totalorder %s59, %s62
    %p71 = scmp.eq.s32.totalorder %s14, 1
    %p72 = por %p70, %p71
    %p73 = scmp.ne.s32.totalorder %s62, %s63
    %p74 = scmp.eq.s32.totalorder %s14, 0
    %p75 = por %p73, %p74
    %p76 = scmp.ne.s32.totalorder %s62, %s63
    %p77 = scmp.eq.s32.totalorder %s15, 1
    %p78 = por %p76, %p77
    %p80 = scmp.ne.s32.totalorder %s63, %s79
    %p81 = scmp.eq.s32.totalorder %s15, 0
    %p82 = por %p80, %p81
    %s83 = ssub.s32 %s16, %s28
    %p84 = scmp.eq.s32.totalorder %s83, 0
    %s86 = sadd.s32 %s85, 1
    %s87 = scalar_select %p84, %s85, %s86
    %p90 = pneg %p84
    %p91 = scmp.eq.s32.totalorder %s9, 1
    %p92 = por %p90, %p91
    %p93 = scmp.ne.s32.totalorder %s85, %s88
    %p94 = scmp.eq.s32.totalorder %s9, 0
    %p95 = por %p93, %p94
    %p96 = scmp.ne.s32.totalorder %s85, %s88
    %p97 = scmp.eq.s32.totalorder %s14, 1
    %p98 = por %p96, %p97
    %p99 = scmp.ne.s32.totalorder %s88, %s89
    %p100 = scmp.eq.s32.totalorder %s14, 0
    %p101 = por %p99, %p100
    %p102 = scmp.ne.s32.totalorder %s88, %s89
    %p103 = scmp.eq.s32.totalorder %s15, 1
    %p104 = por %p102, %p103
    %p106 = scmp.ne.s32.totalorder %s89, %s105
    %p107 = scmp.eq.s32.totalorder %s15, 0
    %p108 = por %p106, %p107
    %s109 = ssub.s32 %s16, %s28
    %s110 = ssub.s32 %s17, %s24
    %s111 = sor.u32 %s109, %s110
    %p112 = scmp.eq.s32.totalorder %s111, 0
    %s114 = sadd.s32 %s113, 1
    %s115 = scalar_select %p112, %s113, %s114
    %p118 = pneg %p112
    %p119 = scmp.eq.s32.totalorder %s9, 1
    %p120 = por %p118, %p119
    %p121 = scmp.ne.s32.totalorder %s113, %s116
    %p122 = scmp.eq.s32.totalorder %s9, 0
    %p123 = por %p121, %p122
    %p124 = scmp.ne.s32.totalorder %s113, %s116
    %p125 = scmp.eq.s32.totalorder %s14, 1
    %p126 = por %p124, %p125
    %p127 = scmp.ne.s32.totalorder %s116, %s117
    %p128 = scmp.eq.s32.totalorder %s14, 0
    %p129 = por %p127, %p128
    %p130 = scmp.ne.s32.totalorder %s116, %s117
    %p131 = scmp.eq.s32.totalorder %s15, 1
    %p132 = por %p130, %p131
    %p134 = scmp.ne.s32.totalorder %s117, %s133
    %p135 = scmp.eq.s32.totalorder %s15, 0
    %p136 = por %p134, %p135
    %p137 = scmp.le.s32.totalorder 1, %s9
    %p138 = scmp.lt.s32.totalorder %s9, 3
    %p139 = pnand %p137, %p138
    %p140 = pneg %p139
    // Predicated region
    $region9: #{neighbor_embedding.4} parent=5 // pred_check
      _
    $region10: #{neighbor_embedding.4} parent=5 // pred_check_branch
      %142 = sbr.rel (%p139) target = $region12
    $region11: #{neighbor_embedding.4} parent=5 // pred_region
      %s143 = ssub.s32 %s9, 1
    $region12: #{neighbor_embedding.4} parent=5 // pred_fallthru
      _
    %p144 = scmp.lt.s32.totalorder %s9, 2
    // Predicated region
    $region13: #{neighbor_embedding.4} parent=5 // pred_check
      %p145 = pneg %p144
    $region14: #{neighbor_embedding.4} parent=5 // pred_check_branch
      %147 = sbr.rel (%p145) target = $region16
    $region15: #{neighbor_embedding.4} parent=5 // pred_region
      // Predicated region
      $region17: #{neighbor_embedding.4} parent=15 // pred_check
        %p148 = pneg %p43
      $region18: #{neighbor_embedding.4} parent=15 // pred_check_branch
        %150 = sbr.rel (%p148) target = $region20
      $region19: #{neighbor_embedding.4} parent=15 // pred_region
        %s151 = smul.u32 8, %s17
        %p152 = scmp.lt.s32.totalorder %s16, 1
        %s153 = scalar_select %p152, %s16, 1
        %p154 = scmp.lt.s32.totalorder %s151, 7
        %s155 = scalar_select %p154, %s151, 7
        %s156 = smul.addr %s153, 8
        %s157 = sadd.s32 %s155, %s156
        %s158 = smul.addr %s157, 4
        %s159 = scalar_lea.vmem %s0, %s158
        %s160 = smul.u32 8, %s17
      $region20: #{neighbor_embedding.4} parent=15 // pred_fallthru
        _
      // Predicated region
      $region21: #{neighbor_embedding.4} parent=15 // pred_check
        %p161 = pneg %p69
      $region22: #{neighbor_embedding.4} parent=15 // pred_check_branch
        %163 = sbr.rel (%p161) target = $region24
      $region23: #{neighbor_embedding.4} parent=15 // pred_region
        %p164 = scmp.lt.s32.totalorder %s16, 1
        %s165 = scalar_select %p164, %s16, 1
        %s166 = smul.addr %s165, 8
        %s167 = smul.addr %s166, 4
        %s168 = scalar_lea.vmem %s1, %s167
      $region24: #{neighbor_embedding.4} parent=15 // pred_fallthru
        _
      // Predicated region
      $region25: #{neighbor_embedding.4} parent=15 // pred_check
        %p169 = pneg %p95
      $region26: #{neighbor_embedding.4} parent=15 // pred_check_branch
        %171 = sbr.rel (%p169) target = $region28
      $region27: #{neighbor_embedding.4} parent=15 // pred_region
        %p172 = scmp.lt.s32.totalorder %s16, 1
        %s173 = scalar_select %p172, %s16, 1
        %s174 = scalar_lea.vmem %s2, %s173
      $region28: #{neighbor_embedding.4} parent=15 // pred_fallthru
        _
    $region16: #{neighbor_embedding.4} parent=5 // pred_fallthru
      _
    %p175 = scmp.le.s32.totalorder 1, %s9
    %p176 = scmp.lt.s32.totalorder %s9, 3
    %p177 = pnand %p175, %p176
    %p178 = pneg %p177
    // Predicated region
    $region29: #{neighbor_embedding.4} parent=5 // pred_check
      _
    $region30: #{neighbor_embedding.4} parent=5 // pred_check_branch
      %180 = sbr.rel (%p177) target = $region32
    $region31: #{neighbor_embedding.4} parent=5 // pred_region
      %s181 = ssub.s32 %s9, 1
      %s182 = smul.u32 8, %s19
      %p183 = scmp.lt.s32.totalorder %s18, 1
      %s184 = scalar_select %p183, %s18, 1
      %p185 = scmp.lt.s32.totalorder %s182, 7
      %s186 = scalar_select %p185, %s182, 7
      %s187 = smul.addr %s184, 8
      %s188 = sadd.s32 %s186, %s187
      %s189 = smul.addr %s188, 4
      %s190 = scalar_lea.vmem %s0, %s189
      %p191 = pneg %p49
      %p192 = pneg %p46
      %p193 = scmp.lt.s32.totalorder %s18, 1
      %s194 = scalar_select %p193, %s18, 1
      %s195 = smul.addr %s194, 8
      %s196 = smul.addr %s195, 4
      %s197 = scalar_lea.vmem %s1, %s196
      %p198 = pneg %p75
      %p199 = pneg %p72
      %p200 = scmp.lt.s32.totalorder %s18, 1
      %s201 = scalar_select %p200, %s18, 1
      %s202 = scalar_lea.vmem %s2, %s201
      %p203 = pneg %p101
      %p204 = pneg %p98
      %p205 = pneg %p129
      %p206 = pneg %p126
      %s207 = smul.u32 8, %s19
      %p208 = scmp.lt.s32.totalorder %s18, 1
      %s209 = scalar_select %p208, %s18, 1
      %p210 = scmp.lt.s32.totalorder %s207, 7
      %s211 = scalar_select %p210, %s207, 7
      %s212 = smul.addr %s209, 8
      %s213 = sadd.s32 %s211, %s212
      %s214 = smul.addr %s213, 8
      %s215 = scalar_lea.vmem %s3, %s214
      %s216 = smul.u32 8, %s19
      %p217 = scmp.lt.s32.totalorder %s18, 1
      %s218 = scalar_select %p217, %s18, 1
      %p219 = scmp.lt.s32.totalorder %s216, 7
      %s220 = scalar_select %p219, %s216, 7
      %s221 = smul.addr %s218, 8
      %s222 = sadd.s32 %s220, %s221
      %s223 = smul.addr %s222, 4
      %s224 = scalar_lea.vmem %s0, %s223
      %s225 = smul.u32 8, %s19
      %p226 = scmp.lt.s32.totalorder %s18, 1
      %s227 = scalar_select %p226, %s18, 1
      %s228 = smul.addr %s227, 8
      %s229 = smul.addr %s228, 4
      %s230 = scalar_lea.vmem %s1, %s229
      %p231 = scmp.lt.s32.totalorder %s18, 1
      %s232 = scalar_select %p231, %s18, 1
      %s233 = scalar_lea.vmem %s2, %s232
      %s234 = smul.u32 8, %s19
      %p235 = scmp.lt.s32.totalorder %s18, 1
      %s236 = scalar_select %p235, %s18, 1
      %p237 = scmp.lt.s32.totalorder %s234, 7
      %s238 = scalar_select %p237, %s234, 7
      %s239 = smul.addr %s236, 8
      %s240 = sadd.s32 %s238, %s239
      %s241 = smul.addr %s240, 8
      %s242 = scalar_lea.vmem %s3, %s241
      %s243 = smul.u32 8, %s19
      %v245 = vld [vmem:[%s224] sm:$0xf]
      %v246 = vld [vmem:[%s224 + $0x4] sm:$0xf]
      %v247 = vld [vmem:[%s224 + $0x8] sm:$0xf]
      %v248 = vld [vmem:[%s224 + $0xc] sm:$0xf]
      %v249 = vld [vmem:[%s224 + $0x10] sm:$0xf]
      %v250 = vld [vmem:[%s224 + $0x14] sm:$0xf]
      %v251 = vld [vmem:[%s224 + $0x18] sm:$0xf]
      %v252 = vld [vmem:[%s224 + $0x1c] sm:$0xf]
      %v253 = vld [vmem:[%s230] sm:$0xf]
      %v254 = vld [vmem:[%s230 + $0x4] sm:$0xf]
      %v255 = vld [vmem:[%s230 + $0x8] sm:$0xf]
      %v256 = vld [vmem:[%s230 + $0xc] sm:$0xf]
      %v257 = vld [vmem:[%s230 + $0x10] sm:$0xf]
      %v258 = vld [vmem:[%s230 + $0x14] sm:$0xf]
      %v259 = vld [vmem:[%s230 + $0x18] sm:$0xf]
      %v260 = vld [vmem:[%s230 + $0x1c] sm:$0xf]
      %v269 = vunpack.c.l.b16 %v245
      %v270 = vunpack.c.l.b16 %v246
      %v271 = vunpack.c.l.b16 %v247
      %v272 = vunpack.c.l.b16 %v248
      %v273 = vunpack.c.l.b16 %v249
      %v274 = vunpack.c.l.b16 %v250
      %v275 = vunpack.c.l.b16 %v251
      %v276 = vunpack.c.l.b16 %v252
      %v277 = vpack.c.b16 %v270, %v269
      %v278 = vpack.c.b16 %v272, %v271
      %v279 = vpack.c.b16 %v274, %v273
      %v280 = vpack.c.b16 %v276, %v275
      %v289 = vunpack.c.l.b16 %v253
      %v290 = vunpack.c.l.b16 %v254
      %v291 = vunpack.c.l.b16 %v255
      %v292 = vunpack.c.l.b16 %v256
      %v293 = vunpack.c.l.b16 %v257
      %v294 = vunpack.c.l.b16 %v258
      %v295 = vunpack.c.l.b16 %v259
      %v296 = vunpack.c.l.b16 %v260
      %v297 = vpack.c.b16 %v290, %v289
      %v298 = vpack.c.b16 %v292, %v291
      %v299 = vpack.c.b16 %v294, %v293
      %v300 = vpack.c.b16 %v296, %v295
      %vm301 = vcmask 523264
      %v303 = vsel %vm301, %v277, 0
      %v306 = vsel %vm301, %v278, 0
      %v309 = vsel %vm301, %v279, 0
      %v312 = vsel %vm301, %v280, 0
      %v315 = vsel %vm301, %v297, 0
      %v318 = vsel %vm301, %v298, 0
      %v321 = vsel %vm301, %v299, 0
      %v324 = vsel %vm301, %v300, 0
      %326 = vmatprep.subr.bf16.mxu0 0
      %327 = vmatpush1.bf16.xpose.msra.mxu0 %v315
      %328 = vmatprep.subr.bf16.mxu0 0
      %329 = vmatpush1.bf16.xpose.msra.mxu0 %v318
      %330 = vmatprep.subr.bf16.mxu0 0
      %331 = vmatpush1.bf16.xpose.msra.mxu0 %v321
      %332 = vmatprep.subr.bf16.mxu0 0
      %333 = vmatpush1.bf16.xpose.msra.mxu0 %v324
      %334 = vmatprep.subr.bf16.mxu0 0
      %335 = vmatpush1.bf16.xpose.msra.mxu0 0
      %336 = vmatprep.subr.bf16.mxu0 0
      %337 = vmatpush1.bf16.xpose.msra.mxu0 0
      %338 = vmatprep.subr.bf16.mxu0 0
      %339 = vmatpush1.bf16.xpose.msra.mxu0 0
      %340 = vmatprep.subr.bf16.mxu0 0
      %341 = vmatpush1.bf16.xpose.msra.mxu0 0
      %342 = vmatprep.subr.bf16.mxu0 0
      %343 = vmatpush1.bf16.xpose.msra.mxu0 0
      %344 = vmatprep.subr.bf16.mxu0 0
      %345 = vmatpush1.bf16.xpose.msra.mxu0 0
      %346 = vmatprep.subr.bf16.mxu0 0
      %347 = vmatpush1.bf16.xpose.msra.mxu0 0
      %348 = vmatprep.subr.bf16.mxu0 0
      %349 = vmatpush1.bf16.xpose.msra.mxu0 0
      %350 = vmatprep.subr.bf16.mxu0 0
      %351 = vmatpush1.bf16.xpose.msra.mxu0 0
      %352 = vmatprep.subr.bf16.mxu0 0
      %353 = vmatpush1.bf16.xpose.msra.mxu0 0
      %354 = vmatprep.subr.bf16.mxu0 0
      %355 = vmatpush1.bf16.xpose.msra.mxu0 0
      %356 = vmatprep.subr.bf16.mxu0 0
      %357 = vmatpush1.bf16.xpose.msra.mxu0 0
      %358 = vmatprep.mubr.bf16.mxu0 0
      %359 = vmatmul.mubr.bf16.gmra.mrb[0].mxu0 %v303
      %v360 = vpop.f32.mrb[0].mxu0
      %v361 = vadd.f32 0.0, %v360
      %v362 = vpop.f32.mrb[0].mxu0
      %v363 = vpop.f32.mrb[0].mxu0
      %v364 = vadd.f32 0.0, %v363
      %v365 = vpop.f32.mrb[0].mxu0
      %366 = vmatprep.mubr.bf16.mxu0 0
      %367 = vmatmul.mubr.bf16.gmra.mrb[0].mxu0 %v306
      %v368 = vpop.f32.mrb[0].mxu0
      %v369 = vadd.f32 0.0, %v368
      %v370 = vpop.f32.mrb[0].mxu0
      %v371 = vpop.f32.mrb[0].mxu0
      %v372 = vadd.f32 0.0, %v371
      %v373 = vpop.f32.mrb[0].mxu0
      %374 = vmatprep.mubr.bf16.mxu0 0
      %375 = vmatmul.mubr.bf16.gmra.mrb[0].mxu0 %v309
      %v376 = vpop.f32.mrb[0].mxu0
      %v377 = vadd.f32 0.0, %v376
      %v378 = vpop.f32.mrb[0].mxu0
      %v379 = vpop.f32.mrb[0].mxu0
      %v380 = vadd.f32 0.0, %v379
      %v381 = vpop.f32.mrb[0].mxu0
      %382 = vmatprep.mubr.bf16.mxu0 0
      %383 = vmatmul.mubr.bf16.gmra.mrb[0].mxu0 %v312
      %v384 = vpop.f32.mrb[0].mxu0
      %v385 = vadd.f32 0.0, %v384
      %v386 = vpop.f32.mrb[0].mxu0
      %v387 = vpop.f32.mrb[0].mxu0
      %v388 = vadd.f32 0.0, %v387
      %v389 = vpop.f32.mrb[0].mxu0
      %390 = vdwg.mxu0
      %v391 = vunpack.c.l.bf16 %v245
      %v392 = vunpack.c.l.bf16 %v246
      %v393 = vunpack.c.l.bf16 %v247
      %v394 = vunpack.c.l.bf16 %v248
      %v395 = vunpack.c.l.bf16 %v249
      %v396 = vunpack.c.l.bf16 %v250
      %v397 = vunpack.c.l.bf16 %v251
      %v398 = vunpack.c.l.bf16 %v252
      %v399 = vmul.f32 %v391, %v391
      %v400 = vmul.f32 %v392, %v392
      %v401 = vmul.f32 %v393, %v393
      %v402 = vmul.f32 %v394, %v394
      %v403 = vmul.f32 %v395, %v395
      %v404 = vmul.f32 %v396, %v396
      %v405 = vmul.f32 %v397, %v397
      %v406 = vmul.f32 %v398, %v398
      %v407 = vsel %vm301, %v399, 0.0
      %408 = vadd.xlane.f32.xlu0 %v407
      %v409 = vpop.xlane.xlu0 %408
      %v410 = vsel %vm301, %v400, 0.0
      %411 = vadd.xlane.f32.xlu0 %v410
      %v412 = vpop.xlane.xlu0 %411
      %v413 = vsel %vm301, %v401, 0.0
      %414 = vadd.xlane.f32.xlu0 %v413
      %v415 = vpop.xlane.xlu0 %414
      %v416 = vsel %vm301, %v402, 0.0
      %417 = vadd.xlane.f32.xlu0 %v416
      %v418 = vpop.xlane.xlu0 %417
      %v419 = vsel %vm301, %v403, 0.0
      %420 = vadd.xlane.f32.xlu0 %v419
      %v421 = vpop.xlane.xlu0 %420
      %v422 = vsel %vm301, %v404, 0.0
      %423 = vadd.xlane.f32.xlu0 %v422
      %v424 = vpop.xlane.xlu0 %423
      %v425 = vsel %vm301, %v405, 0.0
      %426 = vadd.xlane.f32.xlu0 %v425
      %v427 = vpop.xlane.xlu0 %426
      %v428 = vsel %vm301, %v406, 0.0
      %429 = vadd.xlane.f32.xlu0 %v428
      %v430 = vpop.xlane.xlu0 %429
      %v431 = vmul.f32 %v361, 2.0
      %v432 = vmul.f32 %v364, 2.0
      %v433 = vmul.f32 %v369, 2.0
      %v434 = vmul.f32 %v372, 2.0
      %v435 = vmul.f32 %v377, 2.0
      %v436 = vmul.f32 %v380, 2.0
      %v437 = vmul.f32 %v385, 2.0
      %v438 = vmul.f32 %v388, 2.0
      %v439 = vsub.f32 %v431, %v409
      %v440 = vsub.f32 %v432, %v412
      %v441 = vsub.f32 %v433, %v415
      %v442 = vsub.f32 %v434, %v418
      %v443 = vsub.f32 %v435, %v421
      %v444 = vsub.f32 %v436, %v424
      %v445 = vsub.f32 %v437, %v427
      %v446 = vsub.f32 %v438, %v430
      %v447 = vld [vmem:[%s233] sm:$0x1]
      %v449 = vlaneseq
      %v450 = vshrl.u32 %v449, 7
      %v451 = vsub.s32 0, %v450
      %v452 = vrot.slane %v447, %v451
      %v454 = vsub.f32 %v439, %v452
      %v455 = vsub.f32 %v440, %v452
      %v456 = vsub.f32 %v441, %v452
      %v457 = vsub.f32 %v442, %v452
      %v458 = vsub.f32 %v443, %v452
      %v459 = vsub.f32 %v444, %v452
      %v460 = vsub.f32 %v445, %v452
      %v461 = vsub.f32 %v446, %v452
      %462 = vst.msk [vmem:[%s242] sm:$0xff] %vm301, %v454
      %463 = vst.msk [vmem:[%s242 + $0x8] sm:$0xff] %vm301, %v455
      %464 = vst.msk [vmem:[%s242 + $0x10] sm:$0xff] %vm301, %v456
      %465 = vst.msk [vmem:[%s242 + $0x18] sm:$0xff] %vm301, %v457
      %466 = vst.msk [vmem:[%s242 + $0x20] sm:$0xff] %vm301, %v458
      %467 = vst.msk [vmem:[%s242 + $0x28] sm:$0xff] %vm301, %v459
      %468 = vst.msk [vmem:[%s242 + $0x30] sm:$0xff] %vm301, %v460
      %469 = vst.msk [vmem:[%s242 + $0x38] sm:$0xff] %vm301, %v461
      %s470 = smul.u32 8, %s19
      %p471 = scmp.lt.s32.totalorder %s18, 1
      %s472 = scalar_select %p471, %s18, 1
      %p473 = scmp.lt.s32.totalorder %s470, 7
      %s474 = scalar_select %p473, %s470, 7
      %s475 = smul.addr %s472, 8
      %s476 = sadd.s32 %s474, %s475
      %s477 = smul.addr %s476, 8
      %s478 = scalar_lea.vmem %s3, %s477
      // Predicated region
      $region33: #{neighbor_embedding.4} parent=31 // pred_check
        %p479 = pneg %p126
      $region34: #{neighbor_embedding.4} parent=31 // pred_check_branch
        %481 = sbr.rel (%p479) target = $region36
      $region35: #{neighbor_embedding.4} parent=31 // pred_region
        %s482 = smul.u32 8, %s19
      $region36: #{neighbor_embedding.4} parent=31 // pred_fallthru
        _
    $region32: #{neighbor_embedding.4} parent=5 // pred_fallthru
      _
    %p483 = scmp.le.s32.totalorder 2, %s9
    // Predicated region
    $region37: #{neighbor_embedding.4} parent=5 // pred_check
      %p484 = pneg %p483
    $region38: #{neighbor_embedding.4} parent=5 // pred_check_branch
      %486 = sbr.rel (%p484) target = $region40
    $region39: #{neighbor_embedding.4} parent=5 // pred_region
      %s487 = ssub.s32 %s9, 2
      // Predicated region
      $region41: #{neighbor_embedding.4} parent=39 // pred_check
        %p488 = pneg %p132
      $region42: #{neighbor_embedding.4} parent=39 // pred_check_branch
        %490 = sbr.rel (%p488) target = $region44
      $region43: #{neighbor_embedding.4} parent=39 // pred_region
        %s491 = smul.u32 8, %s21
        %p492 = scmp.lt.s32.totalorder %s20, 1
        %s493 = scalar_select %p492, %s20, 1
        %p494 = scmp.lt.s32.totalorder %s491, 7
        %s495 = scalar_select %p494, %s491, 7
        %s496 = smul.addr %s493, 8
        %s497 = sadd.s32 %s495, %s496
        %s498 = smul.addr %s497, 8
        %s499 = scalar_lea.vmem %s3, %s498
      $region44: #{neighbor_embedding.4} parent=39 // pred_fallthru
        _
    $region40: #{neighbor_embedding.4} parent=5 // pred_fallthru
      _
  $region6: #{neighbor_embedding.4} parent=0 // loop_footer
    %s13 = sadd.s32 1, %s9
  $region7: #{neighbor_embedding.4} parent=0 // loop_footer_branch
    %8 = sbr.rel target = $region3
  $region8: #{neighbor_embedding.4} parent=0 // loop_exit
    _

// kernel: neighbor_embedding.3
$region0: #{neighbor_embedding.3}
  #allocation0 [shape = 'u32[]', space=smem, size = 0x4, offset = 0x4, fixed_abs, tag = 'smem constant byte address 0x4 - core index']
  #allocation1 [shape = 'u32[144,128]{1,0:T(1,128)}', space=vmem, size = 0x12000, scoped, tag = 'internal scratch']
  %s0 = inlined_call_operand.vmem [shape: f32[128,8], index: 0, kind: input, shape index: {}]
  %s1 = inlined_call_operand.vmem [shape: bf16[8,64], index: 1, kind: input, shape index: {}]
  %s2 = inlined_call_operand.vmem [shape: f32[1,64], index: 2, kind: input, shape index: {}]
  %s3 = inlined_call_operand.vmem [shape: bf16[64,64], index: 3, kind: input, shape index: {}]
  %s4 = inlined_call_operand.vmem [shape: f32[1,64], index: 4, kind: input, shape index: {}]
  %s5 = inlined_call_operand.vmem [shape: bf16[128,64], index: 5, kind: output, shape index: {}]
  %s6 = sld [smem:[#allocation0]]
  $region53: #{neighbor_embedding.3} parent=0
    _
  %s8 = ssub.s32 1, %s6
  %s9 = scalar_select 0, %s8, %s6
  loop: start=0, step=1, limit=4
  $region2: #{neighbor_embedding.3} parent=0 // loop_pre_header
    _
  $region3: #{neighbor_embedding.3} parent=0 // loop_header
    %s11 = sphi 0, %s15
    %p12 = scmp.ge.s32.totalorder %s11, 4
    %s21 = sphi 0, %s23
    %s24 = sphi 0, %s21
    %s25 = sphi 0, %s24
    %s41 = sphi 0, %s25
    %s45 = sphi 0, %s45
    %s47 = sphi 0, %s45
    %s48 = sphi 0, %s47
    %s62 = sphi 0, %s48
    %s66 = sphi 0, %s66
    %s68 = sphi 0, %s66
    %s69 = sphi 0, %s68
    %s83 = sphi 0, %s69
    %s87 = sphi 0, %s87
    %s89 = sphi 0, %s87
    %s90 = sphi 0, %s89
    %s104 = sphi 0, %s90
    %s108 = sphi 0, %s108
    %s110 = sphi 0, %s108
    %s111 = sphi 0, %s110
    %s125 = sphi 0, %s111
    %s131 = sphi 0, %s133
    %s134 = sphi 0, %s131
    %s135 = sphi 0, %s134
    %s151 = sphi 0, %s135
  $region4: #{neighbor_embedding.3} parent=0 // loop_header_branch
    %14 = sbr.rel (%p12) target = $region8
  $region5: #{neighbor_embedding.3} parent=0 // loop_body
    %s16 = ssub.s32 %s11, 1
    %s17 = ssub.s32 %s11, 2
    %s18 = sadd.s32 %s11, 1
    %s19 = ssub.s32 %s11, %s18
    %p20 = scmp.eq.s32.totalorder %s19, 0
    %s22 = sadd.s32 %s21, 1
    %s23 = scalar_select %p20, %s21, %s22
    %p26 = pneg %p20
    %p27 = scmp.eq.s32.totalorder %s11, 1
    %p28 = por %p26, %p27
    %p29 = scmp.ne.s32.totalorder %s21, %s24
    %p30 = scmp.eq.s32.totalorder %s11, 0
    %p31 = por %p29, %p30
    %p32 = scmp.ne.s32.totalorder %s21, %s24
    %p33 = scmp.eq.s32.totalorder %s16, 1
    %p34 = por %p32, %p33
    %p35 = scmp.ne.s32.totalorder %s24, %s25
    %p36 = scmp.eq.s32.totalorder %s16, 0
    %p37 = por %p35, %p36
    %p38 = scmp.ne.s32.totalorder %s24, %s25
    %p39 = scmp.eq.s32.totalorder %s17, 1
    %p40 = por %p38, %p39
    %p42 = scmp.ne.s32.totalorder %s25, %s41
    %p43 = scmp.eq.s32.totalorder %s17, 0
    %p44 = por %p42, %p43
    %s46 = sadd.s32 %s45, 1
    %p49 = scmp.eq.s32.totalorder %s11, 1
    %p50 = scmp.ne.s32.totalorder %s45, %s47
    %p51 = scmp.eq.s32.totalorder %s11, 0
    %p52 = por %p50, %p51
    %p53 = scmp.ne.s32.totalorder %s45, %s47
    %p54 = scmp.eq.s32.totalorder %s16, 1
    %p55 = por %p53, %p54
    %p56 = scmp.ne.s32.totalorder %s47, %s48
    %p57 = scmp.eq.s32.totalorder %s16, 0
    %p58 = por %p56, %p57
    %p59 = scmp.ne.s32.totalorder %s47, %s48
    %p60 = scmp.eq.s32.totalorder %s17, 1
    %p61 = por %p59, %p60
    %p63 = scmp.ne.s32.totalorder %s48, %s62
    %p64 = scmp.eq.s32.totalorder %s17, 0
    %p65 = por %p63, %p64
    %s67 = sadd.s32 %s66, 1
    %p70 = scmp.eq.s32.totalorder %s11, 1
    %p71 = scmp.ne.s32.totalorder %s66, %s68
    %p72 = scmp.eq.s32.totalorder %s11, 0
    %p73 = por %p71, %p72
    %p74 = scmp.ne.s32.totalorder %s66, %s68
    %p75 = scmp.eq.s32.totalorder %s16, 1
    %p76 = por %p74, %p75
    %p77 = scmp.ne.s32.totalorder %s68, %s69
    %p78 = scmp.eq.s32.totalorder %s16, 0
    %p79 = por %p77, %p78
    %p80 = scmp.ne.s32.totalorder %s68, %s69
    %p81 = scmp.eq.s32.totalorder %s17, 1
    %p82 = por %p80, %p81
    %p84 = scmp.ne.s32.totalorder %s69, %s83
    %p85 = scmp.eq.s32.totalorder %s17, 0
    %p86 = por %p84, %p85
    %s88 = sadd.s32 %s87, 1
    %p91 = scmp.eq.s32.totalorder %s11, 1
    %p92 = scmp.ne.s32.totalorder %s87, %s89
    %p93 = scmp.eq.s32.totalorder %s11, 0
    %p94 = por %p92, %p93
    %p95 = scmp.ne.s32.totalorder %s87, %s89
    %p96 = scmp.eq.s32.totalorder %s16, 1
    %p97 = por %p95, %p96
    %p98 = scmp.ne.s32.totalorder %s89, %s90
    %p99 = scmp.eq.s32.totalorder %s16, 0
    %p100 = por %p98, %p99
    %p101 = scmp.ne.s32.totalorder %s89, %s90
    %p102 = scmp.eq.s32.totalorder %s17, 1
    %p103 = por %p101, %p102
    %p105 = scmp.ne.s32.totalorder %s90, %s104
    %p106 = scmp.eq.s32.totalorder %s17, 0
    %p107 = por %p105, %p106
    %s109 = sadd.s32 %s108, 1
    %p112 = scmp.eq.s32.totalorder %s11, 1
    %p113 = scmp.ne.s32.totalorder %s108, %s110
    %p114 = scmp.eq.s32.totalorder %s11, 0
    %p115 = por %p113, %p114
    %p116 = scmp.ne.s32.totalorder %s108, %s110
    %p117 = scmp.eq.s32.totalorder %s16, 1
    %p118 = por %p116, %p117
    %p119 = scmp.ne.s32.totalorder %s110, %s111
    %p120 = scmp.eq.s32.totalorder %s16, 0
    %p121 = por %p119, %p120
    %p122 = scmp.ne.s32.totalorder %s110, %s111
    %p123 = scmp.eq.s32.totalorder %s17, 1
    %p124 = por %p122, %p123
    %p126 = scmp.ne.s32.totalorder %s111, %s125
    %p127 = scmp.eq.s32.totalorder %s17, 0
    %p128 = por %p126, %p127
    %s129 = ssub.s32 %s11, %s18
    %p130 = scmp.eq.s32.totalorder %s129, 0
    %s132 = sadd.s32 %s131, 1
    %s133 = scalar_select %p130, %s131, %s132
    %p136 = pneg %p130
    %p137 = scmp.eq.s32.totalorder %s11, 1
    %p138 = por %p136, %p137
    %p139 = scmp.ne.s32.totalorder %s131, %s134
    %p140 = scmp.eq.s32.totalorder %s11, 0
    %p141 = por %p139, %p140
    %p142 = scmp.ne.s32.totalorder %s131, %s134
    %p143 = scmp.eq.s32.totalorder %s16, 1
    %p144 = por %p142, %p143
    %p145 = scmp.ne.s32.totalorder %s134, %s135
    %p146 = scmp.eq.s32.totalorder %s16, 0
    %p147 = por %p145, %p146
    %p148 = scmp.ne.s32.totalorder %s134, %s135
    %p149 = scmp.eq.s32.totalorder %s17, 1
    %p150 = por %p148, %p149
    %p152 = scmp.ne.s32.totalorder %s135, %s151
    %p153 = scmp.eq.s32.totalorder %s17, 0
    %p154 = por %p152, %p153
    %p155 = scmp.le.s32.totalorder 1, %s11
    %p156 = scmp.lt.s32.totalorder %s11, 3
    %p157 = pnand %p155, %p156
    %p158 = pneg %p157
    // Predicated region
    $region9: #{neighbor_embedding.3} parent=5 // pred_check
      _
    $region10: #{neighbor_embedding.3} parent=5 // pred_check_branch
      %160 = sbr.rel (%p157) target = $region12
    $region11: #{neighbor_embedding.3} parent=5 // pred_region
      %s161 = ssub.s32 %s11, 1
      // Predicated region
      $region13: #{neighbor_embedding.3} parent=11 // pred_check
        %p162 = pneg %p58
      $region14: #{neighbor_embedding.3} parent=11 // pred_check_branch
        %164 = sbr.rel (%p162) target = $region16
      $region15: #{neighbor_embedding.3} parent=11 // pred_region
        _
      $region16: #{neighbor_embedding.3} parent=11 // pred_fallthru
        _
      // Predicated region
      $region17: #{neighbor_embedding.3} parent=11 // pred_check
        %p165 = pneg %p79
      $region18: #{neighbor_embedding.3} parent=11 // pred_check_branch
        %167 = sbr.rel (%p165) target = $region20
      $region19: #{neighbor_embedding.3} parent=11 // pred_region
        _
      $region20: #{neighbor_embedding.3} parent=11 // pred_fallthru
        _
      // Predicated region
      $region21: #{neighbor_embedding.3} parent=11 // pred_check
        %p168 = pneg %p100
      $region22: #{neighbor_embedding.3} parent=11 // pred_check_branch
        %170 = sbr.rel (%p168) target = $region24
      $region23: #{neighbor_embedding.3} parent=11 // pred_region
        _
      $region24: #{neighbor_embedding.3} parent=11 // pred_fallthru
        _
      // Predicated region
      $region25: #{neighbor_embedding.3} parent=11 // pred_check
        %p171 = pneg %p121
      $region26: #{neighbor_embedding.3} parent=11 // pred_check_branch
        %173 = sbr.rel (%p171) target = $region28
      $region27: #{neighbor_embedding.3} parent=11 // pred_region
        _
      $region28: #{neighbor_embedding.3} parent=11 // pred_fallthru
        _
    $region12: #{neighbor_embedding.3} parent=5 // pred_fallthru
      _
    %p174 = scmp.lt.s32.totalorder %s11, 2
    // Predicated region
    $region29: #{neighbor_embedding.3} parent=5 // pred_check
      %p175 = pneg %p174
    $region30: #{neighbor_embedding.3} parent=5 // pred_check_branch
      %177 = sbr.rel (%p175) target = $region32
    $region31: #{neighbor_embedding.3} parent=5 // pred_region
      // Predicated region
      $region33: #{neighbor_embedding.3} parent=31 // pred_check
        %p178 = pneg %p31
      $region34: #{neighbor_embedding.3} parent=31 // pred_check_branch
        %180 = sbr.rel (%p178) target = $region36
      $region35: #{neighbor_embedding.3} parent=31 // pred_region
        %s181 = smul.u32 8, %s11
        %p182 = scmp.lt.s32.totalorder %s181, 15
        %s183 = scalar_select %p182, %s181, 15
        %s184 = smul.addr %s183, 8
        %s185 = scalar_lea.vmem %s0, %s184
        %s186 = smul.u32 8, %s11
      $region36: #{neighbor_embedding.3} parent=31 // pred_fallthru
        _
    $region32: #{neighbor_embedding.3} parent=5 // pred_fallthru
      _
    %p187 = scmp.le.s32.totalorder 1, %s11
    %p188 = scmp.lt.s32.totalorder %s11, 3
    %p189 = pnand %p187, %p188
    %p190 = pneg %p189
    // Predicated region
    $region37: #{neighbor_embedding.3} parent=5 // pred_check
      _
    $region38: #{neighbor_embedding.3} parent=5 // pred_check_branch
      %192 = sbr.rel (%p189) target = $region40
    $region39: #{neighbor_embedding.3} parent=5 // pred_region
      %s193 = ssub.s32 %s11, 1
      %s194 = smul.u32 8, %s16
      %p195 = scmp.lt.s32.totalorder %s194, 15
      %s196 = scalar_select %p195, %s194, 15
      %s197 = smul.addr %s196, 8
      %s198 = scalar_lea.vmem %s0, %s197
      %p199 = pneg %p37
      %p200 = pneg %p34
      %p201 = pneg %p58
      %p202 = pneg %p55
      %p203 = pneg %p79
      %p204 = pneg %p76
      %p205 = pneg %p100
      %p206 = pneg %p97
      %p207 = pneg %p121
      %p208 = pneg %p118
      %p209 = pneg %p147
      %p210 = pneg %p144
      %s211 = smul.u32 8, %s16
      %p212 = scmp.lt.s32.totalorder %s211, 15
      %s213 = scalar_select %p212, %s211, 15
      %s214 = smul.addr %s213, 4
      %s215 = scalar_lea.vmem %s5, %s214
      %s216 = smul.u32 8, %s16
      %p217 = scmp.lt.s32.totalorder %s216, 15
      %s218 = scalar_select %p217, %s216, 15
      %s219 = smul.addr %s218, 8
      %s220 = scalar_lea.vmem %s0, %s219
      %s221 = smul.u32 8, %s16
      %s222 = smul.u32 8, %s16
      %p223 = scmp.lt.s32.totalorder %s222, 15
      %s224 = scalar_select %p223, %s222, 15
      %s225 = smul.addr %s224, 4
      %s226 = scalar_lea.vmem %s5, %s225
      %s227 = smul.u32 8, %s16
      %v229 = vld [vmem:[%s220] sm:$0xff]
      %v230 = vld [vmem:[%s220 + $0x8] sm:$0xff]
      %v231 = vld [vmem:[%s220 + $0x10] sm:$0xff]
      %v232 = vld [vmem:[%s220 + $0x18] sm:$0xff]
      %v233 = vld [vmem:[%s220 + $0x20] sm:$0xff]
      %v234 = vld [vmem:[%s220 + $0x28] sm:$0xff]
      %v235 = vld [vmem:[%s220 + $0x30] sm:$0xff]
      %v236 = vld [vmem:[%s220 + $0x38] sm:$0xff]
      %v237 = vpack.c.bf16 %v230, %v229
      %v238 = vpack.c.bf16 %v232, %v231
      %v239 = vpack.c.bf16 %v234, %v233
      %v240 = vpack.c.bf16 %v236, %v235
      %v241 = vld [vmem:[%s1] sm:$0xf]
      %v242 = vld [vmem:[%s2] sm:$0x1]
      %v244 = vlaneseq
      %v245 = vshrl.u32 %v244, 7
      %v246 = vsub.s32 0, %v245
      %v247 = vrot.slane %v242, %v246
      %vm249 = vcmask 64512
      %v251 = vsel %vm249, %v237, 0
      %v254 = vsel %vm249, %v238, 0
      %v257 = vsel %vm249, %v239, 0
      %v260 = vsel %vm249, %v240, 0
      %vm262 = vcmask 1043456
      %v264 = vsel %vm262, %v241, 0
      %266 = vmatprep.subr.bf16.mxu0 0
      %267 = vmatpush1.bf16.msra.mxu0 %v264
      %268 = vmatprep.subr.bf16.mxu0 0
      %269 = vmatpush1.bf16.msra.mxu0 0
      %270 = vmatprep.subr.bf16.mxu0 0
      %271 = vmatpush1.bf16.msra.mxu0 0
      %272 = vmatprep.subr.bf16.mxu0 0
      %273 = vmatpush1.bf16.msra.mxu0 0
      %274 = vmatprep.subr.bf16.mxu0 0
      %275 = vmatpush1.bf16.msra.mxu0 0
      %276 = vmatprep.subr.bf16.mxu0 0
      %277 = vmatpush1.bf16.msra.mxu0 0
      %278 = vmatprep.subr.bf16.mxu0 0
      %279 = vmatpush1.bf16.msra.mxu0 0
      %280 = vmatprep.subr.bf16.mxu0 0
      %281 = vmatpush1.bf16.msra.mxu0 0
      %282 = vmatprep.subr.bf16.mxu0 0
      %283 = vmatpush1.bf16.msra.mxu0 0
      %284 = vmatprep.subr.bf16.mxu0 0
      %285 = vmatpush1.bf16.msra.mxu0 0
      %286 = vmatprep.subr.bf16.mxu0 0
      %287 = vmatpush1.bf16.msra.mxu0 0
      %288 = vmatprep.subr.bf16.mxu0 0
      %289 = vmatpush1.bf16.msra.mxu0 0
      %290 = vmatprep.subr.bf16.mxu0 0
      %291 = vmatpush1.bf16.msra.mxu0 0
      %292 = vmatprep.subr.bf16.mxu0 0
      %293 = vmatpush1.bf16.msra.mxu0 0
      %294 = vmatprep.subr.bf16.mxu0 0
      %295 = vmatpush1.bf16.msra.mxu0 0
      %296 = vmatprep.subr.bf16.mxu0 0
      %297 = vmatpush1.bf16.msra.mxu0 0
      %298 = vmatprep.mubr.bf16.mxu0 0
      %299 = vmatmul.mubr.bf16.gmra.mrb[0].mxu0 %v251
      %v300 = vpop.f32.mrb[0].mxu0
      %v301 = vadd.f32 %v247, %v300
      %v302 = vpop.f32.mrb[0].mxu0
      %v303 = vpop.f32.mrb[0].mxu0
      %v304 = vadd.f32 %v247, %v303
      %v305 = vpop.f32.mrb[0].mxu0
      %306 = vmatprep.mubr.bf16.mxu0 0
      %307 = vmatmul.mubr.bf16.gmra.mrb[0].mxu0 %v254
      %v308 = vpop.f32.mrb[0].mxu0
      %v309 = vadd.f32 %v247, %v308
      %v310 = vpop.f32.mrb[0].mxu0
      %v311 = vpop.f32.mrb[0].mxu0
      %v312 = vadd.f32 %v247, %v311
      %v313 = vpop.f32.mrb[0].mxu0
      %314 = vmatprep.mubr.bf16.mxu0 0
      %315 = vmatmul.mubr.bf16.gmra.mrb[0].mxu0 %v257
      %v316 = vpop.f32.mrb[0].mxu0
      %v317 = vadd.f32 %v247, %v316
      %v318 = vpop.f32.mrb[0].mxu0
      %v319 = vpop.f32.mrb[0].mxu0
      %v320 = vadd.f32 %v247, %v319
      %v321 = vpop.f32.mrb[0].mxu0
      %322 = vmatprep.mubr.bf16.mxu0 0
      %323 = vmatmul.mubr.bf16.gmra.mrb[0].mxu0 %v260
      %v324 = vpop.f32.mrb[0].mxu0
      %v325 = vadd.f32 %v247, %v324
      %v326 = vpop.f32.mrb[0].mxu0
      %v327 = vpop.f32.mrb[0].mxu0
      %v328 = vadd.f32 %v247, %v327
      %v329 = vpop.f32.mrb[0].mxu0
      %330 = vdwg.mxu0
      %v331 = vmul.f32 %v301, 0.01
      %v332 = vmul.f32 %v304, 0.01
      %v333 = vmul.f32 %v309, 0.01
      %v334 = vmul.f32 %v312, 0.01
      %v335 = vmul.f32 %v317, 0.01
      %v336 = vmul.f32 %v320, 0.01
      %v337 = vmul.f32 %v325, 0.01
      %v338 = vmul.f32 %v328, 0.01
      %v339 = vmax.f32 %v301, %v331
      %v340 = vmax.f32 %v304, %v332
      %v341 = vmax.f32 %v309, %v333
      %v342 = vmax.f32 %v312, %v334
      %v343 = vmax.f32 %v317, %v335
      %v344 = vmax.f32 %v320, %v336
      %v345 = vmax.f32 %v325, %v337
      %v346 = vmax.f32 %v328, %v338
      %v347 = vpack.c.bf16 %v340, %v339
      %v348 = vpack.c.bf16 %v342, %v341
      %v349 = vpack.c.bf16 %v344, %v343
      %v350 = vpack.c.bf16 %v346, %v345
      %v351 = vld [vmem:[%s3] sm:$0xf]
      %v352 = vld [vmem:[%s3 + $0x4] sm:$0xf]
      %v353 = vld [vmem:[%s3 + $0x8] sm:$0xf]
      %v354 = vld [vmem:[%s3 + $0xc] sm:$0xf]
      %v355 = vld [vmem:[%s3 + $0x10] sm:$0xf]
      %v356 = vld [vmem:[%s3 + $0x14] sm:$0xf]
      %v357 = vld [vmem:[%s3 + $0x18] sm:$0xf]
      %v358 = vld [vmem:[%s3 + $0x1c] sm:$0xf]
      %v359 = vld [vmem:[%s4] sm:$0x1]
      %v361 = vlaneseq
      %v362 = vshrl.u32 %v361, 7
      %v363 = vsub.s32 0, %v362
      %v364 = vrot.slane %v359, %v363
      %v374 = vunpack.c.l.b16 %v351
      %v375 = vunpack.c.l.b16 %v352
      %v376 = vunpack.c.l.b16 %v353
      %v377 = vunpack.c.l.b16 %v354
      %v378 = vunpack.c.l.b16 %v355
      %v379 = vunpack.c.l.b16 %v356
      %v380 = vunpack.c.l.b16 %v357
      %v381 = vunpack.c.l.b16 %v358
      %v382 = vpack.c.b16 %v375, %v374
      %v383 = vpack.c.b16 %v377, %v376
      %v384 = vpack.c.b16 %v379, %v378
      %v385 = vpack.c.b16 %v381, %v380
      %vm390 = vcmask 523264
      %v392 = vsel %vm390, %v347, 0
      %v395 = vsel %vm390, %v348, 0
      %v398 = vsel %vm390, %v349, 0
      %v401 = vsel %vm390, %v350, 0
      %403 = vmatprep.subr.bf16.mxu0 0
      %404 = vmatpush1.bf16.msra.mxu0 %v382
      %405 = vmatprep.subr.bf16.mxu0 0
      %406 = vmatpush1.bf16.msra.mxu0 %v383
      %407 = vmatprep.subr.bf16.mxu0 0
      %408 = vmatpush1.bf16.msra.mxu0 %v384
      %409 = vmatprep.subr.bf16.mxu0 0
      %410 = vmatpush1.bf16.msra.mxu0 %v385
      %411 = vmatprep.subr.bf16.mxu0 0
      %412 = vmatpush1.bf16.msra.mxu0 0
      %413 = vmatprep.subr.bf16.mxu0 0
      %414 = vmatpush1.bf16.msra.mxu0 0
      %415 = vmatprep.subr.bf16.mxu0 0
      %416 = vmatpush1.bf16.msra.mxu0 0
      %417 = vmatprep.subr.bf16.mxu0 0
      %418 = vmatpush1.bf16.msra.mxu0 0
      %419 = vmatprep.subr.bf16.mxu0 0
      %420 = vmatpush1.bf16.msra.mxu0 0
      %421 = vmatprep.subr.bf16.mxu0 0
      %422 = vmatpush1.bf16.msra.mxu0 0
      %423 = vmatprep.subr.bf16.mxu0 0
      %424 = vmatpush1.bf16.msra.mxu0 0
      %425 = vmatprep.subr.bf16.mxu0 0
      %426 = vmatpush1.bf16.msra.mxu0 0
      %427 = vmatprep.subr.bf16.mxu0 0
      %428 = vmatpush1.bf16.msra.mxu0 0
      %429 = vmatprep.subr.bf16.mxu0 0
      %430 = vmatpush1.bf16.msra.mxu0 0
      %431 = vmatprep.subr.bf16.mxu0 0
      %432 = vmatpush1.bf16.msra.mxu0 0
      %433 = vmatprep.subr.bf16.mxu0 0
      %434 = vmatpush1.bf16.msra.mxu0 0
      %435 = vmatprep.mubr.bf16.mxu0 0
      %436 = vmatmul.mubr.bf16.gmra.mrb[0].mxu0 %v392
      %v437 = vpop.f32.mrb[0].mxu0
      %v438 = vadd.f32 %v364, %v437
      %v439 = vpop.f32.mrb[0].mxu0
      %v440 = vpop.f32.mrb[0].mxu0
      %v441 = vadd.f32 %v364, %v440
      %v442 = vpop.f32.mrb[0].mxu0
      %443 = vmatprep.mubr.bf16.mxu0 0
      %444 = vmatmul.mubr.bf16.gmra.mrb[0].mxu0 %v395
      %v445 = vpop.f32.mrb[0].mxu0
      %v446 = vadd.f32 %v364, %v445
      %v447 = vpop.f32.mrb[0].mxu0
      %v448 = vpop.f32.mrb[0].mxu0
      %v449 = vadd.f32 %v364, %v448
      %v450 = vpop.f32.mrb[0].mxu0
      %451 = vmatprep.mubr.bf16.mxu0 0
      %452 = vmatmul.mubr.bf16.gmra.mrb[0].mxu0 %v398
      %v453 = vpop.f32.mrb[0].mxu0
      %v454 = vadd.f32 %v364, %v453
      %v455 = vpop.f32.mrb[0].mxu0
      %v456 = vpop.f32.mrb[0].mxu0
      %v457 = vadd.f32 %v364, %v456
      %v458 = vpop.f32.mrb[0].mxu0
      %459 = vmatprep.mubr.bf16.mxu0 0
      %460 = vmatmul.mubr.bf16.gmra.mrb[0].mxu0 %v401
      %v461 = vpop.f32.mrb[0].mxu0
      %v462 = vadd.f32 %v364, %v461
      %v463 = vpop.f32.mrb[0].mxu0
      %v464 = vpop.f32.mrb[0].mxu0
      %v465 = vadd.f32 %v364, %v464
      %v466 = vpop.f32.mrb[0].mxu0
      %467 = vdwg.mxu0
      %v468 = vmul.f32 %v438, 0.01
      %v469 = vmul.f32 %v441, 0.01
      %v470 = vmul.f32 %v446, 0.01
      %v471 = vmul.f32 %v449, 0.01
      %v472 = vmul.f32 %v454, 0.01
      %v473 = vmul.f32 %v457, 0.01
      %v474 = vmul.f32 %v462, 0.01
      %v475 = vmul.f32 %v465, 0.01
      %v476 = vmax.f32 %v438, %v468
      %v477 = vmax.f32 %v441, %v469
      %v478 = vmax.f32 %v446, %v470
      %v479 = vmax.f32 %v449, %v471
      %v480 = vmax.f32 %v454, %v472
      %v481 = vmax.f32 %v457, %v473
      %v482 = vmax.f32 %v462, %v474
      %v483 = vmax.f32 %v465, %v475
      %v484 = vpack.c.bf16 %v477, %v476
      %v485 = vpack.c.bf16 %v479, %v478
      %v486 = vpack.c.bf16 %v481, %v480
      %v487 = vpack.c.bf16 %v483, %v482
      %v492 = vunpack.c.l.b16 %v484
      %v493 = vunpack.c.h.b16 %v484
      %v494 = vunpack.c.l.b16 %v485
      %v495 = vunpack.c.h.b16 %v485
      %v496 = vunpack.c.l.b16 %v486
      %v497 = vunpack.c.h.b16 %v486
      %v498 = vunpack.c.l.b16 %v487
      %v499 = vunpack.c.h.b16 %v487
      %v500 = vpack.c.b16 %v492, %v492
      %v501 = vpack.c.b16 %v493, %v493
      %v502 = vpack.c.b16 %v494, %v494
      %v503 = vpack.c.b16 %v495, %v495
      %v504 = vpack.c.b16 %v496, %v496
      %v505 = vpack.c.b16 %v497, %v497
      %v506 = vpack.c.b16 %v498, %v498
      %v507 = vpack.c.b16 %v499, %v499
      %vm516 = vcmask 519168
      %517 = vst.msk [vmem:[%s226] sm:$0xf] %vm516, %v500
      %518 = vst.msk [vmem:[%s226 + $0x4] sm:$0xf] %vm516, %v501
      %519 = vst.msk [vmem:[%s226 + $0x8] sm:$0xf] %vm516, %v502
      %520 = vst.msk [vmem:[%s226 + $0xc] sm:$0xf] %vm516, %v503
      %521 = vst.msk [vmem:[%s226 + $0x10] sm:$0xf] %vm516, %v504
      %522 = vst.msk [vmem:[%s226 + $0x14] sm:$0xf] %vm516, %v505
      %523 = vst.msk [vmem:[%s226 + $0x18] sm:$0xf] %vm516, %v506
      %524 = vst.msk [vmem:[%s226 + $0x1c] sm:$0xf] %vm516, %v507
      %s525 = smul.u32 8, %s16
      %p526 = scmp.lt.s32.totalorder %s525, 15
      %s527 = scalar_select %p526, %s525, 15
      %s528 = smul.addr %s527, 4
      %s529 = scalar_lea.vmem %s5, %s528
      // Predicated region
      $region41: #{neighbor_embedding.3} parent=39 // pred_check
        %p530 = pneg %p144
      $region42: #{neighbor_embedding.3} parent=39 // pred_check_branch
        %532 = sbr.rel (%p530) target = $region44
      $region43: #{neighbor_embedding.3} parent=39 // pred_region
        %s533 = smul.u32 8, %s16
      $region44: #{neighbor_embedding.3} parent=39 // pred_fallthru
        _
    $region40: #{neighbor_embedding.3} parent=5 // pred_fallthru
      _
    %p534 = scmp.le.s32.totalorder 2, %s11
    // Predicated region
    $region45: #{neighbor_embedding.3} parent=5 // pred_check
      %p535 = pneg %p534
    $region46: #{neighbor_embedding.3} parent=5 // pred_check_branch
      %537 = sbr.rel (%p535) target = $region48
    $region47: #{neighbor_embedding.3} parent=5 // pred_region
      %s538 = ssub.s32 %s11, 2
      // Predicated region
      $region49: #{neighbor_embedding.3} parent=47 // pred_check
        %p539 = pneg %p150
      $region50: #{neighbor_embedding.3} parent=47 // pred_check_branch
        %541 = sbr.rel (%p539) target = $region52
      $region51: #{neighbor_embedding.3} parent=47 // pred_region
        %s542 = smul.u32 8, %s17
        %p543 = scmp.lt.s32.totalorder %s542, 15
        %s544 = scalar_select %p543, %s542, 15
        %s545 = smul.addr %s544, 4
        %s546 = scalar_lea.vmem %s5, %s545
      $region52: #{neighbor_embedding.3} parent=47 // pred_fallthru
        _
    $region48: #{neighbor_embedding.3} parent=5 // pred_fallthru
      _
  $region6: #{neighbor_embedding.3} parent=0 // loop_footer
    %s15 = sadd.s32 1, %s11
  $region7: #{neighbor_embedding.3} parent=0 // loop_footer_branch
    %10 = sbr.rel target = $region3
  $region8: #{neighbor_embedding.3} parent=0 // loop_exit
    _

// kernel: neighbor_embedding.5
$region0: #{neighbor_embedding.5}
  #allocation0 [shape = 'u32[]', space=smem, size = 0x4, offset = 0x4, fixed_abs, tag = 'smem constant byte address 0x4 - core index']
  #allocation1 [shape = 'u32[144,128]{1,0:T(1,128)}', space=vmem, size = 0x12000, scoped, tag = 'internal scratch']
  %s0 = inlined_call_operand.vmem [shape: bf16[128,64], index: 0, kind: input, shape index: {}]
  %s1 = inlined_call_operand.vmem [shape: bf16[16,128,64], index: 1, kind: input, shape index: {}]
  %s2 = inlined_call_operand.vmem [shape: bf16[64,128], index: 2, kind: input, shape index: {}]
  %s3 = inlined_call_operand.vmem [shape: bf16[64,128], index: 3, kind: input, shape index: {}]
  %s4 = inlined_call_operand.vmem [shape: f32[1,128], index: 4, kind: input, shape index: {}]
  %s5 = inlined_call_operand.vmem [shape: bf16[128,128], index: 5, kind: input, shape index: {}]
  %s6 = inlined_call_operand.vmem [shape: f32[1,128], index: 6, kind: input, shape index: {}]
  %s7 = inlined_call_operand.hbm [shape: f32[128,128], index: 7, kind: output, shape index: {}]
  %s8 = sld [smem:[#allocation0]]
  $region102: #{neighbor_embedding.5} parent=0
    _
  %s10 = ssub.s32 1, %s8
  %s11 = scalar_select 0, %s10, %s8
  $region1: #{neighbor_embedding.5} parent=0
    #allocation2 [shape = 'u8[524288]{0}', space=vmem, size = 0x80000, scoped, tag = 'input window, operand 1']
    #allocation3 [shape = 'u8[65536]{0}', space=vmem, size = 0x10000, scoped, tag = 'output window, operand 0']
    #allocation4 [shape = 's32[2]{0}', space=sflag, size = 0x8, scoped, tag = 'scoped memory for neighbor_embedding.5']
    %12 = vsyncpa [#allocation4], 0
    %s13 = scalar_lea.sflag [#allocation4], 1
    %14 = vsyncpa %s13, 0
    loop: start=0, step=1, limit=4
    $region2: #{neighbor_embedding.5} parent=1 // loop_pre_header
      _
    $region3: #{neighbor_embedding.5} parent=1 // loop_header
      %s16 = sphi 0, %s20
      %p17 = scmp.ge.s32.totalorder %s16, 4
      %s26 = sphi 0, %s28
      %s29 = sphi 0, %s26
      %s30 = sphi 0, %s29
      %s46 = sphi 0, %s30
      %s52 = sphi 0, %s54
      %s55 = sphi 0, %s52
      %s56 = sphi 0, %s55
      %s72 = sphi 0, %s56
      %s76 = sphi 0, %s76
      %s78 = sphi 0, %s76
      %s79 = sphi 0, %s78
      %s93 = sphi 0, %s79
      %s97 = sphi 0, %s97
      %s99 = sphi 0, %s97
      %s100 = sphi 0, %s99
      %s114 = sphi 0, %s100
      %s118 = sphi 0, %s118
      %s120 = sphi 0, %s118
      %s121 = sphi 0, %s120
      %s135 = sphi 0, %s121
      %s139 = sphi 0, %s139
      %s141 = sphi 0, %s139
      %s142 = sphi 0, %s141
      %s156 = sphi 0, %s142
      %s160 = sphi 0, %s160
      %s162 = sphi 0, %s160
      %s163 = sphi 0, %s162
      %s177 = sphi 0, %s163
      %s183 = sphi 0, %s185
      %s186 = sphi 0, %s183
      %s187 = sphi 0, %s186
      %s203 = sphi 0, %s187
    $region4: #{neighbor_embedding.5} parent=1 // loop_header_branch
      %19 = sbr.rel (%p17) target = $region8
    $region5: #{neighbor_embedding.5} parent=1 // loop_body
      %s21 = ssub.s32 %s16, 1
      %s22 = ssub.s32 %s16, 2
      %s23 = sadd.s32 %s16, 1
      %s24 = ssub.s32 %s16, %s23
      %p25 = scmp.eq.s32.totalorder %s24, 0
      %s27 = sadd.s32 %s26, 1
      %s28 = scalar_select %p25, %s26, %s27
      %p31 = pneg %p25
      %p32 = scmp.eq.s32.totalorder %s16, 1
      %p33 = por %p31, %p32
      %p34 = scmp.ne.s32.totalorder %s26, %s29
      %p35 = scmp.eq.s32.totalorder %s16, 0
      %p36 = por %p34, %p35
      %p37 = scmp.ne.s32.totalorder %s26, %s29
      %p38 = scmp.eq.s32.totalorder %s21, 1
      %p39 = por %p37, %p38
      %p40 = scmp.ne.s32.totalorder %s29, %s30
      %p41 = scmp.eq.s32.totalorder %s21, 0
      %p42 = por %p40, %p41
      %p43 = scmp.ne.s32.totalorder %s29, %s30
      %p44 = scmp.eq.s32.totalorder %s22, 1
      %p45 = por %p43, %p44
      %p47 = scmp.ne.s32.totalorder %s30, %s46
      %p48 = scmp.eq.s32.totalorder %s22, 0
      %p49 = por %p47, %p48
      %s50 = ssub.s32 %s16, %s23
      %p51 = scmp.eq.s32.totalorder %s50, 0
      %s53 = sadd.s32 %s52, 1
      %s54 = scalar_select %p51, %s52, %s53
      %p57 = pneg %p51
      %p58 = scmp.eq.s32.totalorder %s16, 1
      %p59 = por %p57, %p58
      %p60 = scmp.ne.s32.totalorder %s52, %s55
      %p61 = scmp.eq.s32.totalorder %s16, 0
      %p62 = por %p60, %p61
      %p63 = scmp.ne.s32.totalorder %s52, %s55
      %p64 = scmp.eq.s32.totalorder %s21, 1
      %p65 = por %p63, %p64
      %p66 = scmp.ne.s32.totalorder %s55, %s56
      %p67 = scmp.eq.s32.totalorder %s21, 0
      %p68 = por %p66, %p67
      %p69 = scmp.ne.s32.totalorder %s55, %s56
      %p70 = scmp.eq.s32.totalorder %s22, 1
      %p71 = por %p69, %p70
      %p73 = scmp.ne.s32.totalorder %s56, %s72
      %p74 = scmp.eq.s32.totalorder %s22, 0
      %p75 = por %p73, %p74
      %s77 = sadd.s32 %s76, 1
      %p80 = scmp.eq.s32.totalorder %s16, 1
      %p81 = scmp.ne.s32.totalorder %s76, %s78
      %p82 = scmp.eq.s32.totalorder %s16, 0
      %p83 = por %p81, %p82
      %p84 = scmp.ne.s32.totalorder %s76, %s78
      %p85 = scmp.eq.s32.totalorder %s21, 1
      %p86 = por %p84, %p85
      %p87 = scmp.ne.s32.totalorder %s78, %s79
      %p88 = scmp.eq.s32.totalorder %s21, 0
      %p89 = por %p87, %p88
      %p90 = scmp.ne.s32.totalorder %s78, %s79
      %p91 = scmp.eq.s32.totalorder %s22, 1
      %p92 = por %p90, %p91
      %p94 = scmp.ne.s32.totalorder %s79, %s93
      %p95 = scmp.eq.s32.totalorder %s22, 0
      %p96 = por %p94, %p95
      %s98 = sadd.s32 %s97, 1
      %p101 = scmp.eq.s32.totalorder %s16, 1
      %p102 = scmp.ne.s32.totalorder %s97, %s99
      %p103 = scmp.eq.s32.totalorder %s16, 0
      %p104 = por %p102, %p103
      %p105 = scmp.ne.s32.totalorder %s97, %s99
      %p106 = scmp.eq.s32.totalorder %s21, 1
      %p107 = por %p105, %p106
      %p108 = scmp.ne.s32.totalorder %s99, %s100
      %p109 = scmp.eq.s32.totalorder %s21, 0
      %p110 = por %p108, %p109
      %p111 = scmp.ne.s32.totalorder %s99, %s100
      %p112 = scmp.eq.s32.totalorder %s22, 1
      %p113 = por %p111, %p112
      %p115 = scmp.ne.s32.totalorder %s100, %s114
      %p116 = scmp.eq.s32.totalorder %s22, 0
      %p117 = por %p115, %p116
      %s119 = sadd.s32 %s118, 1
      %p122 = scmp.eq.s32.totalorder %s16, 1
      %p123 = scmp.ne.s32.totalorder %s118, %s120
      %p124 = scmp.eq.s32.totalorder %s16, 0
      %p125 = por %p123, %p124
      %p126 = scmp.ne.s32.totalorder %s118, %s120
      %p127 = scmp.eq.s32.totalorder %s21, 1
      %p128 = por %p126, %p127
      %p129 = scmp.ne.s32.totalorder %s120, %s121
      %p130 = scmp.eq.s32.totalorder %s21, 0
      %p131 = por %p129, %p130
      %p132 = scmp.ne.s32.totalorder %s120, %s121
      %p133 = scmp.eq.s32.totalorder %s22, 1
      %p134 = por %p132, %p133
      %p136 = scmp.ne.s32.totalorder %s121, %s135
      %p137 = scmp.eq.s32.totalorder %s22, 0
      %p138 = por %p136, %p137
      %s140 = sadd.s32 %s139, 1
      %p143 = scmp.eq.s32.totalorder %s16, 1
      %p144 = scmp.ne.s32.totalorder %s139, %s141
      %p145 = scmp.eq.s32.totalorder %s16, 0
      %p146 = por %p144, %p145
      %p147 = scmp.ne.s32.totalorder %s139, %s141
      %p148 = scmp.eq.s32.totalorder %s21, 1
      %p149 = por %p147, %p148
      %p150 = scmp.ne.s32.totalorder %s141, %s142
      %p151 = scmp.eq.s32.totalorder %s21, 0
      %p152 = por %p150, %p151
      %p153 = scmp.ne.s32.totalorder %s141, %s142
      %p154 = scmp.eq.s32.totalorder %s22, 1
      %p155 = por %p153, %p154
      %p157 = scmp.ne.s32.totalorder %s142, %s156
      %p158 = scmp.eq.s32.totalorder %s22, 0
      %p159 = por %p157, %p158
      %s161 = sadd.s32 %s160, 1
      %p164 = scmp.eq.s32.totalorder %s16, 1
      %p165 = scmp.ne.s32.totalorder %s160, %s162
      %p166 = scmp.eq.s32.totalorder %s16, 0
      %p167 = por %p165, %p166
      %p168 = scmp.ne.s32.totalorder %s160, %s162
      %p169 = scmp.eq.s32.totalorder %s21, 1
      %p170 = por %p168, %p169
      %p171 = scmp.ne.s32.totalorder %s162, %s163
      %p172 = scmp.eq.s32.totalorder %s21, 0
      %p173 = por %p171, %p172
      %p174 = scmp.ne.s32.totalorder %s162, %s163
      %p175 = scmp.eq.s32.totalorder %s22, 1
      %p176 = por %p174, %p175
      %p178 = scmp.ne.s32.totalorder %s163, %s177
      %p179 = scmp.eq.s32.totalorder %s22, 0
      %p180 = por %p178, %p179
      %s181 = ssub.s32 %s16, %s23
      %p182 = scmp.eq.s32.totalorder %s181, 0
      %s184 = sadd.s32 %s183, 1
      %s185 = scalar_select %p182, %s183, %s184
      %p188 = pneg %p182
      %p189 = scmp.eq.s32.totalorder %s16, 1
      %p190 = por %p188, %p189
      %p191 = scmp.ne.s32.totalorder %s183, %s186
      %p192 = scmp.eq.s32.totalorder %s16, 0
      %p193 = por %p191, %p192
      %p194 = scmp.ne.s32.totalorder %s183, %s186
      %p195 = scmp.eq.s32.totalorder %s21, 1
      %p196 = por %p194, %p195
      %p197 = scmp.ne.s32.totalorder %s186, %s187
      %p198 = scmp.eq.s32.totalorder %s21, 0
      %p199 = por %p197, %p198
      %p200 = scmp.ne.s32.totalorder %s186, %s187
      %p201 = scmp.eq.s32.totalorder %s22, 1
      %p202 = por %p200, %p201
      %p204 = scmp.ne.s32.totalorder %s187, %s203
      %p205 = scmp.eq.s32.totalorder %s22, 0
      %p206 = por %p204, %p205
      %p207 = scmp.le.s32.totalorder 1, %s16
      %p208 = scmp.lt.s32.totalorder %s16, 3
      %p209 = pnand %p207, %p208
      %p210 = pneg %p209
      // Predicated region
      $region9: #{neighbor_embedding.5} parent=5 // pred_check
        _
      $region10: #{neighbor_embedding.5} parent=5 // pred_check_branch
        %212 = sbr.rel (%p209) target = $region12
      $region11: #{neighbor_embedding.5} parent=5 // pred_region
        %s213 = ssub.s32 %s16, 1
        // Predicated region
        $region13: #{neighbor_embedding.5} parent=11 // pred_check
          %p214 = pneg %p89
        $region14: #{neighbor_embedding.5} parent=11 // pred_check_branch
          %216 = sbr.rel (%p214) target = $region16
        $region15: #{neighbor_embedding.5} parent=11 // pred_region
          _
        $region16: #{neighbor_embedding.5} parent=11 // pred_fallthru
          _
        // Predicated region
        $region17: #{neighbor_embedding.5} parent=11 // pred_check
          %p217 = pneg %p110
        $region18: #{neighbor_embedding.5} parent=11 // pred_check_branch
          %219 = sbr.rel (%p217) target = $region20
        $region19: #{neighbor_embedding.5} parent=11 // pred_region
          _
        $region20: #{neighbor_embedding.5} parent=11 // pred_fallthru
          _
        // Predicated region
        $region21: #{neighbor_embedding.5} parent=11 // pred_check
          %p220 = pneg %p131
        $region22: #{neighbor_embedding.5} parent=11 // pred_check_branch
          %222 = sbr.rel (%p220) target = $region24
        $region23: #{neighbor_embedding.5} parent=11 // pred_region
          _
        $region24: #{neighbor_embedding.5} parent=11 // pred_fallthru
          _
        // Predicated region
        $region25: #{neighbor_embedding.5} parent=11 // pred_check
          %p223 = pneg %p152
        $region26: #{neighbor_embedding.5} parent=11 // pred_check_branch
          %225 = sbr.rel (%p223) target = $region28
        $region27: #{neighbor_embedding.5} parent=11 // pred_region
          _
        $region28: #{neighbor_embedding.5} parent=11 // pred_fallthru
          _
        // Predicated region
        $region29: #{neighbor_embedding.5} parent=11 // pred_check
          %p226 = pneg %p173
        $region30: #{neighbor_embedding.5} parent=11 // pred_check_branch
          %228 = sbr.rel (%p226) target = $region32
        $region31: #{neighbor_embedding.5} parent=11 // pred_region
          _
        $region32: #{neighbor_embedding.5} parent=11 // pred_fallthru
          _
      $region12: #{neighbor_embedding.5} parent=5 // pred_fallthru
        _
      %p229 = scmp.lt.s32.totalorder %s16, 2
      // Predicated region
      $region33: #{neighbor_embedding.5} parent=5 // pred_check
        %p230 = pneg %p229
      $region34: #{neighbor_embedding.5} parent=5 // pred_check_branch
        %232 = sbr.rel (%p230) target = $region36
      $region35: #{neighbor_embedding.5} parent=5 // pred_region
        // Predicated region
        $region37: #{neighbor_embedding.5} parent=35 // pred_check
          %p233 = pneg %p36
        $region38: #{neighbor_embedding.5} parent=35 // pred_check_branch
          %235 = sbr.rel (%p233) target = $region40
        $region39: #{neighbor_embedding.5} parent=35 // pred_region
          %s236 = smul.u32 8, %s16
          %p237 = scmp.lt.s32.totalorder %s236, 15
          %s238 = scalar_select %p237, %s236, 15
          %s239 = smul.addr %s238, 4
          %s240 = scalar_lea.vmem %s0, %s239
          %s241 = smul.u32 8, %s16
        $region40: #{neighbor_embedding.5} parent=35 // pred_fallthru
          _
        // Predicated region
        $region41: #{neighbor_embedding.5} parent=35 // pred_check
          %p242 = pneg %p62
        $region42: #{neighbor_embedding.5} parent=35 // pred_check_branch
          %244 = sbr.rel (%p242) target = $region44
        $region43: #{neighbor_embedding.5} parent=35 // pred_region
          %s245 = sand.u32 %s52, 1
          %s246 = sand.u32 %s52, 1
          %s247 = smul.addr %s246, 512
          %s248 = scalar_lea.vmem [#allocation2], %s247
          %s249 = smul.u32 8, %s16
          %s250 = smul.addr %s249, 4
          %s251 = scalar_lea.vmem %s1, %s250
          // Predicated region
          $region45: #{neighbor_embedding.5} parent=43 // pred_check
            _
          $region46: #{neighbor_embedding.5} parent=43 // pred_check_branch
            %253 = sbr.rel (0) target = $region48
          $region47: #{neighbor_embedding.5} parent=43 // pred_region
            // Predicated region
            $region49: #{neighbor_embedding.5} parent=47 // pred_check
              _
            $region50: #{neighbor_embedding.5} parent=47 // pred_check_branch
              %255 = sbr.rel target = $region52
            $region51: #{neighbor_embedding.5} parent=47 // pred_region
              // Predicated region
              $region64: #{neighbor_embedding.5} parent=51 // pred_check
                _
              $region65: #{neighbor_embedding.5} parent=51 // pred_check_branch
                %524 = sbr.rel (0) target = $region67
              $region66: #{neighbor_embedding.5} parent=51 // pred_region
                loop: start=0, step=1, limit=1
                $region68: #{neighbor_embedding.5} parent=66 // loop_pre_header
                  _
                $region69: #{neighbor_embedding.5} parent=66 // loop_header
                  %s526 = sphi 0, %s530
                  %p527 = scmp.ge.s32.totalorder %s526, 1
                  %s531 = sphi %s251, %s251
                  %s532 = sphi %s248, %s248
                $region70: #{neighbor_embedding.5} parent=66 // loop_header_branch
                  %529 = sbr.rel (%p527) target = $region74
                $region71: #{neighbor_embedding.5} parent=66 // loop_body
                  _
                $region72: #{neighbor_embedding.5} parent=66 // loop_footer
                  %s530 = sadd.s32 1, %s526
                $region73: #{neighbor_embedding.5} parent=66 // loop_footer_branch
                  %525 = sbr.rel target = $region69
                $region74: #{neighbor_embedding.5} parent=66 // loop_exit
                  _
                loop: start=0, step=1, limit=1
                $region75: #{neighbor_embedding.5} parent=66 // loop_pre_header
                  _
                $region76: #{neighbor_embedding.5} parent=66 // loop_header
                  %s535 = sphi 0, %s539
                  %p536 = scmp.ge.s32.totalorder %s535, 1
                  %s540 = sphi %s251, %s251
                  %s541 = sphi %s248, %s248
                $region77: #{neighbor_embedding.5} parent=66 // loop_header_branch
                  %538 = sbr.rel (%p536) target = $region81
                $region78: #{neighbor_embedding.5} parent=66 // loop_body
                  %v542 = vld [vmem:[%s540] sm:$0xf]
                  %543 = vst [vmem:[%s541] sm:$0xf] %v542
                  %v544 = vld [vmem:[%s540 + $0x4] sm:$0xf]
                  %545 = vst [vmem:[%s541 + $0x4] sm:$0xf] %v544
                  %v546 = vld [vmem:[%s540 + $0x8] sm:$0xf]
                  %547 = vst [vmem:[%s541 + $0x8] sm:$0xf] %v546
                  %v548 = vld [vmem:[%s540 + $0xc] sm:$0xf]
                  %549 = vst [vmem:[%s541 + $0xc] sm:$0xf] %v548
                  %v550 = vld [vmem:[%s540 + $0x10] sm:$0xf]
                  %551 = vst [vmem:[%s541 + $0x10] sm:$0xf] %v550
                  %v552 = vld [vmem:[%s540 + $0x14] sm:$0xf]
                  %553 = vst [vmem:[%s541 + $0x14] sm:$0xf] %v552
                  %v554 = vld [vmem:[%s540 + $0x18] sm:$0xf]
                  %555 = vst [vmem:[%s541 + $0x18] sm:$0xf] %v554
                  %v556 = vld [vmem:[%s540 + $0x1c] sm:$0xf]
                  %557 = vst [vmem:[%s541 + $0x1c] sm:$0xf] %v556
                  %v558 = vld [vmem:[%s540 + $0x40] sm:$0xf]
                  %559 = vst [vmem:[%s541 + $0x20] sm:$0xf] %v558
                  %v560 = vld [vmem:[%s540 + $0x44] sm:$0xf]
                  %561 = vst [vmem:[%s541 + $0x24] sm:$0xf] %v560
                  %v562 = vld [vmem:[%s540 + $0x48] sm:$0xf]
                  %563 = vst [vmem:[%s541 + $0x28] sm:$0xf] %v562
                  %v564 = vld [vmem:[%s540 + $0x4c] sm:$0xf]
                  %565 = vst [vmem:[%s541 + $0x2c] sm:$0xf] %v564
                  %v566 = vld [vmem:[%s540 + $0x50] sm:$0xf]
                  %567 = vst [vmem:[%s541 + $0x30] sm:$0xf] %v566
                  %v568 = vld [vmem:[%s540 + $0x54] sm:$0xf]
                  %569 = vst [vmem:[%s541 + $0x34] sm:$0xf] %v568
                  %v570 = vld [vmem:[%s540 + $0x58] sm:$0xf]
                  %571 = vst [vmem:[%s541 + $0x38] sm:$0xf] %v570
                  %v572 = vld [vmem:[%s540 + $0x5c] sm:$0xf]
                  %573 = vst [vmem:[%s541 + $0x3c] sm:$0xf] %v572
                  %v574 = vld [vmem:[%s540 + $0x80] sm:$0xf]
                  %575 = vst [vmem:[%s541 + $0x40] sm:$0xf] %v574
                  %v576 = vld [vmem:[%s540 + $0x84] sm:$0xf]
                  %577 = vst [vmem:[%s541 + $0x44] sm:$0xf] %v576
                  %v578 = vld [vmem:[%s540 + $0x88] sm:$0xf]
                  %579 = vst [vmem:[%s541 + $0x48] sm:$0xf] %v578
                  %v580 = vld [vmem:[%s540 + $0x8c] sm:$0xf]
                  %581 = vst [vmem:[%s541 + $0x4c] sm:$0xf] %v580
                  %v582 = vld [vmem:[%s540 + $0x90] sm:$0xf]
                  %583 = vst [vmem:[%s541 + $0x50] sm:$0xf] %v582
                  %v584 = vld [vmem:[%s540 + $0x94] sm:$0xf]
                  %585 = vst [vmem:[%s541 + $0x54] sm:$0xf] %v584
                  %v586 = vld [vmem:[%s540 + $0x98] sm:$0xf]
                  %587 = vst [vmem:[%s541 + $0x58] sm:$0xf] %v586
                  %v588 = vld [vmem:[%s540 + $0x9c] sm:$0xf]
                  %589 = vst [vmem:[%s541 + $0x5c] sm:$0xf] %v588
                  %v590 = vld [vmem:[%s540 + $0xc0] sm:$0xf]
                  %591 = vst [vmem:[%s541 + $0x60] sm:$0xf] %v590
                  %v592 = vld [vmem:[%s540 + $0xc4] sm:$0xf]
                  %593 = vst [vmem:[%s541 + $0x64] sm:$0xf] %v592
                  %v594 = vld [vmem:[%s540 + $0xc8] sm:$0xf]
                  %595 = vst [vmem:[%s541 + $0x68] sm:$0xf] %v594
                  %v596 = vld [vmem:[%s540 + $0xcc] sm:$0xf]
                  %597 = vst [vmem:[%s541 + $0x6c] sm:$0xf] %v596
                  %v598 = vld [vmem:[%s540 + $0xd0] sm:$0xf]
                  %599 = vst [vmem:[%s541 + $0x70] sm:$0xf] %v598
                  %v600 = vld [vmem:[%s540 + $0xd4] sm:$0xf]
                  %601 = vst [vmem:[%s541 + $0x74] sm:$0xf] %v600
                  %v602 = vld [vmem:[%s540 + $0xd8] sm:$0xf]
                  %603 = vst [vmem:[%s541 + $0x78] sm:$0xf] %v602
                  %v604 = vld [vmem:[%s540 + $0xdc] sm:$0xf]
                  %605 = vst [vmem:[%s541 + $0x7c] sm:$0xf] %v604
                  %v606 = vld [vmem:[%s540 + $0x100] sm:$0xf]
                  %607 = vst [vmem:[%s541 + $0x80] sm:$0xf] %v606
                  %v608 = vld [vmem:[%s540 + $0x104] sm:$0xf]
                  %609 = vst [vmem:[%s541 + $0x84] sm:$0xf] %v608
                  %v610 = vld [vmem:[%s540 + $0x108] sm:$0xf]
                  %611 = vst [vmem:[%s541 + $0x88] sm:$0xf] %v610
                  %v612 = vld [vmem:[%s540 + $0x10c] sm:$0xf]
                  %613 = vst [vmem:[%s541 + $0x8c] sm:$0xf] %v612
                  %v614 = vld [vmem:[%s540 + $0x110] sm:$0xf]
                  %615 = vst [vmem:[%s541 + $0x90] sm:$0xf] %v614
                  %v616 = vld [vmem:[%s540 + $0x114] sm:$0xf]
                  %617 = vst [vmem:[%s541 + $0x94] sm:$0xf] %v616
                  %v618 = vld [vmem:[%s540 + $0x118] sm:$0xf]
                  %619 = vst [vmem:[%s541 + $0x98] sm:$0xf] %v618
                  %v620 = vld [vmem:[%s540 + $0x11c] sm:$0xf]
                  %621 = vst [vmem:[%s541 + $0x9c] sm:$0xf] %v620
                  %v622 = vld [vmem:[%s540 + $0x140] sm:$0xf]
                  %623 = vst [vmem:[%s541 + $0xa0] sm:$0xf] %v622
                  %v624 = vld [vmem:[%s540 + $0x144] sm:$0xf]
                  %625 = vst [vmem:[%s541 + $0xa4] sm:$0xf] %v624
                  %v626 = vld [vmem:[%s540 + $0x148] sm:$0xf]
                  %627 = vst [vmem:[%s541 + $0xa8] sm:$0xf] %v626
                  %v628 = vld [vmem:[%s540 + $0x14c] sm:$0xf]
                  %629 = vst [vmem:[%s541 + $0xac] sm:$0xf] %v628
                  %v630 = vld [vmem:[%s540 + $0x150] sm:$0xf]
                  %631 = vst [vmem:[%s541 + $0xb0] sm:$0xf] %v630
                  %v632 = vld [vmem:[%s540 + $0x154] sm:$0xf]
                  %633 = vst [vmem:[%s541 + $0xb4] sm:$0xf] %v632
                  %v634 = vld [vmem:[%s540 + $0x158] sm:$0xf]
                  %635 = vst [vmem:[%s541 + $0xb8] sm:$0xf] %v634
                  %v636 = vld [vmem:[%s540 + $0x15c] sm:$0xf]
                  %637 = vst [vmem:[%s541 + $0xbc] sm:$0xf] %v636
                  %v638 = vld [vmem:[%s540 + $0x180] sm:$0xf]
                  %639 = vst [vmem:[%s541 + $0xc0] sm:$0xf] %v638
                  %v640 = vld [vmem:[%s540 + $0x184] sm:$0xf]
                  %641 = vst [vmem:[%s541 + $0xc4] sm:$0xf] %v640
                  %v642 = vld [vmem:[%s540 + $0x188] sm:$0xf]
                  %643 = vst [vmem:[%s541 + $0xc8] sm:$0xf] %v642
                  %v644 = vld [vmem:[%s540 + $0x18c] sm:$0xf]
                  %645 = vst [vmem:[%s541 + $0xcc] sm:$0xf] %v644
                  %v646 = vld [vmem:[%s540 + $0x190] sm:$0xf]
                  %647 = vst [vmem:[%s541 + $0xd0] sm:$0xf] %v646
                  %v648 = vld [vmem:[%s540 + $0x194] sm:$0xf]
                  %649 = vst [vmem:[%s541 + $0xd4] sm:$0xf] %v648
                  %v650 = vld [vmem:[%s540 + $0x198] sm:$0xf]
                  %651 = vst [vmem:[%s541 + $0xd8] sm:$0xf] %v650
                  %v652 = vld [vmem:[%s540 + $0x19c] sm:$0xf]
                  %653 = vst [vmem:[%s541 + $0xdc] sm:$0xf] %v652
                  %v654 = vld [vmem:[%s540 + $0x1c0] sm:$0xf]
                  %655 = vst [vmem:[%s541 + $0xe0] sm:$0xf] %v654
                  %v656 = vld [vmem:[%s540 + $0x1c4] sm:$0xf]
                  %657 = vst [vmem:[%s541 + $0xe4] sm:$0xf] %v656
                  %v658 = vld [vmem:[%s540 + $0x1c8] sm:$0xf]
                  %659 = vst [vmem:[%s541 + $0xe8] sm:$0xf] %v658
                  %v660 = vld [vmem:[%s540 + $0x1cc] sm:$0xf]
                  %661 = vst [vmem:[%s541 + $0xec] sm:$0xf] %v660
                  %v662 = vld [vmem:[%s540 + $0x1d0] sm:$0xf]
                  %663 = vst [vmem:[%s541 + $0xf0] sm:$0xf] %v662
                  %v664 = vld [vmem:[%s540 + $0x1d4] sm:$0xf]
                  %665 = vst [vmem:[%s541 + $0xf4] sm:$0xf] %v664
                  %v666 = vld [vmem:[%s540 + $0x1d8] sm:$0xf]
                  %667 = vst [vmem:[%s541 + $0xf8] sm:$0xf] %v666
                  %v668 = vld [vmem:[%s540 + $0x1dc] sm:$0xf]
                  %669 = vst [vmem:[%s541 + $0xfc] sm:$0xf] %v668
                  %v670 = vld [vmem:[%s540 + $0x200] sm:$0xf]
                  %671 = vst [vmem:[%s541 + $0x100] sm:$0xf] %v670
                  %v672 = vld [vmem:[%s540 + $0x204] sm:$0xf]
                  %673 = vst [vmem:[%s541 + $0x104] sm:$0xf] %v672
                  %v674 = vld [vmem:[%s540 + $0x208] sm:$0xf]
                  %675 = vst [vmem:[%s541 + $0x108] sm:$0xf] %v674
                  %v676 = vld [vmem:[%s540 + $0x20c] sm:$0xf]
                  %677 = vst [vmem:[%s541 + $0x10c] sm:$0xf] %v676
                  %v678 = vld [vmem:[%s540 + $0x210] sm:$0xf]
                  %679 = vst [vmem:[%s541 + $0x110] sm:$0xf] %v678
                  %v680 = vld [vmem:[%s540 + $0x214] sm:$0xf]
                  %681 = vst [vmem:[%s541 + $0x114] sm:$0xf] %v680
                  %v682 = vld [vmem:[%s540 + $0x218] sm:$0xf]
                  %683 = vst [vmem:[%s541 + $0x118] sm:$0xf] %v682
                  %v684 = vld [vmem:[%s540 + $0x21c] sm:$0xf]
                  %685 = vst [vmem:[%s541 + $0x11c] sm:$0xf] %v684
                  %v686 = vld [vmem:[%s540 + $0x240] sm:$0xf]
                  %687 = vst [vmem:[%s541 + $0x120] sm:$0xf] %v686
                  %v688 = vld [vmem:[%s540 + $0x244] sm:$0xf]
                  %689 = vst [vmem:[%s541 + $0x124] sm:$0xf] %v688
                  %v690 = vld [vmem:[%s540 + $0x248] sm:$0xf]
                  %691 = vst [vmem:[%s541 + $0x128] sm:$0xf] %v690
                  %v692 = vld [vmem:[%s540 + $0x24c] sm:$0xf]
                  %693 = vst [vmem:[%s541 + $0x12c] sm:$0xf] %v692
                  %v694 = vld [vmem:[%s540 + $0x250] sm:$0xf]
                  %695 = vst [vmem:[%s541 + $0x130] sm:$0xf] %v694
                  %v696 = vld [vmem:[%s540 + $0x254] sm:$0xf]
                  %697 = vst [vmem:[%s541 + $0x134] sm:$0xf] %v696
                  %v698 = vld [vmem:[%s540 + $0x258] sm:$0xf]
                  %699 = vst [vmem:[%s541 + $0x138] sm:$0xf] %v698
                  %v700 = vld [vmem:[%s540 + $0x25c] sm:$0xf]
                  %701 = vst [vmem:[%s541 + $0x13c] sm:$0xf] %v700
                  %v702 = vld [vmem:[%s540 + $0x280] sm:$0xf]
                  %703 = vst [vmem:[%s541 + $0x140] sm:$0xf] %v702
                  %v704 = vld [vmem:[%s540 + $0x284] sm:$0xf]
                  %705 = vst [vmem:[%s541 + $0x144] sm:$0xf] %v704
                  %v706 = vld [vmem:[%s540 + $0x288] sm:$0xf]
                  %707 = vst [vmem:[%s541 + $0x148] sm:$0xf] %v706
                  %v708 = vld [vmem:[%s540 + $0x28c] sm:$0xf]
                  %709 = vst [vmem:[%s541 + $0x14c] sm:$0xf] %v708
                  %v710 = vld [vmem:[%s540 + $0x290] sm:$0xf]
                  %711 = vst [vmem:[%s541 + $0x150] sm:$0xf] %v710
                  %v712 = vld [vmem:[%s540 + $0x294] sm:$0xf]
                  %713 = vst [vmem:[%s541 + $0x154] sm:$0xf] %v712
                  %v714 = vld [vmem:[%s540 + $0x298] sm:$0xf]
                  %715 = vst [vmem:[%s541 + $0x158] sm:$0xf] %v714
                  %v716 = vld [vmem:[%s540 + $0x29c] sm:$0xf]
                  %717 = vst [vmem:[%s541 + $0x15c] sm:$0xf] %v716
                  %v718 = vld [vmem:[%s540 + $0x2c0] sm:$0xf]
                  %719 = vst [vmem:[%s541 + $0x160] sm:$0xf] %v718
                  %v720 = vld [vmem:[%s540 + $0x2c4] sm:$0xf]
                  %721 = vst [vmem:[%s541 + $0x164] sm:$0xf] %v720
                  %v722 = vld [vmem:[%s540 + $0x2c8] sm:$0xf]
                  %723 = vst [vmem:[%s541 + $0x168] sm:$0xf] %v722
                  %v724 = vld [vmem:[%s540 + $0x2cc] sm:$0xf]
                  %725 = vst [vmem:[%s541 + $0x16c] sm:$0xf] %v724
                  %v726 = vld [vmem:[%s540 + $0x2d0] sm:$0xf]
                  %727 = vst [vmem:[%s541 + $0x170] sm:$0xf] %v726
                  %v728 = vld [vmem:[%s540 + $0x2d4] sm:$0xf]
                  %729 = vst [vmem:[%s541 + $0x174] sm:$0xf] %v728
                  %v730 = vld [vmem:[%s540 + $0x2d8] sm:$0xf]
                  %731 = vst [vmem:[%s541 + $0x178] sm:$0xf] %v730
                  %v732 = vld [vmem:[%s540 + $0x2dc] sm:$0xf]
                  %733 = vst [vmem:[%s541 + $0x17c] sm:$0xf] %v732
                  %v734 = vld [vmem:[%s540 + $0x300] sm:$0xf]
                  %735 = vst [vmem:[%s541 + $0x180] sm:$0xf] %v734
                  %v736 = vld [vmem:[%s540 + $0x304] sm:$0xf]
                  %737 = vst [vmem:[%s541 + $0x184] sm:$0xf] %v736
                  %v738 = vld [vmem:[%s540 + $0x308] sm:$0xf]
                  %739 = vst [vmem:[%s541 + $0x188] sm:$0xf] %v738
                  %v740 = vld [vmem:[%s540 + $0x30c] sm:$0xf]
                  %741 = vst [vmem:[%s541 + $0x18c] sm:$0xf] %v740
                  %v742 = vld [vmem:[%s540 + $0x310] sm:$0xf]
                  %743 = vst [vmem:[%s541 + $0x190] sm:$0xf] %v742
                  %v744 = vld [vmem:[%s540 + $0x314] sm:$0xf]
                  %745 = vst [vmem:[%s541 + $0x194] sm:$0xf] %v744
                  %v746 = vld [vmem:[%s540 + $0x318] sm:$0xf]
                  %747 = vst [vmem:[%s541 + $0x198] sm:$0xf] %v746
                  %v748 = vld [vmem:[%s540 + $0x31c] sm:$0xf]
                  %749 = vst [vmem:[%s541 + $0x19c] sm:$0xf] %v748
                  %v750 = vld [vmem:[%s540 + $0x340] sm:$0xf]
                  %751 = vst [vmem:[%s541 + $0x1a0] sm:$0xf] %v750
                  %v752 = vld [vmem:[%s540 + $0x344] sm:$0xf]
                  %753 = vst [vmem:[%s541 + $0x1a4] sm:$0xf] %v752
                  %v754 = vld [vmem:[%s540 + $0x348] sm:$0xf]
                  %755 = vst [vmem:[%s541 + $0x1a8] sm:$0xf] %v754
                  %v756 = vld [vmem:[%s540 + $0x34c] sm:$0xf]
                  %757 = vst [vmem:[%s541 + $0x1ac] sm:$0xf] %v756
                  %v758 = vld [vmem:[%s540 + $0x350] sm:$0xf]
                  %759 = vst [vmem:[%s541 + $0x1b0] sm:$0xf] %v758
                  %v760 = vld [vmem:[%s540 + $0x354] sm:$0xf]
                  %761 = vst [vmem:[%s541 + $0x1b4] sm:$0xf] %v760
                  %v762 = vld [vmem:[%s540 + $0x358] sm:$0xf]
                  %763 = vst [vmem:[%s541 + $0x1b8] sm:$0xf] %v762
                  %v764 = vld [vmem:[%s540 + $0x35c] sm:$0xf]
                  %765 = vst [vmem:[%s541 + $0x1bc] sm:$0xf] %v764
                  %v766 = vld [vmem:[%s540 + $0x380] sm:$0xf]
                  %767 = vst [vmem:[%s541 + $0x1c0] sm:$0xf] %v766
                  %v768 = vld [vmem:[%s540 + $0x384] sm:$0xf]
                  %769 = vst [vmem:[%s541 + $0x1c4] sm:$0xf] %v768
                  %v770 = vld [vmem:[%s540 + $0x388] sm:$0xf]
                  %771 = vst [vmem:[%s541 + $0x1c8] sm:$0xf] %v770
                  %v772 = vld [vmem:[%s540 + $0x38c] sm:$0xf]
                  %773 = vst [vmem:[%s541 + $0x1cc] sm:$0xf] %v772
                  %v774 = vld [vmem:[%s540 + $0x390] sm:$0xf]
                  %775 = vst [vmem:[%s541 + $0x1d0] sm:$0xf] %v774
                  %v776 = vld [vmem:[%s540 + $0x394] sm:$0xf]
                  %777 = vst [vmem:[%s541 + $0x1d4] sm:$0xf] %v776
                  %v778 = vld [vmem:[%s540 + $0x398] sm:$0xf]
                  %779 = vst [vmem:[%s541 + $0x1d8] sm:$0xf] %v778
                  %v780 = vld [vmem:[%s540 + $0x39c] sm:$0xf]
                  %781 = vst [vmem:[%s541 + $0x1dc] sm:$0xf] %v780
                  %v782 = vld [vmem:[%s540 + $0x3c0] sm:$0xf]
                  %783 = vst [vmem:[%s541 + $0x1e0] sm:$0xf] %v782
                  %v784 = vld [vmem:[%s540 + $0x3c4] sm:$0xf]
                  %785 = vst [vmem:[%s541 + $0x1e4] sm:$0xf] %v784
                  %v786 = vld [vmem:[%s540 + $0x3c8] sm:$0xf]
                  %787 = vst [vmem:[%s541 + $0x1e8] sm:$0xf] %v786
                  %v788 = vld [vmem:[%s540 + $0x3cc] sm:$0xf]
                  %789 = vst [vmem:[%s541 + $0x1ec] sm:$0xf] %v788
                  %v790 = vld [vmem:[%s540 + $0x3d0] sm:$0xf]
                  %791 = vst [vmem:[%s541 + $0x1f0] sm:$0xf] %v790
                  %v792 = vld [vmem:[%s540 + $0x3d4] sm:$0xf]
                  %793 = vst [vmem:[%s541 + $0x1f4] sm:$0xf] %v792
                  %v794 = vld [vmem:[%s540 + $0x3d8] sm:$0xf]
                  %795 = vst [vmem:[%s541 + $0x1f8] sm:$0xf] %v794
                  %v796 = vld [vmem:[%s540 + $0x3dc] sm:$0xf]
                  %797 = vst [vmem:[%s541 + $0x1fc] sm:$0xf] %v796
                $region79: #{neighbor_embedding.5} parent=66 // loop_footer
                  %s539 = sadd.s32 1, %s535
                $region80: #{neighbor_embedding.5} parent=66 // loop_footer_branch
                  %534 = sbr.rel target = $region76
                $region81: #{neighbor_embedding.5} parent=66 // loop_exit
                  _
              $region67: #{neighbor_embedding.5} parent=51 // pred_fallthru
                _
            $region52: #{neighbor_embedding.5} parent=47 // pred_fallthru
              _
            // Predicated region
            $region53: #{neighbor_embedding.5} parent=47 // pred_check
              _
            $region54: #{neighbor_embedding.5} parent=47 // pred_check_branch
              %257 = sbr.rel (0) target = $region56
            $region55: #{neighbor_embedding.5} parent=47 // pred_region
              loop: start=0, step=1, limit=1
              $region57: #{neighbor_embedding.5} parent=55 // loop_pre_header
                _
              $region58: #{neighbor_embedding.5} parent=55 // loop_header
                %s260 = sphi 0, %s264
                %p261 = scmp.ge.s32.totalorder %s260, 1
                %s265 = sphi %s251, %s251
                %s266 = sphi %s248, %s248
              $region59: #{neighbor_embedding.5} parent=55 // loop_header_branch
                %263 = sbr.rel (%p261) target = $region63
              $region60: #{neighbor_embedding.5} parent=55 // loop_body
                %v267 = vld [vmem:[%s265] sm:$0xf]
                %268 = vst [vmem:[%s266] sm:$0xf] %v267
                %v269 = vld [vmem:[%s265 + $0x4] sm:$0xf]
                %270 = vst [vmem:[%s266 + $0x4] sm:$0xf] %v269
                %v271 = vld [vmem:[%s265 + $0x8] sm:$0xf]
                %272 = vst [vmem:[%s266 + $0x8] sm:$0xf] %v271
                %v273 = vld [vmem:[%s265 + $0xc] sm:$0xf]
                %274 = vst [vmem:[%s266 + $0xc] sm:$0xf] %v273
                %v275 = vld [vmem:[%s265 + $0x10] sm:$0xf]
                %276 = vst [vmem:[%s266 + $0x10] sm:$0xf] %v275
                %v277 = vld [vmem:[%s265 + $0x14] sm:$0xf]
                %278 = vst [vmem:[%s266 + $0x14] sm:$0xf] %v277
                %v279 = vld [vmem:[%s265 + $0x18] sm:$0xf]
                %280 = vst [vmem:[%s266 + $0x18] sm:$0xf] %v279
                %v281 = vld [vmem:[%s265 + $0x1c] sm:$0xf]
                %282 = vst [vmem:[%s266 + $0x1c] sm:$0xf] %v281
                %v283 = vld [vmem:[%s265 + $0x40] sm:$0xf]
                %284 = vst [vmem:[%s266 + $0x20] sm:$0xf] %v283
                %v285 = vld [vmem:[%s265 + $0x44] sm:$0xf]
                %286 = vst [vmem:[%s266 + $0x24] sm:$0xf] %v285
                %v287 = vld [vmem:[%s265 + $0x48] sm:$0xf]
                %288 = vst [vmem:[%s266 + $0x28] sm:$0xf] %v287
                %v289 = vld [vmem:[%s265 + $0x4c] sm:$0xf]
                %290 = vst [vmem:[%s266 + $0x2c] sm:$0xf] %v289
                %v291 = vld [vmem:[%s265 + $0x50] sm:$0xf]
                %292 = vst [vmem:[%s266 + $0x30] sm:$0xf] %v291
                %v293 = vld [vmem:[%s265 + $0x54] sm:$0xf]
                %294 = vst [vmem:[%s266 + $0x34] sm:$0xf] %v293
                %v295 = vld [vmem:[%s265 + $0x58] sm:$0xf]
                %296 = vst [vmem:[%s266 + $0x38] sm:$0xf] %v295
                %v297 = vld [vmem:[%s265 + $0x5c] sm:$0xf]
                %298 = vst [vmem:[%s266 + $0x3c] sm:$0xf] %v297
                %v299 = vld [vmem:[%s265 + $0x80] sm:$0xf]
                %300 = vst [vmem:[%s266 + $0x40] sm:$0xf] %v299
                %v301 = vld [vmem:[%s265 + $0x84] sm:$0xf]
                %302 = vst [vmem:[%s266 + $0x44] sm:$0xf] %v301
                %v303 = vld [vmem:[%s265 + $0x88] sm:$0xf]
                %304 = vst [vmem:[%s266 + $0x48] sm:$0xf] %v303
                %v305 = vld [vmem:[%s265 + $0x8c] sm:$0xf]
                %306 = vst [vmem:[%s266 + $0x4c] sm:$0xf] %v305
                %v307 = vld [vmem:[%s265 + $0x90] sm:$0xf]
                %308 = vst [vmem:[%s266 + $0x50] sm:$0xf] %v307
                %v309 = vld [vmem:[%s265 + $0x94] sm:$0xf]
                %310 = vst [vmem:[%s266 + $0x54] sm:$0xf] %v309
                %v311 = vld [vmem:[%s265 + $0x98] sm:$0xf]
                %312 = vst [vmem:[%s266 + $0x58] sm:$0xf] %v311
                %v313 = vld [vmem:[%s265 + $0x9c] sm:$0xf]
                %314 = vst [vmem:[%s266 + $0x5c] sm:$0xf] %v313
                %v315 = vld [vmem:[%s265 + $0xc0] sm:$0xf]
                %316 = vst [vmem:[%s266 + $0x60] sm:$0xf] %v315
                %v317 = vld [vmem:[%s265 + $0xc4] sm:$0xf]
                %318 = vst [vmem:[%s266 + $0x64] sm:$0xf] %v317
                %v319 = vld [vmem:[%s265 + $0xc8] sm:$0xf]
                %320 = vst [vmem:[%s266 + $0x68] sm:$0xf] %v319
                %v321 = vld [vmem:[%s265 + $0xcc] sm:$0xf]
                %322 = vst [vmem:[%s266 + $0x6c] sm:$0xf] %v321
                %v323 = vld [vmem:[%s265 + $0xd0] sm:$0xf]
                %324 = vst [vmem:[%s266 + $0x70] sm:$0xf] %v323
                %v325 = vld [vmem:[%s265 + $0xd4] sm:$0xf]
                %326 = vst [vmem:[%s266 + $0x74] sm:$0xf] %v325
                %v327 = vld [vmem:[%s265 + $0xd8] sm:$0xf]
                %328 = vst [vmem:[%s266 + $0x78] sm:$0xf] %v327
                %v329 = vld [vmem:[%s265 + $0xdc] sm:$0xf]
                %330 = vst [vmem:[%s266 + $0x7c] sm:$0xf] %v329
                %v331 = vld [vmem:[%s265 + $0x100] sm:$0xf]
                %332 = vst [vmem:[%s266 + $0x80] sm:$0xf] %v331
                %v333 = vld [vmem:[%s265 + $0x104] sm:$0xf]
                %334 = vst [vmem:[%s266 + $0x84] sm:$0xf] %v333
                %v335 = vld [vmem:[%s265 + $0x108] sm:$0xf]
                %336 = vst [vmem:[%s266 + $0x88] sm:$0xf] %v335
                %v337 = vld [vmem:[%s265 + $0x10c] sm:$0xf]
                %338 = vst [vmem:[%s266 + $0x8c] sm:$0xf] %v337
                %v339 = vld [vmem:[%s265 + $0x110] sm:$0xf]
                %340 = vst [vmem:[%s266 + $0x90] sm:$0xf] %v339
                %v341 = vld [vmem:[%s265 + $0x114] sm:$0xf]
                %342 = vst [vmem:[%s266 + $0x94] sm:$0xf] %v341
                %v343 = vld [vmem:[%s265 + $0x118] sm:$0xf]
                %344 = vst [vmem:[%s266 + $0x98] sm:$0xf] %v343
                %v345 = vld [vmem:[%s265 + $0x11c] sm:$0xf]
                %346 = vst [vmem:[%s266 + $0x9c] sm:$0xf] %v345
                %v347 = vld [vmem:[%s265 + $0x140] sm:$0xf]
                %348 = vst [vmem:[%s266 + $0xa0] sm:$0xf] %v347
                %v349 = vld [vmem:[%s265 + $0x144] sm:$0xf]
                %350 = vst [vmem:[%s266 + $0xa4] sm:$0xf] %v349
                %v351 = vld [vmem:[%s265 + $0x148] sm:$0xf]
                %352 = vst [vmem:[%s266 + $0xa8] sm:$0xf] %v351
                %v353 = vld [vmem:[%s265 + $0x14c] sm:$0xf]
                %354 = vst [vmem:[%s266 + $0xac] sm:$0xf] %v353
                %v355 = vld [vmem:[%s265 + $0x150] sm:$0xf]
                %356 = vst [vmem:[%s266 + $0xb0] sm:$0xf] %v355
                %v357 = vld [vmem:[%s265 + $0x154] sm:$0xf]
                %358 = vst [vmem:[%s266 + $0xb4] sm:$0xf] %v357
                %v359 = vld [vmem:[%s265 + $0x158] sm:$0xf]
                %360 = vst [vmem:[%s266 + $0xb8] sm:$0xf] %v359
                %v361 = vld [vmem:[%s265 + $0x15c] sm:$0xf]
                %362 = vst [vmem:[%s266 + $0xbc] sm:$0xf] %v361
                %v363 = vld [vmem:[%s265 + $0x180] sm:$0xf]
                %364 = vst [vmem:[%s266 + $0xc0] sm:$0xf] %v363
                %v365 = vld [vmem:[%s265 + $0x184] sm:$0xf]
                %366 = vst [vmem:[%s266 + $0xc4] sm:$0xf] %v365
                %v367 = vld [vmem:[%s265 + $0x188] sm:$0xf]
                %368 = vst [vmem:[%s266 + $0xc8] sm:$0xf] %v367
                %v369 = vld [vmem:[%s265 + $0x18c] sm:$0xf]
                %370 = vst [vmem:[%s266 + $0xcc] sm:$0xf] %v369
                %v371 = vld [vmem:[%s265 + $0x190] sm:$0xf]
                %372 = vst [vmem:[%s266 + $0xd0] sm:$0xf] %v371
                %v373 = vld [vmem:[%s265 + $0x194] sm:$0xf]
                %374 = vst [vmem:[%s266 + $0xd4] sm:$0xf] %v373
                %v375 = vld [vmem:[%s265 + $0x198] sm:$0xf]
                %376 = vst [vmem:[%s266 + $0xd8] sm:$0xf] %v375
                %v377 = vld [vmem:[%s265 + $0x19c] sm:$0xf]
                %378 = vst [vmem:[%s266 + $0xdc] sm:$0xf] %v377
                %v379 = vld [vmem:[%s265 + $0x1c0] sm:$0xf]
                %380 = vst [vmem:[%s266 + $0xe0] sm:$0xf] %v379
                %v381 = vld [vmem:[%s265 + $0x1c4] sm:$0xf]
                %382 = vst [vmem:[%s266 + $0xe4] sm:$0xf] %v381
                %v383 = vld [vmem:[%s265 + $0x1c8] sm:$0xf]
                %384 = vst [vmem:[%s266 + $0xe8] sm:$0xf] %v383
                %v385 = vld [vmem:[%s265 + $0x1cc] sm:$0xf]
                %386 = vst [vmem:[%s266 + $0xec] sm:$0xf] %v385
                %v387 = vld [vmem:[%s265 + $0x1d0] sm:$0xf]
                %388 = vst [vmem:[%s266 + $0xf0] sm:$0xf] %v387
                %v389 = vld [vmem:[%s265 + $0x1d4] sm:$0xf]
                %390 = vst [vmem:[%s266 + $0xf4] sm:$0xf] %v389
                %v391 = vld [vmem:[%s265 + $0x1d8] sm:$0xf]
                %392 = vst [vmem:[%s266 + $0xf8] sm:$0xf] %v391
                %v393 = vld [vmem:[%s265 + $0x1dc] sm:$0xf]
                %394 = vst [vmem:[%s266 + $0xfc] sm:$0xf] %v393
                %v395 = vld [vmem:[%s265 + $0x200] sm:$0xf]
                %396 = vst [vmem:[%s266 + $0x100] sm:$0xf] %v395
                %v397 = vld [vmem:[%s265 + $0x204] sm:$0xf]
                %398 = vst [vmem:[%s266 + $0x104] sm:$0xf] %v397
                %v399 = vld [vmem:[%s265 + $0x208] sm:$0xf]
                %400 = vst [vmem:[%s266 + $0x108] sm:$0xf] %v399
                %v401 = vld [vmem:[%s265 + $0x20c] sm:$0xf]
                %402 = vst [vmem:[%s266 + $0x10c] sm:$0xf] %v401
                %v403 = vld [vmem:[%s265 + $0x210] sm:$0xf]
                %404 = vst [vmem:[%s266 + $0x110] sm:$0xf] %v403
                %v405 = vld [vmem:[%s265 + $0x214] sm:$0xf]
                %406 = vst [vmem:[%s266 + $0x114] sm:$0xf] %v405
                %v407 = vld [vmem:[%s265 + $0x218] sm:$0xf]
                %408 = vst [vmem:[%s266 + $0x118] sm:$0xf] %v407
                %v409 = vld [vmem:[%s265 + $0x21c] sm:$0xf]
                %410 = vst [vmem:[%s266 + $0x11c] sm:$0xf] %v409
                %v411 = vld [vmem:[%s265 + $0x240] sm:$0xf]
                %412 = vst [vmem:[%s266 + $0x120] sm:$0xf] %v411
                %v413 = vld [vmem:[%s265 + $0x244] sm:$0xf]
                %414 = vst [vmem:[%s266 + $0x124] sm:$0xf] %v413
                %v415 = vld [vmem:[%s265 + $0x248] sm:$0xf]
                %416 = vst [vmem:[%s266 + $0x128] sm:$0xf] %v415
                %v417 = vld [vmem:[%s265 + $0x24c] sm:$0xf]
                %418 = vst [vmem:[%s266 + $0x12c] sm:$0xf] %v417
                %v419 = vld [vmem:[%s265 + $0x250] sm:$0xf]
                %420 = vst [vmem:[%s266 + $0x130] sm:$0xf] %v419
                %v421 = vld [vmem:[%s265 + $0x254] sm:$0xf]
                %422 = vst [vmem:[%s266 + $0x134] sm:$0xf] %v421
                %v423 = vld [vmem:[%s265 + $0x258] sm:$0xf]
                %424 = vst [vmem:[%s266 + $0x138] sm:$0xf] %v423
                %v425 = vld [vmem:[%s265 + $0x25c] sm:$0xf]
                %426 = vst [vmem:[%s266 + $0x13c] sm:$0xf] %v425
                %v427 = vld [vmem:[%s265 + $0x280] sm:$0xf]
                %428 = vst [vmem:[%s266 + $0x140] sm:$0xf] %v427
                %v429 = vld [vmem:[%s265 + $0x284] sm:$0xf]
                %430 = vst [vmem:[%s266 + $0x144] sm:$0xf] %v429
                %v431 = vld [vmem:[%s265 + $0x288] sm:$0xf]
                %432 = vst [vmem:[%s266 + $0x148] sm:$0xf] %v431
                %v433 = vld [vmem:[%s265 + $0x28c] sm:$0xf]
                %434 = vst [vmem:[%s266 + $0x14c] sm:$0xf] %v433
                %v435 = vld [vmem:[%s265 + $0x290] sm:$0xf]
                %436 = vst [vmem:[%s266 + $0x150] sm:$0xf] %v435
                %v437 = vld [vmem:[%s265 + $0x294] sm:$0xf]
                %438 = vst [vmem:[%s266 + $0x154] sm:$0xf] %v437
                %v439 = vld [vmem:[%s265 + $0x298] sm:$0xf]
                %440 = vst [vmem:[%s266 + $0x158] sm:$0xf] %v439
                %v441 = vld [vmem:[%s265 + $0x29c] sm:$0xf]
                %442 = vst [vmem:[%s266 + $0x15c] sm:$0xf] %v441
                %v443 = vld [vmem:[%s265 + $0x2c0] sm:$0xf]
                %444 = vst [vmem:[%s266 + $0x160] sm:$0xf] %v443
                %v445 = vld [vmem:[%s265 + $0x2c4] sm:$0xf]
                %446 = vst [vmem:[%s266 + $0x164] sm:$0xf] %v445
                %v447 = vld [vmem:[%s265 + $0x2c8] sm:$0xf]
                %448 = vst [vmem:[%s266 + $0x168] sm:$0xf] %v447
                %v449 = vld [vmem:[%s265 + $0x2cc] sm:$0xf]
                %450 = vst [vmem:[%s266 + $0x16c] sm:$0xf] %v449
                %v451 = vld [vmem:[%s265 + $0x2d0] sm:$0xf]
                %452 = vst [vmem:[%s266 + $0x170] sm:$0xf] %v451
                %v453 = vld [vmem:[%s265 + $0x2d4] sm:$0xf]
                %454 = vst [vmem:[%s266 + $0x174] sm:$0xf] %v453
                %v455 = vld [vmem:[%s265 + $0x2d8] sm:$0xf]
                %456 = vst [vmem:[%s266 + $0x178] sm:$0xf] %v455
                %v457 = vld [vmem:[%s265 + $0x2dc] sm:$0xf]
                %458 = vst [vmem:[%s266 + $0x17c] sm:$0xf] %v457
                %v459 = vld [vmem:[%s265 + $0x300] sm:$0xf]
                %460 = vst [vmem:[%s266 + $0x180] sm:$0xf] %v459
                %v461 = vld [vmem:[%s265 + $0x304] sm:$0xf]
                %462 = vst [vmem:[%s266 + $0x184] sm:$0xf] %v461
                %v463 = vld [vmem:[%s265 + $0x308] sm:$0xf]
                %464 = vst [vmem:[%s266 + $0x188] sm:$0xf] %v463
                %v465 = vld [vmem:[%s265 + $0x30c] sm:$0xf]
                %466 = vst [vmem:[%s266 + $0x18c] sm:$0xf] %v465
                %v467 = vld [vmem:[%s265 + $0x310] sm:$0xf]
                %468 = vst [vmem:[%s266 + $0x190] sm:$0xf] %v467
                %v469 = vld [vmem:[%s265 + $0x314] sm:$0xf]
                %470 = vst [vmem:[%s266 + $0x194] sm:$0xf] %v469
                %v471 = vld [vmem:[%s265 + $0x318] sm:$0xf]
                %472 = vst [vmem:[%s266 + $0x198] sm:$0xf] %v471
                %v473 = vld [vmem:[%s265 + $0x31c] sm:$0xf]
                %474 = vst [vmem:[%s266 + $0x19c] sm:$0xf] %v473
                %v475 = vld [vmem:[%s265 + $0x340] sm:$0xf]
                %476 = vst [vmem:[%s266 + $0x1a0] sm:$0xf] %v475
                %v477 = vld [vmem:[%s265 + $0x344] sm:$0xf]
                %478 = vst [vmem:[%s266 + $0x1a4] sm:$0xf] %v477
                %v479 = vld [vmem:[%s265 + $0x348] sm:$0xf]
                %480 = vst [vmem:[%s266 + $0x1a8] sm:$0xf] %v479
                %v481 = vld [vmem:[%s265 + $0x34c] sm:$0xf]
                %482 = vst [vmem:[%s266 + $0x1ac] sm:$0xf] %v481
                %v483 = vld [vmem:[%s265 + $0x350] sm:$0xf]
                %484 = vst [vmem:[%s266 + $0x1b0] sm:$0xf] %v483
                %v485 = vld [vmem:[%s265 + $0x354] sm:$0xf]
                %486 = vst [vmem:[%s266 + $0x1b4] sm:$0xf] %v485
                %v487 = vld [vmem:[%s265 + $0x358] sm:$0xf]
                %488 = vst [vmem:[%s266 + $0x1b8] sm:$0xf] %v487
                %v489 = vld [vmem:[%s265 + $0x35c] sm:$0xf]
                %490 = vst [vmem:[%s266 + $0x1bc] sm:$0xf] %v489
                %v491 = vld [vmem:[%s265 + $0x380] sm:$0xf]
                %492 = vst [vmem:[%s266 + $0x1c0] sm:$0xf] %v491
                %v493 = vld [vmem:[%s265 + $0x384] sm:$0xf]
                %494 = vst [vmem:[%s266 + $0x1c4] sm:$0xf] %v493
                %v495 = vld [vmem:[%s265 + $0x388] sm:$0xf]
                %496 = vst [vmem:[%s266 + $0x1c8] sm:$0xf] %v495
                %v497 = vld [vmem:[%s265 + $0x38c] sm:$0xf]
                %498 = vst [vmem:[%s266 + $0x1cc] sm:$0xf] %v497
                %v499 = vld [vmem:[%s265 + $0x390] sm:$0xf]
                %500 = vst [vmem:[%s266 + $0x1d0] sm:$0xf] %v499
                %v501 = vld [vmem:[%s265 + $0x394] sm:$0xf]
                %502 = vst [vmem:[%s266 + $0x1d4] sm:$0xf] %v501
                %v503 = vld [vmem:[%s265 + $0x398] sm:$0xf]
                %504 = vst [vmem:[%s266 + $0x1d8] sm:$0xf] %v503
                %v505 = vld [vmem:[%s265 + $0x39c] sm:$0xf]
                %506 = vst [vmem:[%s266 + $0x1dc] sm:$0xf] %v505
                %v507 = vld [vmem:[%s265 + $0x3c0] sm:$0xf]
                %508 = vst [vmem:[%s266 + $0x1e0] sm:$0xf] %v507
                %v509 = vld [vmem:[%s265 + $0x3c4] sm:$0xf]
                %510 = vst [vmem:[%s266 + $0x1e4] sm:$0xf] %v509
                %v511 = vld [vmem:[%s265 + $0x3c8] sm:$0xf]
                %512 = vst [vmem:[%s266 + $0x1e8] sm:$0xf] %v511
                %v513 = vld [vmem:[%s265 + $0x3cc] sm:$0xf]
                %514 = vst [vmem:[%s266 + $0x1ec] sm:$0xf] %v513
                %v515 = vld [vmem:[%s265 + $0x3d0] sm:$0xf]
                %516 = vst [vmem:[%s266 + $0x1f0] sm:$0xf] %v515
                %v517 = vld [vmem:[%s265 + $0x3d4] sm:$0xf]
                %518 = vst [vmem:[%s266 + $0x1f4] sm:$0xf] %v517
                %v519 = vld [vmem:[%s265 + $0x3d8] sm:$0xf]
                %520 = vst [vmem:[%s266 + $0x1f8] sm:$0xf] %v519
                %v521 = vld [vmem:[%s265 + $0x3dc] sm:$0xf]
                %522 = vst [vmem:[%s266 + $0x1fc] sm:$0xf] %v521
              $region61: #{neighbor_embedding.5} parent=55 // loop_footer
                %s264 = sadd.s32 1, %s260
              $region62: #{neighbor_embedding.5} parent=55 // loop_footer_branch
                %259 = sbr.rel target = $region58
              $region63: #{neighbor_embedding.5} parent=55 // loop_exit
                _
            $region56: #{neighbor_embedding.5} parent=47 // pred_fallthru
              _
          $region48: #{neighbor_embedding.5} parent=43 // pred_fallthru
            _
          %798 = vnop
        $region44: #{neighbor_embedding.5} parent=35 // pred_fallthru
          _
      $region36: #{neighbor_embedding.5} parent=5 // pred_fallthru
        _
      %p799 = scmp.le.s32.totalorder 1, %s16
      %p800 = scmp.lt.s32.totalorder %s16, 3
      %p801 = pnand %p799, %p800
      %p802 = pneg %p801
      // Predicated region
      $region82: #{neighbor_embedding.5} parent=5 // pred_check
        _
      $region83: #{neighbor_embedding.5} parent=5 // pred_check_branch
        %804 = sbr.rel (%p801) target = $region85
      $region84: #{neighbor_embedding.5} parent=5 // pred_region
        %s805 = ssub.s32 %s16, 1
        %s806 = sand.u32 %s55, 1
        %s807 = sand.u32 %s55, 1
        %s808 = smul.addr %s807, 512
        %s809 = scalar_lea.vmem [#allocation2], %s808
        // Predicated region
        $region86: #{neighbor_embedding.5} parent=84 // pred_check
          %p810 = pneg %p68
        $region87: #{neighbor_embedding.5} parent=84 // pred_check_branch
          %812 = sbr.rel (%p810) target = $region89
        $region88: #{neighbor_embedding.5} parent=84 // pred_region
          _
        $region89: #{neighbor_embedding.5} parent=84 // pred_fallthru
          _
        %s813 = smul.u32 8, %s21
        %p814 = scmp.lt.s32.totalorder %s813, 15
        %s815 = scalar_select %p814, %s813, 15
        %s816 = smul.addr %s815, 4
        %s817 = scalar_lea.vmem %s0, %s816
        %p818 = pneg %p42
        %p819 = pneg %p39
        %s820 = sand.u32 %s55, 1
        %s821 = sand.u32 %s55, 1
        %s822 = smul.addr %s821, 512
        %s823 = scalar_lea.vmem [#allocation2], %s822
        %p824 = pneg %p68
        %p825 = pneg %p65
        %p826 = pneg %p89
        %p827 = pneg %p86
        %p828 = pneg %p110
        %p829 = pneg %p107
        %p830 = pneg %p131
        %p831 = pneg %p128
        %p832 = pneg %p152
        %p833 = pneg %p149
        %p834 = pneg %p173
        %p835 = pneg %p170
        %p836 = pneg %p199
        %p837 = pneg %p196
        %s838 = sand.u32 %s186, 1
        %s839 = scalar_lea.sflag [#allocation4], %s838
        %s840 = sand.u32 %s186, 1
        %s841 = smul.addr %s840, 64
        %s842 = scalar_lea.vmem [#allocation3], %s841
        %s843 = smul.u32 8, %s21
        %p844 = scmp.lt.s32.totalorder %s843, 15
        %s845 = scalar_select %p844, %s843, 15
        %s846 = smul.addr %s845, 4
        %s847 = scalar_lea.vmem %s0, %s846
        %s848 = smul.u32 8, %s21
        %s849 = smul.u32 8, %s21
        %s850 = smul.u32 8, %s21
        %v852 = vld [vmem:[%s2] sm:$0xf]
        %v853 = vld [vmem:[%s2 + $0x4] sm:$0xf]
        %v854 = vld [vmem:[%s2 + $0x8] sm:$0xf]
        %v855 = vld [vmem:[%s2 + $0xc] sm:$0xf]
        %v856 = vld [vmem:[%s2 + $0x10] sm:$0xf]
        %v857 = vld [vmem:[%s2 + $0x14] sm:$0xf]
        %v858 = vld [vmem:[%s2 + $0x18] sm:$0xf]
        %v859 = vld [vmem:[%s2 + $0x1c] sm:$0xf]
        %v860 = vld [vmem:[%s5] sm:$0xf]
        %v861 = vld [vmem:[%s5 + $0x4] sm:$0xf]
        %v862 = vld [vmem:[%s5 + $0x8] sm:$0xf]
        %v863 = vld [vmem:[%s5 + $0xc] sm:$0xf]
        %v864 = vld [vmem:[%s5 + $0x10] sm:$0xf]
        %v865 = vld [vmem:[%s5 + $0x14] sm:$0xf]
        %v866 = vld [vmem:[%s5 + $0x18] sm:$0xf]
        %v867 = vld [vmem:[%s5 + $0x1c] sm:$0xf]
        %v868 = vld [vmem:[%s5 + $0x20] sm:$0xf]
        %v869 = vld [vmem:[%s5 + $0x24] sm:$0xf]
        %v870 = vld [vmem:[%s5 + $0x28] sm:$0xf]
        %v871 = vld [vmem:[%s5 + $0x2c] sm:$0xf]
        %v872 = vld [vmem:[%s5 + $0x30] sm:$0xf]
        %v873 = vld [vmem:[%s5 + $0x34] sm:$0xf]
        %v874 = vld [vmem:[%s5 + $0x38] sm:$0xf]
        %v875 = vld [vmem:[%s5 + $0x3c] sm:$0xf]
        %v876 = vld [vmem:[%s6] sm:$0x1]
        %v877 = vld [vmem:[%s847] sm:$0xf]
        %v878 = vld [vmem:[%s847 + $0x4] sm:$0xf]
        %v879 = vld [vmem:[%s847 + $0x8] sm:$0xf]
        %v880 = vld [vmem:[%s847 + $0xc] sm:$0xf]
        %v881 = vld [vmem:[%s847 + $0x10] sm:$0xf]
        %v882 = vld [vmem:[%s847 + $0x14] sm:$0xf]
        %v883 = vld [vmem:[%s847 + $0x18] sm:$0xf]
        %v884 = vld [vmem:[%s847 + $0x1c] sm:$0xf]
        %v885 = vld [vmem:[%s3] sm:$0xf]
        %v886 = vld [vmem:[%s3 + $0x4] sm:$0xf]
        %v887 = vld [vmem:[%s3 + $0x8] sm:$0xf]
        %v888 = vld [vmem:[%s3 + $0xc] sm:$0xf]
        %v889 = vld [vmem:[%s3 + $0x10] sm:$0xf]
        %v890 = vld [vmem:[%s3 + $0x14] sm:$0xf]
        %v891 = vld [vmem:[%s3 + $0x18] sm:$0xf]
        %v892 = vld [vmem:[%s3 + $0x1c] sm:$0xf]
        %v893 = vld [vmem:[%s4] sm:$0x1]
        %v895 = vlaneseq
        %v896 = vshrl.u32 %v895, 7
        %v897 = vsub.s32 0, %v896
        %v898 = vrot.slane %v893, %v897
        %v908 = vunpack.c.l.b16 %v877
        %v909 = vunpack.c.l.b16 %v878
        %v910 = vunpack.c.l.b16 %v879
        %v911 = vunpack.c.l.b16 %v880
        %v912 = vunpack.c.l.b16 %v881
        %v913 = vunpack.c.l.b16 %v882
        %v914 = vunpack.c.l.b16 %v883
        %v915 = vunpack.c.l.b16 %v884
        %v916 = vpack.c.b16 %v909, %v908
        %v917 = vpack.c.b16 %v911, %v910
        %v918 = vpack.c.b16 %v913, %v912
        %v919 = vpack.c.b16 %v915, %v914
        %v928 = vunpack.c.l.b16 %v885
        %v929 = vunpack.c.l.b16 %v886
        %v930 = vunpack.c.l.b16 %v887
        %v931 = vunpack.c.l.b16 %v888
        %v932 = vunpack.c.l.b16 %v889
        %v933 = vunpack.c.l.b16 %v890
        %v934 = vunpack.c.l.b16 %v891
        %v935 = vunpack.c.l.b16 %v892
        %v936 = vpack.c.b16 %v929, %v928
        %v937 = vpack.c.b16 %v931, %v930
        %v938 = vpack.c.b16 %v933, %v932
        %v939 = vpack.c.b16 %v935, %v934
        %vm944 = vcmask 523264
        %v946 = vsel %vm944, %v916, 0
        %v949 = vsel %vm944, %v917, 0
        %v952 = vsel %vm944, %v918, 0
        %v955 = vsel %vm944, %v919, 0
        %957 = vmatprep.subr.bf16.mxu0 0
        %958 = vmatpush1.bf16.msra.mxu0 %v936
        %959 = vmatprep.subr.bf16.mxu0 0
        %960 = vmatpush1.bf16.msra.mxu0 %v937
        %961 = vmatprep.subr.bf16.mxu0 0
        %962 = vmatpush1.bf16.msra.mxu0 %v938
        %963 = vmatprep.subr.bf16.mxu0 0
        %964 = vmatpush1.bf16.msra.mxu0 %v939
        %965 = vmatprep.subr.bf16.mxu0 0
        %966 = vmatpush1.bf16.msra.mxu0 0
        %967 = vmatprep.subr.bf16.mxu0 0
        %968 = vmatpush1.bf16.msra.mxu0 0
        %969 = vmatprep.subr.bf16.mxu0 0
        %970 = vmatpush1.bf16.msra.mxu0 0
        %971 = vmatprep.subr.bf16.mxu0 0
        %972 = vmatpush1.bf16.msra.mxu0 0
        %973 = vmatprep.subr.bf16.mxu0 0
        %974 = vmatpush1.bf16.msra.mxu0 0
        %975 = vmatprep.subr.bf16.mxu0 0
        %976 = vmatpush1.bf16.msra.mxu0 0
        %977 = vmatprep.subr.bf16.mxu0 0
        %978 = vmatpush1.bf16.msra.mxu0 0
        %979 = vmatprep.subr.bf16.mxu0 0
        %980 = vmatpush1.bf16.msra.mxu0 0
        %981 = vmatprep.subr.bf16.mxu0 0
        %982 = vmatpush1.bf16.msra.mxu0 0
        %983 = vmatprep.subr.bf16.mxu0 0
        %984 = vmatpush1.bf16.msra.mxu0 0
        %985 = vmatprep.subr.bf16.mxu0 0
        %986 = vmatpush1.bf16.msra.mxu0 0
        %987 = vmatprep.subr.bf16.mxu0 0
        %988 = vmatpush1.bf16.msra.mxu0 0
        %989 = vmatprep.mubr.bf16.mxu0 0
        %990 = vmatmul.mubr.bf16.gmra.mrb[0].mxu0 %v946
        %v991 = vpop.f32.mrb[0].mxu0
        %v992 = vadd.f32 %v898, %v991
        %v993 = vpop.f32.mrb[0].mxu0
        %v994 = vpop.f32.mrb[0].mxu0
        %v995 = vadd.f32 %v898, %v994
        %v996 = vpop.f32.mrb[0].mxu0
        %997 = vmatprep.mubr.bf16.mxu0 0
        %998 = vmatmul.mubr.bf16.gmra.mrb[0].mxu0 %v949
        %v999 = vpop.f32.mrb[0].mxu0
        %v1000 = vadd.f32 %v898, %v999
        %v1001 = vpop.f32.mrb[0].mxu0
        %v1002 = vpop.f32.mrb[0].mxu0
        %v1003 = vadd.f32 %v898, %v1002
        %v1004 = vpop.f32.mrb[0].mxu0
        %1005 = vmatprep.mubr.bf16.mxu0 0
        %1006 = vmatmul.mubr.bf16.gmra.mrb[0].mxu0 %v952
        %v1007 = vpop.f32.mrb[0].mxu0
        %v1008 = vadd.f32 %v898, %v1007
        %v1009 = vpop.f32.mrb[0].mxu0
        %v1010 = vpop.f32.mrb[0].mxu0
        %v1011 = vadd.f32 %v898, %v1010
        %v1012 = vpop.f32.mrb[0].mxu0
        %1013 = vmatprep.mubr.bf16.mxu0 0
        %1014 = vmatmul.mubr.bf16.gmra.mrb[0].mxu0 %v955
        %v1015 = vpop.f32.mrb[0].mxu0
        %v1016 = vadd.f32 %v898, %v1015
        %v1017 = vpop.f32.mrb[0].mxu0
        %v1018 = vpop.f32.mrb[0].mxu0
        %v1019 = vadd.f32 %v898, %v1018
        %v1020 = vpop.f32.mrb[0].mxu0
        %1021 = vdwg.mxu0
        %v1022 = vld [vmem:[%s809] sm:$0xf]
        %v1023 = vld [vmem:[%s809 + $0x4] sm:$0xf]
        %v1024 = vld [vmem:[%s809 + $0x8] sm:$0xf]
        %v1025 = vld [vmem:[%s809 + $0xc] sm:$0xf]
        %v1026 = vld [vmem:[%s809 + $0x10] sm:$0xf]
        %v1027 = vld [vmem:[%s809 + $0x14] sm:$0xf]
        %v1028 = vld [vmem:[%s809 + $0x18] sm:$0xf]
        %v1029 = vld [vmem:[%s809 + $0x1c] sm:$0xf]
        %v1038 = vunpack.c.l.b16 %v1022
        %v1039 = vunpack.c.l.b16 %v1023
        %v1040 = vunpack.c.l.b16 %v1024
        %v1041 = vunpack.c.l.b16 %v1025
        %v1042 = vunpack.c.l.b16 %v1026
        %v1043 = vunpack.c.l.b16 %v1027
        %v1044 = vunpack.c.l.b16 %v1028
        %v1045 = vunpack.c.l.b16 %v1029
        %v1046 = vpack.c.b16 %v1039, %v1038
        %v1047 = vpack.c.b16 %v1041, %v1040
        %v1048 = vpack.c.b16 %v1043, %v1042
        %v1049 = vpack.c.b16 %v1045, %v1044
        %v1058 = vunpack.c.l.b16 %v852
        %v1059 = vunpack.c.l.b16 %v853
        %v1060 = vunpack.c.l.b16 %v854
        %v1061 = vunpack.c.l.b16 %v855
        %v1062 = vunpack.c.l.b16 %v856
        %v1063 = vunpack.c.l.b16 %v857
        %v1064 = vunpack.c.l.b16 %v858
        %v1065 = vunpack.c.l.b16 %v859
        %v1066 = vpack.c.b16 %v1059, %v1058
        %v1067 = vpack.c.b16 %v1061, %v1060
        %v1068 = vpack.c.b16 %v1063, %v1062
        %v1069 = vpack.c.b16 %v1065, %v1064
        %v1075 = vsel %vm944, %v1046, 0
        %v1078 = vsel %vm944, %v1047, 0
        %v1081 = vsel %vm944, %v1048, 0
        %v1084 = vsel %vm944, %v1049, 0
        %1086 = vmatprep.subr.bf16.mxu0 0
        %1087 = vmatpush1.bf16.msra.mxu0 %v1066
        %1088 = vmatprep.subr.bf16.mxu0 0
        %1089 = vmatpush1.bf16.msra.mxu0 %v1067
        %1090 = vmatprep.subr.bf16.mxu0 0
        %1091 = vmatpush1.bf16.msra.mxu0 %v1068
        %1092 = vmatprep.subr.bf16.mxu0 0
        %1093 = vmatpush1.bf16.msra.mxu0 %v1069
        %1094 = vmatprep.subr.bf16.mxu0 0
        %1095 = vmatpush1.bf16.msra.mxu0 0
        %1096 = vmatprep.subr.bf16.mxu0 0
        %1097 = vmatpush1.bf16.msra.mxu0 0
        %1098 = vmatprep.subr.bf16.mxu0 0
        %1099 = vmatpush1.bf16.msra.mxu0 0
        %1100 = vmatprep.subr.bf16.mxu0 0
        %1101 = vmatpush1.bf16.msra.mxu0 0
        %1102 = vmatprep.subr.bf16.mxu0 0
        %1103 = vmatpush1.bf16.msra.mxu0 0
        %1104 = vmatprep.subr.bf16.mxu0 0
        %1105 = vmatpush1.bf16.msra.mxu0 0
        %1106 = vmatprep.subr.bf16.mxu0 0
        %1107 = vmatpush1.bf16.msra.mxu0 0
        %1108 = vmatprep.subr.bf16.mxu0 0
        %1109 = vmatpush1.bf16.msra.mxu0 0
        %1110 = vmatprep.subr.bf16.mxu0 0
        %1111 = vmatpush1.bf16.msra.mxu0 0
        %1112 = vmatprep.subr.bf16.mxu0 0
        %1113 = vmatpush1.bf16.msra.mxu0 0
        %1114 = vmatprep.subr.bf16.mxu0 0
        %1115 = vmatpush1.bf16.msra.mxu0 0
        %1116 = vmatprep.subr.bf16.mxu0 0
        %1117 = vmatpush1.bf16.msra.mxu0 0
        %1118 = vmatprep.mubr.bf16.mxu0 0
        %1119 = vmatmul.mubr.bf16.gmra.mrb[0].mxu0 %v1075
        %v1120 = vpop.f32.mrb[0].mxu0
        %v1121 = vadd.f32 %v992, %v1120
        %v1122 = vpop.f32.mrb[0].mxu0
        %v1123 = vpop.f32.mrb[0].mxu0
        %v1124 = vadd.f32 %v995, %v1123
        %v1125 = vpop.f32.mrb[0].mxu0
        %1126 = vmatprep.mubr.bf16.mxu0 0
        %1127 = vmatmul.mubr.bf16.gmra.mrb[0].mxu0 %v1078
        %v1128 = vpop.f32.mrb[0].mxu0
        %v1129 = vadd.f32 %v1000, %v1128
        %v1130 = vpop.f32.mrb[0].mxu0
        %v1131 = vpop.f32.mrb[0].mxu0
        %v1132 = vadd.f32 %v1003, %v1131
        %v1133 = vpop.f32.mrb[0].mxu0
        %1134 = vmatprep.mubr.bf16.mxu0 0
        %1135 = vmatmul.mubr.bf16.gmra.mrb[0].mxu0 %v1081
        %v1136 = vpop.f32.mrb[0].mxu0
        %v1137 = vadd.f32 %v1008, %v1136
        %v1138 = vpop.f32.mrb[0].mxu0
        %v1139 = vpop.f32.mrb[0].mxu0
        %v1140 = vadd.f32 %v1011, %v1139
        %v1141 = vpop.f32.mrb[0].mxu0
        %1142 = vmatprep.mubr.bf16.mxu0 0
        %1143 = vmatmul.mubr.bf16.gmra.mrb[0].mxu0 %v1084
        %v1144 = vpop.f32.mrb[0].mxu0
        %v1145 = vadd.f32 %v1016, %v1144
        %v1146 = vpop.f32.mrb[0].mxu0
        %v1147 = vpop.f32.mrb[0].mxu0
        %v1148 = vadd.f32 %v1019, %v1147
        %v1149 = vpop.f32.mrb[0].mxu0
        %1150 = vdwg.mxu0
        %v1151 = vmul.f32 %v1121, 0.01
        %v1152 = vmul.f32 %v1124, 0.01
        %v1153 = vmul.f32 %v1129, 0.01
        %v1154 = vmul.f32 %v1132, 0.01
        %v1155 = vmul.f32 %v1137, 0.01
        %v1156 = vmul.f32 %v1140, 0.01
        %v1157 = vmul.f32 %v1145, 0.01
        %v1158 = vmul.f32 %v1148, 0.01
        %v1159 = vmax.f32 %v1121, %v1151
        %v1160 = vmax.f32 %v1124, %v1152
        %v1161 = vmax.f32 %v1129, %v1153
        %v1162 = vmax.f32 %v1132, %v1154
        %v1163 = vmax.f32 %v1137, %v1155
        %v1164 = vmax.f32 %v1140, %v1156
        %v1165 = vmax.f32 %v1145, %v1157
        %v1166 = vmax.f32 %v1148, %v1158
        %v1167 = vpack.c.bf16 %v1160, %v1159
        %v1168 = vpack.c.bf16 %v1162, %v1161
        %v1169 = vpack.c.bf16 %v1164, %v1163
        %v1170 = vpack.c.bf16 %v1166, %v1165
        %v1172 = vlaneseq
        %v1173 = vshrl.u32 %v1172, 7
        %v1174 = vsub.s32 0, %v1173
        %v1175 = vrot.slane %v876, %v1174
        %v1193 = vunpack.c.l.b16 %v860
        %v1194 = vunpack.c.l.b16 %v861
        %v1195 = vunpack.c.l.b16 %v862
        %v1196 = vunpack.c.l.b16 %v863
        %v1197 = vunpack.c.l.b16 %v864
        %v1198 = vunpack.c.l.b16 %v865
        %v1199 = vunpack.c.l.b16 %v866
        %v1200 = vunpack.c.l.b16 %v867
        %v1201 = vunpack.c.l.b16 %v868
        %v1202 = vunpack.c.l.b16 %v869
        %v1203 = vunpack.c.l.b16 %v870
        %v1204 = vunpack.c.l.b16 %v871
        %v1205 = vunpack.c.l.b16 %v872
        %v1206 = vunpack.c.l.b16 %v873
        %v1207 = vunpack.c.l.b16 %v874
        %v1208 = vunpack.c.l.b16 %v875
        %v1209 = vpack.c.b16 %v1194, %v1193
        %v1210 = vpack.c.b16 %v1196, %v1195
        %v1211 = vpack.c.b16 %v1198, %v1197
        %v1212 = vpack.c.b16 %v1200, %v1199
        %v1213 = vpack.c.b16 %v1202, %v1201
        %v1214 = vpack.c.b16 %v1204, %v1203
        %v1215 = vpack.c.b16 %v1206, %v1205
        %v1216 = vpack.c.b16 %v1208, %v1207
        %1225 = vmatprep.subr.bf16.mxu0 0
        %1226 = vmatpush1.bf16.msra.mxu0 %v1209
        %1227 = vmatprep.subr.bf16.mxu0 0
        %1228 = vmatpush1.bf16.msra.mxu0 %v1210
        %1229 = vmatprep.subr.bf16.mxu0 0
        %1230 = vmatpush1.bf16.msra.mxu0 %v1211
        %1231 = vmatprep.subr.bf16.mxu0 0
        %1232 = vmatpush1.bf16.msra.mxu0 %v1212
        %1233 = vmatprep.subr.bf16.mxu0 0
        %1234 = vmatpush1.bf16.msra.mxu0 %v1213
        %1235 = vmatprep.subr.bf16.mxu0 0
        %1236 = vmatpush1.bf16.msra.mxu0 %v1214
        %1237 = vmatprep.subr.bf16.mxu0 0
        %1238 = vmatpush1.bf16.msra.mxu0 %v1215
        %1239 = vmatprep.subr.bf16.mxu0 0
        %1240 = vmatpush1.bf16.msra.mxu0 %v1216
        %1241 = vmatprep.subr.bf16.mxu0 0
        %1242 = vmatpush1.bf16.msra.mxu0 0
        %1243 = vmatprep.subr.bf16.mxu0 0
        %1244 = vmatpush1.bf16.msra.mxu0 0
        %1245 = vmatprep.subr.bf16.mxu0 0
        %1246 = vmatpush1.bf16.msra.mxu0 0
        %1247 = vmatprep.subr.bf16.mxu0 0
        %1248 = vmatpush1.bf16.msra.mxu0 0
        %1249 = vmatprep.subr.bf16.mxu0 0
        %1250 = vmatpush1.bf16.msra.mxu0 0
        %1251 = vmatprep.subr.bf16.mxu0 0
        %1252 = vmatpush1.bf16.msra.mxu0 0
        %1253 = vmatprep.subr.bf16.mxu0 0
        %1254 = vmatpush1.bf16.msra.mxu0 0
        %1255 = vmatprep.subr.bf16.mxu0 0
        %1256 = vmatpush1.bf16.msra.mxu0 0
        %1257 = vmatprep.mubr.bf16.mxu0 0
        %1258 = vmatmul.mubr.bf16.gmra.mrb[0].mxu0 %v1167
        %v1259 = vpop.f32.mrb[0].mxu0
        %v1260 = vadd.f32 %v1175, %v1259
        %v1261 = vpop.f32.mrb[0].mxu0
        %v1262 = vpop.f32.mrb[0].mxu0
        %v1263 = vadd.f32 %v1175, %v1262
        %v1264 = vpop.f32.mrb[0].mxu0
        %1265 = vmatprep.mubr.bf16.mxu0 0
        %1266 = vmatmul.mubr.bf16.gmra.mrb[0].mxu0 %v1168
        %v1267 = vpop.f32.mrb[0].mxu0
        %v1268 = vadd.f32 %v1175, %v1267
        %v1269 = vpop.f32.mrb[0].mxu0
        %v1270 = vpop.f32.mrb[0].mxu0
        %v1271 = vadd.f32 %v1175, %v1270
        %v1272 = vpop.f32.mrb[0].mxu0
        %1273 = vmatprep.mubr.bf16.mxu0 0
        %1274 = vmatmul.mubr.bf16.gmra.mrb[0].mxu0 %v1169
        %v1275 = vpop.f32.mrb[0].mxu0
        %v1276 = vadd.f32 %v1175, %v1275
        %v1277 = vpop.f32.mrb[0].mxu0
        %v1278 = vpop.f32.mrb[0].mxu0
        %v1279 = vadd.f32 %v1175, %v1278
        %v1280 = vpop.f32.mrb[0].mxu0
        %1281 = vmatprep.mubr.bf16.mxu0 0
        %1282 = vmatmul.mubr.bf16.gmra.mrb[0].mxu0 %v1170
        %v1283 = vpop.f32.mrb[0].mxu0
        %v1284 = vadd.f32 %v1175, %v1283
        %v1285 = vpop.f32.mrb[0].mxu0
        %v1286 = vpop.f32.mrb[0].mxu0
        %v1287 = vadd.f32 %v1175, %v1286
        %v1288 = vpop.f32.mrb[0].mxu0
        %1289 = vdwg.mxu0
        %v1290 = vmul.f32 %v1260, 0.01
        %v1291 = vmul.f32 %v1263, 0.01
        %v1292 = vmul.f32 %v1268, 0.01
        %v1293 = vmul.f32 %v1271, 0.01
        %v1294 = vmul.f32 %v1276, 0.01
        %v1295 = vmul.f32 %v1279, 0.01
        %v1296 = vmul.f32 %v1284, 0.01
        %v1297 = vmul.f32 %v1287, 0.01
        %v1298 = vmax.f32 %v1260, %v1290
        %v1299 = vmax.f32 %v1263, %v1291
        %v1300 = vmax.f32 %v1268, %v1292
        %v1301 = vmax.f32 %v1271, %v1293
        %v1302 = vmax.f32 %v1276, %v1294
        %v1303 = vmax.f32 %v1279, %v1295
        %v1304 = vmax.f32 %v1284, %v1296
        %v1305 = vmax.f32 %v1287, %v1297
        %s1306 = scalar_lea.vmem %s809, 32 [#allocation2]
        %v1307 = vld [vmem:[%s1306] sm:$0xf]
        %v1308 = vld [vmem:[%s1306 + $0x4] sm:$0xf]
        %v1309 = vld [vmem:[%s1306 + $0x8] sm:$0xf]
        %v1310 = vld [vmem:[%s1306 + $0xc] sm:$0xf]
        %v1311 = vld [vmem:[%s1306 + $0x10] sm:$0xf]
        %v1312 = vld [vmem:[%s1306 + $0x14] sm:$0xf]
        %v1313 = vld [vmem:[%s1306 + $0x18] sm:$0xf]
        %v1314 = vld [vmem:[%s1306 + $0x1c] sm:$0xf]
        %v1323 = vunpack.c.l.b16 %v1307
        %v1324 = vunpack.c.l.b16 %v1308
        %v1325 = vunpack.c.l.b16 %v1309
        %v1326 = vunpack.c.l.b16 %v1310
        %v1327 = vunpack.c.l.b16 %v1311
        %v1328 = vunpack.c.l.b16 %v1312
        %v1329 = vunpack.c.l.b16 %v1313
        %v1330 = vunpack.c.l.b16 %v1314
        %v1331 = vpack.c.b16 %v1324, %v1323
        %v1332 = vpack.c.b16 %v1326, %v1325
        %v1333 = vpack.c.b16 %v1328, %v1327
        %v1334 = vpack.c.b16 %v1330, %v1329
        %v1336 = vsel %vm944, %v1331, 0
        %v1339 = vsel %vm944, %v1332, 0
        %v1342 = vsel %vm944, %v1333, 0
        %v1345 = vsel %vm944, %v1334, 0
        %1347 = vmatprep.subr.bf16.mxu0 0
        %1348 = vmatpush1.bf16.msra.mxu0 %v1066
        %1349 = vmatprep.subr.bf16.mxu0 0
        %1350 = vmatpush1.bf16.msra.mxu0 %v1067
        %1351 = vmatprep.subr.bf16.mxu0 0
        %1352 = vmatpush1.bf16.msra.mxu0 %v1068
        %1353 = vmatprep.subr.bf16.mxu0 0
        %1354 = vmatpush1.bf16.msra.mxu0 %v1069
        %1355 = vmatprep.subr.bf16.mxu0 0
        %1356 = vmatpush1.bf16.msra.mxu0 0
        %1357 = vmatprep.subr.bf16.mxu0 0
        %1358 = vmatpush1.bf16.msra.mxu0 0
        %1359 = vmatprep.subr.bf16.mxu0 0
        %1360 = vmatpush1.bf16.msra.mxu0 0
        %1361 = vmatprep.subr.bf16.mxu0 0
        %1362 = vmatpush1.bf16.msra.mxu0 0
        %1363 = vmatprep.subr.bf16.mxu0 0
        %1364 = vmatpush1.bf16.msra.mxu0 0
        %1365 = vmatprep.subr.bf16.mxu0 0
        %1366 = vmatpush1.bf16.msra.mxu0 0
        %1367 = vmatprep.subr.bf16.mxu0 0
        %1368 = vmatpush1.bf16.msra.mxu0 0
        %1369 = vmatprep.subr.bf16.mxu0 0
        %1370 = vmatpush1.bf16.msra.mxu0 0
        %1371 = vmatprep.subr.bf16.mxu0 0
        %1372 = vmatpush1.bf16.msra.mxu0 0
        %1373 = vmatprep.subr.bf16.mxu0 0
        %1374 = vmatpush1.bf16.msra.mxu0 0
        %1375 = vmatprep.subr.bf16.mxu0 0
        %1376 = vmatpush1.bf16.msra.mxu0 0
        %1377 = vmatprep.subr.bf16.mxu0 0
        %1378 = vmatpush1.bf16.msra.mxu0 0
        %1379 = vmatprep.mubr.bf16.mxu0 0
        %1380 = vmatmul.mubr.bf16.gmra.mrb[0].mxu0 %v1336
        %v1381 = vpop.f32.mrb[0].mxu0
        %v1382 = vadd.f32 %v992, %v1381
        %v1383 = vpop.f32.mrb[0].mxu0
        %v1384 = vpop.f32.mrb[0].mxu0
        %v1385 = vadd.f32 %v995, %v1384
        %v1386 = vpop.f32.mrb[0].mxu0
        %1387 = vmatprep.mubr.bf16.mxu0 0
        %1388 = vmatmul.mubr.bf16.gmra.mrb[0].mxu0 %v1339
        %v1389 = vpop.f32.mrb[0].mxu0
        %v1390 = vadd.f32 %v1000, %v1389
        %v1391 = vpop.f32.mrb[0].mxu0
        %v1392 = vpop.f32.mrb[0].mxu0
        %v1393 = vadd.f32 %v1003, %v1392
        %v1394 = vpop.f32.mrb[0].mxu0
        %1395 = vmatprep.mubr.bf16.mxu0 0
        %1396 = vmatmul.mubr.bf16.gmra.mrb[0].mxu0 %v1342
        %v1397 = vpop.f32.mrb[0].mxu0
        %v1398 = vadd.f32 %v1008, %v1397
        %v1399 = vpop.f32.mrb[0].mxu0
        %v1400 = vpop.f32.mrb[0].mxu0
        %v1401 = vadd.f32 %v1011, %v1400
        %v1402 = vpop.f32.mrb[0].mxu0
        %1403 = vmatprep.mubr.bf16.mxu0 0
        %1404 = vmatmul.mubr.bf16.gmra.mrb[0].mxu0 %v1345
        %v1405 = vpop.f32.mrb[0].mxu0
        %v1406 = vadd.f32 %v1016, %v1405
        %v1407 = vpop.f32.mrb[0].mxu0
        %v1408 = vpop.f32.mrb[0].mxu0
        %v1409 = vadd.f32 %v1019, %v1408
        %v1410 = vpop.f32.mrb[0].mxu0
        %1411 = vdwg.mxu0
        %v1412 = vmul.f32 %v1382, 0.01
        %v1413 = vmul.f32 %v1385, 0.01
        %v1414 = vmul.f32 %v1390, 0.01
        %v1415 = vmul.f32 %v1393, 0.01
        %v1416 = vmul.f32 %v1398, 0.01
        %v1417 = vmul.f32 %v1401, 0.01
        %v1418 = vmul.f32 %v1406, 0.01
        %v1419 = vmul.f32 %v1409, 0.01
        %v1420 = vmax.f32 %v1382, %v1412
        %v1421 = vmax.f32 %v1385, %v1413
        %v1422 = vmax.f32 %v1390, %v1414
        %v1423 = vmax.f32 %v1393, %v1415
        %v1424 = vmax.f32 %v1398, %v1416
        %v1425 = vmax.f32 %v1401, %v1417
        %v1426 = vmax.f32 %v1406, %v1418
        %v1427 = vmax.f32 %v1409, %v1419
        %v1428 = vpack.c.bf16 %v1421, %v1420
        %v1429 = vpack.c.bf16 %v1423, %v1422
        %v1430 = vpack.c.bf16 %v1425, %v1424
        %v1431 = vpack.c.bf16 %v1427, %v1426
        %1432 = vmatprep.subr.bf16.mxu0 0
        %1433 = vmatpush1.bf16.msra.mxu0 %v1209
        %1434 = vmatprep.subr.bf16.mxu0 0
        %1435 = vmatpush1.bf16.msra.mxu0 %v1210
        %1436 = vmatprep.subr.bf16.mxu0 0
        %1437 = vmatpush1.bf16.msra.mxu0 %v1211
        %1438 = vmatprep.subr.bf16.mxu0 0
        %1439 = vmatpush1.bf16.msra.mxu0 %v1212
        %1440 = vmatprep.subr.bf16.mxu0 0
        %1441 = vmatpush1.bf16.msra.mxu0 %v1213
        %1442 = vmatprep.subr.bf16.mxu0 0
        %1443 = vmatpush1.bf16.msra.mxu0 %v1214
        %1444 = vmatprep.subr.bf16.mxu0 0
        %1445 = vmatpush1.bf16.msra.mxu0 %v1215
        %1446 = vmatprep.subr.bf16.mxu0 0
        %1447 = vmatpush1.bf16.msra.mxu0 %v1216
        %1448 = vmatprep.subr.bf16.mxu0 0
        %1449 = vmatpush1.bf16.msra.mxu0 0
        %1450 = vmatprep.subr.bf16.mxu0 0
        %1451 = vmatpush1.bf16.msra.mxu0 0
        %1452 = vmatprep.subr.bf16.mxu0 0
        %1453 = vmatpush1.bf16.msra.mxu0 0
        %1454 = vmatprep.subr.bf16.mxu0 0
        %1455 = vmatpush1.bf16.msra.mxu0 0
        %1456 = vmatprep.subr.bf16.mxu0 0
        %1457 = vmatpush1.bf16.msra.mxu0 0
        %1458 = vmatprep.subr.bf16.mxu0 0
        %1459 = vmatpush1.bf16.msra.mxu0 0
        %1460 = vmatprep.subr.bf16.mxu0 0
        %1461 = vmatpush1.bf16.msra.mxu0 0
        %1462 = vmatprep.subr.bf16.mxu0 0
        %1463 = vmatpush1.bf16.msra.mxu0 0
        %1464 = vmatprep.mubr.bf16.mxu0 0
        %1465 = vmatmul.mubr.bf16.gmra.mrb[0].mxu0 %v1428
        %v1466 = vpop.f32.mrb[0].mxu0
        %v1467 = vadd.f32 %v1175, %v1466
        %v1468 = vpop.f32.mrb[0].mxu0
        %v1469 = vpop.f32.mrb[0].mxu0
        %v1470 = vadd.f32 %v1175, %v1469
        %v1471 = vpop.f32.mrb[0].mxu0
        %1472 = vmatprep.mubr.bf16.mxu0 0
        %1473 = vmatmul.mubr.bf16.gmra.mrb[0].mxu0 %v1429
        %v1474 = vpop.f32.mrb[0].mxu0
        %v1475 = vadd.f32 %v1175, %v1474
        %v1476 = vpop.f32.mrb[0].mxu0
        %v1477 = vpop.f32.mrb[0].mxu0
        %v1478 = vadd.f32 %v1175, %v1477
        %v1479 = vpop.f32.mrb[0].mxu0
        %1480 = vmatprep.mubr.bf16.mxu0 0
        %1481 = vmatmul.mubr.bf16.gmra.mrb[0].mxu0 %v1430
        %v1482 = vpop.f32.mrb[0].mxu0
        %v1483 = vadd.f32 %v1175, %v1482
        %v1484 = vpop.f32.mrb[0].mxu0
        %v1485 = vpop.f32.mrb[0].mxu0
        %v1486 = vadd.f32 %v1175, %v1485
        %v1487 = vpop.f32.mrb[0].mxu0
        %1488 = vmatprep.mubr.bf16.mxu0 0
        %1489 = vmatmul.mubr.bf16.gmra.mrb[0].mxu0 %v1431
        %v1490 = vpop.f32.mrb[0].mxu0
        %v1491 = vadd.f32 %v1175, %v1490
        %v1492 = vpop.f32.mrb[0].mxu0
        %v1493 = vpop.f32.mrb[0].mxu0
        %v1494 = vadd.f32 %v1175, %v1493
        %v1495 = vpop.f32.mrb[0].mxu0
        %1496 = vdwg.mxu0
        %v1497 = vmul.f32 %v1467, 0.01
        %v1498 = vmul.f32 %v1470, 0.01
        %v1499 = vmul.f32 %v1475, 0.01
        %v1500 = vmul.f32 %v1478, 0.01
        %v1501 = vmul.f32 %v1483, 0.01
        %v1502 = vmul.f32 %v1486, 0.01
        %v1503 = vmul.f32 %v1491, 0.01
        %v1504 = vmul.f32 %v1494, 0.01
        %v1505 = vmax.f32 %v1467, %v1497
        %v1506 = vmax.f32 %v1470, %v1498
        %v1507 = vmax.f32 %v1475, %v1499
        %v1508 = vmax.f32 %v1478, %v1500
        %v1509 = vmax.f32 %v1483, %v1501
        %v1510 = vmax.f32 %v1486, %v1502
        %v1511 = vmax.f32 %v1491, %v1503
        %v1512 = vmax.f32 %v1494, %v1504
        %v1513 = vmax.f32 %v1298, %v1505
        %v1514 = vmax.f32 %v1299, %v1506
        %v1515 = vmax.f32 %v1300, %v1507
        %v1516 = vmax.f32 %v1301, %v1508
        %v1517 = vmax.f32 %v1302, %v1509
        %v1518 = vmax.f32 %v1303, %v1510
        %v1519 = vmax.f32 %v1304, %v1511
        %v1520 = vmax.f32 %v1305, %v1512
        %s1521 = scalar_lea.vmem %s809, 64 [#allocation2]
        %v1522 = vld [vmem:[%s1521] sm:$0xf]
        %v1523 = vld [vmem:[%s1521 + $0x4] sm:$0xf]
        %v1524 = vld [vmem:[%s1521 + $0x8] sm:$0xf]
        %v1525 = vld [vmem:[%s1521 + $0xc] sm:$0xf]
        %v1526 = vld [vmem:[%s1521 + $0x10] sm:$0xf]
        %v1527 = vld [vmem:[%s1521 + $0x14] sm:$0xf]
        %v1528 = vld [vmem:[%s1521 + $0x18] sm:$0xf]
        %v1529 = vld [vmem:[%s1521 + $0x1c] sm:$0xf]
        %v1538 = vunpack.c.l.b16 %v1522
        %v1539 = vunpack.c.l.b16 %v1523
        %v1540 = vunpack.c.l.b16 %v1524
        %v1541 = vunpack.c.l.b16 %v1525
        %v1542 = vunpack.c.l.b16 %v1526
        %v1543 = vunpack.c.l.b16 %v1527
        %v1544 = vunpack.c.l.b16 %v1528
        %v1545 = vunpack.c.l.b16 %v1529
        %v1546 = vpack.c.b16 %v1539, %v1538
        %v1547 = vpack.c.b16 %v1541, %v1540
        %v1548 = vpack.c.b16 %v1543, %v1542
        %v1549 = vpack.c.b16 %v1545, %v1544
        %v1551 = vsel %vm944, %v1546, 0
        %v1554 = vsel %vm944, %v1547, 0
        %v1557 = vsel %vm944, %v1548, 0
        %v1560 = vsel %vm944, %v1549, 0
        %1562 = vmatprep.subr.bf16.mxu0 0
        %1563 = vmatpush1.bf16.msra.mxu0 %v1066
        %1564 = vmatprep.subr.bf16.mxu0 0
        %1565 = vmatpush1.bf16.msra.mxu0 %v1067
        %1566 = vmatprep.subr.bf16.mxu0 0
        %1567 = vmatpush1.bf16.msra.mxu0 %v1068
        %1568 = vmatprep.subr.bf16.mxu0 0
        %1569 = vmatpush1.bf16.msra.mxu0 %v1069
        %1570 = vmatprep.subr.bf16.mxu0 0
        %1571 = vmatpush1.bf16.msra.mxu0 0
        %1572 = vmatprep.subr.bf16.mxu0 0
        %1573 = vmatpush1.bf16.msra.mxu0 0
        %1574 = vmatprep.subr.bf16.mxu0 0
        %1575 = vmatpush1.bf16.msra.mxu0 0
        %1576 = vmatprep.subr.bf16.mxu0 0
        %1577 = vmatpush1.bf16.msra.mxu0 0
        %1578 = vmatprep.subr.bf16.mxu0 0
        %1579 = vmatpush1.bf16.msra.mxu0 0
        %1580 = vmatprep.subr.bf16.mxu0 0
        %1581 = vmatpush1.bf16.msra.mxu0 0
        %1582 = vmatprep.subr.bf16.mxu0 0
        %1583 = vmatpush1.bf16.msra.mxu0 0
        %1584 = vmatprep.subr.bf16.mxu0 0
        %1585 = vmatpush1.bf16.msra.mxu0 0
        %1586 = vmatprep.subr.bf16.mxu0 0
        %1587 = vmatpush1.bf16.msra.mxu0 0
        %1588 = vmatprep.subr.bf16.mxu0 0
        %1589 = vmatpush1.bf16.msra.mxu0 0
        %1590 = vmatprep.subr.bf16.mxu0 0
        %1591 = vmatpush1.bf16.msra.mxu0 0
        %1592 = vmatprep.subr.bf16.mxu0 0
        %1593 = vmatpush1.bf16.msra.mxu0 0
        %1594 = vmatprep.mubr.bf16.mxu0 0
        %1595 = vmatmul.mubr.bf16.gmra.mrb[0].mxu0 %v1551
        %v1596 = vpop.f32.mrb[0].mxu0
        %v1597 = vadd.f32 %v992, %v1596
        %v1598 = vpop.f32.mrb[0].mxu0
        %v1599 = vpop.f32.mrb[0].mxu0
        %v1600 = vadd.f32 %v995, %v1599
        %v1601 = vpop.f32.mrb[0].mxu0
        %1602 = vmatprep.mubr.bf16.mxu0 0
        %1603 = vmatmul.mubr.bf16.gmra.mrb[0].mxu0 %v1554
        %v1604 = vpop.f32.mrb[0].mxu0
        %v1605 = vadd.f32 %v1000, %v1604
        %v1606 = vpop.f32.mrb[0].mxu0
        %v1607 = vpop.f32.mrb[0].mxu0
        %v1608 = vadd.f32 %v1003, %v1607
        %v1609 = vpop.f32.mrb[0].mxu0
        %1610 = vmatprep.mubr.bf16.mxu0 0
        %1611 = vmatmul.mubr.bf16.gmra.mrb[0].mxu0 %v1557
        %v1612 = vpop.f32.mrb[0].mxu0
        %v1613 = vadd.f32 %v1008, %v1612
        %v1614 = vpop.f32.mrb[0].mxu0
        %v1615 = vpop.f32.mrb[0].mxu0
        %v1616 = vadd.f32 %v1011, %v1615
        %v1617 = vpop.f32.mrb[0].mxu0
        %1618 = vmatprep.mubr.bf16.mxu0 0
        %1619 = vmatmul.mubr.bf16.gmra.mrb[0].mxu0 %v1560
        %v1620 = vpop.f32.mrb[0].mxu0
        %v1621 = vadd.f32 %v1016, %v1620
        %v1622 = vpop.f32.mrb[0].mxu0
        %v1623 = vpop.f32.mrb[0].mxu0
        %v1624 = vadd.f32 %v1019, %v1623
        %v1625 = vpop.f32.mrb[0].mxu0
        %1626 = vdwg.mxu0
        %v1627 = vmul.f32 %v1597, 0.01
        %v1628 = vmul.f32 %v1600, 0.01
        %v1629 = vmul.f32 %v1605, 0.01
        %v1630 = vmul.f32 %v1608, 0.01
        %v1631 = vmul.f32 %v1613, 0.01
        %v1632 = vmul.f32 %v1616, 0.01
        %v1633 = vmul.f32 %v1621, 0.01
        %v1634 = vmul.f32 %v1624, 0.01
        %v1635 = vmax.f32 %v1597, %v1627
        %v1636 = vmax.f32 %v1600, %v1628
        %v1637 = vmax.f32 %v1605, %v1629
        %v1638 = vmax.f32 %v1608, %v1630
        %v1639 = vmax.f32 %v1613, %v1631
        %v1640 = vmax.f32 %v1616, %v1632
        %v1641 = vmax.f32 %v1621, %v1633
        %v1642 = vmax.f32 %v1624, %v1634
        %v1643 = vpack.c.bf16 %v1636, %v1635
        %v1644 = vpack.c.bf16 %v1638, %v1637
        %v1645 = vpack.c.bf16 %v1640, %v1639
        %v1646 = vpack.c.bf16 %v1642, %v1641
        %1647 = vmatprep.subr.bf16.mxu0 0
        %1648 = vmatpush1.bf16.msra.mxu0 %v1209
        %1649 = vmatprep.subr.bf16.mxu0 0
        %1650 = vmatpush1.bf16.msra.mxu0 %v1210
        %1651 = vmatprep.subr.bf16.mxu0 0
        %1652 = vmatpush1.bf16.msra.mxu0 %v1211
        %1653 = vmatprep.subr.bf16.mxu0 0
        %1654 = vmatpush1.bf16.msra.mxu0 %v1212
        %1655 = vmatprep.subr.bf16.mxu0 0
        %1656 = vmatpush1.bf16.msra.mxu0 %v1213
        %1657 = vmatprep.subr.bf16.mxu0 0
        %1658 = vmatpush1.bf16.msra.mxu0 %v1214
        %1659 = vmatprep.subr.bf16.mxu0 0
        %1660 = vmatpush1.bf16.msra.mxu0 %v1215
        %1661 = vmatprep.subr.bf16.mxu0 0
        %1662 = vmatpush1.bf16.msra.mxu0 %v1216
        %1663 = vmatprep.subr.bf16.mxu0 0
        %1664 = vmatpush1.bf16.msra.mxu0 0
        %1665 = vmatprep.subr.bf16.mxu0 0
        %1666 = vmatpush1.bf16.msra.mxu0 0
        %1667 = vmatprep.subr.bf16.mxu0 0
        %1668 = vmatpush1.bf16.msra.mxu0 0
        %1669 = vmatprep.subr.bf16.mxu0 0
        %1670 = vmatpush1.bf16.msra.mxu0 0
        %1671 = vmatprep.subr.bf16.mxu0 0
        %1672 = vmatpush1.bf16.msra.mxu0 0
        %1673 = vmatprep.subr.bf16.mxu0 0
        %1674 = vmatpush1.bf16.msra.mxu0 0
        %1675 = vmatprep.subr.bf16.mxu0 0
        %1676 = vmatpush1.bf16.msra.mxu0 0
        %1677 = vmatprep.subr.bf16.mxu0 0
        %1678 = vmatpush1.bf16.msra.mxu0 0
        %1679 = vmatprep.mubr.bf16.mxu0 0
        %1680 = vmatmul.mubr.bf16.gmra.mrb[0].mxu0 %v1643
        %v1681 = vpop.f32.mrb[0].mxu0
        %v1682 = vadd.f32 %v1175, %v1681
        %v1683 = vpop.f32.mrb[0].mxu0
        %v1684 = vpop.f32.mrb[0].mxu0
        %v1685 = vadd.f32 %v1175, %v1684
        %v1686 = vpop.f32.mrb[0].mxu0
        %1687 = vmatprep.mubr.bf16.mxu0 0
        %1688 = vmatmul.mubr.bf16.gmra.mrb[0].mxu0 %v1644
        %v1689 = vpop.f32.mrb[0].mxu0
        %v1690 = vadd.f32 %v1175, %v1689
        %v1691 = vpop.f32.mrb[0].mxu0
        %v1692 = vpop.f32.mrb[0].mxu0
        %v1693 = vadd.f32 %v1175, %v1692
        %v1694 = vpop.f32.mrb[0].mxu0
        %1695 = vmatprep.mubr.bf16.mxu0 0
        %1696 = vmatmul.mubr.bf16.gmra.mrb[0].mxu0 %v1645
        %v1697 = vpop.f32.mrb[0].mxu0
        %v1698 = vadd.f32 %v1175, %v1697
        %v1699 = vpop.f32.mrb[0].mxu0
        %v1700 = vpop.f32.mrb[0].mxu0
        %v1701 = vadd.f32 %v1175, %v1700
        %v1702 = vpop.f32.mrb[0].mxu0
        %1703 = vmatprep.mubr.bf16.mxu0 0
        %1704 = vmatmul.mubr.bf16.gmra.mrb[0].mxu0 %v1646
        %v1705 = vpop.f32.mrb[0].mxu0
        %v1706 = vadd.f32 %v1175, %v1705
        %v1707 = vpop.f32.mrb[0].mxu0
        %v1708 = vpop.f32.mrb[0].mxu0
        %v1709 = vadd.f32 %v1175, %v1708
        %v1710 = vpop.f32.mrb[0].mxu0
        %1711 = vdwg.mxu0
        %v1712 = vmul.f32 %v1682, 0.01
        %v1713 = vmul.f32 %v1685, 0.01
        %v1714 = vmul.f32 %v1690, 0.01
        %v1715 = vmul.f32 %v1693, 0.01
        %v1716 = vmul.f32 %v1698, 0.01
        %v1717 = vmul.f32 %v1701, 0.01
        %v1718 = vmul.f32 %v1706, 0.01
        %v1719 = vmul.f32 %v1709, 0.01
        %v1720 = vmax.f32 %v1682, %v1712
        %v1721 = vmax.f32 %v1685, %v1713
        %v1722 = vmax.f32 %v1690, %v1714
        %v1723 = vmax.f32 %v1693, %v1715
        %v1724 = vmax.f32 %v1698, %v1716
        %v1725 = vmax.f32 %v1701, %v1717
        %v1726 = vmax.f32 %v1706, %v1718
        %v1727 = vmax.f32 %v1709, %v1719
        %v1728 = vmax.f32 %v1513, %v1720
        %v1729 = vmax.f32 %v1514, %v1721
        %v1730 = vmax.f32 %v1515, %v1722
        %v1731 = vmax.f32 %v1516, %v1723
        %v1732 = vmax.f32 %v1517, %v1724
        %v1733 = vmax.f32 %v1518, %v1725
        %v1734 = vmax.f32 %v1519, %v1726
        %v1735 = vmax.f32 %v1520, %v1727
        %s1736 = scalar_lea.vmem %s809, 96 [#allocation2]
        %v1737 = vld [vmem:[%s1736] sm:$0xf]
        %v1738 = vld [vmem:[%s1736 + $0x4] sm:$0xf]
        %v1739 = vld [vmem:[%s1736 + $0x8] sm:$0xf]
        %v1740 = vld [vmem:[%s1736 + $0xc] sm:$0xf]
        %v1741 = vld [vmem:[%s1736 + $0x10] sm:$0xf]
        %v1742 = vld [vmem:[%s1736 + $0x14] sm:$0xf]
        %v1743 = vld [vmem:[%s1736 + $0x18] sm:$0xf]
        %v1744 = vld [vmem:[%s1736 + $0x1c] sm:$0xf]
        %v1753 = vunpack.c.l.b16 %v1737
        %v1754 = vunpack.c.l.b16 %v1738
        %v1755 = vunpack.c.l.b16 %v1739
        %v1756 = vunpack.c.l.b16 %v1740
        %v1757 = vunpack.c.l.b16 %v1741
        %v1758 = vunpack.c.l.b16 %v1742
        %v1759 = vunpack.c.l.b16 %v1743
        %v1760 = vunpack.c.l.b16 %v1744
        %v1761 = vpack.c.b16 %v1754, %v1753
        %v1762 = vpack.c.b16 %v1756, %v1755
        %v1763 = vpack.c.b16 %v1758, %v1757
        %v1764 = vpack.c.b16 %v1760, %v1759
        %v1766 = vsel %vm944, %v1761, 0
        %v1769 = vsel %vm944, %v1762, 0
        %v1772 = vsel %vm944, %v1763, 0
        %v1775 = vsel %vm944, %v1764, 0
        %1777 = vmatprep.subr.bf16.mxu0 0
        %1778 = vmatpush1.bf16.msra.mxu0 %v1066
        %1779 = vmatprep.subr.bf16.mxu0 0
        %1780 = vmatpush1.bf16.msra.mxu0 %v1067
        %1781 = vmatprep.subr.bf16.mxu0 0
        %1782 = vmatpush1.bf16.msra.mxu0 %v1068
        %1783 = vmatprep.subr.bf16.mxu0 0
        %1784 = vmatpush1.bf16.msra.mxu0 %v1069
        %1785 = vmatprep.subr.bf16.mxu0 0
        %1786 = vmatpush1.bf16.msra.mxu0 0
        %1787 = vmatprep.subr.bf16.mxu0 0
        %1788 = vmatpush1.bf16.msra.mxu0 0
        %1789 = vmatprep.subr.bf16.mxu0 0
        %1790 = vmatpush1.bf16.msra.mxu0 0
        %1791 = vmatprep.subr.bf16.mxu0 0
        %1792 = vmatpush1.bf16.msra.mxu0 0
        %1793 = vmatprep.subr.bf16.mxu0 0
        %1794 = vmatpush1.bf16.msra.mxu0 0
        %1795 = vmatprep.subr.bf16.mxu0 0
        %1796 = vmatpush1.bf16.msra.mxu0 0
        %1797 = vmatprep.subr.bf16.mxu0 0
        %1798 = vmatpush1.bf16.msra.mxu0 0
        %1799 = vmatprep.subr.bf16.mxu0 0
        %1800 = vmatpush1.bf16.msra.mxu0 0
        %1801 = vmatprep.subr.bf16.mxu0 0
        %1802 = vmatpush1.bf16.msra.mxu0 0
        %1803 = vmatprep.subr.bf16.mxu0 0
        %1804 = vmatpush1.bf16.msra.mxu0 0
        %1805 = vmatprep.subr.bf16.mxu0 0
        %1806 = vmatpush1.bf16.msra.mxu0 0
        %1807 = vmatprep.subr.bf16.mxu0 0
        %1808 = vmatpush1.bf16.msra.mxu0 0
        %1809 = vmatprep.mubr.bf16.mxu0 0
        %1810 = vmatmul.mubr.bf16.gmra.mrb[0].mxu0 %v1766
        %v1811 = vpop.f32.mrb[0].mxu0
        %v1812 = vadd.f32 %v992, %v1811
        %v1813 = vpop.f32.mrb[0].mxu0
        %v1814 = vpop.f32.mrb[0].mxu0
        %v1815 = vadd.f32 %v995, %v1814
        %v1816 = vpop.f32.mrb[0].mxu0
        %1817 = vmatprep.mubr.bf16.mxu0 0
        %1818 = vmatmul.mubr.bf16.gmra.mrb[0].mxu0 %v1769
        %v1819 = vpop.f32.mrb[0].mxu0
        %v1820 = vadd.f32 %v1000, %v1819
        %v1821 = vpop.f32.mrb[0].mxu0
        %v1822 = vpop.f32.mrb[0].mxu0
        %v1823 = vadd.f32 %v1003, %v1822
        %v1824 = vpop.f32.mrb[0].mxu0
        %1825 = vmatprep.mubr.bf16.mxu0 0
        %1826 = vmatmul.mubr.bf16.gmra.mrb[0].mxu0 %v1772
        %v1827 = vpop.f32.mrb[0].mxu0
        %v1828 = vadd.f32 %v1008, %v1827
        %v1829 = vpop.f32.mrb[0].mxu0
        %v1830 = vpop.f32.mrb[0].mxu0
        %v1831 = vadd.f32 %v1011, %v1830
        %v1832 = vpop.f32.mrb[0].mxu0
        %1833 = vmatprep.mubr.bf16.mxu0 0
        %1834 = vmatmul.mubr.bf16.gmra.mrb[0].mxu0 %v1775
        %v1835 = vpop.f32.mrb[0].mxu0
        %v1836 = vadd.f32 %v1016, %v1835
        %v1837 = vpop.f32.mrb[0].mxu0
        %v1838 = vpop.f32.mrb[0].mxu0
        %v1839 = vadd.f32 %v1019, %v1838
        %v1840 = vpop.f32.mrb[0].mxu0
        %1841 = vdwg.mxu0
        %v1842 = vmul.f32 %v1812, 0.01
        %v1843 = vmul.f32 %v1815, 0.01
        %v1844 = vmul.f32 %v1820, 0.01
        %v1845 = vmul.f32 %v1823, 0.01
        %v1846 = vmul.f32 %v1828, 0.01
        %v1847 = vmul.f32 %v1831, 0.01
        %v1848 = vmul.f32 %v1836, 0.01
        %v1849 = vmul.f32 %v1839, 0.01
        %v1850 = vmax.f32 %v1812, %v1842
        %v1851 = vmax.f32 %v1815, %v1843
        %v1852 = vmax.f32 %v1820, %v1844
        %v1853 = vmax.f32 %v1823, %v1845
        %v1854 = vmax.f32 %v1828, %v1846
        %v1855 = vmax.f32 %v1831, %v1847
        %v1856 = vmax.f32 %v1836, %v1848
        %v1857 = vmax.f32 %v1839, %v1849
        %v1858 = vpack.c.bf16 %v1851, %v1850
        %v1859 = vpack.c.bf16 %v1853, %v1852
        %v1860 = vpack.c.bf16 %v1855, %v1854
        %v1861 = vpack.c.bf16 %v1857, %v1856
        %1862 = vmatprep.subr.bf16.mxu0 0
        %1863 = vmatpush1.bf16.msra.mxu0 %v1209
        %1864 = vmatprep.subr.bf16.mxu0 0
        %1865 = vmatpush1.bf16.msra.mxu0 %v1210
        %1866 = vmatprep.subr.bf16.mxu0 0
        %1867 = vmatpush1.bf16.msra.mxu0 %v1211
        %1868 = vmatprep.subr.bf16.mxu0 0
        %1869 = vmatpush1.bf16.msra.mxu0 %v1212
        %1870 = vmatprep.subr.bf16.mxu0 0
        %1871 = vmatpush1.bf16.msra.mxu0 %v1213
        %1872 = vmatprep.subr.bf16.mxu0 0
        %1873 = vmatpush1.bf16.msra.mxu0 %v1214
        %1874 = vmatprep.subr.bf16.mxu0 0
        %1875 = vmatpush1.bf16.msra.mxu0 %v1215
        %1876 = vmatprep.subr.bf16.mxu0 0
        %1877 = vmatpush1.bf16.msra.mxu0 %v1216
        %1878 = vmatprep.subr.bf16.mxu0 0
        %1879 = vmatpush1.bf16.msra.mxu0 0
        %1880 = vmatprep.subr.bf16.mxu0 0
        %1881 = vmatpush1.bf16.msra.mxu0 0
        %1882 = vmatprep.subr.bf16.mxu0 0
        %1883 = vmatpush1.bf16.msra.mxu0 0
        %1884 = vmatprep.subr.bf16.mxu0 0
        %1885 = vmatpush1.bf16.msra.mxu0 0
        %1886 = vmatprep.subr.bf16.mxu0 0
        %1887 = vmatpush1.bf16.msra.mxu0 0
        %1888 = vmatprep.subr.bf16.mxu0 0
        %1889 = vmatpush1.bf16.msra.mxu0 0
        %1890 = vmatprep.subr.bf16.mxu0 0
        %1891 = vmatpush1.bf16.msra.mxu0 0
        %1892 = vmatprep.subr.bf16.mxu0 0
        %1893 = vmatpush1.bf16.msra.mxu0 0
        %1894 = vmatprep.mubr.bf16.mxu0 0
        %1895 = vmatmul.mubr.bf16.gmra.mrb[0].mxu0 %v1858
        %v1896 = vpop.f32.mrb[0].mxu0
        %v1897 = vadd.f32 %v1175, %v1896
        %v1898 = vpop.f32.mrb[0].mxu0
        %v1899 = vpop.f32.mrb[0].mxu0
        %v1900 = vadd.f32 %v1175, %v1899
        %v1901 = vpop.f32.mrb[0].mxu0
        %1902 = vmatprep.mubr.bf16.mxu0 0
        %1903 = vmatmul.mubr.bf16.gmra.mrb[0].mxu0 %v1859
        %v1904 = vpop.f32.mrb[0].mxu0
        %v1905 = vadd.f32 %v1175, %v1904
        %v1906 = vpop.f32.mrb[0].mxu0
        %v1907 = vpop.f32.mrb[0].mxu0
        %v1908 = vadd.f32 %v1175, %v1907
        %v1909 = vpop.f32.mrb[0].mxu0
        %1910 = vmatprep.mubr.bf16.mxu0 0
        %1911 = vmatmul.mubr.bf16.gmra.mrb[0].mxu0 %v1860
        %v1912 = vpop.f32.mrb[0].mxu0
        %v1913 = vadd.f32 %v1175, %v1912
        %v1914 = vpop.f32.mrb[0].mxu0
        %v1915 = vpop.f32.mrb[0].mxu0
        %v1916 = vadd.f32 %v1175, %v1915
        %v1917 = vpop.f32.mrb[0].mxu0
        %1918 = vmatprep.mubr.bf16.mxu0 0
        %1919 = vmatmul.mubr.bf16.gmra.mrb[0].mxu0 %v1861
        %v1920 = vpop.f32.mrb[0].mxu0
        %v1921 = vadd.f32 %v1175, %v1920
        %v1922 = vpop.f32.mrb[0].mxu0
        %v1923 = vpop.f32.mrb[0].mxu0
        %v1924 = vadd.f32 %v1175, %v1923
        %v1925 = vpop.f32.mrb[0].mxu0
        %1926 = vdwg.mxu0
        %v1927 = vmul.f32 %v1897, 0.01
        %v1928 = vmul.f32 %v1900, 0.01
        %v1929 = vmul.f32 %v1905, 0.01
        %v1930 = vmul.f32 %v1908, 0.01
        %v1931 = vmul.f32 %v1913, 0.01
        %v1932 = vmul.f32 %v1916, 0.01
        %v1933 = vmul.f32 %v1921, 0.01
        %v1934 = vmul.f32 %v1924, 0.01
        %v1935 = vmax.f32 %v1897, %v1927
        %v1936 = vmax.f32 %v1900, %v1928
        %v1937 = vmax.f32 %v1905, %v1929
        %v1938 = vmax.f32 %v1908, %v1930
        %v1939 = vmax.f32 %v1913, %v1931
        %v1940 = vmax.f32 %v1916, %v1932
        %v1941 = vmax.f32 %v1921, %v1933
        %v1942 = vmax.f32 %v1924, %v1934
        %v1943 = vmax.f32 %v1728, %v1935
        %v1944 = vmax.f32 %v1729, %v1936
        %v1945 = vmax.f32 %v1730, %v1937
        %v1946 = vmax.f32 %v1731, %v1938
        %v1947 = vmax.f32 %v1732, %v1939
        %v1948 = vmax.f32 %v1733, %v1940
        %v1949 = vmax.f32 %v1734, %v1941
        %v1950 = vmax.f32 %v1735, %v1942
        %s1951 = scalar_lea.vmem %s809, 128 [#allocation2]
        %v1952 = vld [vmem:[%s1951] sm:$0xf]
        %v1953 = vld [vmem:[%s1951 + $0x4] sm:$0xf]
        %v1954 = vld [vmem:[%s1951 + $0x8] sm:$0xf]
        %v1955 = vld [vmem:[%s1951 + $0xc] sm:$0xf]
        %v1956 = vld [vmem:[%s1951 + $0x10] sm:$0xf]
        %v1957 = vld [vmem:[%s1951 + $0x14] sm:$0xf]
        %v1958 = vld [vmem:[%s1951 + $0x18] sm:$0xf]
        %v1959 = vld [vmem:[%s1951 + $0x1c] sm:$0xf]
        %v1968 = vunpack.c.l.b16 %v1952
        %v1969 = vunpack.c.l.b16 %v1953
        %v1970 = vunpack.c.l.b16 %v1954
        %v1971 = vunpack.c.l.b16 %v1955
        %v1972 = vunpack.c.l.b16 %v1956
        %v1973 = vunpack.c.l.b16 %v1957
        %v1974 = vunpack.c.l.b16 %v1958
        %v1975 = vunpack.c.l.b16 %v1959
        %v1976 = vpack.c.b16 %v1969, %v1968
        %v1977 = vpack.c.b16 %v1971, %v1970
        %v1978 = vpack.c.b16 %v1973, %v1972
        %v1979 = vpack.c.b16 %v1975, %v1974
        %v1981 = vsel %vm944, %v1976, 0
        %v1984 = vsel %vm944, %v1977, 0
        %v1987 = vsel %vm944, %v1978, 0
        %v1990 = vsel %vm944, %v1979, 0
        %1992 = vmatprep.subr.bf16.mxu0 0
        %1993 = vmatpush1.bf16.msra.mxu0 %v1066
        %1994 = vmatprep.subr.bf16.mxu0 0
        %1995 = vmatpush1.bf16.msra.mxu0 %v1067
        %1996 = vmatprep.subr.bf16.mxu0 0
        %1997 = vmatpush1.bf16.msra.mxu0 %v1068
        %1998 = vmatprep.subr.bf16.mxu0 0
        %1999 = vmatpush1.bf16.msra.mxu0 %v1069
        %2000 = vmatprep.subr.bf16.mxu0 0
        %2001 = vmatpush1.bf16.msra.mxu0 0
        %2002 = vmatprep.subr.bf16.mxu0 0
        %2003 = vmatpush1.bf16.msra.mxu0 0
        %2004 = vmatprep.subr.bf16.mxu0 0
        %2005 = vmatpush1.bf16.msra.mxu0 0
        %2006 = vmatprep.subr.bf16.mxu0 0
        %2007 = vmatpush1.bf16.msra.mxu0 0
        %2008 = vmatprep.subr.bf16.mxu0 0
        %2009 = vmatpush1.bf16.msra.mxu0 0
        %2010 = vmatprep.subr.bf16.mxu0 0
        %2011 = vmatpush1.bf16.msra.mxu0 0
        %2012 = vmatprep.subr.bf16.mxu0 0
        %2013 = vmatpush1.bf16.msra.mxu0 0
        %2014 = vmatprep.subr.bf16.mxu0 0
        %2015 = vmatpush1.bf16.msra.mxu0 0
        %2016 = vmatprep.subr.bf16.mxu0 0
        %2017 = vmatpush1.bf16.msra.mxu0 0
        %2018 = vmatprep.subr.bf16.mxu0 0
        %2019 = vmatpush1.bf16.msra.mxu0 0
        %2020 = vmatprep.subr.bf16.mxu0 0
        %2021 = vmatpush1.bf16.msra.mxu0 0
        %2022 = vmatprep.subr.bf16.mxu0 0
        %2023 = vmatpush1.bf16.msra.mxu0 0
        %2024 = vmatprep.mubr.bf16.mxu0 0
        %2025 = vmatmul.mubr.bf16.gmra.mrb[0].mxu0 %v1981
        %v2026 = vpop.f32.mrb[0].mxu0
        %v2027 = vadd.f32 %v992, %v2026
        %v2028 = vpop.f32.mrb[0].mxu0
        %v2029 = vpop.f32.mrb[0].mxu0
        %v2030 = vadd.f32 %v995, %v2029
        %v2031 = vpop.f32.mrb[0].mxu0
        %2032 = vmatprep.mubr.bf16.mxu0 0
        %2033 = vmatmul.mubr.bf16.gmra.mrb[0].mxu0 %v1984
        %v2034 = vpop.f32.mrb[0].mxu0
        %v2035 = vadd.f32 %v1000, %v2034
        %v2036 = vpop.f32.mrb[0].mxu0
        %v2037 = vpop.f32.mrb[0].mxu0
        %v2038 = vadd.f32 %v1003, %v2037
        %v2039 = vpop.f32.mrb[0].mxu0
        %2040 = vmatprep.mubr.bf16.mxu0 0
        %2041 = vmatmul.mubr.bf16.gmra.mrb[0].mxu0 %v1987
        %v2042 = vpop.f32.mrb[0].mxu0
        %v2043 = vadd.f32 %v1008, %v2042
        %v2044 = vpop.f32.mrb[0].mxu0
        %v2045 = vpop.f32.mrb[0].mxu0
        %v2046 = vadd.f32 %v1011, %v2045
        %v2047 = vpop.f32.mrb[0].mxu0
        %2048 = vmatprep.mubr.bf16.mxu0 0
        %2049 = vmatmul.mubr.bf16.gmra.mrb[0].mxu0 %v1990
        %v2050 = vpop.f32.mrb[0].mxu0
        %v2051 = vadd.f32 %v1016, %v2050
        %v2052 = vpop.f32.mrb[0].mxu0
        %v2053 = vpop.f32.mrb[0].mxu0
        %v2054 = vadd.f32 %v1019, %v2053
        %v2055 = vpop.f32.mrb[0].mxu0
        %2056 = vdwg.mxu0
        %v2057 = vmul.f32 %v2027, 0.01
        %v2058 = vmul.f32 %v2030, 0.01
        %v2059 = vmul.f32 %v2035, 0.01
        %v2060 = vmul.f32 %v2038, 0.01
        %v2061 = vmul.f32 %v2043, 0.01
        %v2062 = vmul.f32 %v2046, 0.01
        %v2063 = vmul.f32 %v2051, 0.01
        %v2064 = vmul.f32 %v2054, 0.01
        %v2065 = vmax.f32 %v2027, %v2057
        %v2066 = vmax.f32 %v2030, %v2058
        %v2067 = vmax.f32 %v2035, %v2059
        %v2068 = vmax.f32 %v2038, %v2060
        %v2069 = vmax.f32 %v2043, %v2061
        %v2070 = vmax.f32 %v2046, %v2062
        %v2071 = vmax.f32 %v2051, %v2063
        %v2072 = vmax.f32 %v2054, %v2064
        %v2073 = vpack.c.bf16 %v2066, %v2065
        %v2074 = vpack.c.bf16 %v2068, %v2067
        %v2075 = vpack.c.bf16 %v2070, %v2069
        %v2076 = vpack.c.bf16 %v2072, %v2071
        %2077 = vmatprep.subr.bf16.mxu0 0
        %2078 = vmatpush1.bf16.msra.mxu0 %v1209
        %2079 = vmatprep.subr.bf16.mxu0 0
        %2080 = vmatpush1.bf16.msra.mxu0 %v1210
        %2081 = vmatprep.subr.bf16.mxu0 0
        %2082 = vmatpush1.bf16.msra.mxu0 %v1211
        %2083 = vmatprep.subr.bf16.mxu0 0
        %2084 = vmatpush1.bf16.msra.mxu0 %v1212
        %2085 = vmatprep.subr.bf16.mxu0 0
        %2086 = vmatpush1.bf16.msra.mxu0 %v1213
        %2087 = vmatprep.subr.bf16.mxu0 0
        %2088 = vmatpush1.bf16.msra.mxu0 %v1214
        %2089 = vmatprep.subr.bf16.mxu0 0
        %2090 = vmatpush1.bf16.msra.mxu0 %v1215
        %2091 = vmatprep.subr.bf16.mxu0 0
        %2092 = vmatpush1.bf16.msra.mxu0 %v1216
        %2093 = vmatprep.subr.bf16.mxu0 0
        %2094 = vmatpush1.bf16.msra.mxu0 0
        %2095 = vmatprep.subr.bf16.mxu0 0
        %2096 = vmatpush1.bf16.msra.mxu0 0
        %2097 = vmatprep.subr.bf16.mxu0 0
        %2098 = vmatpush1.bf16.msra.mxu0 0
        %2099 = vmatprep.subr.bf16.mxu0 0
        %2100 = vmatpush1.bf16.msra.mxu0 0
        %2101 = vmatprep.subr.bf16.mxu0 0
        %2102 = vmatpush1.bf16.msra.mxu0 0
        %2103 = vmatprep.subr.bf16.mxu0 0
        %2104 = vmatpush1.bf16.msra.mxu0 0
        %2105 = vmatprep.subr.bf16.mxu0 0
        %2106 = vmatpush1.bf16.msra.mxu0 0
        %2107 = vmatprep.subr.bf16.mxu0 0
        %2108 = vmatpush1.bf16.msra.mxu0 0
        %2109 = vmatprep.mubr.bf16.mxu0 0
        %2110 = vmatmul.mubr.bf16.gmra.mrb[0].mxu0 %v2073
        %v2111 = vpop.f32.mrb[0].mxu0
        %v2112 = vadd.f32 %v1175, %v2111
        %v2113 = vpop.f32.mrb[0].mxu0
        %v2114 = vpop.f32.mrb[0].mxu0
        %v2115 = vadd.f32 %v1175, %v2114
        %v2116 = vpop.f32.mrb[0].mxu0
        %2117 = vmatprep.mubr.bf16.mxu0 0
        %2118 = vmatmul.mubr.bf16.gmra.mrb[0].mxu0 %v2074
        %v2119 = vpop.f32.mrb[0].mxu0
        %v2120 = vadd.f32 %v1175, %v2119
        %v2121 = vpop.f32.mrb[0].mxu0
        %v2122 = vpop.f32.mrb[0].mxu0
        %v2123 = vadd.f32 %v1175, %v2122
        %v2124 = vpop.f32.mrb[0].mxu0
        %2125 = vmatprep.mubr.bf16.mxu0 0
        %2126 = vmatmul.mubr.bf16.gmra.mrb[0].mxu0 %v2075
        %v2127 = vpop.f32.mrb[0].mxu0
        %v2128 = vadd.f32 %v1175, %v2127
        %v2129 = vpop.f32.mrb[0].mxu0
        %v2130 = vpop.f32.mrb[0].mxu0
        %v2131 = vadd.f32 %v1175, %v2130
        %v2132 = vpop.f32.mrb[0].mxu0
        %2133 = vmatprep.mubr.bf16.mxu0 0
        %2134 = vmatmul.mubr.bf16.gmra.mrb[0].mxu0 %v2076
        %v2135 = vpop.f32.mrb[0].mxu0
        %v2136 = vadd.f32 %v1175, %v2135
        %v2137 = vpop.f32.mrb[0].mxu0
        %v2138 = vpop.f32.mrb[0].mxu0
        %v2139 = vadd.f32 %v1175, %v2138
        %v2140 = vpop.f32.mrb[0].mxu0
        %2141 = vdwg.mxu0
        %v2142 = vmul.f32 %v2112, 0.01
        %v2143 = vmul.f32 %v2115, 0.01
        %v2144 = vmul.f32 %v2120, 0.01
        %v2145 = vmul.f32 %v2123, 0.01
        %v2146 = vmul.f32 %v2128, 0.01
        %v2147 = vmul.f32 %v2131, 0.01
        %v2148 = vmul.f32 %v2136, 0.01
        %v2149 = vmul.f32 %v2139, 0.01
        %v2150 = vmax.f32 %v2112, %v2142
        %v2151 = vmax.f32 %v2115, %v2143
        %v2152 = vmax.f32 %v2120, %v2144
        %v2153 = vmax.f32 %v2123, %v2145
        %v2154 = vmax.f32 %v2128, %v2146
        %v2155 = vmax.f32 %v2131, %v2147
        %v2156 = vmax.f32 %v2136, %v2148
        %v2157 = vmax.f32 %v2139, %v2149
        %v2158 = vmax.f32 %v1943, %v2150
        %v2159 = vmax.f32 %v1944, %v2151
        %v2160 = vmax.f32 %v1945, %v2152
        %v2161 = vmax.f32 %v1946, %v2153
        %v2162 = vmax.f32 %v1947, %v2154
        %v2163 = vmax.f32 %v1948, %v2155
        %v2164 = vmax.f32 %v1949, %v2156
        %v2165 = vmax.f32 %v1950, %v2157
        %s2166 = scalar_lea.vmem %s809, 160 [#allocation2]
        %v2167 = vld [vmem:[%s2166] sm:$0xf]
        %v2168 = vld [vmem:[%s2166 + $0x4] sm:$0xf]
        %v2169 = vld [vmem:[%s2166 + $0x8] sm:$0xf]
        %v2170 = vld [vmem:[%s2166 + $0xc] sm:$0xf]
        %v2171 = vld [vmem:[%s2166 + $0x10] sm:$0xf]
        %v2172 = vld [vmem:[%s2166 + $0x14] sm:$0xf]
        %v2173 = vld [vmem:[%s2166 + $0x18] sm:$0xf]
        %v2174 = vld [vmem:[%s2166 + $0x1c] sm:$0xf]
        %v2183 = vunpack.c.l.b16 %v2167
        %v2184 = vunpack.c.l.b16 %v2168
        %v2185 = vunpack.c.l.b16 %v2169
        %v2186 = vunpack.c.l.b16 %v2170
        %v2187 = vunpack.c.l.b16 %v2171
        %v2188 = vunpack.c.l.b16 %v2172
        %v2189 = vunpack.c.l.b16 %v2173
        %v2190 = vunpack.c.l.b16 %v2174
        %v2191 = vpack.c.b16 %v2184, %v2183
        %v2192 = vpack.c.b16 %v2186, %v2185
        %v2193 = vpack.c.b16 %v2188, %v2187
        %v2194 = vpack.c.b16 %v2190, %v2189
        %v2196 = vsel %vm944, %v2191, 0
        %v2199 = vsel %vm944, %v2192, 0
        %v2202 = vsel %vm944, %v2193, 0
        %v2205 = vsel %vm944, %v2194, 0
        %2207 = vmatprep.subr.bf16.mxu0 0
        %2208 = vmatpush1.bf16.msra.mxu0 %v1066
        %2209 = vmatprep.subr.bf16.mxu0 0
        %2210 = vmatpush1.bf16.msra.mxu0 %v1067
        %2211 = vmatprep.subr.bf16.mxu0 0
        %2212 = vmatpush1.bf16.msra.mxu0 %v1068
        %2213 = vmatprep.subr.bf16.mxu0 0
        %2214 = vmatpush1.bf16.msra.mxu0 %v1069
        %2215 = vmatprep.subr.bf16.mxu0 0
        %2216 = vmatpush1.bf16.msra.mxu0 0
        %2217 = vmatprep.subr.bf16.mxu0 0
        %2218 = vmatpush1.bf16.msra.mxu0 0
        %2219 = vmatprep.subr.bf16.mxu0 0
        %2220 = vmatpush1.bf16.msra.mxu0 0
        %2221 = vmatprep.subr.bf16.mxu0 0
        %2222 = vmatpush1.bf16.msra.mxu0 0
        %2223 = vmatprep.subr.bf16.mxu0 0
        %2224 = vmatpush1.bf16.msra.mxu0 0
        %2225 = vmatprep.subr.bf16.mxu0 0
        %2226 = vmatpush1.bf16.msra.mxu0 0
        %2227 = vmatprep.subr.bf16.mxu0 0
        %2228 = vmatpush1.bf16.msra.mxu0 0
        %2229 = vmatprep.subr.bf16.mxu0 0
        %2230 = vmatpush1.bf16.msra.mxu0 0
        %2231 = vmatprep.subr.bf16.mxu0 0
        %2232 = vmatpush1.bf16.msra.mxu0 0
        %2233 = vmatprep.subr.bf16.mxu0 0
        %2234 = vmatpush1.bf16.msra.mxu0 0
        %2235 = vmatprep.subr.bf16.mxu0 0
        %2236 = vmatpush1.bf16.msra.mxu0 0
        %2237 = vmatprep.subr.bf16.mxu0 0
        %2238 = vmatpush1.bf16.msra.mxu0 0
        %2239 = vmatprep.mubr.bf16.mxu0 0
        %2240 = vmatmul.mubr.bf16.gmra.mrb[0].mxu0 %v2196
        %v2241 = vpop.f32.mrb[0].mxu0
        %v2242 = vadd.f32 %v992, %v2241
        %v2243 = vpop.f32.mrb[0].mxu0
        %v2244 = vpop.f32.mrb[0].mxu0
        %v2245 = vadd.f32 %v995, %v2244
        %v2246 = vpop.f32.mrb[0].mxu0
        %2247 = vmatprep.mubr.bf16.mxu0 0
        %2248 = vmatmul.mubr.bf16.gmra.mrb[0].mxu0 %v2199
        %v2249 = vpop.f32.mrb[0].mxu0
        %v2250 = vadd.f32 %v1000, %v2249
        %v2251 = vpop.f32.mrb[0].mxu0
        %v2252 = vpop.f32.mrb[0].mxu0
        %v2253 = vadd.f32 %v1003, %v2252
        %v2254 = vpop.f32.mrb[0].mxu0
        %2255 = vmatprep.mubr.bf16.mxu0 0
        %2256 = vmatmul.mubr.bf16.gmra.mrb[0].mxu0 %v2202
        %v2257 = vpop.f32.mrb[0].mxu0
        %v2258 = vadd.f32 %v1008, %v2257
        %v2259 = vpop.f32.mrb[0].mxu0
        %v2260 = vpop.f32.mrb[0].mxu0
        %v2261 = vadd.f32 %v1011, %v2260
        %v2262 = vpop.f32.mrb[0].mxu0
        %2263 = vmatprep.mubr.bf16.mxu0 0
        %2264 = vmatmul.mubr.bf16.gmra.mrb[0].mxu0 %v2205
        %v2265 = vpop.f32.mrb[0].mxu0
        %v2266 = vadd.f32 %v1016, %v2265
        %v2267 = vpop.f32.mrb[0].mxu0
        %v2268 = vpop.f32.mrb[0].mxu0
        %v2269 = vadd.f32 %v1019, %v2268
        %v2270 = vpop.f32.mrb[0].mxu0
        %2271 = vdwg.mxu0
        %v2272 = vmul.f32 %v2242, 0.01
        %v2273 = vmul.f32 %v2245, 0.01
        %v2274 = vmul.f32 %v2250, 0.01
        %v2275 = vmul.f32 %v2253, 0.01
        %v2276 = vmul.f32 %v2258, 0.01
        %v2277 = vmul.f32 %v2261, 0.01
        %v2278 = vmul.f32 %v2266, 0.01
        %v2279 = vmul.f32 %v2269, 0.01
        %v2280 = vmax.f32 %v2242, %v2272
        %v2281 = vmax.f32 %v2245, %v2273
        %v2282 = vmax.f32 %v2250, %v2274
        %v2283 = vmax.f32 %v2253, %v2275
        %v2284 = vmax.f32 %v2258, %v2276
        %v2285 = vmax.f32 %v2261, %v2277
        %v2286 = vmax.f32 %v2266, %v2278
        %v2287 = vmax.f32 %v2269, %v2279
        %v2288 = vpack.c.bf16 %v2281, %v2280
        %v2289 = vpack.c.bf16 %v2283, %v2282
        %v2290 = vpack.c.bf16 %v2285, %v2284
        %v2291 = vpack.c.bf16 %v2287, %v2286
        %2292 = vmatprep.subr.bf16.mxu0 0
        %2293 = vmatpush1.bf16.msra.mxu0 %v1209
        %2294 = vmatprep.subr.bf16.mxu0 0
        %2295 = vmatpush1.bf16.msra.mxu0 %v1210
        %2296 = vmatprep.subr.bf16.mxu0 0
        %2297 = vmatpush1.bf16.msra.mxu0 %v1211
        %2298 = vmatprep.subr.bf16.mxu0 0
        %2299 = vmatpush1.bf16.msra.mxu0 %v1212
        %2300 = vmatprep.subr.bf16.mxu0 0
        %2301 = vmatpush1.bf16.msra.mxu0 %v1213
        %2302 = vmatprep.subr.bf16.mxu0 0
        %2303 = vmatpush1.bf16.msra.mxu0 %v1214
        %2304 = vmatprep.subr.bf16.mxu0 0
        %2305 = vmatpush1.bf16.msra.mxu0 %v1215
        %2306 = vmatprep.subr.bf16.mxu0 0
        %2307 = vmatpush1.bf16.msra.mxu0 %v1216
        %2308 = vmatprep.subr.bf16.mxu0 0
        %2309 = vmatpush1.bf16.msra.mxu0 0
        %2310 = vmatprep.subr.bf16.mxu0 0
        %2311 = vmatpush1.bf16.msra.mxu0 0
        %2312 = vmatprep.subr.bf16.mxu0 0
        %2313 = vmatpush1.bf16.msra.mxu0 0
        %2314 = vmatprep.subr.bf16.mxu0 0
        %2315 = vmatpush1.bf16.msra.mxu0 0
        %2316 = vmatprep.subr.bf16.mxu0 0
        %2317 = vmatpush1.bf16.msra.mxu0 0
        %2318 = vmatprep.subr.bf16.mxu0 0
        %2319 = vmatpush1.bf16.msra.mxu0 0
        %2320 = vmatprep.subr.bf16.mxu0 0
        %2321 = vmatpush1.bf16.msra.mxu0 0
        %2322 = vmatprep.subr.bf16.mxu0 0
        %2323 = vmatpush1.bf16.msra.mxu0 0
        %2324 = vmatprep.mubr.bf16.mxu0 0
        %2325 = vmatmul.mubr.bf16.gmra.mrb[0].mxu0 %v2288
        %v2326 = vpop.f32.mrb[0].mxu0
        %v2327 = vadd.f32 %v1175, %v2326
        %v2328 = vpop.f32.mrb[0].mxu0
        %v2329 = vpop.f32.mrb[0].mxu0
        %v2330 = vadd.f32 %v1175, %v2329
        %v2331 = vpop.f32.mrb[0].mxu0
        %2332 = vmatprep.mubr.bf16.mxu0 0
        %2333 = vmatmul.mubr.bf16.gmra.mrb[0].mxu0 %v2289
        %v2334 = vpop.f32.mrb[0].mxu0
        %v2335 = vadd.f32 %v1175, %v2334
        %v2336 = vpop.f32.mrb[0].mxu0
        %v2337 = vpop.f32.mrb[0].mxu0
        %v2338 = vadd.f32 %v1175, %v2337
        %v2339 = vpop.f32.mrb[0].mxu0
        %2340 = vmatprep.mubr.bf16.mxu0 0
        %2341 = vmatmul.mubr.bf16.gmra.mrb[0].mxu0 %v2290
        %v2342 = vpop.f32.mrb[0].mxu0
        %v2343 = vadd.f32 %v1175, %v2342
        %v2344 = vpop.f32.mrb[0].mxu0
        %v2345 = vpop.f32.mrb[0].mxu0
        %v2346 = vadd.f32 %v1175, %v2345
        %v2347 = vpop.f32.mrb[0].mxu0
        %2348 = vmatprep.mubr.bf16.mxu0 0
        %2349 = vmatmul.mubr.bf16.gmra.mrb[0].mxu0 %v2291
        %v2350 = vpop.f32.mrb[0].mxu0
        %v2351 = vadd.f32 %v1175, %v2350
        %v2352 = vpop.f32.mrb[0].mxu0
        %v2353 = vpop.f32.mrb[0].mxu0
        %v2354 = vadd.f32 %v1175, %v2353
        %v2355 = vpop.f32.mrb[0].mxu0
        %2356 = vdwg.mxu0
        %v2357 = vmul.f32 %v2327, 0.01
        %v2358 = vmul.f32 %v2330, 0.01
        %v2359 = vmul.f32 %v2335, 0.01
        %v2360 = vmul.f32 %v2338, 0.01
        %v2361 = vmul.f32 %v2343, 0.01
        %v2362 = vmul.f32 %v2346, 0.01
        %v2363 = vmul.f32 %v2351, 0.01
        %v2364 = vmul.f32 %v2354, 0.01
        %v2365 = vmax.f32 %v2327, %v2357
        %v2366 = vmax.f32 %v2330, %v2358
        %v2367 = vmax.f32 %v2335, %v2359
        %v2368 = vmax.f32 %v2338, %v2360
        %v2369 = vmax.f32 %v2343, %v2361
        %v2370 = vmax.f32 %v2346, %v2362
        %v2371 = vmax.f32 %v2351, %v2363
        %v2372 = vmax.f32 %v2354, %v2364
        %v2373 = vmax.f32 %v2158, %v2365
        %v2374 = vmax.f32 %v2159, %v2366
        %v2375 = vmax.f32 %v2160, %v2367
        %v2376 = vmax.f32 %v2161, %v2368
        %v2377 = vmax.f32 %v2162, %v2369
        %v2378 = vmax.f32 %v2163, %v2370
        %v2379 = vmax.f32 %v2164, %v2371
        %v2380 = vmax.f32 %v2165, %v2372
        %s2381 = scalar_lea.vmem %s809, 192 [#allocation2]
        %v2382 = vld [vmem:[%s2381] sm:$0xf]
        %v2383 = vld [vmem:[%s2381 + $0x4] sm:$0xf]
        %v2384 = vld [vmem:[%s2381 + $0x8] sm:$0xf]
        %v2385 = vld [vmem:[%s2381 + $0xc] sm:$0xf]
        %v2386 = vld [vmem:[%s2381 + $0x10] sm:$0xf]
        %v2387 = vld [vmem:[%s2381 + $0x14] sm:$0xf]
        %v2388 = vld [vmem:[%s2381 + $0x18] sm:$0xf]
        %v2389 = vld [vmem:[%s2381 + $0x1c] sm:$0xf]
        %v2398 = vunpack.c.l.b16 %v2382
        %v2399 = vunpack.c.l.b16 %v2383
        %v2400 = vunpack.c.l.b16 %v2384
        %v2401 = vunpack.c.l.b16 %v2385
        %v2402 = vunpack.c.l.b16 %v2386
        %v2403 = vunpack.c.l.b16 %v2387
        %v2404 = vunpack.c.l.b16 %v2388
        %v2405 = vunpack.c.l.b16 %v2389
        %v2406 = vpack.c.b16 %v2399, %v2398
        %v2407 = vpack.c.b16 %v2401, %v2400
        %v2408 = vpack.c.b16 %v2403, %v2402
        %v2409 = vpack.c.b16 %v2405, %v2404
        %v2411 = vsel %vm944, %v2406, 0
        %v2414 = vsel %vm944, %v2407, 0
        %v2417 = vsel %vm944, %v2408, 0
        %v2420 = vsel %vm944, %v2409, 0
        %2422 = vmatprep.subr.bf16.mxu0 0
        %2423 = vmatpush1.bf16.msra.mxu0 %v1066
        %2424 = vmatprep.subr.bf16.mxu0 0
        %2425 = vmatpush1.bf16.msra.mxu0 %v1067
        %2426 = vmatprep.subr.bf16.mxu0 0
        %2427 = vmatpush1.bf16.msra.mxu0 %v1068
        %2428 = vmatprep.subr.bf16.mxu0 0
        %2429 = vmatpush1.bf16.msra.mxu0 %v1069
        %2430 = vmatprep.subr.bf16.mxu0 0
        %2431 = vmatpush1.bf16.msra.mxu0 0
        %2432 = vmatprep.subr.bf16.mxu0 0
        %2433 = vmatpush1.bf16.msra.mxu0 0
        %2434 = vmatprep.subr.bf16.mxu0 0
        %2435 = vmatpush1.bf16.msra.mxu0 0
        %2436 = vmatprep.subr.bf16.mxu0 0
        %2437 = vmatpush1.bf16.msra.mxu0 0
        %2438 = vmatprep.subr.bf16.mxu0 0
        %2439 = vmatpush1.bf16.msra.mxu0 0
        %2440 = vmatprep.subr.bf16.mxu0 0
        %2441 = vmatpush1.bf16.msra.mxu0 0
        %2442 = vmatprep.subr.bf16.mxu0 0
        %2443 = vmatpush1.bf16.msra.mxu0 0
        %2444 = vmatprep.subr.bf16.mxu0 0
        %2445 = vmatpush1.bf16.msra.mxu0 0
        %2446 = vmatprep.subr.bf16.mxu0 0
        %2447 = vmatpush1.bf16.msra.mxu0 0
        %2448 = vmatprep.subr.bf16.mxu0 0
        %2449 = vmatpush1.bf16.msra.mxu0 0
        %2450 = vmatprep.subr.bf16.mxu0 0
        %2451 = vmatpush1.bf16.msra.mxu0 0
        %2452 = vmatprep.subr.bf16.mxu0 0
        %2453 = vmatpush1.bf16.msra.mxu0 0
        %2454 = vmatprep.mubr.bf16.mxu0 0
        %2455 = vmatmul.mubr.bf16.gmra.mrb[0].mxu0 %v2411
        %v2456 = vpop.f32.mrb[0].mxu0
        %v2457 = vadd.f32 %v992, %v2456
        %v2458 = vpop.f32.mrb[0].mxu0
        %v2459 = vpop.f32.mrb[0].mxu0
        %v2460 = vadd.f32 %v995, %v2459
        %v2461 = vpop.f32.mrb[0].mxu0
        %2462 = vmatprep.mubr.bf16.mxu0 0
        %2463 = vmatmul.mubr.bf16.gmra.mrb[0].mxu0 %v2414
        %v2464 = vpop.f32.mrb[0].mxu0
        %v2465 = vadd.f32 %v1000, %v2464
        %v2466 = vpop.f32.mrb[0].mxu0
        %v2467 = vpop.f32.mrb[0].mxu0
        %v2468 = vadd.f32 %v1003, %v2467
        %v2469 = vpop.f32.mrb[0].mxu0
        %2470 = vmatprep.mubr.bf16.mxu0 0
        %2471 = vmatmul.mubr.bf16.gmra.mrb[0].mxu0 %v2417
        %v2472 = vpop.f32.mrb[0].mxu0
        %v2473 = vadd.f32 %v1008, %v2472
        %v2474 = vpop.f32.mrb[0].mxu0
        %v2475 = vpop.f32.mrb[0].mxu0
        %v2476 = vadd.f32 %v1011, %v2475
        %v2477 = vpop.f32.mrb[0].mxu0
        %2478 = vmatprep.mubr.bf16.mxu0 0
        %2479 = vmatmul.mubr.bf16.gmra.mrb[0].mxu0 %v2420
        %v2480 = vpop.f32.mrb[0].mxu0
        %v2481 = vadd.f32 %v1016, %v2480
        %v2482 = vpop.f32.mrb[0].mxu0
        %v2483 = vpop.f32.mrb[0].mxu0
        %v2484 = vadd.f32 %v1019, %v2483
        %v2485 = vpop.f32.mrb[0].mxu0
        %2486 = vdwg.mxu0
        %v2487 = vmul.f32 %v2457, 0.01
        %v2488 = vmul.f32 %v2460, 0.01
        %v2489 = vmul.f32 %v2465, 0.01
        %v2490 = vmul.f32 %v2468, 0.01
        %v2491 = vmul.f32 %v2473, 0.01
        %v2492 = vmul.f32 %v2476, 0.01
        %v2493 = vmul.f32 %v2481, 0.01
        %v2494 = vmul.f32 %v2484, 0.01
        %v2495 = vmax.f32 %v2457, %v2487
        %v2496 = vmax.f32 %v2460, %v2488
        %v2497 = vmax.f32 %v2465, %v2489
        %v2498 = vmax.f32 %v2468, %v2490
        %v2499 = vmax.f32 %v2473, %v2491
        %v2500 = vmax.f32 %v2476, %v2492
        %v2501 = vmax.f32 %v2481, %v2493
        %v2502 = vmax.f32 %v2484, %v2494
        %v2503 = vpack.c.bf16 %v2496, %v2495
        %v2504 = vpack.c.bf16 %v2498, %v2497
        %v2505 = vpack.c.bf16 %v2500, %v2499
        %v2506 = vpack.c.bf16 %v2502, %v2501
        %2507 = vmatprep.subr.bf16.mxu0 0
        %2508 = vmatpush1.bf16.msra.mxu0 %v1209
        %2509 = vmatprep.subr.bf16.mxu0 0
        %2510 = vmatpush1.bf16.msra.mxu0 %v1210
        %2511 = vmatprep.subr.bf16.mxu0 0
        %2512 = vmatpush1.bf16.msra.mxu0 %v1211
        %2513 = vmatprep.subr.bf16.mxu0 0
        %2514 = vmatpush1.bf16.msra.mxu0 %v1212
        %2515 = vmatprep.subr.bf16.mxu0 0
        %2516 = vmatpush1.bf16.msra.mxu0 %v1213
        %2517 = vmatprep.subr.bf16.mxu0 0
        %2518 = vmatpush1.bf16.msra.mxu0 %v1214
        %2519 = vmatprep.subr.bf16.mxu0 0
        %2520 = vmatpush1.bf16.msra.mxu0 %v1215
        %2521 = vmatprep.subr.bf16.mxu0 0
        %2522 = vmatpush1.bf16.msra.mxu0 %v1216
        %2523 = vmatprep.subr.bf16.mxu0 0
        %2524 = vmatpush1.bf16.msra.mxu0 0
        %2525 = vmatprep.subr.bf16.mxu0 0
        %2526 = vmatpush1.bf16.msra.mxu0 0
        %2527 = vmatprep.subr.bf16.mxu0 0
        %2528 = vmatpush1.bf16.msra.mxu0 0
        %2529 = vmatprep.subr.bf16.mxu0 0
        %2530 = vmatpush1.bf16.msra.mxu0 0
        %2531 = vmatprep.subr.bf16.mxu0 0
        %2532 = vmatpush1.bf16.msra.mxu0 0
        %2533 = vmatprep.subr.bf16.mxu0 0
        %2534 = vmatpush1.bf16.msra.mxu0 0
        %2535 = vmatprep.subr.bf16.mxu0 0
        %2536 = vmatpush1.bf16.msra.mxu0 0
        %2537 = vmatprep.subr.bf16.mxu0 0
        %2538 = vmatpush1.bf16.msra.mxu0 0
        %2539 = vmatprep.mubr.bf16.mxu0 0
        %2540 = vmatmul.mubr.bf16.gmra.mrb[0].mxu0 %v2503
        %v2541 = vpop.f32.mrb[0].mxu0
        %v2542 = vadd.f32 %v1175, %v2541
        %v2543 = vpop.f32.mrb[0].mxu0
        %v2544 = vpop.f32.mrb[0].mxu0
        %v2545 = vadd.f32 %v1175, %v2544
        %v2546 = vpop.f32.mrb[0].mxu0
        %2547 = vmatprep.mubr.bf16.mxu0 0
        %2548 = vmatmul.mubr.bf16.gmra.mrb[0].mxu0 %v2504
        %v2549 = vpop.f32.mrb[0].mxu0
        %v2550 = vadd.f32 %v1175, %v2549
        %v2551 = vpop.f32.mrb[0].mxu0
        %v2552 = vpop.f32.mrb[0].mxu0
        %v2553 = vadd.f32 %v1175, %v2552
        %v2554 = vpop.f32.mrb[0].mxu0
        %2555 = vmatprep.mubr.bf16.mxu0 0
        %2556 = vmatmul.mubr.bf16.gmra.mrb[0].mxu0 %v2505
        %v2557 = vpop.f32.mrb[0].mxu0
        %v2558 = vadd.f32 %v1175, %v2557
        %v2559 = vpop.f32.mrb[0].mxu0
        %v2560 = vpop.f32.mrb[0].mxu0
        %v2561 = vadd.f32 %v1175, %v2560
        %v2562 = vpop.f32.mrb[0].mxu0
        %2563 = vmatprep.mubr.bf16.mxu0 0
        %2564 = vmatmul.mubr.bf16.gmra.mrb[0].mxu0 %v2506
        %v2565 = vpop.f32.mrb[0].mxu0
        %v2566 = vadd.f32 %v1175, %v2565
        %v2567 = vpop.f32.mrb[0].mxu0
        %v2568 = vpop.f32.mrb[0].mxu0
        %v2569 = vadd.f32 %v1175, %v2568
        %v2570 = vpop.f32.mrb[0].mxu0
        %2571 = vdwg.mxu0
        %v2572 = vmul.f32 %v2542, 0.01
        %v2573 = vmul.f32 %v2545, 0.01
        %v2574 = vmul.f32 %v2550, 0.01
        %v2575 = vmul.f32 %v2553, 0.01
        %v2576 = vmul.f32 %v2558, 0.01
        %v2577 = vmul.f32 %v2561, 0.01
        %v2578 = vmul.f32 %v2566, 0.01
        %v2579 = vmul.f32 %v2569, 0.01
        %v2580 = vmax.f32 %v2542, %v2572
        %v2581 = vmax.f32 %v2545, %v2573
        %v2582 = vmax.f32 %v2550, %v2574
        %v2583 = vmax.f32 %v2553, %v2575
        %v2584 = vmax.f32 %v2558, %v2576
        %v2585 = vmax.f32 %v2561, %v2577
        %v2586 = vmax.f32 %v2566, %v2578
        %v2587 = vmax.f32 %v2569, %v2579
        %v2588 = vmax.f32 %v2373, %v2580
        %v2589 = vmax.f32 %v2374, %v2581
        %v2590 = vmax.f32 %v2375, %v2582
        %v2591 = vmax.f32 %v2376, %v2583
        %v2592 = vmax.f32 %v2377, %v2584
        %v2593 = vmax.f32 %v2378, %v2585
        %v2594 = vmax.f32 %v2379, %v2586
        %v2595 = vmax.f32 %v2380, %v2587
        %s2596 = scalar_lea.vmem %s809, 224 [#allocation2]
        %v2597 = vld [vmem:[%s2596] sm:$0xf]
        %v2598 = vld [vmem:[%s2596 + $0x4] sm:$0xf]
        %v2599 = vld [vmem:[%s2596 + $0x8] sm:$0xf]
        %v2600 = vld [vmem:[%s2596 + $0xc] sm:$0xf]
        %v2601 = vld [vmem:[%s2596 + $0x10] sm:$0xf]
        %v2602 = vld [vmem:[%s2596 + $0x14] sm:$0xf]
        %v2603 = vld [vmem:[%s2596 + $0x18] sm:$0xf]
        %v2604 = vld [vmem:[%s2596 + $0x1c] sm:$0xf]
        %v2613 = vunpack.c.l.b16 %v2597
        %v2614 = vunpack.c.l.b16 %v2598
        %v2615 = vunpack.c.l.b16 %v2599
        %v2616 = vunpack.c.l.b16 %v2600
        %v2617 = vunpack.c.l.b16 %v2601
        %v2618 = vunpack.c.l.b16 %v2602
        %v2619 = vunpack.c.l.b16 %v2603
        %v2620 = vunpack.c.l.b16 %v2604
        %v2621 = vpack.c.b16 %v2614, %v2613
        %v2622 = vpack.c.b16 %v2616, %v2615
        %v2623 = vpack.c.b16 %v2618, %v2617
        %v2624 = vpack.c.b16 %v2620, %v2619
        %v2626 = vsel %vm944, %v2621, 0
        %v2629 = vsel %vm944, %v2622, 0
        %v2632 = vsel %vm944, %v2623, 0
        %v2635 = vsel %vm944, %v2624, 0
        %2637 = vmatprep.subr.bf16.mxu0 0
        %2638 = vmatpush1.bf16.msra.mxu0 %v1066
        %2639 = vmatprep.subr.bf16.mxu0 0
        %2640 = vmatpush1.bf16.msra.mxu0 %v1067
        %2641 = vmatprep.subr.bf16.mxu0 0
        %2642 = vmatpush1.bf16.msra.mxu0 %v1068
        %2643 = vmatprep.subr.bf16.mxu0 0
        %2644 = vmatpush1.bf16.msra.mxu0 %v1069
        %2645 = vmatprep.subr.bf16.mxu0 0
        %2646 = vmatpush1.bf16.msra.mxu0 0
        %2647 = vmatprep.subr.bf16.mxu0 0
        %2648 = vmatpush1.bf16.msra.mxu0 0
        %2649 = vmatprep.subr.bf16.mxu0 0
        %2650 = vmatpush1.bf16.msra.mxu0 0
        %2651 = vmatprep.subr.bf16.mxu0 0
        %2652 = vmatpush1.bf16.msra.mxu0 0
        %2653 = vmatprep.subr.bf16.mxu0 0
        %2654 = vmatpush1.bf16.msra.mxu0 0
        %2655 = vmatprep.subr.bf16.mxu0 0
        %2656 = vmatpush1.bf16.msra.mxu0 0
        %2657 = vmatprep.subr.bf16.mxu0 0
        %2658 = vmatpush1.bf16.msra.mxu0 0
        %2659 = vmatprep.subr.bf16.mxu0 0
        %2660 = vmatpush1.bf16.msra.mxu0 0
        %2661 = vmatprep.subr.bf16.mxu0 0
        %2662 = vmatpush1.bf16.msra.mxu0 0
        %2663 = vmatprep.subr.bf16.mxu0 0
        %2664 = vmatpush1.bf16.msra.mxu0 0
        %2665 = vmatprep.subr.bf16.mxu0 0
        %2666 = vmatpush1.bf16.msra.mxu0 0
        %2667 = vmatprep.subr.bf16.mxu0 0
        %2668 = vmatpush1.bf16.msra.mxu0 0
        %2669 = vmatprep.mubr.bf16.mxu0 0
        %2670 = vmatmul.mubr.bf16.gmra.mrb[0].mxu0 %v2626
        %v2671 = vpop.f32.mrb[0].mxu0
        %v2672 = vadd.f32 %v992, %v2671
        %v2673 = vpop.f32.mrb[0].mxu0
        %v2674 = vpop.f32.mrb[0].mxu0
        %v2675 = vadd.f32 %v995, %v2674
        %v2676 = vpop.f32.mrb[0].mxu0
        %2677 = vmatprep.mubr.bf16.mxu0 0
        %2678 = vmatmul.mubr.bf16.gmra.mrb[0].mxu0 %v2629
        %v2679 = vpop.f32.mrb[0].mxu0
        %v2680 = vadd.f32 %v1000, %v2679
        %v2681 = vpop.f32.mrb[0].mxu0
        %v2682 = vpop.f32.mrb[0].mxu0
        %v2683 = vadd.f32 %v1003, %v2682
        %v2684 = vpop.f32.mrb[0].mxu0
        %2685 = vmatprep.mubr.bf16.mxu0 0
        %2686 = vmatmul.mubr.bf16.gmra.mrb[0].mxu0 %v2632
        %v2687 = vpop.f32.mrb[0].mxu0
        %v2688 = vadd.f32 %v1008, %v2687
        %v2689 = vpop.f32.mrb[0].mxu0
        %v2690 = vpop.f32.mrb[0].mxu0
        %v2691 = vadd.f32 %v1011, %v2690
        %v2692 = vpop.f32.mrb[0].mxu0
        %2693 = vmatprep.mubr.bf16.mxu0 0
        %2694 = vmatmul.mubr.bf16.gmra.mrb[0].mxu0 %v2635
        %v2695 = vpop.f32.mrb[0].mxu0
        %v2696 = vadd.f32 %v1016, %v2695
        %v2697 = vpop.f32.mrb[0].mxu0
        %v2698 = vpop.f32.mrb[0].mxu0
        %v2699 = vadd.f32 %v1019, %v2698
        %v2700 = vpop.f32.mrb[0].mxu0
        %2701 = vdwg.mxu0
        %v2702 = vmul.f32 %v2672, 0.01
        %v2703 = vmul.f32 %v2675, 0.01
        %v2704 = vmul.f32 %v2680, 0.01
        %v2705 = vmul.f32 %v2683, 0.01
        %v2706 = vmul.f32 %v2688, 0.01
        %v2707 = vmul.f32 %v2691, 0.01
        %v2708 = vmul.f32 %v2696, 0.01
        %v2709 = vmul.f32 %v2699, 0.01
        %v2710 = vmax.f32 %v2672, %v2702
        %v2711 = vmax.f32 %v2675, %v2703
        %v2712 = vmax.f32 %v2680, %v2704
        %v2713 = vmax.f32 %v2683, %v2705
        %v2714 = vmax.f32 %v2688, %v2706
        %v2715 = vmax.f32 %v2691, %v2707
        %v2716 = vmax.f32 %v2696, %v2708
        %v2717 = vmax.f32 %v2699, %v2709
        %v2718 = vpack.c.bf16 %v2711, %v2710
        %v2719 = vpack.c.bf16 %v2713, %v2712
        %v2720 = vpack.c.bf16 %v2715, %v2714
        %v2721 = vpack.c.bf16 %v2717, %v2716
        %2722 = vmatprep.subr.bf16.mxu0 0
        %2723 = vmatpush1.bf16.msra.mxu0 %v1209
        %2724 = vmatprep.subr.bf16.mxu0 0
        %2725 = vmatpush1.bf16.msra.mxu0 %v1210
        %2726 = vmatprep.subr.bf16.mxu0 0
        %2727 = vmatpush1.bf16.msra.mxu0 %v1211
        %2728 = vmatprep.subr.bf16.mxu0 0
        %2729 = vmatpush1.bf16.msra.mxu0 %v1212
        %2730 = vmatprep.subr.bf16.mxu0 0
        %2731 = vmatpush1.bf16.msra.mxu0 %v1213
        %2732 = vmatprep.subr.bf16.mxu0 0
        %2733 = vmatpush1.bf16.msra.mxu0 %v1214
        %2734 = vmatprep.subr.bf16.mxu0 0
        %2735 = vmatpush1.bf16.msra.mxu0 %v1215
        %2736 = vmatprep.subr.bf16.mxu0 0
        %2737 = vmatpush1.bf16.msra.mxu0 %v1216
        %2738 = vmatprep.subr.bf16.mxu0 0
        %2739 = vmatpush1.bf16.msra.mxu0 0
        %2740 = vmatprep.subr.bf16.mxu0 0
        %2741 = vmatpush1.bf16.msra.mxu0 0
        %2742 = vmatprep.subr.bf16.mxu0 0
        %2743 = vmatpush1.bf16.msra.mxu0 0
        %2744 = vmatprep.subr.bf16.mxu0 0
        %2745 = vmatpush1.bf16.msra.mxu0 0
        %2746 = vmatprep.subr.bf16.mxu0 0
        %2747 = vmatpush1.bf16.msra.mxu0 0
        %2748 = vmatprep.subr.bf16.mxu0 0
        %2749 = vmatpush1.bf16.msra.mxu0 0
        %2750 = vmatprep.subr.bf16.mxu0 0
        %2751 = vmatpush1.bf16.msra.mxu0 0
        %2752 = vmatprep.subr.bf16.mxu0 0
        %2753 = vmatpush1.bf16.msra.mxu0 0
        %2754 = vmatprep.mubr.bf16.mxu0 0
        %2755 = vmatmul.mubr.bf16.gmra.mrb[0].mxu0 %v2718
        %v2756 = vpop.f32.mrb[0].mxu0
        %v2757 = vadd.f32 %v1175, %v2756
        %v2758 = vpop.f32.mrb[0].mxu0
        %v2759 = vpop.f32.mrb[0].mxu0
        %v2760 = vadd.f32 %v1175, %v2759
        %v2761 = vpop.f32.mrb[0].mxu0
        %2762 = vmatprep.mubr.bf16.mxu0 0
        %2763 = vmatmul.mubr.bf16.gmra.mrb[0].mxu0 %v2719
        %v2764 = vpop.f32.mrb[0].mxu0
        %v2765 = vadd.f32 %v1175, %v2764
        %v2766 = vpop.f32.mrb[0].mxu0
        %v2767 = vpop.f32.mrb[0].mxu0
        %v2768 = vadd.f32 %v1175, %v2767
        %v2769 = vpop.f32.mrb[0].mxu0
        %2770 = vmatprep.mubr.bf16.mxu0 0
        %2771 = vmatmul.mubr.bf16.gmra.mrb[0].mxu0 %v2720
        %v2772 = vpop.f32.mrb[0].mxu0
        %v2773 = vadd.f32 %v1175, %v2772
        %v2774 = vpop.f32.mrb[0].mxu0
        %v2775 = vpop.f32.mrb[0].mxu0
        %v2776 = vadd.f32 %v1175, %v2775
        %v2777 = vpop.f32.mrb[0].mxu0
        %2778 = vmatprep.mubr.bf16.mxu0 0
        %2779 = vmatmul.mubr.bf16.gmra.mrb[0].mxu0 %v2721
        %v2780 = vpop.f32.mrb[0].mxu0
        %v2781 = vadd.f32 %v1175, %v2780
        %v2782 = vpop.f32.mrb[0].mxu0
        %v2783 = vpop.f32.mrb[0].mxu0
        %v2784 = vadd.f32 %v1175, %v2783
        %v2785 = vpop.f32.mrb[0].mxu0
        %2786 = vdwg.mxu0
        %v2787 = vmul.f32 %v2757, 0.01
        %v2788 = vmul.f32 %v2760, 0.01
        %v2789 = vmul.f32 %v2765, 0.01
        %v2790 = vmul.f32 %v2768, 0.01
        %v2791 = vmul.f32 %v2773, 0.01
        %v2792 = vmul.f32 %v2776, 0.01
        %v2793 = vmul.f32 %v2781, 0.01
        %v2794 = vmul.f32 %v2784, 0.01
        %v2795 = vmax.f32 %v2757, %v2787
        %v2796 = vmax.f32 %v2760, %v2788
        %v2797 = vmax.f32 %v2765, %v2789
        %v2798 = vmax.f32 %v2768, %v2790
        %v2799 = vmax.f32 %v2773, %v2791
        %v2800 = vmax.f32 %v2776, %v2792
        %v2801 = vmax.f32 %v2781, %v2793
        %v2802 = vmax.f32 %v2784, %v2794
        %v2803 = vmax.f32 %v2588, %v2795
        %v2804 = vmax.f32 %v2589, %v2796
        %v2805 = vmax.f32 %v2590, %v2797
        %v2806 = vmax.f32 %v2591, %v2798
        %v2807 = vmax.f32 %v2592, %v2799
        %v2808 = vmax.f32 %v2593, %v2800
        %v2809 = vmax.f32 %v2594, %v2801
        %v2810 = vmax.f32 %v2595, %v2802
        %s2811 = scalar_lea.vmem %s809, 256 [#allocation2]
        %v2812 = vld [vmem:[%s2811] sm:$0xf]
        %v2813 = vld [vmem:[%s2811 + $0x4] sm:$0xf]
        %v2814 = vld [vmem:[%s2811 + $0x8] sm:$0xf]
        %v2815 = vld [vmem:[%s2811 + $0xc] sm:$0xf]
        %v2816 = vld [vmem:[%s2811 + $0x10] sm:$0xf]
        %v2817 = vld [vmem:[%s2811 + $0x14] sm:$0xf]
        %v2818 = vld [vmem:[%s2811 + $0x18] sm:$0xf]
        %v2819 = vld [vmem:[%s2811 + $0x1c] sm:$0xf]
        %v2828 = vunpack.c.l.b16 %v2812
        %v2829 = vunpack.c.l.b16 %v2813
        %v2830 = vunpack.c.l.b16 %v2814
        %v2831 = vunpack.c.l.b16 %v2815
        %v2832 = vunpack.c.l.b16 %v2816
        %v2833 = vunpack.c.l.b16 %v2817
        %v2834 = vunpack.c.l.b16 %v2818
        %v2835 = vunpack.c.l.b16 %v2819
        %v2836 = vpack.c.b16 %v2829, %v2828
        %v2837 = vpack.c.b16 %v2831, %v2830
        %v2838 = vpack.c.b16 %v2833, %v2832
        %v2839 = vpack.c.b16 %v2835, %v2834
        %v2841 = vsel %vm944, %v2836, 0
        %v2844 = vsel %vm944, %v2837, 0
        %v2847 = vsel %vm944, %v2838, 0
        %v2850 = vsel %vm944, %v2839, 0
        %2852 = vmatprep.subr.bf16.mxu0 0
        %2853 = vmatpush1.bf16.msra.mxu0 %v1066
        %2854 = vmatprep.subr.bf16.mxu0 0
        %2855 = vmatpush1.bf16.msra.mxu0 %v1067
        %2856 = vmatprep.subr.bf16.mxu0 0
        %2857 = vmatpush1.bf16.msra.mxu0 %v1068
        %2858 = vmatprep.subr.bf16.mxu0 0
        %2859 = vmatpush1.bf16.msra.mxu0 %v1069
        %2860 = vmatprep.subr.bf16.mxu0 0
        %2861 = vmatpush1.bf16.msra.mxu0 0
        %2862 = vmatprep.subr.bf16.mxu0 0
        %2863 = vmatpush1.bf16.msra.mxu0 0
        %2864 = vmatprep.subr.bf16.mxu0 0
        %2865 = vmatpush1.bf16.msra.mxu0 0
        %2866 = vmatprep.subr.bf16.mxu0 0
        %2867 = vmatpush1.bf16.msra.mxu0 0
        %2868 = vmatprep.subr.bf16.mxu0 0
        %2869 = vmatpush1.bf16.msra.mxu0 0
        %2870 = vmatprep.subr.bf16.mxu0 0
        %2871 = vmatpush1.bf16.msra.mxu0 0
        %2872 = vmatprep.subr.bf16.mxu0 0
        %2873 = vmatpush1.bf16.msra.mxu0 0
        %2874 = vmatprep.subr.bf16.mxu0 0
        %2875 = vmatpush1.bf16.msra.mxu0 0
        %2876 = vmatprep.subr.bf16.mxu0 0
        %2877 = vmatpush1.bf16.msra.mxu0 0
        %2878 = vmatprep.subr.bf16.mxu0 0
        %2879 = vmatpush1.bf16.msra.mxu0 0
        %2880 = vmatprep.subr.bf16.mxu0 0
        %2881 = vmatpush1.bf16.msra.mxu0 0
        %2882 = vmatprep.subr.bf16.mxu0 0
        %2883 = vmatpush1.bf16.msra.mxu0 0
        %2884 = vmatprep.mubr.bf16.mxu0 0
        %2885 = vmatmul.mubr.bf16.gmra.mrb[0].mxu0 %v2841
        %v2886 = vpop.f32.mrb[0].mxu0
        %v2887 = vadd.f32 %v992, %v2886
        %v2888 = vpop.f32.mrb[0].mxu0
        %v2889 = vpop.f32.mrb[0].mxu0
        %v2890 = vadd.f32 %v995, %v2889
        %v2891 = vpop.f32.mrb[0].mxu0
        %2892 = vmatprep.mubr.bf16.mxu0 0
        %2893 = vmatmul.mubr.bf16.gmra.mrb[0].mxu0 %v2844
        %v2894 = vpop.f32.mrb[0].mxu0
        %v2895 = vadd.f32 %v1000, %v2894
        %v2896 = vpop.f32.mrb[0].mxu0
        %v2897 = vpop.f32.mrb[0].mxu0
        %v2898 = vadd.f32 %v1003, %v2897
        %v2899 = vpop.f32.mrb[0].mxu0
        %2900 = vmatprep.mubr.bf16.mxu0 0
        %2901 = vmatmul.mubr.bf16.gmra.mrb[0].mxu0 %v2847
        %v2902 = vpop.f32.mrb[0].mxu0
        %v2903 = vadd.f32 %v1008, %v2902
        %v2904 = vpop.f32.mrb[0].mxu0
        %v2905 = vpop.f32.mrb[0].mxu0
        %v2906 = vadd.f32 %v1011, %v2905
        %v2907 = vpop.f32.mrb[0].mxu0
        %2908 = vmatprep.mubr.bf16.mxu0 0
        %2909 = vmatmul.mubr.bf16.gmra.mrb[0].mxu0 %v2850
        %v2910 = vpop.f32.mrb[0].mxu0
        %v2911 = vadd.f32 %v1016, %v2910
        %v2912 = vpop.f32.mrb[0].mxu0
        %v2913 = vpop.f32.mrb[0].mxu0
        %v2914 = vadd.f32 %v1019, %v2913
        %v2915 = vpop.f32.mrb[0].mxu0
        %2916 = vdwg.mxu0
        %v2917 = vmul.f32 %v2887, 0.01
        %v2918 = vmul.f32 %v2890, 0.01
        %v2919 = vmul.f32 %v2895, 0.01
        %v2920 = vmul.f32 %v2898, 0.01
        %v2921 = vmul.f32 %v2903, 0.01
        %v2922 = vmul.f32 %v2906, 0.01
        %v2923 = vmul.f32 %v2911, 0.01
        %v2924 = vmul.f32 %v2914, 0.01
        %v2925 = vmax.f32 %v2887, %v2917
        %v2926 = vmax.f32 %v2890, %v2918
        %v2927 = vmax.f32 %v2895, %v2919
        %v2928 = vmax.f32 %v2898, %v2920
        %v2929 = vmax.f32 %v2903, %v2921
        %v2930 = vmax.f32 %v2906, %v2922
        %v2931 = vmax.f32 %v2911, %v2923
        %v2932 = vmax.f32 %v2914, %v2924
        %v2933 = vpack.c.bf16 %v2926, %v2925
        %v2934 = vpack.c.bf16 %v2928, %v2927
        %v2935 = vpack.c.bf16 %v2930, %v2929
        %v2936 = vpack.c.bf16 %v2932, %v2931
        %2937 = vmatprep.subr.bf16.mxu0 0
        %2938 = vmatpush1.bf16.msra.mxu0 %v1209
        %2939 = vmatprep.subr.bf16.mxu0 0
        %2940 = vmatpush1.bf16.msra.mxu0 %v1210
        %2941 = vmatprep.subr.bf16.mxu0 0
        %2942 = vmatpush1.bf16.msra.mxu0 %v1211
        %2943 = vmatprep.subr.bf16.mxu0 0
        %2944 = vmatpush1.bf16.msra.mxu0 %v1212
        %2945 = vmatprep.subr.bf16.mxu0 0
        %2946 = vmatpush1.bf16.msra.mxu0 %v1213
        %2947 = vmatprep.subr.bf16.mxu0 0
        %2948 = vmatpush1.bf16.msra.mxu0 %v1214
        %2949 = vmatprep.subr.bf16.mxu0 0
        %2950 = vmatpush1.bf16.msra.mxu0 %v1215
        %2951 = vmatprep.subr.bf16.mxu0 0
        %2952 = vmatpush1.bf16.msra.mxu0 %v1216
        %2953 = vmatprep.subr.bf16.mxu0 0
        %2954 = vmatpush1.bf16.msra.mxu0 0
        %2955 = vmatprep.subr.bf16.mxu0 0
        %2956 = vmatpush1.bf16.msra.mxu0 0
        %2957 = vmatprep.subr.bf16.mxu0 0
        %2958 = vmatpush1.bf16.msra.mxu0 0
        %2959 = vmatprep.subr.bf16.mxu0 0
        %2960 = vmatpush1.bf16.msra.mxu0 0
        %2961 = vmatprep.subr.bf16.mxu0 0
        %2962 = vmatpush1.bf16.msra.mxu0 0
        %2963 = vmatprep.subr.bf16.mxu0 0
        %2964 = vmatpush1.bf16.msra.mxu0 0
        %2965 = vmatprep.subr.bf16.mxu0 0
        %2966 = vmatpush1.bf16.msra.mxu0 0
        %2967 = vmatprep.subr.bf16.mxu0 0
        %2968 = vmatpush1.bf16.msra.mxu0 0
        %2969 = vmatprep.mubr.bf16.mxu0 0
        %2970 = vmatmul.mubr.bf16.gmra.mrb[0].mxu0 %v2933
        %v2971 = vpop.f32.mrb[0].mxu0
        %v2972 = vadd.f32 %v1175, %v2971
        %v2973 = vpop.f32.mrb[0].mxu0
        %v2974 = vpop.f32.mrb[0].mxu0
        %v2975 = vadd.f32 %v1175, %v2974
        %v2976 = vpop.f32.mrb[0].mxu0
        %2977 = vmatprep.mubr.bf16.mxu0 0
        %2978 = vmatmul.mubr.bf16.gmra.mrb[0].mxu0 %v2934
        %v2979 = vpop.f32.mrb[0].mxu0
        %v2980 = vadd.f32 %v1175, %v2979
        %v2981 = vpop.f32.mrb[0].mxu0
        %v2982 = vpop.f32.mrb[0].mxu0
        %v2983 = vadd.f32 %v1175, %v2982
        %v2984 = vpop.f32.mrb[0].mxu0
        %2985 = vmatprep.mubr.bf16.mxu0 0
        %2986 = vmatmul.mubr.bf16.gmra.mrb[0].mxu0 %v2935
        %v2987 = vpop.f32.mrb[0].mxu0
        %v2988 = vadd.f32 %v1175, %v2987
        %v2989 = vpop.f32.mrb[0].mxu0
        %v2990 = vpop.f32.mrb[0].mxu0
        %v2991 = vadd.f32 %v1175, %v2990
        %v2992 = vpop.f32.mrb[0].mxu0
        %2993 = vmatprep.mubr.bf16.mxu0 0
        %2994 = vmatmul.mubr.bf16.gmra.mrb[0].mxu0 %v2936
        %v2995 = vpop.f32.mrb[0].mxu0
        %v2996 = vadd.f32 %v1175, %v2995
        %v2997 = vpop.f32.mrb[0].mxu0
        %v2998 = vpop.f32.mrb[0].mxu0
        %v2999 = vadd.f32 %v1175, %v2998
        %v3000 = vpop.f32.mrb[0].mxu0
        %3001 = vdwg.mxu0
        %v3002 = vmul.f32 %v2972, 0.01
        %v3003 = vmul.f32 %v2975, 0.01
        %v3004 = vmul.f32 %v2980, 0.01
        %v3005 = vmul.f32 %v2983, 0.01
        %v3006 = vmul.f32 %v2988, 0.01
        %v3007 = vmul.f32 %v2991, 0.01
        %v3008 = vmul.f32 %v2996, 0.01
        %v3009 = vmul.f32 %v2999, 0.01
        %v3010 = vmax.f32 %v2972, %v3002
        %v3011 = vmax.f32 %v2975, %v3003
        %v3012 = vmax.f32 %v2980, %v3004
        %v3013 = vmax.f32 %v2983, %v3005
        %v3014 = vmax.f32 %v2988, %v3006
        %v3015 = vmax.f32 %v2991, %v3007
        %v3016 = vmax.f32 %v2996, %v3008
        %v3017 = vmax.f32 %v2999, %v3009
        %v3018 = vmax.f32 %v2803, %v3010
        %v3019 = vmax.f32 %v2804, %v3011
        %v3020 = vmax.f32 %v2805, %v3012
        %v3021 = vmax.f32 %v2806, %v3013
        %v3022 = vmax.f32 %v2807, %v3014
        %v3023 = vmax.f32 %v2808, %v3015
        %v3024 = vmax.f32 %v2809, %v3016
        %v3025 = vmax.f32 %v2810, %v3017
        %s3026 = scalar_lea.vmem %s809, 288 [#allocation2]
        %v3027 = vld [vmem:[%s3026] sm:$0xf]
        %v3028 = vld [vmem:[%s3026 + $0x4] sm:$0xf]
        %v3029 = vld [vmem:[%s3026 + $0x8] sm:$0xf]
        %v3030 = vld [vmem:[%s3026 + $0xc] sm:$0xf]
        %v3031 = vld [vmem:[%s3026 + $0x10] sm:$0xf]
        %v3032 = vld [vmem:[%s3026 + $0x14] sm:$0xf]
        %v3033 = vld [vmem:[%s3026 + $0x18] sm:$0xf]
        %v3034 = vld [vmem:[%s3026 + $0x1c] sm:$0xf]
        %v3043 = vunpack.c.l.b16 %v3027
        %v3044 = vunpack.c.l.b16 %v3028
        %v3045 = vunpack.c.l.b16 %v3029
        %v3046 = vunpack.c.l.b16 %v3030
        %v3047 = vunpack.c.l.b16 %v3031
        %v3048 = vunpack.c.l.b16 %v3032
        %v3049 = vunpack.c.l.b16 %v3033
        %v3050 = vunpack.c.l.b16 %v3034
        %v3051 = vpack.c.b16 %v3044, %v3043
        %v3052 = vpack.c.b16 %v3046, %v3045
        %v3053 = vpack.c.b16 %v3048, %v3047
        %v3054 = vpack.c.b16 %v3050, %v3049
        %v3056 = vsel %vm944, %v3051, 0
        %v3059 = vsel %vm944, %v3052, 0
        %v3062 = vsel %vm944, %v3053, 0
        %v3065 = vsel %vm944, %v3054, 0
        %3067 = vmatprep.subr.bf16.mxu0 0
        %3068 = vmatpush1.bf16.msra.mxu0 %v1066
        %3069 = vmatprep.subr.bf16.mxu0 0
        %3070 = vmatpush1.bf16.msra.mxu0 %v1067
        %3071 = vmatprep.subr.bf16.mxu0 0
        %3072 = vmatpush1.bf16.msra.mxu0 %v1068
        %3073 = vmatprep.subr.bf16.mxu0 0
        %3074 = vmatpush1.bf16.msra.mxu0 %v1069
        %3075 = vmatprep.subr.bf16.mxu0 0
        %3076 = vmatpush1.bf16.msra.mxu0 0
        %3077 = vmatprep.subr.bf16.mxu0 0
        %3078 = vmatpush1.bf16.msra.mxu0 0
        %3079 = vmatprep.subr.bf16.mxu0 0
        %3080 = vmatpush1.bf16.msra.mxu0 0
        %3081 = vmatprep.subr.bf16.mxu0 0
        %3082 = vmatpush1.bf16.msra.mxu0 0
        %3083 = vmatprep.subr.bf16.mxu0 0
        %3084 = vmatpush1.bf16.msra.mxu0 0
        %3085 = vmatprep.subr.bf16.mxu0 0
        %3086 = vmatpush1.bf16.msra.mxu0 0
        %3087 = vmatprep.subr.bf16.mxu0 0
        %3088 = vmatpush1.bf16.msra.mxu0 0
        %3089 = vmatprep.subr.bf16.mxu0 0
        %3090 = vmatpush1.bf16.msra.mxu0 0
        %3091 = vmatprep.subr.bf16.mxu0 0
        %3092 = vmatpush1.bf16.msra.mxu0 0
        %3093 = vmatprep.subr.bf16.mxu0 0
        %3094 = vmatpush1.bf16.msra.mxu0 0
        %3095 = vmatprep.subr.bf16.mxu0 0
        %3096 = vmatpush1.bf16.msra.mxu0 0
        %3097 = vmatprep.subr.bf16.mxu0 0
        %3098 = vmatpush1.bf16.msra.mxu0 0
        %3099 = vmatprep.mubr.bf16.mxu0 0
        %3100 = vmatmul.mubr.bf16.gmra.mrb[0].mxu0 %v3056
        %v3101 = vpop.f32.mrb[0].mxu0
        %v3102 = vadd.f32 %v992, %v3101
        %v3103 = vpop.f32.mrb[0].mxu0
        %v3104 = vpop.f32.mrb[0].mxu0
        %v3105 = vadd.f32 %v995, %v3104
        %v3106 = vpop.f32.mrb[0].mxu0
        %3107 = vmatprep.mubr.bf16.mxu0 0
        %3108 = vmatmul.mubr.bf16.gmra.mrb[0].mxu0 %v3059
        %v3109 = vpop.f32.mrb[0].mxu0
        %v3110 = vadd.f32 %v1000, %v3109
        %v3111 = vpop.f32.mrb[0].mxu0
        %v3112 = vpop.f32.mrb[0].mxu0
        %v3113 = vadd.f32 %v1003, %v3112
        %v3114 = vpop.f32.mrb[0].mxu0
        %3115 = vmatprep.mubr.bf16.mxu0 0
        %3116 = vmatmul.mubr.bf16.gmra.mrb[0].mxu0 %v3062
        %v3117 = vpop.f32.mrb[0].mxu0
        %v3118 = vadd.f32 %v1008, %v3117
        %v3119 = vpop.f32.mrb[0].mxu0
        %v3120 = vpop.f32.mrb[0].mxu0
        %v3121 = vadd.f32 %v1011, %v3120
        %v3122 = vpop.f32.mrb[0].mxu0
        %3123 = vmatprep.mubr.bf16.mxu0 0
        %3124 = vmatmul.mubr.bf16.gmra.mrb[0].mxu0 %v3065
        %v3125 = vpop.f32.mrb[0].mxu0
        %v3126 = vadd.f32 %v1016, %v3125
        %v3127 = vpop.f32.mrb[0].mxu0
        %v3128 = vpop.f32.mrb[0].mxu0
        %v3129 = vadd.f32 %v1019, %v3128
        %v3130 = vpop.f32.mrb[0].mxu0
        %3131 = vdwg.mxu0
        %v3132 = vmul.f32 %v3102, 0.01
        %v3133 = vmul.f32 %v3105, 0.01
        %v3134 = vmul.f32 %v3110, 0.01
        %v3135 = vmul.f32 %v3113, 0.01
        %v3136 = vmul.f32 %v3118, 0.01
        %v3137 = vmul.f32 %v3121, 0.01
        %v3138 = vmul.f32 %v3126, 0.01
        %v3139 = vmul.f32 %v3129, 0.01
        %v3140 = vmax.f32 %v3102, %v3132
        %v3141 = vmax.f32 %v3105, %v3133
        %v3142 = vmax.f32 %v3110, %v3134
        %v3143 = vmax.f32 %v3113, %v3135
        %v3144 = vmax.f32 %v3118, %v3136
        %v3145 = vmax.f32 %v3121, %v3137
        %v3146 = vmax.f32 %v3126, %v3138
        %v3147 = vmax.f32 %v3129, %v3139
        %v3148 = vpack.c.bf16 %v3141, %v3140
        %v3149 = vpack.c.bf16 %v3143, %v3142
        %v3150 = vpack.c.bf16 %v3145, %v3144
        %v3151 = vpack.c.bf16 %v3147, %v3146
        %3152 = vmatprep.subr.bf16.mxu0 0
        %3153 = vmatpush1.bf16.msra.mxu0 %v1209
        %3154 = vmatprep.subr.bf16.mxu0 0
        %3155 = vmatpush1.bf16.msra.mxu0 %v1210
        %3156 = vmatprep.subr.bf16.mxu0 0
        %3157 = vmatpush1.bf16.msra.mxu0 %v1211
        %3158 = vmatprep.subr.bf16.mxu0 0
        %3159 = vmatpush1.bf16.msra.mxu0 %v1212
        %3160 = vmatprep.subr.bf16.mxu0 0
        %3161 = vmatpush1.bf16.msra.mxu0 %v1213
        %3162 = vmatprep.subr.bf16.mxu0 0
        %3163 = vmatpush1.bf16.msra.mxu0 %v1214
        %3164 = vmatprep.subr.bf16.mxu0 0
        %3165 = vmatpush1.bf16.msra.mxu0 %v1215
        %3166 = vmatprep.subr.bf16.mxu0 0
        %3167 = vmatpush1.bf16.msra.mxu0 %v1216
        %3168 = vmatprep.subr.bf16.mxu0 0
        %3169 = vmatpush1.bf16.msra.mxu0 0
        %3170 = vmatprep.subr.bf16.mxu0 0
        %3171 = vmatpush1.bf16.msra.mxu0 0
        %3172 = vmatprep.subr.bf16.mxu0 0
        %3173 = vmatpush1.bf16.msra.mxu0 0
        %3174 = vmatprep.subr.bf16.mxu0 0
        %3175 = vmatpush1.bf16.msra.mxu0 0
        %3176 = vmatprep.subr.bf16.mxu0 0
        %3177 = vmatpush1.bf16.msra.mxu0 0
        %3178 = vmatprep.subr.bf16.mxu0 0
        %3179 = vmatpush1.bf16.msra.mxu0 0
        %3180 = vmatprep.subr.bf16.mxu0 0
        %3181 = vmatpush1.bf16.msra.mxu0 0
        %3182 = vmatprep.subr.bf16.mxu0 0
        %3183 = vmatpush1.bf16.msra.mxu0 0
        %3184 = vmatprep.mubr.bf16.mxu0 0
        %3185 = vmatmul.mubr.bf16.gmra.mrb[0].mxu0 %v3148
        %v3186 = vpop.f32.mrb[0].mxu0
        %v3187 = vadd.f32 %v1175, %v3186
        %v3188 = vpop.f32.mrb[0].mxu0
        %v3189 = vpop.f32.mrb[0].mxu0
        %v3190 = vadd.f32 %v1175, %v3189
        %v3191 = vpop.f32.mrb[0].mxu0
        %3192 = vmatprep.mubr.bf16.mxu0 0
        %3193 = vmatmul.mubr.bf16.gmra.mrb[0].mxu0 %v3149
        %v3194 = vpop.f32.mrb[0].mxu0
        %v3195 = vadd.f32 %v1175, %v3194
        %v3196 = vpop.f32.mrb[0].mxu0
        %v3197 = vpop.f32.mrb[0].mxu0
        %v3198 = vadd.f32 %v1175, %v3197
        %v3199 = vpop.f32.mrb[0].mxu0
        %3200 = vmatprep.mubr.bf16.mxu0 0
        %3201 = vmatmul.mubr.bf16.gmra.mrb[0].mxu0 %v3150
        %v3202 = vpop.f32.mrb[0].mxu0
        %v3203 = vadd.f32 %v1175, %v3202
        %v3204 = vpop.f32.mrb[0].mxu0
        %v3205 = vpop.f32.mrb[0].mxu0
        %v3206 = vadd.f32 %v1175, %v3205
        %v3207 = vpop.f32.mrb[0].mxu0
        %3208 = vmatprep.mubr.bf16.mxu0 0
        %3209 = vmatmul.mubr.bf16.gmra.mrb[0].mxu0 %v3151
        %v3210 = vpop.f32.mrb[0].mxu0
        %v3211 = vadd.f32 %v1175, %v3210
        %v3212 = vpop.f32.mrb[0].mxu0
        %v3213 = vpop.f32.mrb[0].mxu0
        %v3214 = vadd.f32 %v1175, %v3213
        %v3215 = vpop.f32.mrb[0].mxu0
        %3216 = vdwg.mxu0
        %v3217 = vmul.f32 %v3187, 0.01
        %v3218 = vmul.f32 %v3190, 0.01
        %v3219 = vmul.f32 %v3195, 0.01
        %v3220 = vmul.f32 %v3198, 0.01
        %v3221 = vmul.f32 %v3203, 0.01
        %v3222 = vmul.f32 %v3206, 0.01
        %v3223 = vmul.f32 %v3211, 0.01
        %v3224 = vmul.f32 %v3214, 0.01
        %v3225 = vmax.f32 %v3187, %v3217
        %v3226 = vmax.f32 %v3190, %v3218
        %v3227 = vmax.f32 %v3195, %v3219
        %v3228 = vmax.f32 %v3198, %v3220
        %v3229 = vmax.f32 %v3203, %v3221
        %v3230 = vmax.f32 %v3206, %v3222
        %v3231 = vmax.f32 %v3211, %v3223
        %v3232 = vmax.f32 %v3214, %v3224
        %v3233 = vmax.f32 %v3018, %v3225
        %v3234 = vmax.f32 %v3019, %v3226
        %v3235 = vmax.f32 %v3020, %v3227
        %v3236 = vmax.f32 %v3021, %v3228
        %v3237 = vmax.f32 %v3022, %v3229
        %v3238 = vmax.f32 %v3023, %v3230
        %v3239 = vmax.f32 %v3024, %v3231
        %v3240 = vmax.f32 %v3025, %v3232
        %s3241 = scalar_lea.vmem %s809, 320 [#allocation2]
        %v3242 = vld [vmem:[%s3241] sm:$0xf]
        %v3243 = vld [vmem:[%s3241 + $0x4] sm:$0xf]
        %v3244 = vld [vmem:[%s3241 + $0x8] sm:$0xf]
        %v3245 = vld [vmem:[%s3241 + $0xc] sm:$0xf]
        %v3246 = vld [vmem:[%s3241 + $0x10] sm:$0xf]
        %v3247 = vld [vmem:[%s3241 + $0x14] sm:$0xf]
        %v3248 = vld [vmem:[%s3241 + $0x18] sm:$0xf]
        %v3249 = vld [vmem:[%s3241 + $0x1c] sm:$0xf]
        %v3258 = vunpack.c.l.b16 %v3242
        %v3259 = vunpack.c.l.b16 %v3243
        %v3260 = vunpack.c.l.b16 %v3244
        %v3261 = vunpack.c.l.b16 %v3245
        %v3262 = vunpack.c.l.b16 %v3246
        %v3263 = vunpack.c.l.b16 %v3247
        %v3264 = vunpack.c.l.b16 %v3248
        %v3265 = vunpack.c.l.b16 %v3249
        %v3266 = vpack.c.b16 %v3259, %v3258
        %v3267 = vpack.c.b16 %v3261, %v3260
        %v3268 = vpack.c.b16 %v3263, %v3262
        %v3269 = vpack.c.b16 %v3265, %v3264
        %v3271 = vsel %vm944, %v3266, 0
        %v3274 = vsel %vm944, %v3267, 0
        %v3277 = vsel %vm944, %v3268, 0
        %v3280 = vsel %vm944, %v3269, 0
        %3282 = vmatprep.subr.bf16.mxu0 0
        %3283 = vmatpush1.bf16.msra.mxu0 %v1066
        %3284 = vmatprep.subr.bf16.mxu0 0
        %3285 = vmatpush1.bf16.msra.mxu0 %v1067
        %3286 = vmatprep.subr.bf16.mxu0 0
        %3287 = vmatpush1.bf16.msra.mxu0 %v1068
        %3288 = vmatprep.subr.bf16.mxu0 0
        %3289 = vmatpush1.bf16.msra.mxu0 %v1069
        %3290 = vmatprep.subr.bf16.mxu0 0
        %3291 = vmatpush1.bf16.msra.mxu0 0
        %3292 = vmatprep.subr.bf16.mxu0 0
        %3293 = vmatpush1.bf16.msra.mxu0 0
        %3294 = vmatprep.subr.bf16.mxu0 0
        %3295 = vmatpush1.bf16.msra.mxu0 0
        %3296 = vmatprep.subr.bf16.mxu0 0
        %3297 = vmatpush1.bf16.msra.mxu0 0
        %3298 = vmatprep.subr.bf16.mxu0 0
        %3299 = vmatpush1.bf16.msra.mxu0 0
        %3300 = vmatprep.subr.bf16.mxu0 0
        %3301 = vmatpush1.bf16.msra.mxu0 0
        %3302 = vmatprep.subr.bf16.mxu0 0
        %3303 = vmatpush1.bf16.msra.mxu0 0
        %3304 = vmatprep.subr.bf16.mxu0 0
        %3305 = vmatpush1.bf16.msra.mxu0 0
        %3306 = vmatprep.subr.bf16.mxu0 0
        %3307 = vmatpush1.bf16.msra.mxu0 0
        %3308 = vmatprep.subr.bf16.mxu0 0
        %3309 = vmatpush1.bf16.msra.mxu0 0
        %3310 = vmatprep.subr.bf16.mxu0 0
        %3311 = vmatpush1.bf16.msra.mxu0 0
        %3312 = vmatprep.subr.bf16.mxu0 0
        %3313 = vmatpush1.bf16.msra.mxu0 0
        %3314 = vmatprep.mubr.bf16.mxu0 0
        %3315 = vmatmul.mubr.bf16.gmra.mrb[0].mxu0 %v3271
        %v3316 = vpop.f32.mrb[0].mxu0
        %v3317 = vadd.f32 %v992, %v3316
        %v3318 = vpop.f32.mrb[0].mxu0
        %v3319 = vpop.f32.mrb[0].mxu0
        %v3320 = vadd.f32 %v995, %v3319
        %v3321 = vpop.f32.mrb[0].mxu0
        %3322 = vmatprep.mubr.bf16.mxu0 0
        %3323 = vmatmul.mubr.bf16.gmra.mrb[0].mxu0 %v3274
        %v3324 = vpop.f32.mrb[0].mxu0
        %v3325 = vadd.f32 %v1000, %v3324
        %v3326 = vpop.f32.mrb[0].mxu0
        %v3327 = vpop.f32.mrb[0].mxu0
        %v3328 = vadd.f32 %v1003, %v3327
        %v3329 = vpop.f32.mrb[0].mxu0
        %3330 = vmatprep.mubr.bf16.mxu0 0
        %3331 = vmatmul.mubr.bf16.gmra.mrb[0].mxu0 %v3277
        %v3332 = vpop.f32.mrb[0].mxu0
        %v3333 = vadd.f32 %v1008, %v3332
        %v3334 = vpop.f32.mrb[0].mxu0
        %v3335 = vpop.f32.mrb[0].mxu0
        %v3336 = vadd.f32 %v1011, %v3335
        %v3337 = vpop.f32.mrb[0].mxu0
        %3338 = vmatprep.mubr.bf16.mxu0 0
        %3339 = vmatmul.mubr.bf16.gmra.mrb[0].mxu0 %v3280
        %v3340 = vpop.f32.mrb[0].mxu0
        %v3341 = vadd.f32 %v1016, %v3340
        %v3342 = vpop.f32.mrb[0].mxu0
        %v3343 = vpop.f32.mrb[0].mxu0
        %v3344 = vadd.f32 %v1019, %v3343
        %v3345 = vpop.f32.mrb[0].mxu0
        %3346 = vdwg.mxu0
        %v3347 = vmul.f32 %v3317, 0.01
        %v3348 = vmul.f32 %v3320, 0.01
        %v3349 = vmul.f32 %v3325, 0.01
        %v3350 = vmul.f32 %v3328, 0.01
        %v3351 = vmul.f32 %v3333, 0.01
        %v3352 = vmul.f32 %v3336, 0.01
        %v3353 = vmul.f32 %v3341, 0.01
        %v3354 = vmul.f32 %v3344, 0.01
        %v3355 = vmax.f32 %v3317, %v3347
        %v3356 = vmax.f32 %v3320, %v3348
        %v3357 = vmax.f32 %v3325, %v3349
        %v3358 = vmax.f32 %v3328, %v3350
        %v3359 = vmax.f32 %v3333, %v3351
        %v3360 = vmax.f32 %v3336, %v3352
        %v3361 = vmax.f32 %v3341, %v3353
        %v3362 = vmax.f32 %v3344, %v3354
        %v3363 = vpack.c.bf16 %v3356, %v3355
        %v3364 = vpack.c.bf16 %v3358, %v3357
        %v3365 = vpack.c.bf16 %v3360, %v3359
        %v3366 = vpack.c.bf16 %v3362, %v3361
        %3367 = vmatprep.subr.bf16.mxu0 0
        %3368 = vmatpush1.bf16.msra.mxu0 %v1209
        %3369 = vmatprep.subr.bf16.mxu0 0
        %3370 = vmatpush1.bf16.msra.mxu0 %v1210
        %3371 = vmatprep.subr.bf16.mxu0 0
        %3372 = vmatpush1.bf16.msra.mxu0 %v1211
        %3373 = vmatprep.subr.bf16.mxu0 0
        %3374 = vmatpush1.bf16.msra.mxu0 %v1212
        %3375 = vmatprep.subr.bf16.mxu0 0
        %3376 = vmatpush1.bf16.msra.mxu0 %v1213
        %3377 = vmatprep.subr.bf16.mxu0 0
        %3378 = vmatpush1.bf16.msra.mxu0 %v1214
        %3379 = vmatprep.subr.bf16.mxu0 0
        %3380 = vmatpush1.bf16.msra.mxu0 %v1215
        %3381 = vmatprep.subr.bf16.mxu0 0
        %3382 = vmatpush1.bf16.msra.mxu0 %v1216
        %3383 = vmatprep.subr.bf16.mxu0 0
        %3384 = vmatpush1.bf16.msra.mxu0 0
        %3385 = vmatprep.subr.bf16.mxu0 0
        %3386 = vmatpush1.bf16.msra.mxu0 0
        %3387 = vmatprep.subr.bf16.mxu0 0
        %3388 = vmatpush1.bf16.msra.mxu0 0
        %3389 = vmatprep.subr.bf16.mxu0 0
        %3390 = vmatpush1.bf16.msra.mxu0 0
        %3391 = vmatprep.subr.bf16.mxu0 0
        %3392 = vmatpush1.bf16.msra.mxu0 0
        %3393 = vmatprep.subr.bf16.mxu0 0
        %3394 = vmatpush1.bf16.msra.mxu0 0
        %3395 = vmatprep.subr.bf16.mxu0 0
        %3396 = vmatpush1.bf16.msra.mxu0 0
        %3397 = vmatprep.subr.bf16.mxu0 0
        %3398 = vmatpush1.bf16.msra.mxu0 0
        %3399 = vmatprep.mubr.bf16.mxu0 0
        %3400 = vmatmul.mubr.bf16.gmra.mrb[0].mxu0 %v3363
        %v3401 = vpop.f32.mrb[0].mxu0
        %v3402 = vadd.f32 %v1175, %v3401
        %v3403 = vpop.f32.mrb[0].mxu0
        %v3404 = vpop.f32.mrb[0].mxu0
        %v3405 = vadd.f32 %v1175, %v3404
        %v3406 = vpop.f32.mrb[0].mxu0
        %3407 = vmatprep.mubr.bf16.mxu0 0
        %3408 = vmatmul.mubr.bf16.gmra.mrb[0].mxu0 %v3364
        %v3409 = vpop.f32.mrb[0].mxu0
        %v3410 = vadd.f32 %v1175, %v3409
        %v3411 = vpop.f32.mrb[0].mxu0
        %v3412 = vpop.f32.mrb[0].mxu0
        %v3413 = vadd.f32 %v1175, %v3412
        %v3414 = vpop.f32.mrb[0].mxu0
        %3415 = vmatprep.mubr.bf16.mxu0 0
        %3416 = vmatmul.mubr.bf16.gmra.mrb[0].mxu0 %v3365
        %v3417 = vpop.f32.mrb[0].mxu0
        %v3418 = vadd.f32 %v1175, %v3417
        %v3419 = vpop.f32.mrb[0].mxu0
        %v3420 = vpop.f32.mrb[0].mxu0
        %v3421 = vadd.f32 %v1175, %v3420
        %v3422 = vpop.f32.mrb[0].mxu0
        %3423 = vmatprep.mubr.bf16.mxu0 0
        %3424 = vmatmul.mubr.bf16.gmra.mrb[0].mxu0 %v3366
        %v3425 = vpop.f32.mrb[0].mxu0
        %v3426 = vadd.f32 %v1175, %v3425
        %v3427 = vpop.f32.mrb[0].mxu0
        %v3428 = vpop.f32.mrb[0].mxu0
        %v3429 = vadd.f32 %v1175, %v3428
        %v3430 = vpop.f32.mrb[0].mxu0
        %3431 = vdwg.mxu0
        %v3432 = vmul.f32 %v3402, 0.01
        %v3433 = vmul.f32 %v3405, 0.01
        %v3434 = vmul.f32 %v3410, 0.01
        %v3435 = vmul.f32 %v3413, 0.01
        %v3436 = vmul.f32 %v3418, 0.01
        %v3437 = vmul.f32 %v3421, 0.01
        %v3438 = vmul.f32 %v3426, 0.01
        %v3439 = vmul.f32 %v3429, 0.01
        %v3440 = vmax.f32 %v3402, %v3432
        %v3441 = vmax.f32 %v3405, %v3433
        %v3442 = vmax.f32 %v3410, %v3434
        %v3443 = vmax.f32 %v3413, %v3435
        %v3444 = vmax.f32 %v3418, %v3436
        %v3445 = vmax.f32 %v3421, %v3437
        %v3446 = vmax.f32 %v3426, %v3438
        %v3447 = vmax.f32 %v3429, %v3439
        %v3448 = vmax.f32 %v3233, %v3440
        %v3449 = vmax.f32 %v3234, %v3441
        %v3450 = vmax.f32 %v3235, %v3442
        %v3451 = vmax.f32 %v3236, %v3443
        %v3452 = vmax.f32 %v3237, %v3444
        %v3453 = vmax.f32 %v3238, %v3445
        %v3454 = vmax.f32 %v3239, %v3446
        %v3455 = vmax.f32 %v3240, %v3447
        %s3456 = scalar_lea.vmem %s809, 352 [#allocation2]
        %v3457 = vld [vmem:[%s3456] sm:$0xf]
        %v3458 = vld [vmem:[%s3456 + $0x4] sm:$0xf]
        %v3459 = vld [vmem:[%s3456 + $0x8] sm:$0xf]
        %v3460 = vld [vmem:[%s3456 + $0xc] sm:$0xf]
        %v3461 = vld [vmem:[%s3456 + $0x10] sm:$0xf]
        %v3462 = vld [vmem:[%s3456 + $0x14] sm:$0xf]
        %v3463 = vld [vmem:[%s3456 + $0x18] sm:$0xf]
        %v3464 = vld [vmem:[%s3456 + $0x1c] sm:$0xf]
        %v3473 = vunpack.c.l.b16 %v3457
        %v3474 = vunpack.c.l.b16 %v3458
        %v3475 = vunpack.c.l.b16 %v3459
        %v3476 = vunpack.c.l.b16 %v3460
        %v3477 = vunpack.c.l.b16 %v3461
        %v3478 = vunpack.c.l.b16 %v3462
        %v3479 = vunpack.c.l.b16 %v3463
        %v3480 = vunpack.c.l.b16 %v3464
        %v3481 = vpack.c.b16 %v3474, %v3473
        %v3482 = vpack.c.b16 %v3476, %v3475
        %v3483 = vpack.c.b16 %v3478, %v3477
        %v3484 = vpack.c.b16 %v3480, %v3479
        %v3486 = vsel %vm944, %v3481, 0
        %v3489 = vsel %vm944, %v3482, 0
        %v3492 = vsel %vm944, %v3483, 0
        %v3495 = vsel %vm944, %v3484, 0
        %3497 = vmatprep.subr.bf16.mxu0 0
        %3498 = vmatpush1.bf16.msra.mxu0 %v1066
        %3499 = vmatprep.subr.bf16.mxu0 0
        %3500 = vmatpush1.bf16.msra.mxu0 %v1067
        %3501 = vmatprep.subr.bf16.mxu0 0
        %3502 = vmatpush1.bf16.msra.mxu0 %v1068
        %3503 = vmatprep.subr.bf16.mxu0 0
        %3504 = vmatpush1.bf16.msra.mxu0 %v1069
        %3505 = vmatprep.subr.bf16.mxu0 0
        %3506 = vmatpush1.bf16.msra.mxu0 0
        %3507 = vmatprep.subr.bf16.mxu0 0
        %3508 = vmatpush1.bf16.msra.mxu0 0
        %3509 = vmatprep.subr.bf16.mxu0 0
        %3510 = vmatpush1.bf16.msra.mxu0 0
        %3511 = vmatprep.subr.bf16.mxu0 0
        %3512 = vmatpush1.bf16.msra.mxu0 0
        %3513 = vmatprep.subr.bf16.mxu0 0
        %3514 = vmatpush1.bf16.msra.mxu0 0
        %3515 = vmatprep.subr.bf16.mxu0 0
        %3516 = vmatpush1.bf16.msra.mxu0 0
        %3517 = vmatprep.subr.bf16.mxu0 0
        %3518 = vmatpush1.bf16.msra.mxu0 0
        %3519 = vmatprep.subr.bf16.mxu0 0
        %3520 = vmatpush1.bf16.msra.mxu0 0
        %3521 = vmatprep.subr.bf16.mxu0 0
        %3522 = vmatpush1.bf16.msra.mxu0 0
        %3523 = vmatprep.subr.bf16.mxu0 0
        %3524 = vmatpush1.bf16.msra.mxu0 0
        %3525 = vmatprep.subr.bf16.mxu0 0
        %3526 = vmatpush1.bf16.msra.mxu0 0
        %3527 = vmatprep.subr.bf16.mxu0 0
        %3528 = vmatpush1.bf16.msra.mxu0 0
        %3529 = vmatprep.mubr.bf16.mxu0 0
        %3530 = vmatmul.mubr.bf16.gmra.mrb[0].mxu0 %v3486
        %v3531 = vpop.f32.mrb[0].mxu0
        %v3532 = vadd.f32 %v992, %v3531
        %v3533 = vpop.f32.mrb[0].mxu0
        %v3534 = vpop.f32.mrb[0].mxu0
        %v3535 = vadd.f32 %v995, %v3534
        %v3536 = vpop.f32.mrb[0].mxu0
        %3537 = vmatprep.mubr.bf16.mxu0 0
        %3538 = vmatmul.mubr.bf16.gmra.mrb[0].mxu0 %v3489
        %v3539 = vpop.f32.mrb[0].mxu0
        %v3540 = vadd.f32 %v1000, %v3539
        %v3541 = vpop.f32.mrb[0].mxu0
        %v3542 = vpop.f32.mrb[0].mxu0
        %v3543 = vadd.f32 %v1003, %v3542
        %v3544 = vpop.f32.mrb[0].mxu0
        %3545 = vmatprep.mubr.bf16.mxu0 0
        %3546 = vmatmul.mubr.bf16.gmra.mrb[0].mxu0 %v3492
        %v3547 = vpop.f32.mrb[0].mxu0
        %v3548 = vadd.f32 %v1008, %v3547
        %v3549 = vpop.f32.mrb[0].mxu0
        %v3550 = vpop.f32.mrb[0].mxu0
        %v3551 = vadd.f32 %v1011, %v3550
        %v3552 = vpop.f32.mrb[0].mxu0
        %3553 = vmatprep.mubr.bf16.mxu0 0
        %3554 = vmatmul.mubr.bf16.gmra.mrb[0].mxu0 %v3495
        %v3555 = vpop.f32.mrb[0].mxu0
        %v3556 = vadd.f32 %v1016, %v3555
        %v3557 = vpop.f32.mrb[0].mxu0
        %v3558 = vpop.f32.mrb[0].mxu0
        %v3559 = vadd.f32 %v1019, %v3558
        %v3560 = vpop.f32.mrb[0].mxu0
        %3561 = vdwg.mxu0
        %v3562 = vmul.f32 %v3532, 0.01
        %v3563 = vmul.f32 %v3535, 0.01
        %v3564 = vmul.f32 %v3540, 0.01
        %v3565 = vmul.f32 %v3543, 0.01
        %v3566 = vmul.f32 %v3548, 0.01
        %v3567 = vmul.f32 %v3551, 0.01
        %v3568 = vmul.f32 %v3556, 0.01
        %v3569 = vmul.f32 %v3559, 0.01
        %v3570 = vmax.f32 %v3532, %v3562
        %v3571 = vmax.f32 %v3535, %v3563
        %v3572 = vmax.f32 %v3540, %v3564
        %v3573 = vmax.f32 %v3543, %v3565
        %v3574 = vmax.f32 %v3548, %v3566
        %v3575 = vmax.f32 %v3551, %v3567
        %v3576 = vmax.f32 %v3556, %v3568
        %v3577 = vmax.f32 %v3559, %v3569
        %v3578 = vpack.c.bf16 %v3571, %v3570
        %v3579 = vpack.c.bf16 %v3573, %v3572
        %v3580 = vpack.c.bf16 %v3575, %v3574
        %v3581 = vpack.c.bf16 %v3577, %v3576
        %3582 = vmatprep.subr.bf16.mxu0 0
        %3583 = vmatpush1.bf16.msra.mxu0 %v1209
        %3584 = vmatprep.subr.bf16.mxu0 0
        %3585 = vmatpush1.bf16.msra.mxu0 %v1210
        %3586 = vmatprep.subr.bf16.mxu0 0
        %3587 = vmatpush1.bf16.msra.mxu0 %v1211
        %3588 = vmatprep.subr.bf16.mxu0 0
        %3589 = vmatpush1.bf16.msra.mxu0 %v1212
        %3590 = vmatprep.subr.bf16.mxu0 0
        %3591 = vmatpush1.bf16.msra.mxu0 %v1213
        %3592 = vmatprep.subr.bf16.mxu0 0
        %3593 = vmatpush1.bf16.msra.mxu0 %v1214
        %3594 = vmatprep.subr.bf16.mxu0 0
        %3595 = vmatpush1.bf16.msra.mxu0 %v1215
        %3596 = vmatprep.subr.bf16.mxu0 0
        %3597 = vmatpush1.bf16.msra.mxu0 %v1216
        %3598 = vmatprep.subr.bf16.mxu0 0
        %3599 = vmatpush1.bf16.msra.mxu0 0
        %3600 = vmatprep.subr.bf16.mxu0 0
        %3601 = vmatpush1.bf16.msra.mxu0 0
        %3602 = vmatprep.subr.bf16.mxu0 0
        %3603 = vmatpush1.bf16.msra.mxu0 0
        %3604 = vmatprep.subr.bf16.mxu0 0
        %3605 = vmatpush1.bf16.msra.mxu0 0
        %3606 = vmatprep.subr.bf16.mxu0 0
        %3607 = vmatpush1.bf16.msra.mxu0 0
        %3608 = vmatprep.subr.bf16.mxu0 0
        %3609 = vmatpush1.bf16.msra.mxu0 0
        %3610 = vmatprep.subr.bf16.mxu0 0
        %3611 = vmatpush1.bf16.msra.mxu0 0
        %3612 = vmatprep.subr.bf16.mxu0 0
        %3613 = vmatpush1.bf16.msra.mxu0 0
        %3614 = vmatprep.mubr.bf16.mxu0 0
        %3615 = vmatmul.mubr.bf16.gmra.mrb[0].mxu0 %v3578
        %v3616 = vpop.f32.mrb[0].mxu0
        %v3617 = vadd.f32 %v1175, %v3616
        %v3618 = vpop.f32.mrb[0].mxu0
        %v3619 = vpop.f32.mrb[0].mxu0
        %v3620 = vadd.f32 %v1175, %v3619
        %v3621 = vpop.f32.mrb[0].mxu0
        %3622 = vmatprep.mubr.bf16.mxu0 0
        %3623 = vmatmul.mubr.bf16.gmra.mrb[0].mxu0 %v3579
        %v3624 = vpop.f32.mrb[0].mxu0
        %v3625 = vadd.f32 %v1175, %v3624
        %v3626 = vpop.f32.mrb[0].mxu0
        %v3627 = vpop.f32.mrb[0].mxu0
        %v3628 = vadd.f32 %v1175, %v3627
        %v3629 = vpop.f32.mrb[0].mxu0
        %3630 = vmatprep.mubr.bf16.mxu0 0
        %3631 = vmatmul.mubr.bf16.gmra.mrb[0].mxu0 %v3580
        %v3632 = vpop.f32.mrb[0].mxu0
        %v3633 = vadd.f32 %v1175, %v3632
        %v3634 = vpop.f32.mrb[0].mxu0
        %v3635 = vpop.f32.mrb[0].mxu0
        %v3636 = vadd.f32 %v1175, %v3635
        %v3637 = vpop.f32.mrb[0].mxu0
        %3638 = vmatprep.mubr.bf16.mxu0 0
        %3639 = vmatmul.mubr.bf16.gmra.mrb[0].mxu0 %v3581
        %v3640 = vpop.f32.mrb[0].mxu0
        %v3641 = vadd.f32 %v1175, %v3640
        %v3642 = vpop.f32.mrb[0].mxu0
        %v3643 = vpop.f32.mrb[0].mxu0
        %v3644 = vadd.f32 %v1175, %v3643
        %v3645 = vpop.f32.mrb[0].mxu0
        %3646 = vdwg.mxu0
        %v3647 = vmul.f32 %v3617, 0.01
        %v3648 = vmul.f32 %v3620, 0.01
        %v3649 = vmul.f32 %v3625, 0.01
        %v3650 = vmul.f32 %v3628, 0.01
        %v3651 = vmul.f32 %v3633, 0.01
        %v3652 = vmul.f32 %v3636, 0.01
        %v3653 = vmul.f32 %v3641, 0.01
        %v3654 = vmul.f32 %v3644, 0.01
        %v3655 = vmax.f32 %v3617, %v3647
        %v3656 = vmax.f32 %v3620, %v3648
        %v3657 = vmax.f32 %v3625, %v3649
        %v3658 = vmax.f32 %v3628, %v3650
        %v3659 = vmax.f32 %v3633, %v3651
        %v3660 = vmax.f32 %v3636, %v3652
        %v3661 = vmax.f32 %v3641, %v3653
        %v3662 = vmax.f32 %v3644, %v3654
        %v3663 = vmax.f32 %v3448, %v3655
        %v3664 = vmax.f32 %v3449, %v3656
        %v3665 = vmax.f32 %v3450, %v3657
        %v3666 = vmax.f32 %v3451, %v3658
        %v3667 = vmax.f32 %v3452, %v3659
        %v3668 = vmax.f32 %v3453, %v3660
        %v3669 = vmax.f32 %v3454, %v3661
        %v3670 = vmax.f32 %v3455, %v3662
        %s3671 = scalar_lea.vmem %s809, 384 [#allocation2]
        %v3672 = vld [vmem:[%s3671] sm:$0xf]
        %v3673 = vld [vmem:[%s3671 + $0x4] sm:$0xf]
        %v3674 = vld [vmem:[%s3671 + $0x8] sm:$0xf]
        %v3675 = vld [vmem:[%s3671 + $0xc] sm:$0xf]
        %v3676 = vld [vmem:[%s3671 + $0x10] sm:$0xf]
        %v3677 = vld [vmem:[%s3671 + $0x14] sm:$0xf]
        %v3678 = vld [vmem:[%s3671 + $0x18] sm:$0xf]
        %v3679 = vld [vmem:[%s3671 + $0x1c] sm:$0xf]
        %v3688 = vunpack.c.l.b16 %v3672
        %v3689 = vunpack.c.l.b16 %v3673
        %v3690 = vunpack.c.l.b16 %v3674
        %v3691 = vunpack.c.l.b16 %v3675
        %v3692 = vunpack.c.l.b16 %v3676
        %v3693 = vunpack.c.l.b16 %v3677
        %v3694 = vunpack.c.l.b16 %v3678
        %v3695 = vunpack.c.l.b16 %v3679
        %v3696 = vpack.c.b16 %v3689, %v3688
        %v3697 = vpack.c.b16 %v3691, %v3690
        %v3698 = vpack.c.b16 %v3693, %v3692
        %v3699 = vpack.c.b16 %v3695, %v3694
        %v3701 = vsel %vm944, %v3696, 0
        %v3704 = vsel %vm944, %v3697, 0
        %v3707 = vsel %vm944, %v3698, 0
        %v3710 = vsel %vm944, %v3699, 0
        %3712 = vmatprep.subr.bf16.mxu0 0
        %3713 = vmatpush1.bf16.msra.mxu0 %v1066
        %3714 = vmatprep.subr.bf16.mxu0 0
        %3715 = vmatpush1.bf16.msra.mxu0 %v1067
        %3716 = vmatprep.subr.bf16.mxu0 0
        %3717 = vmatpush1.bf16.msra.mxu0 %v1068
        %3718 = vmatprep.subr.bf16.mxu0 0
        %3719 = vmatpush1.bf16.msra.mxu0 %v1069
        %3720 = vmatprep.subr.bf16.mxu0 0
        %3721 = vmatpush1.bf16.msra.mxu0 0
        %3722 = vmatprep.subr.bf16.mxu0 0
        %3723 = vmatpush1.bf16.msra.mxu0 0
        %3724 = vmatprep.subr.bf16.mxu0 0
        %3725 = vmatpush1.bf16.msra.mxu0 0
        %3726 = vmatprep.subr.bf16.mxu0 0
        %3727 = vmatpush1.bf16.msra.mxu0 0
        %3728 = vmatprep.subr.bf16.mxu0 0
        %3729 = vmatpush1.bf16.msra.mxu0 0
        %3730 = vmatprep.subr.bf16.mxu0 0
        %3731 = vmatpush1.bf16.msra.mxu0 0
        %3732 = vmatprep.subr.bf16.mxu0 0
        %3733 = vmatpush1.bf16.msra.mxu0 0
        %3734 = vmatprep.subr.bf16.mxu0 0
        %3735 = vmatpush1.bf16.msra.mxu0 0
        %3736 = vmatprep.subr.bf16.mxu0 0
        %3737 = vmatpush1.bf16.msra.mxu0 0
        %3738 = vmatprep.subr.bf16.mxu0 0
        %3739 = vmatpush1.bf16.msra.mxu0 0
        %3740 = vmatprep.subr.bf16.mxu0 0
        %3741 = vmatpush1.bf16.msra.mxu0 0
        %3742 = vmatprep.subr.bf16.mxu0 0
        %3743 = vmatpush1.bf16.msra.mxu0 0
        %3744 = vmatprep.mubr.bf16.mxu0 0
        %3745 = vmatmul.mubr.bf16.gmra.mrb[0].mxu0 %v3701
        %v3746 = vpop.f32.mrb[0].mxu0
        %v3747 = vadd.f32 %v992, %v3746
        %v3748 = vpop.f32.mrb[0].mxu0
        %v3749 = vpop.f32.mrb[0].mxu0
        %v3750 = vadd.f32 %v995, %v3749
        %v3751 = vpop.f32.mrb[0].mxu0
        %3752 = vmatprep.mubr.bf16.mxu0 0
        %3753 = vmatmul.mubr.bf16.gmra.mrb[0].mxu0 %v3704
        %v3754 = vpop.f32.mrb[0].mxu0
        %v3755 = vadd.f32 %v1000, %v3754
        %v3756 = vpop.f32.mrb[0].mxu0
        %v3757 = vpop.f32.mrb[0].mxu0
        %v3758 = vadd.f32 %v1003, %v3757
        %v3759 = vpop.f32.mrb[0].mxu0
        %3760 = vmatprep.mubr.bf16.mxu0 0
        %3761 = vmatmul.mubr.bf16.gmra.mrb[0].mxu0 %v3707
        %v3762 = vpop.f32.mrb[0].mxu0
        %v3763 = vadd.f32 %v1008, %v3762
        %v3764 = vpop.f32.mrb[0].mxu0
        %v3765 = vpop.f32.mrb[0].mxu0
        %v3766 = vadd.f32 %v1011, %v3765
        %v3767 = vpop.f32.mrb[0].mxu0
        %3768 = vmatprep.mubr.bf16.mxu0 0
        %3769 = vmatmul.mubr.bf16.gmra.mrb[0].mxu0 %v3710
        %v3770 = vpop.f32.mrb[0].mxu0
        %v3771 = vadd.f32 %v1016, %v3770
        %v3772 = vpop.f32.mrb[0].mxu0
        %v3773 = vpop.f32.mrb[0].mxu0
        %v3774 = vadd.f32 %v1019, %v3773
        %v3775 = vpop.f32.mrb[0].mxu0
        %3776 = vdwg.mxu0
        %v3777 = vmul.f32 %v3747, 0.01
        %v3778 = vmul.f32 %v3750, 0.01
        %v3779 = vmul.f32 %v3755, 0.01
        %v3780 = vmul.f32 %v3758, 0.01
        %v3781 = vmul.f32 %v3763, 0.01
        %v3782 = vmul.f32 %v3766, 0.01
        %v3783 = vmul.f32 %v3771, 0.01
        %v3784 = vmul.f32 %v3774, 0.01
        %v3785 = vmax.f32 %v3747, %v3777
        %v3786 = vmax.f32 %v3750, %v3778
        %v3787 = vmax.f32 %v3755, %v3779
        %v3788 = vmax.f32 %v3758, %v3780
        %v3789 = vmax.f32 %v3763, %v3781
        %v3790 = vmax.f32 %v3766, %v3782
        %v3791 = vmax.f32 %v3771, %v3783
        %v3792 = vmax.f32 %v3774, %v3784
        %v3793 = vpack.c.bf16 %v3786, %v3785
        %v3794 = vpack.c.bf16 %v3788, %v3787
        %v3795 = vpack.c.bf16 %v3790, %v3789
        %v3796 = vpack.c.bf16 %v3792, %v3791
        %3797 = vmatprep.subr.bf16.mxu0 0
        %3798 = vmatpush1.bf16.msra.mxu0 %v1209
        %3799 = vmatprep.subr.bf16.mxu0 0
        %3800 = vmatpush1.bf16.msra.mxu0 %v1210
        %3801 = vmatprep.subr.bf16.mxu0 0
        %3802 = vmatpush1.bf16.msra.mxu0 %v1211
        %3803 = vmatprep.subr.bf16.mxu0 0
        %3804 = vmatpush1.bf16.msra.mxu0 %v1212
        %3805 = vmatprep.subr.bf16.mxu0 0
        %3806 = vmatpush1.bf16.msra.mxu0 %v1213
        %3807 = vmatprep.subr.bf16.mxu0 0
        %3808 = vmatpush1.bf16.msra.mxu0 %v1214
        %3809 = vmatprep.subr.bf16.mxu0 0
        %3810 = vmatpush1.bf16.msra.mxu0 %v1215
        %3811 = vmatprep.subr.bf16.mxu0 0
        %3812 = vmatpush1.bf16.msra.mxu0 %v1216
        %3813 = vmatprep.subr.bf16.mxu0 0
        %3814 = vmatpush1.bf16.msra.mxu0 0
        %3815 = vmatprep.subr.bf16.mxu0 0
        %3816 = vmatpush1.bf16.msra.mxu0 0
        %3817 = vmatprep.subr.bf16.mxu0 0
        %3818 = vmatpush1.bf16.msra.mxu0 0
        %3819 = vmatprep.subr.bf16.mxu0 0
        %3820 = vmatpush1.bf16.msra.mxu0 0
        %3821 = vmatprep.subr.bf16.mxu0 0
        %3822 = vmatpush1.bf16.msra.mxu0 0
        %3823 = vmatprep.subr.bf16.mxu0 0
        %3824 = vmatpush1.bf16.msra.mxu0 0
        %3825 = vmatprep.subr.bf16.mxu0 0
        %3826 = vmatpush1.bf16.msra.mxu0 0
        %3827 = vmatprep.subr.bf16.mxu0 0
        %3828 = vmatpush1.bf16.msra.mxu0 0
        %3829 = vmatprep.mubr.bf16.mxu0 0
        %3830 = vmatmul.mubr.bf16.gmra.mrb[0].mxu0 %v3793
        %v3831 = vpop.f32.mrb[0].mxu0
        %v3832 = vadd.f32 %v1175, %v3831
        %v3833 = vpop.f32.mrb[0].mxu0
        %v3834 = vpop.f32.mrb[0].mxu0
        %v3835 = vadd.f32 %v1175, %v3834
        %v3836 = vpop.f32.mrb[0].mxu0
        %3837 = vmatprep.mubr.bf16.mxu0 0
        %3838 = vmatmul.mubr.bf16.gmra.mrb[0].mxu0 %v3794
        %v3839 = vpop.f32.mrb[0].mxu0
        %v3840 = vadd.f32 %v1175, %v3839
        %v3841 = vpop.f32.mrb[0].mxu0
        %v3842 = vpop.f32.mrb[0].mxu0
        %v3843 = vadd.f32 %v1175, %v3842
        %v3844 = vpop.f32.mrb[0].mxu0
        %3845 = vmatprep.mubr.bf16.mxu0 0
        %3846 = vmatmul.mubr.bf16.gmra.mrb[0].mxu0 %v3795
        %v3847 = vpop.f32.mrb[0].mxu0
        %v3848 = vadd.f32 %v1175, %v3847
        %v3849 = vpop.f32.mrb[0].mxu0
        %v3850 = vpop.f32.mrb[0].mxu0
        %v3851 = vadd.f32 %v1175, %v3850
        %v3852 = vpop.f32.mrb[0].mxu0
        %3853 = vmatprep.mubr.bf16.mxu0 0
        %3854 = vmatmul.mubr.bf16.gmra.mrb[0].mxu0 %v3796
        %v3855 = vpop.f32.mrb[0].mxu0
        %v3856 = vadd.f32 %v1175, %v3855
        %v3857 = vpop.f32.mrb[0].mxu0
        %v3858 = vpop.f32.mrb[0].mxu0
        %v3859 = vadd.f32 %v1175, %v3858
        %v3860 = vpop.f32.mrb[0].mxu0
        %3861 = vdwg.mxu0
        %v3862 = vmul.f32 %v3832, 0.01
        %v3863 = vmul.f32 %v3835, 0.01
        %v3864 = vmul.f32 %v3840, 0.01
        %v3865 = vmul.f32 %v3843, 0.01
        %v3866 = vmul.f32 %v3848, 0.01
        %v3867 = vmul.f32 %v3851, 0.01
        %v3868 = vmul.f32 %v3856, 0.01
        %v3869 = vmul.f32 %v3859, 0.01
        %v3870 = vmax.f32 %v3832, %v3862
        %v3871 = vmax.f32 %v3835, %v3863
        %v3872 = vmax.f32 %v3840, %v3864
        %v3873 = vmax.f32 %v3843, %v3865
        %v3874 = vmax.f32 %v3848, %v3866
        %v3875 = vmax.f32 %v3851, %v3867
        %v3876 = vmax.f32 %v3856, %v3868
        %v3877 = vmax.f32 %v3859, %v3869
        %v3878 = vmax.f32 %v3663, %v3870
        %v3879 = vmax.f32 %v3664, %v3871
        %v3880 = vmax.f32 %v3665, %v3872
        %v3881 = vmax.f32 %v3666, %v3873
        %v3882 = vmax.f32 %v3667, %v3874
        %v3883 = vmax.f32 %v3668, %v3875
        %v3884 = vmax.f32 %v3669, %v3876
        %v3885 = vmax.f32 %v3670, %v3877
        %s3886 = scalar_lea.vmem %s809, 416 [#allocation2]
        %v3887 = vld [vmem:[%s3886] sm:$0xf]
        %v3888 = vld [vmem:[%s3886 + $0x4] sm:$0xf]
        %v3889 = vld [vmem:[%s3886 + $0x8] sm:$0xf]
        %v3890 = vld [vmem:[%s3886 + $0xc] sm:$0xf]
        %v3891 = vld [vmem:[%s3886 + $0x10] sm:$0xf]
        %v3892 = vld [vmem:[%s3886 + $0x14] sm:$0xf]
        %v3893 = vld [vmem:[%s3886 + $0x18] sm:$0xf]
        %v3894 = vld [vmem:[%s3886 + $0x1c] sm:$0xf]
        %v3903 = vunpack.c.l.b16 %v3887
        %v3904 = vunpack.c.l.b16 %v3888
        %v3905 = vunpack.c.l.b16 %v3889
        %v3906 = vunpack.c.l.b16 %v3890
        %v3907 = vunpack.c.l.b16 %v3891
        %v3908 = vunpack.c.l.b16 %v3892
        %v3909 = vunpack.c.l.b16 %v3893
        %v3910 = vunpack.c.l.b16 %v3894
        %v3911 = vpack.c.b16 %v3904, %v3903
        %v3912 = vpack.c.b16 %v3906, %v3905
        %v3913 = vpack.c.b16 %v3908, %v3907
        %v3914 = vpack.c.b16 %v3910, %v3909
        %v3916 = vsel %vm944, %v3911, 0
        %v3919 = vsel %vm944, %v3912, 0
        %v3922 = vsel %vm944, %v3913, 0
        %v3925 = vsel %vm944, %v3914, 0
        %3927 = vmatprep.subr.bf16.mxu0 0
        %3928 = vmatpush1.bf16.msra.mxu0 %v1066
        %3929 = vmatprep.subr.bf16.mxu0 0
        %3930 = vmatpush1.bf16.msra.mxu0 %v1067
        %3931 = vmatprep.subr.bf16.mxu0 0
        %3932 = vmatpush1.bf16.msra.mxu0 %v1068
        %3933 = vmatprep.subr.bf16.mxu0 0
        %3934 = vmatpush1.bf16.msra.mxu0 %v1069
        %3935 = vmatprep.subr.bf16.mxu0 0
        %3936 = vmatpush1.bf16.msra.mxu0 0
        %3937 = vmatprep.subr.bf16.mxu0 0
        %3938 = vmatpush1.bf16.msra.mxu0 0
        %3939 = vmatprep.subr.bf16.mxu0 0
        %3940 = vmatpush1.bf16.msra.mxu0 0
        %3941 = vmatprep.subr.bf16.mxu0 0
        %3942 = vmatpush1.bf16.msra.mxu0 0
        %3943 = vmatprep.subr.bf16.mxu0 0
        %3944 = vmatpush1.bf16.msra.mxu0 0
        %3945 = vmatprep.subr.bf16.mxu0 0
        %3946 = vmatpush1.bf16.msra.mxu0 0
        %3947 = vmatprep.subr.bf16.mxu0 0
        %3948 = vmatpush1.bf16.msra.mxu0 0
        %3949 = vmatprep.subr.bf16.mxu0 0
        %3950 = vmatpush1.bf16.msra.mxu0 0
        %3951 = vmatprep.subr.bf16.mxu0 0
        %3952 = vmatpush1.bf16.msra.mxu0 0
        %3953 = vmatprep.subr.bf16.mxu0 0
        %3954 = vmatpush1.bf16.msra.mxu0 0
        %3955 = vmatprep.subr.bf16.mxu0 0
        %3956 = vmatpush1.bf16.msra.mxu0 0
        %3957 = vmatprep.subr.bf16.mxu0 0
        %3958 = vmatpush1.bf16.msra.mxu0 0
        %3959 = vmatprep.mubr.bf16.mxu0 0
        %3960 = vmatmul.mubr.bf16.gmra.mrb[0].mxu0 %v3916
        %v3961 = vpop.f32.mrb[0].mxu0
        %v3962 = vadd.f32 %v992, %v3961
        %v3963 = vpop.f32.mrb[0].mxu0
        %v3964 = vpop.f32.mrb[0].mxu0
        %v3965 = vadd.f32 %v995, %v3964
        %v3966 = vpop.f32.mrb[0].mxu0
        %3967 = vmatprep.mubr.bf16.mxu0 0
        %3968 = vmatmul.mubr.bf16.gmra.mrb[0].mxu0 %v3919
        %v3969 = vpop.f32.mrb[0].mxu0
        %v3970 = vadd.f32 %v1000, %v3969
        %v3971 = vpop.f32.mrb[0].mxu0
        %v3972 = vpop.f32.mrb[0].mxu0
        %v3973 = vadd.f32 %v1003, %v3972
        %v3974 = vpop.f32.mrb[0].mxu0
        %3975 = vmatprep.mubr.bf16.mxu0 0
        %3976 = vmatmul.mubr.bf16.gmra.mrb[0].mxu0 %v3922
        %v3977 = vpop.f32.mrb[0].mxu0
        %v3978 = vadd.f32 %v1008, %v3977
        %v3979 = vpop.f32.mrb[0].mxu0
        %v3980 = vpop.f32.mrb[0].mxu0
        %v3981 = vadd.f32 %v1011, %v3980
        %v3982 = vpop.f32.mrb[0].mxu0
        %3983 = vmatprep.mubr.bf16.mxu0 0
        %3984 = vmatmul.mubr.bf16.gmra.mrb[0].mxu0 %v3925
        %v3985 = vpop.f32.mrb[0].mxu0
        %v3986 = vadd.f32 %v1016, %v3985
        %v3987 = vpop.f32.mrb[0].mxu0
        %v3988 = vpop.f32.mrb[0].mxu0
        %v3989 = vadd.f32 %v1019, %v3988
        %v3990 = vpop.f32.mrb[0].mxu0
        %3991 = vdwg.mxu0
        %v3992 = vmul.f32 %v3962, 0.01
        %v3993 = vmul.f32 %v3965, 0.01
        %v3994 = vmul.f32 %v3970, 0.01
        %v3995 = vmul.f32 %v3973, 0.01
        %v3996 = vmul.f32 %v3978, 0.01
        %v3997 = vmul.f32 %v3981, 0.01
        %v3998 = vmul.f32 %v3986, 0.01
        %v3999 = vmul.f32 %v3989, 0.01
        %v4000 = vmax.f32 %v3962, %v3992
        %v4001 = vmax.f32 %v3965, %v3993
        %v4002 = vmax.f32 %v3970, %v3994
        %v4003 = vmax.f32 %v3973, %v3995
        %v4004 = vmax.f32 %v3978, %v3996
        %v4005 = vmax.f32 %v3981, %v3997
        %v4006 = vmax.f32 %v3986, %v3998
        %v4007 = vmax.f32 %v3989, %v3999
        %v4008 = vpack.c.bf16 %v4001, %v4000
        %v4009 = vpack.c.bf16 %v4003, %v4002
        %v4010 = vpack.c.bf16 %v4005, %v4004
        %v4011 = vpack.c.bf16 %v4007, %v4006
        %4012 = vmatprep.subr.bf16.mxu0 0
        %4013 = vmatpush1.bf16.msra.mxu0 %v1209
        %4014 = vmatprep.subr.bf16.mxu0 0
        %4015 = vmatpush1.bf16.msra.mxu0 %v1210
        %4016 = vmatprep.subr.bf16.mxu0 0
        %4017 = vmatpush1.bf16.msra.mxu0 %v1211
        %4018 = vmatprep.subr.bf16.mxu0 0
        %4019 = vmatpush1.bf16.msra.mxu0 %v1212
        %4020 = vmatprep.subr.bf16.mxu0 0
        %4021 = vmatpush1.bf16.msra.mxu0 %v1213
        %4022 = vmatprep.subr.bf16.mxu0 0
        %4023 = vmatpush1.bf16.msra.mxu0 %v1214
        %4024 = vmatprep.subr.bf16.mxu0 0
        %4025 = vmatpush1.bf16.msra.mxu0 %v1215
        %4026 = vmatprep.subr.bf16.mxu0 0
        %4027 = vmatpush1.bf16.msra.mxu0 %v1216
        %4028 = vmatprep.subr.bf16.mxu0 0
        %4029 = vmatpush1.bf16.msra.mxu0 0
        %4030 = vmatprep.subr.bf16.mxu0 0
        %4031 = vmatpush1.bf16.msra.mxu0 0
        %4032 = vmatprep.subr.bf16.mxu0 0
        %4033 = vmatpush1.bf16.msra.mxu0 0
        %4034 = vmatprep.subr.bf16.mxu0 0
        %4035 = vmatpush1.bf16.msra.mxu0 0
        %4036 = vmatprep.subr.bf16.mxu0 0
        %4037 = vmatpush1.bf16.msra.mxu0 0
        %4038 = vmatprep.subr.bf16.mxu0 0
        %4039 = vmatpush1.bf16.msra.mxu0 0
        %4040 = vmatprep.subr.bf16.mxu0 0
        %4041 = vmatpush1.bf16.msra.mxu0 0
        %4042 = vmatprep.subr.bf16.mxu0 0
        %4043 = vmatpush1.bf16.msra.mxu0 0
        %4044 = vmatprep.mubr.bf16.mxu0 0
        %4045 = vmatmul.mubr.bf16.gmra.mrb[0].mxu0 %v4008
        %v4046 = vpop.f32.mrb[0].mxu0
        %v4047 = vadd.f32 %v1175, %v4046
        %v4048 = vpop.f32.mrb[0].mxu0
        %v4049 = vpop.f32.mrb[0].mxu0
        %v4050 = vadd.f32 %v1175, %v4049
        %v4051 = vpop.f32.mrb[0].mxu0
        %4052 = vmatprep.mubr.bf16.mxu0 0
        %4053 = vmatmul.mubr.bf16.gmra.mrb[0].mxu0 %v4009
        %v4054 = vpop.f32.mrb[0].mxu0
        %v4055 = vadd.f32 %v1175, %v4054
        %v4056 = vpop.f32.mrb[0].mxu0
        %v4057 = vpop.f32.mrb[0].mxu0
        %v4058 = vadd.f32 %v1175, %v4057
        %v4059 = vpop.f32.mrb[0].mxu0
        %4060 = vmatprep.mubr.bf16.mxu0 0
        %4061 = vmatmul.mubr.bf16.gmra.mrb[0].mxu0 %v4010
        %v4062 = vpop.f32.mrb[0].mxu0
        %v4063 = vadd.f32 %v1175, %v4062
        %v4064 = vpop.f32.mrb[0].mxu0
        %v4065 = vpop.f32.mrb[0].mxu0
        %v4066 = vadd.f32 %v1175, %v4065
        %v4067 = vpop.f32.mrb[0].mxu0
        %4068 = vmatprep.mubr.bf16.mxu0 0
        %4069 = vmatmul.mubr.bf16.gmra.mrb[0].mxu0 %v4011
        %v4070 = vpop.f32.mrb[0].mxu0
        %v4071 = vadd.f32 %v1175, %v4070
        %v4072 = vpop.f32.mrb[0].mxu0
        %v4073 = vpop.f32.mrb[0].mxu0
        %v4074 = vadd.f32 %v1175, %v4073
        %v4075 = vpop.f32.mrb[0].mxu0
        %4076 = vdwg.mxu0
        %v4077 = vmul.f32 %v4047, 0.01
        %v4078 = vmul.f32 %v4050, 0.01
        %v4079 = vmul.f32 %v4055, 0.01
        %v4080 = vmul.f32 %v4058, 0.01
        %v4081 = vmul.f32 %v4063, 0.01
        %v4082 = vmul.f32 %v4066, 0.01
        %v4083 = vmul.f32 %v4071, 0.01
        %v4084 = vmul.f32 %v4074, 0.01
        %v4085 = vmax.f32 %v4047, %v4077
        %v4086 = vmax.f32 %v4050, %v4078
        %v4087 = vmax.f32 %v4055, %v4079
        %v4088 = vmax.f32 %v4058, %v4080
        %v4089 = vmax.f32 %v4063, %v4081
        %v4090 = vmax.f32 %v4066, %v4082
        %v4091 = vmax.f32 %v4071, %v4083
        %v4092 = vmax.f32 %v4074, %v4084
        %v4093 = vmax.f32 %v3878, %v4085
        %v4094 = vmax.f32 %v3879, %v4086
        %v4095 = vmax.f32 %v3880, %v4087
        %v4096 = vmax.f32 %v3881, %v4088
        %v4097 = vmax.f32 %v3882, %v4089
        %v4098 = vmax.f32 %v3883, %v4090
        %v4099 = vmax.f32 %v3884, %v4091
        %v4100 = vmax.f32 %v3885, %v4092
        %s4101 = scalar_lea.vmem %s809, 448 [#allocation2]
        %v4102 = vld [vmem:[%s4101] sm:$0xf]
        %v4103 = vld [vmem:[%s4101 + $0x4] sm:$0xf]
        %v4104 = vld [vmem:[%s4101 + $0x8] sm:$0xf]
        %v4105 = vld [vmem:[%s4101 + $0xc] sm:$0xf]
        %v4106 = vld [vmem:[%s4101 + $0x10] sm:$0xf]
        %v4107 = vld [vmem:[%s4101 + $0x14] sm:$0xf]
        %v4108 = vld [vmem:[%s4101 + $0x18] sm:$0xf]
        %v4109 = vld [vmem:[%s4101 + $0x1c] sm:$0xf]
        %v4118 = vunpack.c.l.b16 %v4102
        %v4119 = vunpack.c.l.b16 %v4103
        %v4120 = vunpack.c.l.b16 %v4104
        %v4121 = vunpack.c.l.b16 %v4105
        %v4122 = vunpack.c.l.b16 %v4106
        %v4123 = vunpack.c.l.b16 %v4107
        %v4124 = vunpack.c.l.b16 %v4108
        %v4125 = vunpack.c.l.b16 %v4109
        %v4126 = vpack.c.b16 %v4119, %v4118
        %v4127 = vpack.c.b16 %v4121, %v4120
        %v4128 = vpack.c.b16 %v4123, %v4122
        %v4129 = vpack.c.b16 %v4125, %v4124
        %v4131 = vsel %vm944, %v4126, 0
        %v4134 = vsel %vm944, %v4127, 0
        %v4137 = vsel %vm944, %v4128, 0
        %v4140 = vsel %vm944, %v4129, 0
        %4142 = vmatprep.subr.bf16.mxu0 0
        %4143 = vmatpush1.bf16.msra.mxu0 %v1066
        %4144 = vmatprep.subr.bf16.mxu0 0
        %4145 = vmatpush1.bf16.msra.mxu0 %v1067
        %4146 = vmatprep.subr.bf16.mxu0 0
        %4147 = vmatpush1.bf16.msra.mxu0 %v1068
        %4148 = vmatprep.subr.bf16.mxu0 0
        %4149 = vmatpush1.bf16.msra.mxu0 %v1069
        %4150 = vmatprep.subr.bf16.mxu0 0
        %4151 = vmatpush1.bf16.msra.mxu0 0
        %4152 = vmatprep.subr.bf16.mxu0 0
        %4153 = vmatpush1.bf16.msra.mxu0 0
        %4154 = vmatprep.subr.bf16.mxu0 0
        %4155 = vmatpush1.bf16.msra.mxu0 0
        %4156 = vmatprep.subr.bf16.mxu0 0
        %4157 = vmatpush1.bf16.msra.mxu0 0
        %4158 = vmatprep.subr.bf16.mxu0 0
        %4159 = vmatpush1.bf16.msra.mxu0 0
        %4160 = vmatprep.subr.bf16.mxu0 0
        %4161 = vmatpush1.bf16.msra.mxu0 0
        %4162 = vmatprep.subr.bf16.mxu0 0
        %4163 = vmatpush1.bf16.msra.mxu0 0
        %4164 = vmatprep.subr.bf16.mxu0 0
        %4165 = vmatpush1.bf16.msra.mxu0 0
        %4166 = vmatprep.subr.bf16.mxu0 0
        %4167 = vmatpush1.bf16.msra.mxu0 0
        %4168 = vmatprep.subr.bf16.mxu0 0
        %4169 = vmatpush1.bf16.msra.mxu0 0
        %4170 = vmatprep.subr.bf16.mxu0 0
        %4171 = vmatpush1.bf16.msra.mxu0 0
        %4172 = vmatprep.subr.bf16.mxu0 0
        %4173 = vmatpush1.bf16.msra.mxu0 0
        %4174 = vmatprep.mubr.bf16.mxu0 0
        %4175 = vmatmul.mubr.bf16.gmra.mrb[0].mxu0 %v4131
        %v4176 = vpop.f32.mrb[0].mxu0
        %v4177 = vadd.f32 %v992, %v4176
        %v4178 = vpop.f32.mrb[0].mxu0
        %v4179 = vpop.f32.mrb[0].mxu0
        %v4180 = vadd.f32 %v995, %v4179
        %v4181 = vpop.f32.mrb[0].mxu0
        %4182 = vmatprep.mubr.bf16.mxu0 0
        %4183 = vmatmul.mubr.bf16.gmra.mrb[0].mxu0 %v4134
        %v4184 = vpop.f32.mrb[0].mxu0
        %v4185 = vadd.f32 %v1000, %v4184
        %v4186 = vpop.f32.mrb[0].mxu0
        %v4187 = vpop.f32.mrb[0].mxu0
        %v4188 = vadd.f32 %v1003, %v4187
        %v4189 = vpop.f32.mrb[0].mxu0
        %4190 = vmatprep.mubr.bf16.mxu0 0
        %4191 = vmatmul.mubr.bf16.gmra.mrb[0].mxu0 %v4137
        %v4192 = vpop.f32.mrb[0].mxu0
        %v4193 = vadd.f32 %v1008, %v4192
        %v4194 = vpop.f32.mrb[0].mxu0
        %v4195 = vpop.f32.mrb[0].mxu0
        %v4196 = vadd.f32 %v1011, %v4195
        %v4197 = vpop.f32.mrb[0].mxu0
        %4198 = vmatprep.mubr.bf16.mxu0 0
        %4199 = vmatmul.mubr.bf16.gmra.mrb[0].mxu0 %v4140
        %v4200 = vpop.f32.mrb[0].mxu0
        %v4201 = vadd.f32 %v1016, %v4200
        %v4202 = vpop.f32.mrb[0].mxu0
        %v4203 = vpop.f32.mrb[0].mxu0
        %v4204 = vadd.f32 %v1019, %v4203
        %v4205 = vpop.f32.mrb[0].mxu0
        %4206 = vdwg.mxu0
        %v4207 = vmul.f32 %v4177, 0.01
        %v4208 = vmul.f32 %v4180, 0.01
        %v4209 = vmul.f32 %v4185, 0.01
        %v4210 = vmul.f32 %v4188, 0.01
        %v4211 = vmul.f32 %v4193, 0.01
        %v4212 = vmul.f32 %v4196, 0.01
        %v4213 = vmul.f32 %v4201, 0.01
        %v4214 = vmul.f32 %v4204, 0.01
        %v4215 = vmax.f32 %v4177, %v4207
        %v4216 = vmax.f32 %v4180, %v4208
        %v4217 = vmax.f32 %v4185, %v4209
        %v4218 = vmax.f32 %v4188, %v4210
        %v4219 = vmax.f32 %v4193, %v4211
        %v4220 = vmax.f32 %v4196, %v4212
        %v4221 = vmax.f32 %v4201, %v4213
        %v4222 = vmax.f32 %v4204, %v4214
        %v4223 = vpack.c.bf16 %v4216, %v4215
        %v4224 = vpack.c.bf16 %v4218, %v4217
        %v4225 = vpack.c.bf16 %v4220, %v4219
        %v4226 = vpack.c.bf16 %v4222, %v4221
        %4227 = vmatprep.subr.bf16.mxu0 0
        %4228 = vmatpush1.bf16.msra.mxu0 %v1209
        %4229 = vmatprep.subr.bf16.mxu0 0
        %4230 = vmatpush1.bf16.msra.mxu0 %v1210
        %4231 = vmatprep.subr.bf16.mxu0 0
        %4232 = vmatpush1.bf16.msra.mxu0 %v1211
        %4233 = vmatprep.subr.bf16.mxu0 0
        %4234 = vmatpush1.bf16.msra.mxu0 %v1212
        %4235 = vmatprep.subr.bf16.mxu0 0
        %4236 = vmatpush1.bf16.msra.mxu0 %v1213
        %4237 = vmatprep.subr.bf16.mxu0 0
        %4238 = vmatpush1.bf16.msra.mxu0 %v1214
        %4239 = vmatprep.subr.bf16.mxu0 0
        %4240 = vmatpush1.bf16.msra.mxu0 %v1215
        %4241 = vmatprep.subr.bf16.mxu0 0
        %4242 = vmatpush1.bf16.msra.mxu0 %v1216
        %4243 = vmatprep.subr.bf16.mxu0 0
        %4244 = vmatpush1.bf16.msra.mxu0 0
        %4245 = vmatprep.subr.bf16.mxu0 0
        %4246 = vmatpush1.bf16.msra.mxu0 0
        %4247 = vmatprep.subr.bf16.mxu0 0
        %4248 = vmatpush1.bf16.msra.mxu0 0
        %4249 = vmatprep.subr.bf16.mxu0 0
        %4250 = vmatpush1.bf16.msra.mxu0 0
        %4251 = vmatprep.subr.bf16.mxu0 0
        %4252 = vmatpush1.bf16.msra.mxu0 0
        %4253 = vmatprep.subr.bf16.mxu0 0
        %4254 = vmatpush1.bf16.msra.mxu0 0
        %4255 = vmatprep.subr.bf16.mxu0 0
        %4256 = vmatpush1.bf16.msra.mxu0 0
        %4257 = vmatprep.subr.bf16.mxu0 0
        %4258 = vmatpush1.bf16.msra.mxu0 0
        %4259 = vmatprep.mubr.bf16.mxu0 0
        %4260 = vmatmul.mubr.bf16.gmra.mrb[0].mxu0 %v4223
        %v4261 = vpop.f32.mrb[0].mxu0
        %v4262 = vadd.f32 %v1175, %v4261
        %v4263 = vpop.f32.mrb[0].mxu0
        %v4264 = vpop.f32.mrb[0].mxu0
        %v4265 = vadd.f32 %v1175, %v4264
        %v4266 = vpop.f32.mrb[0].mxu0
        %4267 = vmatprep.mubr.bf16.mxu0 0
        %4268 = vmatmul.mubr.bf16.gmra.mrb[0].mxu0 %v4224
        %v4269 = vpop.f32.mrb[0].mxu0
        %v4270 = vadd.f32 %v1175, %v4269
        %v4271 = vpop.f32.mrb[0].mxu0
        %v4272 = vpop.f32.mrb[0].mxu0
        %v4273 = vadd.f32 %v1175, %v4272
        %v4274 = vpop.f32.mrb[0].mxu0
        %4275 = vmatprep.mubr.bf16.mxu0 0
        %4276 = vmatmul.mubr.bf16.gmra.mrb[0].mxu0 %v4225
        %v4277 = vpop.f32.mrb[0].mxu0
        %v4278 = vadd.f32 %v1175, %v4277
        %v4279 = vpop.f32.mrb[0].mxu0
        %v4280 = vpop.f32.mrb[0].mxu0
        %v4281 = vadd.f32 %v1175, %v4280
        %v4282 = vpop.f32.mrb[0].mxu0
        %4283 = vmatprep.mubr.bf16.mxu0 0
        %4284 = vmatmul.mubr.bf16.gmra.mrb[0].mxu0 %v4226
        %v4285 = vpop.f32.mrb[0].mxu0
        %v4286 = vadd.f32 %v1175, %v4285
        %v4287 = vpop.f32.mrb[0].mxu0
        %v4288 = vpop.f32.mrb[0].mxu0
        %v4289 = vadd.f32 %v1175, %v4288
        %v4290 = vpop.f32.mrb[0].mxu0
        %4291 = vdwg.mxu0
        %v4292 = vmul.f32 %v4262, 0.01
        %v4293 = vmul.f32 %v4265, 0.01
        %v4294 = vmul.f32 %v4270, 0.01
        %v4295 = vmul.f32 %v4273, 0.01
        %v4296 = vmul.f32 %v4278, 0.01
        %v4297 = vmul.f32 %v4281, 0.01
        %v4298 = vmul.f32 %v4286, 0.01
        %v4299 = vmul.f32 %v4289, 0.01
        %v4300 = vmax.f32 %v4262, %v4292
        %v4301 = vmax.f32 %v4265, %v4293
        %v4302 = vmax.f32 %v4270, %v4294
        %v4303 = vmax.f32 %v4273, %v4295
        %v4304 = vmax.f32 %v4278, %v4296
        %v4305 = vmax.f32 %v4281, %v4297
        %v4306 = vmax.f32 %v4286, %v4298
        %v4307 = vmax.f32 %v4289, %v4299
        %v4308 = vmax.f32 %v4093, %v4300
        %v4309 = vmax.f32 %v4094, %v4301
        %v4310 = vmax.f32 %v4095, %v4302
        %v4311 = vmax.f32 %v4096, %v4303
        %v4312 = vmax.f32 %v4097, %v4304
        %v4313 = vmax.f32 %v4098, %v4305
        %v4314 = vmax.f32 %v4099, %v4306
        %v4315 = vmax.f32 %v4100, %v4307
        %s4316 = scalar_lea.vmem %s809, 480 [#allocation2]
        %v4317 = vld [vmem:[%s4316] sm:$0xf]
        %v4318 = vld [vmem:[%s4316 + $0x4] sm:$0xf]
        %v4319 = vld [vmem:[%s4316 + $0x8] sm:$0xf]
        %v4320 = vld [vmem:[%s4316 + $0xc] sm:$0xf]
        %v4321 = vld [vmem:[%s4316 + $0x10] sm:$0xf]
        %v4322 = vld [vmem:[%s4316 + $0x14] sm:$0xf]
        %v4323 = vld [vmem:[%s4316 + $0x18] sm:$0xf]
        %v4324 = vld [vmem:[%s4316 + $0x1c] sm:$0xf]
        %v4333 = vunpack.c.l.b16 %v4317
        %v4334 = vunpack.c.l.b16 %v4318
        %v4335 = vunpack.c.l.b16 %v4319
        %v4336 = vunpack.c.l.b16 %v4320
        %v4337 = vunpack.c.l.b16 %v4321
        %v4338 = vunpack.c.l.b16 %v4322
        %v4339 = vunpack.c.l.b16 %v4323
        %v4340 = vunpack.c.l.b16 %v4324
        %v4341 = vpack.c.b16 %v4334, %v4333
        %v4342 = vpack.c.b16 %v4336, %v4335
        %v4343 = vpack.c.b16 %v4338, %v4337
        %v4344 = vpack.c.b16 %v4340, %v4339
        %v4346 = vsel %vm944, %v4341, 0
        %v4349 = vsel %vm944, %v4342, 0
        %v4352 = vsel %vm944, %v4343, 0
        %v4355 = vsel %vm944, %v4344, 0
        %4357 = vmatprep.subr.bf16.mxu0 0
        %4358 = vmatpush1.bf16.msra.mxu0 %v1066
        %4359 = vmatprep.subr.bf16.mxu0 0
        %4360 = vmatpush1.bf16.msra.mxu0 %v1067
        %4361 = vmatprep.subr.bf16.mxu0 0
        %4362 = vmatpush1.bf16.msra.mxu0 %v1068
        %4363 = vmatprep.subr.bf16.mxu0 0
        %4364 = vmatpush1.bf16.msra.mxu0 %v1069
        %4365 = vmatprep.subr.bf16.mxu0 0
        %4366 = vmatpush1.bf16.msra.mxu0 0
        %4367 = vmatprep.subr.bf16.mxu0 0
        %4368 = vmatpush1.bf16.msra.mxu0 0
        %4369 = vmatprep.subr.bf16.mxu0 0
        %4370 = vmatpush1.bf16.msra.mxu0 0
        %4371 = vmatprep.subr.bf16.mxu0 0
        %4372 = vmatpush1.bf16.msra.mxu0 0
        %4373 = vmatprep.subr.bf16.mxu0 0
        %4374 = vmatpush1.bf16.msra.mxu0 0
        %4375 = vmatprep.subr.bf16.mxu0 0
        %4376 = vmatpush1.bf16.msra.mxu0 0
        %4377 = vmatprep.subr.bf16.mxu0 0
        %4378 = vmatpush1.bf16.msra.mxu0 0
        %4379 = vmatprep.subr.bf16.mxu0 0
        %4380 = vmatpush1.bf16.msra.mxu0 0
        %4381 = vmatprep.subr.bf16.mxu0 0
        %4382 = vmatpush1.bf16.msra.mxu0 0
        %4383 = vmatprep.subr.bf16.mxu0 0
        %4384 = vmatpush1.bf16.msra.mxu0 0
        %4385 = vmatprep.subr.bf16.mxu0 0
        %4386 = vmatpush1.bf16.msra.mxu0 0
        %4387 = vmatprep.subr.bf16.mxu0 0
        %4388 = vmatpush1.bf16.msra.mxu0 0
        %4389 = vmatprep.mubr.bf16.mxu0 0
        %4390 = vmatmul.mubr.bf16.gmra.mrb[0].mxu0 %v4346
        %v4391 = vpop.f32.mrb[0].mxu0
        %v4392 = vadd.f32 %v992, %v4391
        %v4393 = vpop.f32.mrb[0].mxu0
        %v4394 = vpop.f32.mrb[0].mxu0
        %v4395 = vadd.f32 %v995, %v4394
        %v4396 = vpop.f32.mrb[0].mxu0
        %4397 = vmatprep.mubr.bf16.mxu0 0
        %4398 = vmatmul.mubr.bf16.gmra.mrb[0].mxu0 %v4349
        %v4399 = vpop.f32.mrb[0].mxu0
        %v4400 = vadd.f32 %v1000, %v4399
        %v4401 = vpop.f32.mrb[0].mxu0
        %v4402 = vpop.f32.mrb[0].mxu0
        %v4403 = vadd.f32 %v1003, %v4402
        %v4404 = vpop.f32.mrb[0].mxu0
        %4405 = vmatprep.mubr.bf16.mxu0 0
        %4406 = vmatmul.mubr.bf16.gmra.mrb[0].mxu0 %v4352
        %v4407 = vpop.f32.mrb[0].mxu0
        %v4408 = vadd.f32 %v1008, %v4407
        %v4409 = vpop.f32.mrb[0].mxu0
        %v4410 = vpop.f32.mrb[0].mxu0
        %v4411 = vadd.f32 %v1011, %v4410
        %v4412 = vpop.f32.mrb[0].mxu0
        %4413 = vmatprep.mubr.bf16.mxu0 0
        %4414 = vmatmul.mubr.bf16.gmra.mrb[0].mxu0 %v4355
        %v4415 = vpop.f32.mrb[0].mxu0
        %v4416 = vadd.f32 %v1016, %v4415
        %v4417 = vpop.f32.mrb[0].mxu0
        %v4418 = vpop.f32.mrb[0].mxu0
        %v4419 = vadd.f32 %v1019, %v4418
        %v4420 = vpop.f32.mrb[0].mxu0
        %4421 = vdwg.mxu0
        %v4422 = vmul.f32 %v4392, 0.01
        %v4423 = vmul.f32 %v4395, 0.01
        %v4424 = vmul.f32 %v4400, 0.01
        %v4425 = vmul.f32 %v4403, 0.01
        %v4426 = vmul.f32 %v4408, 0.01
        %v4427 = vmul.f32 %v4411, 0.01
        %v4428 = vmul.f32 %v4416, 0.01
        %v4429 = vmul.f32 %v4419, 0.01
        %v4430 = vmax.f32 %v4392, %v4422
        %v4431 = vmax.f32 %v4395, %v4423
        %v4432 = vmax.f32 %v4400, %v4424
        %v4433 = vmax.f32 %v4403, %v4425
        %v4434 = vmax.f32 %v4408, %v4426
        %v4435 = vmax.f32 %v4411, %v4427
        %v4436 = vmax.f32 %v4416, %v4428
        %v4437 = vmax.f32 %v4419, %v4429
        %v4438 = vpack.c.bf16 %v4431, %v4430
        %v4439 = vpack.c.bf16 %v4433, %v4432
        %v4440 = vpack.c.bf16 %v4435, %v4434
        %v4441 = vpack.c.bf16 %v4437, %v4436
        %4442 = vmatprep.subr.bf16.mxu0 0
        %4443 = vmatpush1.bf16.msra.mxu0 %v1209
        %4444 = vmatprep.subr.bf16.mxu0 0
        %4445 = vmatpush1.bf16.msra.mxu0 %v1210
        %4446 = vmatprep.subr.bf16.mxu0 0
        %4447 = vmatpush1.bf16.msra.mxu0 %v1211
        %4448 = vmatprep.subr.bf16.mxu0 0
        %4449 = vmatpush1.bf16.msra.mxu0 %v1212
        %4450 = vmatprep.subr.bf16.mxu0 0
        %4451 = vmatpush1.bf16.msra.mxu0 %v1213
        %4452 = vmatprep.subr.bf16.mxu0 0
        %4453 = vmatpush1.bf16.msra.mxu0 %v1214
        %4454 = vmatprep.subr.bf16.mxu0 0
        %4455 = vmatpush1.bf16.msra.mxu0 %v1215
        %4456 = vmatprep.subr.bf16.mxu0 0
        %4457 = vmatpush1.bf16.msra.mxu0 %v1216
        %4458 = vmatprep.subr.bf16.mxu0 0
        %4459 = vmatpush1.bf16.msra.mxu0 0
        %4460 = vmatprep.subr.bf16.mxu0 0
        %4461 = vmatpush1.bf16.msra.mxu0 0
        %4462 = vmatprep.subr.bf16.mxu0 0
        %4463 = vmatpush1.bf16.msra.mxu0 0
        %4464 = vmatprep.subr.bf16.mxu0 0
        %4465 = vmatpush1.bf16.msra.mxu0 0
        %4466 = vmatprep.subr.bf16.mxu0 0
        %4467 = vmatpush1.bf16.msra.mxu0 0
        %4468 = vmatprep.subr.bf16.mxu0 0
        %4469 = vmatpush1.bf16.msra.mxu0 0
        %4470 = vmatprep.subr.bf16.mxu0 0
        %4471 = vmatpush1.bf16.msra.mxu0 0
        %4472 = vmatprep.subr.bf16.mxu0 0
        %4473 = vmatpush1.bf16.msra.mxu0 0
        %4474 = vmatprep.mubr.bf16.mxu0 0
        %4475 = vmatmul.mubr.bf16.gmra.mrb[0].mxu0 %v4438
        %v4476 = vpop.f32.mrb[0].mxu0
        %v4477 = vadd.f32 %v1175, %v4476
        %v4478 = vpop.f32.mrb[0].mxu0
        %v4479 = vpop.f32.mrb[0].mxu0
        %v4480 = vadd.f32 %v1175, %v4479
        %v4481 = vpop.f32.mrb[0].mxu0
        %4482 = vmatprep.mubr.bf16.mxu0 0
        %4483 = vmatmul.mubr.bf16.gmra.mrb[0].mxu0 %v4439
        %v4484 = vpop.f32.mrb[0].mxu0
        %v4485 = vadd.f32 %v1175, %v4484
        %v4486 = vpop.f32.mrb[0].mxu0
        %v4487 = vpop.f32.mrb[0].mxu0
        %v4488 = vadd.f32 %v1175, %v4487
        %v4489 = vpop.f32.mrb[0].mxu0
        %4490 = vmatprep.mubr.bf16.mxu0 0
        %4491 = vmatmul.mubr.bf16.gmra.mrb[0].mxu0 %v4440
        %v4492 = vpop.f32.mrb[0].mxu0
        %v4493 = vadd.f32 %v1175, %v4492
        %v4494 = vpop.f32.mrb[0].mxu0
        %v4495 = vpop.f32.mrb[0].mxu0
        %v4496 = vadd.f32 %v1175, %v4495
        %v4497 = vpop.f32.mrb[0].mxu0
        %4498 = vmatprep.mubr.bf16.mxu0 0
        %4499 = vmatmul.mubr.bf16.gmra.mrb[0].mxu0 %v4441
        %v4500 = vpop.f32.mrb[0].mxu0
        %v4501 = vadd.f32 %v1175, %v4500
        %v4502 = vpop.f32.mrb[0].mxu0
        %v4503 = vpop.f32.mrb[0].mxu0
        %v4504 = vadd.f32 %v1175, %v4503
        %v4505 = vpop.f32.mrb[0].mxu0
        %4506 = vdwg.mxu0
        %v4507 = vmul.f32 %v4477, 0.01
        %v4508 = vmul.f32 %v4480, 0.01
        %v4509 = vmul.f32 %v4485, 0.01
        %v4510 = vmul.f32 %v4488, 0.01
        %v4511 = vmul.f32 %v4493, 0.01
        %v4512 = vmul.f32 %v4496, 0.01
        %v4513 = vmul.f32 %v4501, 0.01
        %v4514 = vmul.f32 %v4504, 0.01
        %v4515 = vmax.f32 %v4477, %v4507
        %v4516 = vmax.f32 %v4480, %v4508
        %v4517 = vmax.f32 %v4485, %v4509
        %v4518 = vmax.f32 %v4488, %v4510
        %v4519 = vmax.f32 %v4493, %v4511
        %v4520 = vmax.f32 %v4496, %v4512
        %v4521 = vmax.f32 %v4501, %v4513
        %v4522 = vmax.f32 %v4504, %v4514
        %v4523 = vmax.f32 %v4308, %v4515
        %v4524 = vmax.f32 %v4309, %v4516
        %v4525 = vmax.f32 %v4310, %v4517
        %v4526 = vmax.f32 %v4311, %v4518
        %v4527 = vmax.f32 %v4312, %v4519
        %v4528 = vmax.f32 %v4313, %v4520
        %v4529 = vmax.f32 %v4314, %v4521
        %v4530 = vmax.f32 %v4315, %v4522
        %4531 = vst [vmem:[%s842] sm:$0xff] %v4523
        %4532 = vst [vmem:[%s842 + $0x8] sm:$0xff] %v4524
        %4533 = vst [vmem:[%s842 + $0x10] sm:$0xff] %v4525
        %4534 = vst [vmem:[%s842 + $0x18] sm:$0xff] %v4526
        %4535 = vst [vmem:[%s842 + $0x20] sm:$0xff] %v4527
        %4536 = vst [vmem:[%s842 + $0x28] sm:$0xff] %v4528
        %4537 = vst [vmem:[%s842 + $0x30] sm:$0xff] %v4529
        %4538 = vst [vmem:[%s842 + $0x38] sm:$0xff] %v4530
        %s4539 = sand.u32 %s186, 1
        %s4540 = scalar_lea.sflag [#allocation4], %s4539
        %s4541 = sand.u32 %s186, 1
        %s4542 = smul.addr %s4541, 64
        %s4543 = scalar_lea.vmem [#allocation3], %s4542
        // Predicated region
        $region90: #{neighbor_embedding.5} parent=84 // pred_check
          %p4544 = pneg %p196
        $region91: #{neighbor_embedding.5} parent=84 // pred_check_branch
          %4546 = sbr.rel (%p4544) target = $region93
        $region92: #{neighbor_embedding.5} parent=84 // pred_region
          %s4547 = smul.u32 8, %s21
          %s4549 = ssub.s32 1024, 1024
          %4550 = vsyncadd %s4540, %s4549
          %s4551 = smul.addr %s4547, 128
          %s4552 = scalar_lea.hbm %s7, %s4551
          %s4553 = sshll.u32 %s4543, 4
          %s4554 = int_to_ptr.vmem [resolvable:$true] %s4553
          %4559 = dma.vmem_to_hbm [thread:$0]  %s4554, 1024, %s4552, %s4540, 128, 128, 8
        $region93: #{neighbor_embedding.5} parent=84 // pred_fallthru
          _
      $region85: #{neighbor_embedding.5} parent=5 // pred_fallthru
        _
      %p4560 = scmp.le.s32.totalorder 2, %s16
      // Predicated region
      $region94: #{neighbor_embedding.5} parent=5 // pred_check
        %p4561 = pneg %p4560
      $region95: #{neighbor_embedding.5} parent=5 // pred_check_branch
        %4563 = sbr.rel (%p4561) target = $region97
      $region96: #{neighbor_embedding.5} parent=5 // pred_region
        %s4564 = ssub.s32 %s16, 2
        // Predicated region
        $region98: #{neighbor_embedding.5} parent=96 // pred_check
          %p4565 = pneg %p202
        $region99: #{neighbor_embedding.5} parent=96 // pred_check_branch
          %4567 = sbr.rel (%p4565) target = $region101
        $region100: #{neighbor_embedding.5} parent=96 // pred_region
          %s4568 = sand.u32 %s187, 1
          %s4569 = scalar_lea.sflag [#allocation4], %s4568
          %s4570 = sand.u32 %s187, 1
          %s4571 = smul.addr %s4570, 64
          %s4572 = scalar_lea.vmem [#allocation3], %s4571
          %4573 = dma.done %s4569, 1024
        $region101: #{neighbor_embedding.5} parent=96 // pred_fallthru
          _
      $region97: #{neighbor_embedding.5} parent=5 // pred_fallthru
        _
    $region6: #{neighbor_embedding.5} parent=1 // loop_footer
      %s20 = sadd.s32 1, %s16
    $region7: #{neighbor_embedding.5} parent=1 // loop_footer_branch
      %15 = sbr.rel target = $region3
    $region8: #{neighbor_embedding.5} parent=1 // loop_exit
      _
    %4574 = vsyncpa [#allocation4], 1
    %s4575 = scalar_lea.sflag [#allocation4], 1
    %4576 = vsyncpa %s4575, 1

</llo_original>
